<compile_context>
chip_gen: v7x
topology: tpu7x:2x2x1
jax: 0.10.0
libtpu: 0.0.40
codegen_flags: <defaults>
</compile_context>

<pallas_src>
import functools

import numpy as np
import jax
import jax.numpy as jnp
from jax.experimental import pallas as pl
from jax.experimental.pallas import tpu as pltpu


# ---------------- static architecture geometry (input 1 x 36 x 36) ----------
H0 = W0 = 36
NCLASSES = 5
CPAD = 128                     # channel axes padded to 128 lanes
G = 32                         # guard rows around each padded spatial buffer

H1 = H0 // 2                   # 18  (after first 2x2 pool)  -> conv1
H2 = H1 // 2                   # 9   (after second 2x2 pool) -> conv2
H3 = H2 // 3                   # 3   (after first 3x3 pool)  -> conv3
                               # final 3x3 pool -> 1x1

def _pdims(h):                 # padded row width, padded #rows (square image)
    return h + 2, (h + 2) * (h + 2)

WP1, S1 = _pdims(H1)           # 20, 400
WP2, S2 = _pdims(H2)           # 11, 121
WP3, S3 = _pdims(H3)           # 5,  25

def _rup8(n):
    return ((n + 7) // 8) * 8

BUF1_ROWS = _rup8(G + S1)      # conv1 input (pool0 output) buffer
ACC1_ROWS = _rup8(2 * G + S1)  # conv accumulators need guards on both sides
ACC2_ROWS = _rup8(2 * G + S2)
ACC3_ROWS = _rup8(2 * G + S3)

CIN1P = 16                     # conv1 real Cin=1, padded (bf16 sublane tile)
CIN2 = 64
CIN3 = 64
FEAT = 96                      # conv3 real Cout == flatten dim (spatial 1x1)


def _pool_select(h, k):
    """(Sn, S) 0/1 matrix: picks the top-left entry of every k*k window from the
    padded h x h grid (flattened) and drops it into the interior of the padded
    (h//k) x (h//k) grid; border rows stay zero (=> zero conv padding)."""
    wp, s = _pdims(h)
    hn = h // k
    wpn, sn = _pdims(hn)
    m = np.zeros((sn, s), np.float32)
    for ho in range(hn):
        for wo in range(hn):
            m[(ho + 1) * wpn + (wo + 1), (1 + ho * k) * wp + (1 + wo * k)] = 1.0
    return m


_P1 = _pool_select(H1, 2)      # (121, 400)
_P2 = _pool_select(H2, 3)      # (25, 121)


# ----------------------------- fused kernel ---------------------------------
def _fused_kernel(x_ref, w1, s1, t1, p1, w2, s2, t2, p2, w3, s3, t3,
                  wf1, bf1, wf2, bf2, o_ref, buf1, acc1, acc2, acc3):
    f32 = jnp.float32
    bf16 = jnp.bfloat16

    # Fresh state for this image (scratch persists across grid steps).
    buf1[...] = jnp.zeros_like(buf1)
    acc1[...] = jnp.zeros_like(acc1)
    acc2[...] = jnp.zeros_like(acc2)
    acc3[...] = jnp.zeros_like(acc3)

    # ---- MaxPool2d(2,2) on the raw 36x36 single-channel image -> padded 18x18
    # x_ref rows hold horizontally adjacent pixel pairs: row = h*(W0//2)+w//2.
    hw = W0 // 2
    for ho in range(H1):
        r0 = x_ref[pl.ds((2 * ho) * hw, hw), :]          # (18, 2)
        r1 = x_ref[pl.ds((2 * ho + 1) * hw, hw), :]      # (18, 2)
        m = jnp.max(jnp.maximum(r0, r1), axis=1, keepdims=True)   # (18, 1)
        buf1[pl.ds(G + (ho + 1) * WP1 + 1, hw), :] = (
            jnp.broadcast_to(m, (hw, CIN1P)))            # zero weight rows 1..

    def conv_bn(lhs, w_ref, scale_ref, shift_ref, acc_ref, wp, size):
        # 3x3 'same' conv (no bias) as 9 shift-accumulated matmuls over the
        # whole padded image, then ReLU -> BatchNorm(eval) epilogue in f32.
        for k in range(9):
            di, dj = divmod(k, 3)
            delta = (1 - di) * wp + (1 - dj)
            y = jnp.dot(lhs, w_ref[k], preferred_element_type=f32)
            acc_ref[pl.ds(G + delta, size), :] += y
        a = acc_ref[pl.ds(G, size), :]
        acc_ref[pl.ds(G, size), :] = (
            jnp.maximum(a, 0.0) * scale_ref[...] + shift_ref[...])

    def pooled(acc_ref, p_ref, wp, size, k):
        # Window max over k*k shifted contiguous views, then a 0/1 selection
        # matmul that subsamples (stride k) and zero-pads the next grid.
        mh = acc_ref[pl.ds(G, size), :]
        for i in range(k):
            for j in range(k):
                if i == 0 and j == 0:
                    continue
                mh = jnp.maximum(mh, acc_ref[pl.ds(G + i * wp + j, size), :])
        return jnp.dot(p_ref[...], mh, preferred_element_type=f32)

    # ---- conv1 (1->64) on 18x18, MaxPool2d(2,2) -> padded 9x9
    lhs1 = buf1[pl.ds(G, S1), :].astype(bf16)                       # (400, 16)
    conv_bn(lhs1, w1, s1, t1, acc1, WP1, S1)
    x2 = pooled(acc1, p1, WP1, S1, 2)                               # (121, 128)

    # ---- conv2 (64->64) on 9x9, MaxPool2d(3,3) -> padded 3x3
    lhs2 = x2[:, :CIN2].astype(bf16)                                # (121, 64)
    conv_bn(lhs2, w2, s2, t2, acc2, WP2, S2)
    x3 = pooled(acc2, p2, WP2, S2, 3)                               # (25, 128)

    # ---- conv3 (64->96) on 3x3, MaxPool2d(3,3) -> 1x1
    lhs3 = x3[:, :CIN3].astype(bf16)                                # (25, 64)
    conv_bn(lhs3, w3, s3, t3, acc3, WP3, S3)
    feat = acc3[pl.ds(G + 1 * WP3 + 1, 3), :]
    feat = jnp.maximum(feat, acc3[pl.ds(G + 2 * WP3 + 1, 3), :])
    feat = jnp.maximum(feat, acc3[pl.ds(G + 3 * WP3 + 1, 3), :])
    feat = jnp.max(feat, axis=0, keepdims=True)                     # (1, 128)

    # ---- Dropout (eval) -> identity; fcn (Linear+ReLU) and last_fc fused.
    # TODO(synk): training-mode dropout (random masking) not implemented; eval semantics used.
    h = jnp.dot(feat[:, :FEAT].astype(bf16), wf1[...],
                preferred_element_type=f32) + bf1[...]
    h = jnp.maximum(h, 0.0)
    logits = jnp.dot(h.astype(bf16), wf2[...],
                     preferred_element_type=f32) + bf2[...]
    o_ref[0] = logits


# ----------------------------- parameters -----------------------------------
def _xavier_normal(key, shape, fan_in, fan_out):
    std = (2.0 / (fan_in + fan_out)) ** 0.5
    return std * jax.random.normal(key, shape, jnp.float32)


def init_params(key):
    eps = 1e-5
    conv_defs = [(1, 64, CIN1P), (64, 64, CIN2), (64, 96, CIN3)]
    ks = jax.random.split(key, 5)
    params = {}
    for li, (cin, cout, cin_pad) in enumerate(conv_defs, start=1):
        w = _xavier_normal(ks[li - 1], (cout, cin, 3, 3), cin * 9, cout * 9)
        wk = jnp.transpose(w, (2, 3, 1, 0)).reshape(9, cin, cout)   # (9,Cin,Cout)
        wk = jnp.pad(wk, ((0, 0), (0, cin_pad - cin), (0, CPAD - cout)))
        params[f"w{li}"] = wk.astype(jnp.bfloat16)
        # fresh nn.BatchNorm2d in eval: gamma=1, beta=0, running stats (0, 1)
        scale = jnp.full((cout,), 1.0 / np.sqrt(1.0 + eps), jnp.float32)
        shift = jnp.zeros((cout,), jnp.float32)
        params[f"s{li}"] = jnp.pad(scale, (0, CPAD - cout)).reshape(1, CPAD)
        params[f"t{li}"] = jnp.pad(shift, (0, CPAD - cout)).reshape(1, CPAD)
    wf1 = _xavier_normal(ks[3], (FEAT, 128), FEAT, 128)             # x @ W1
    wf2 = _xavier_normal(ks[4], (128, NCLASSES), 128, NCLASSES)     # x @ W2
    params["wf1"] = wf1.astype(jnp.bfloat16)
    params["bf1"] = jnp.zeros((1, CPAD), jnp.float32)
    params["wf2"] = jnp.pad(wf2, ((0, 0), (0, CPAD - NCLASSES))).astype(jnp.bfloat16)
    params["bf2"] = jnp.zeros((1, CPAD), jnp.float32)
    return params


# ----------------------------- forward ---------------------------------------
@jax.jit
def single_chan_expert_forward(x, params):
    B = x.shape[0]
    # (B,1,36,36) -> rows of horizontally adjacent pixel pairs (free reshape).
    x2 = x.reshape(B * H0 * W0 // 2, 2)
    const = lambda n: (lambda b: (0,) * n)  # grid-invariant (stays VMEM-resident)
    out = pl.pallas_call(
        _fused_kernel,
        grid=(B,),
        out_shape=jax.ShapeDtypeStruct((B, 1, CPAD), jnp.float32),
        in_specs=[
            pl.BlockSpec((H0 * W0 // 2, 2), lambda b: (b, 0)),      # image b
            pl.BlockSpec((9, CIN1P, CPAD), const(3)),               # conv1 W
            pl.BlockSpec((1, CPAD), const(2)),                      # bn1 scale
            pl.BlockSpec((1, CPAD), const(2)),                      # bn1 shift
            pl.BlockSpec(_P1.shape, const(2)),                      # pool1 select
            pl.BlockSpec((9, CIN2, CPAD), const(3)),                # conv2 W
            pl.BlockSpec((1, CPAD), const(2)),
            pl.BlockSpec((1, CPAD), const(2)),
            pl.BlockSpec(_P2.shape, const(2)),                      # pool2 select
            pl.BlockSpec((9, CIN3, CPAD), const(3)),                # conv3 W
            pl.BlockSpec((1, CPAD), const(2)),
            pl.BlockSpec((1, CPAD), const(2)),
            pl.BlockSpec((FEAT, CPAD), const(2)),                   # fc1 W^T
            pl.BlockSpec((1, CPAD), const(2)),                      # fc1 b
            pl.BlockSpec((CPAD, CPAD), const(2)),                   # fc2 W^T (padded)
            pl.BlockSpec((1, CPAD), const(2)),                      # fc2 b
        ],
        out_specs=pl.BlockSpec((1, 1, CPAD), lambda b: (b, 0, 0)),
        scratch_shapes=[
            pltpu.VMEM((BUF1_ROWS, CIN1P), jnp.float32),            # pool0 out
            pltpu.VMEM((ACC1_ROWS, CPAD), jnp.float32),             # conv1 acc
            pltpu.VMEM((ACC2_ROWS, CPAD), jnp.float32),             # conv2 acc
            pltpu.VMEM((ACC3_ROWS, CPAD), jnp.float32),             # conv3 acc
        ],
        compiler_params=pltpu.CompilerParams(
            dimension_semantics=("parallel",)),
    )(x2,
      params["w1"], params["s1"], params["t1"], _P1,
      params["w2"], params["s2"], params["t2"], _P2,
      params["w3"], params["s3"], params["t3"],
      params["wf1"], params["bf1"], params["wf2"], params["bf2"])
    logits = out.reshape(B, CPAD)[:, :NCLASSES]
    return {"logits": logits}


# ----------------------------- main ------------------------------------------
if __name__ == "__main__":
    ts = {"dropout": 0.5, "input_dim": (1, 36, 36), "nclasses": 5}
    B = 2
    key = jax.random.PRNGKey(0)
    kx, kp = jax.random.split(key)
    x = jax.random.normal(kx, (B, *ts["input_dim"]), jnp.float32)

    params = init_params(kp)
    out = single_chan_expert_forward(x, params)
    logits = jax.block_until_ready(out["logits"])
    assert logits.shape == (B, ts["nclasses"]), logits.shape
    assert bool(jnp.all(jnp.isfinite(logits)))
    print("KERNEL_OK")
</pallas_src>

<mosaic_0001>
module attributes {stable_mosaic.version = 11 : i64} {
  func.func @_fused_kernel(%arg0: i32, %arg1: memref<648x2xf32, #tpu.memory_space<vmem>>, %arg2: memref<9x16x128xbf16, #tpu.memory_space<vmem>>, %arg3: memref<1x128xf32, #tpu.memory_space<vmem>>, %arg4: memref<1x128xf32, #tpu.memory_space<vmem>>, %arg5: memref<121x400xf32, #tpu.memory_space<vmem>>, %arg6: memref<9x64x128xbf16, #tpu.memory_space<vmem>>, %arg7: memref<1x128xf32, #tpu.memory_space<vmem>>, %arg8: memref<1x128xf32, #tpu.memory_space<vmem>>, %arg9: memref<25x121xf32, #tpu.memory_space<vmem>>, %arg10: memref<9x64x128xbf16, #tpu.memory_space<vmem>>, %arg11: memref<1x128xf32, #tpu.memory_space<vmem>>, %arg12: memref<1x128xf32, #tpu.memory_space<vmem>>, %arg13: memref<96x128xbf16, #tpu.memory_space<vmem>>, %arg14: memref<1x128xf32, #tpu.memory_space<vmem>>, %arg15: memref<128x128xbf16, #tpu.memory_space<vmem>>, %arg16: memref<1x128xf32, #tpu.memory_space<vmem>>, %arg17: memref<1x1x128xf32, #tpu.memory_space<vmem>>, %arg18: memref<432x16xf32, #tpu.memory_space<vmem>>, %arg19: memref<464x128xf32, #tpu.memory_space<vmem>>, %arg20: memref<192x128xf32, #tpu.memory_space<vmem>>, %arg21: memref<96x128xf32, #tpu.memory_space<vmem>>) attributes {dimension_semantics = [#tpu.dimension_semantics<parallel>], iteration_bounds = array<i64: 2>, scalar_prefetch = 0 : i64, scratch_operands = 4 : i64, tpu.core_type = #tpu.core_type<tc>, window_params = [{transform_indices = @transform_0, window_bounds = array<i64: 648, 2>}, {pipeline_mode = #tpu.pipeline_mode<synchronous>, transform_indices = @transform_1, window_bounds = array<i64: 9, 16, 128>}, {pipeline_mode = #tpu.pipeline_mode<synchronous>, transform_indices = @transform_2, window_bounds = array<i64: 1, 128>}, {pipeline_mode = #tpu.pipeline_mode<synchronous>, transform_indices = @transform_3, window_bounds = array<i64: 1, 128>}, {pipeline_mode = #tpu.pipeline_mode<synchronous>, transform_indices = @transform_4, window_bounds = array<i64: 121, 400>}, {pipeline_mode = #tpu.pipeline_mode<synchronous>, transform_indices = @transform_5, window_bounds = array<i64: 9, 64, 128>}, {pipeline_mode = #tpu.pipeline_mode<synchronous>, transform_indices = @transform_6, window_bounds = array<i64: 1, 128>}, {pipeline_mode = #tpu.pipeline_mode<synchronous>, transform_indices = @transform_7, window_bounds = array<i64: 1, 128>}, {pipeline_mode = #tpu.pipeline_mode<synchronous>, transform_indices = @transform_8, window_bounds = array<i64: 25, 121>}, {pipeline_mode = #tpu.pipeline_mode<synchronous>, transform_indices = @transform_9, window_bounds = array<i64: 9, 64, 128>}, {pipeline_mode = #tpu.pipeline_mode<synchronous>, transform_indices = @transform_10, window_bounds = array<i64: 1, 128>}, {pipeline_mode = #tpu.pipeline_mode<synchronous>, transform_indices = @transform_11, window_bounds = array<i64: 1, 128>}, {pipeline_mode = #tpu.pipeline_mode<synchronous>, transform_indices = @transform_12, window_bounds = array<i64: 96, 128>}, {pipeline_mode = #tpu.pipeline_mode<synchronous>, transform_indices = @transform_13, window_bounds = array<i64: 1, 128>}, {pipeline_mode = #tpu.pipeline_mode<synchronous>, transform_indices = @transform_14, window_bounds = array<i64: 128, 128>}, {pipeline_mode = #tpu.pipeline_mode<synchronous>, transform_indices = @transform_15, window_bounds = array<i64: 1, 128>}, {transform_indices = @transform_16, window_bounds = array<i64: 1, 1, 128>}]} {
    %cst = arith.constant 0.000000e+00 : f32
    %0 = vector.broadcast %cst : f32 to vector<432x16xf32>
    %c0 = arith.constant 0 : index
    %c0_0 = arith.constant 0 : index
    %1 = vector.load %arg18[%c0, %c0_0] : memref<432x16xf32, #tpu.memory_space<vmem>>, vector<432x16xf32>
    tpu.vector_store %arg18[%c0, %c0_0], %0 {strides = array<i32>} : memref<432x16xf32, #tpu.memory_space<vmem>>, vector<432x16xf32>,
    %cst_1 = arith.constant 0.000000e+00 : f32
    %2 = vector.broadcast %cst_1 : f32 to vector<464x128xf32>
    %c0_2 = arith.constant 0 : index
    %c0_3 = arith.constant 0 : index
    %3 = vector.load %arg19[%c0_2, %c0_3] : memref<464x128xf32, #tpu.memory_space<vmem>>, vector<464x128xf32>
    tpu.vector_store %arg19[%c0_2, %c0_3], %2 {strides = array<i32>} : memref<464x128xf32, #tpu.memory_space<vmem>>, vector<464x128xf32>,
    %cst_4 = arith.constant 0.000000e+00 : f32
    %4 = vector.broadcast %cst_4 : f32 to vector<192x128xf32>
    %c0_5 = arith.constant 0 : index
    %c0_6 = arith.constant 0 : index
    %5 = vector.load %arg20[%c0_5, %c0_6] : memref<192x128xf32, #tpu.memory_space<vmem>>, vector<192x128xf32>
    tpu.vector_store %arg20[%c0_5, %c0_6], %4 {strides = array<i32>} : memref<192x128xf32, #tpu.memory_space<vmem>>, vector<192x128xf32>,
    %cst_7 = arith.constant 0.000000e+00 : f32
    %6 = vector.broadcast %cst_7 : f32 to vector<96x128xf32>
    %c0_8 = arith.constant 0 : index
    %c0_9 = arith.constant 0 : index
    %7 = vector.load %arg21[%c0_8, %c0_9] : memref<96x128xf32, #tpu.memory_space<vmem>>, vector<96x128xf32>
    tpu.vector_store %arg21[%c0_8, %c0_9], %6 {strides = array<i32>} : memref<96x128xf32, #tpu.memory_space<vmem>>, vector<96x128xf32>,
    %c0_10 = arith.constant 0 : index
    %c0_11 = arith.constant 0 : index
    %8 = vector.load %arg1[%c0_10, %c0_11] : memref<648x2xf32, #tpu.memory_space<vmem>>, vector<18x2xf32>
    %c18 = arith.constant 18 : index
    %c0_12 = arith.constant 0 : index
    %9 = vector.load %arg1[%c18, %c0_12] : memref<648x2xf32, #tpu.memory_space<vmem>>, vector<18x2xf32>
    %10 = arith.maximumf %8, %9 : vector<18x2xf32>
    %cst_13 = arith.constant dense<0xFF800000> : vector<18xf32>
    %11 = vector.multi_reduction <maximumf>, %10, %cst_13 [1] : vector<18x2xf32> to vector<18xf32>
    %12 = vector.shape_cast %11 : vector<18xf32> to vector<18x1xf32>
    %13 = vector.shape_cast %12 : vector<18x1xf32> to vector<18x1xf32>
    %14 = vector.broadcast %13 : vector<18x1xf32> to vector<18x16xf32>
    %c53 = arith.constant 53 : index
    %c0_14 = arith.constant 0 : index
    %15 = vector.load %arg18[%c53, %c0_14] : memref<432x16xf32, #tpu.memory_space<vmem>>, vector<18x16xf32>
    tpu.vector_store %arg18[%c53, %c0_14], %14 {strides = array<i32>} : memref<432x16xf32, #tpu.memory_space<vmem>>, vector<18x16xf32>,
    %c36 = arith.constant 36 : index
    %c0_15 = arith.constant 0 : index
    %16 = vector.load %arg1[%c36, %c0_15] : memref<648x2xf32, #tpu.memory_space<vmem>>, vector<18x2xf32>
    %c54 = arith.constant 54 : index
    %c0_16 = arith.constant 0 : index
    %17 = vector.load %arg1[%c54, %c0_16] : memref<648x2xf32, #tpu.memory_space<vmem>>, vector<18x2xf32>
    %18 = arith.maximumf %16, %17 : vector<18x2xf32>
    %cst_17 = arith.constant dense<0xFF800000> : vector<18xf32>
    %19 = vector.multi_reduction <maximumf>, %18, %cst_17 [1] : vector<18x2xf32> to vector<18xf32>
    %20 = vector.shape_cast %19 : vector<18xf32> to vector<18x1xf32>
    %21 = vector.shape_cast %20 : vector<18x1xf32> to vector<18x1xf32>
    %22 = vector.broadcast %21 : vector<18x1xf32> to vector<18x16xf32>
    %c73 = arith.constant 73 : index
    %c0_18 = arith.constant 0 : index
    %23 = vector.load %arg18[%c73, %c0_18] : memref<432x16xf32, #tpu.memory_space<vmem>>, vector<18x16xf32>
    tpu.vector_store %arg18[%c73, %c0_18], %22 {strides = array<i32>} : memref<432x16xf32, #tpu.memory_space<vmem>>, vector<18x16xf32>,
    %c72 = arith.constant 72 : index
    %c0_19 = arith.constant 0 : index
    %24 = vector.load %arg1[%c72, %c0_19] : memref<648x2xf32, #tpu.memory_space<vmem>>, vector<18x2xf32>
    %c90 = arith.constant 90 : index
    %c0_20 = arith.constant 0 : index
    %25 = vector.load %arg1[%c90, %c0_20] : memref<648x2xf32, #tpu.memory_space<vmem>>, vector<18x2xf32>
    %26 = arith.maximumf %24, %25 : vector<18x2xf32>
    %cst_21 = arith.constant dense<0xFF800000> : vector<18xf32>
    %27 = vector.multi_reduction <maximumf>, %26, %cst_21 [1] : vector<18x2xf32> to vector<18xf32>
    %28 = vector.shape_cast %27 : vector<18xf32> to vector<18x1xf32>
    %29 = vector.shape_cast %28 : vector<18x1xf32> to vector<18x1xf32>
    %30 = vector.broadcast %29 : vector<18x1xf32> to vector<18x16xf32>
    %c93 = arith.constant 93 : index
    %c0_22 = arith.constant 0 : index
    %31 = vector.load %arg18[%c93, %c0_22] : memref<432x16xf32, #tpu.memory_space<vmem>>, vector<18x16xf32>
    tpu.vector_store %arg18[%c93, %c0_22], %30 {strides = array<i32>} : memref<432x16xf32, #tpu.memory_space<vmem>>, vector<18x16xf32>,
    %c108 = arith.constant 108 : index
    %c0_23 = arith.constant 0 : index
    %32 = vector.load %arg1[%c108, %c0_23] : memref<648x2xf32, #tpu.memory_space<vmem>>, vector<18x2xf32>
    %c126 = arith.constant 126 : index
    %c0_24 = arith.constant 0 : index
    %33 = vector.load %arg1[%c126, %c0_24] : memref<648x2xf32, #tpu.memory_space<vmem>>, vector<18x2xf32>
    %34 = arith.maximumf %32, %33 : vector<18x2xf32>
    %cst_25 = arith.constant dense<0xFF800000> : vector<18xf32>
    %35 = vector.multi_reduction <maximumf>, %34, %cst_25 [1] : vector<18x2xf32> to vector<18xf32>
    %36 = vector.shape_cast %35 : vector<18xf32> to vector<18x1xf32>
    %37 = vector.shape_cast %36 : vector<18x1xf32> to vector<18x1xf32>
    %38 = vector.broadcast %37 : vector<18x1xf32> to vector<18x16xf32>
    %c113 = arith.constant 113 : index
    %c0_26 = arith.constant 0 : index
    %39 = vector.load %arg18[%c113, %c0_26] : memref<432x16xf32, #tpu.memory_space<vmem>>, vector<18x16xf32>
    tpu.vector_store %arg18[%c113, %c0_26], %38 {strides = array<i32>} : memref<432x16xf32, #tpu.memory_space<vmem>>, vector<18x16xf32>,
    %c144 = arith.constant 144 : index
    %c0_27 = arith.constant 0 : index
    %40 = vector.load %arg1[%c144, %c0_27] : memref<648x2xf32, #tpu.memory_space<vmem>>, vector<18x2xf32>
    %c162 = arith.constant 162 : index
    %c0_28 = arith.constant 0 : index
    %41 = vector.load %arg1[%c162, %c0_28] : memref<648x2xf32, #tpu.memory_space<vmem>>, vector<18x2xf32>
    %42 = arith.maximumf %40, %41 : vector<18x2xf32>
    %cst_29 = arith.constant dense<0xFF800000> : vector<18xf32>
    %43 = vector.multi_reduction <maximumf>, %42, %cst_29 [1] : vector<18x2xf32> to vector<18xf32>
    %44 = vector.shape_cast %43 : vector<18xf32> to vector<18x1xf32>
    %45 = vector.shape_cast %44 : vector<18x1xf32> to vector<18x1xf32>
    %46 = vector.broadcast %45 : vector<18x1xf32> to vector<18x16xf32>
    %c133 = arith.constant 133 : index
    %c0_30 = arith.constant 0 : index
    %47 = vector.load %arg18[%c133, %c0_30] : memref<432x16xf32, #tpu.memory_space<vmem>>, vector<18x16xf32>
    tpu.vector_store %arg18[%c133, %c0_30], %46 {strides = array<i32>} : memref<432x16xf32, #tpu.memory_space<vmem>>, vector<18x16xf32>,
    %c180 = arith.constant 180 : index
    %c0_31 = arith.constant 0 : index
    %48 = vector.load %arg1[%c180, %c0_31] : memref<648x2xf32, #tpu.memory_space<vmem>>, vector<18x2xf32>
    %c198 = arith.constant 198 : index
    %c0_32 = arith.constant 0 : index
    %49 = vector.load %arg1[%c198, %c0_32] : memref<648x2xf32, #tpu.memory_space<vmem>>, vector<18x2xf32>
    %50 = arith.maximumf %48, %49 : vector<18x2xf32>
    %cst_33 = arith.constant dense<0xFF800000> : vector<18xf32>
    %51 = vector.multi_reduction <maximumf>, %50, %cst_33 [1] : vector<18x2xf32> to vector<18xf32>
    %52 = vector.shape_cast %51 : vector<18xf32> to vector<18x1xf32>
    %53 = vector.shape_cast %52 : vector<18x1xf32> to vector<18x1xf32>
    %54 = vector.broadcast %53 : vector<18x1xf32> to vector<18x16xf32>
    %c153 = arith.constant 153 : index
    %c0_34 = arith.constant 0 : index
    %55 = vector.load %arg18[%c153, %c0_34] : memref<432x16xf32, #tpu.memory_space<vmem>>, vector<18x16xf32>
    tpu.vector_store %arg18[%c153, %c0_34], %54 {strides = array<i32>} : memref<432x16xf32, #tpu.memory_space<vmem>>, vector<18x16xf32>,
    %c216 = arith.constant 216 : index
    %c0_35 = arith.constant 0 : index
    %56 = vector.load %arg1[%c216, %c0_35] : memref<648x2xf32, #tpu.memory_space<vmem>>, vector<18x2xf32>
    %c234 = arith.constant 234 : index
    %c0_36 = arith.constant 0 : index
    %57 = vector.load %arg1[%c234, %c0_36] : memref<648x2xf32, #tpu.memory_space<vmem>>, vector<18x2xf32>
    %58 = arith.maximumf %56, %57 : vector<18x2xf32>
    %cst_37 = arith.constant dense<0xFF800000> : vector<18xf32>
    %59 = vector.multi_reduction <maximumf>, %58, %cst_37 [1] : vector<18x2xf32> to vector<18xf32>
    %60 = vector.shape_cast %59 : vector<18xf32> to vector<18x1xf32>
    %61 = vector.shape_cast %60 : vector<18x1xf32> to vector<18x1xf32>
    %62 = vector.broadcast %61 : vector<18x1xf32> to vector<18x16xf32>
    %c173 = arith.constant 173 : index
    %c0_38 = arith.constant 0 : index
    %63 = vector.load %arg18[%c173, %c0_38] : memref<432x16xf32, #tpu.memory_space<vmem>>, vector<18x16xf32>
    tpu.vector_store %arg18[%c173, %c0_38], %62 {strides = array<i32>} : memref<432x16xf32, #tpu.memory_space<vmem>>, vector<18x16xf32>,
    %c252 = arith.constant 252 : index
    %c0_39 = arith.constant 0 : index
    %64 = vector.load %arg1[%c252, %c0_39] : memref<648x2xf32, #tpu.memory_space<vmem>>, vector<18x2xf32>
    %c270 = arith.constant 270 : index
    %c0_40 = arith.constant 0 : index
    %65 = vector.load %arg1[%c270, %c0_40] : memref<648x2xf32, #tpu.memory_space<vmem>>, vector<18x2xf32>
    %66 = arith.maximumf %64, %65 : vector<18x2xf32>
    %cst_41 = arith.constant dense<0xFF800000> : vector<18xf32>
    %67 = vector.multi_reduction <maximumf>, %66, %cst_41 [1] : vector<18x2xf32> to vector<18xf32>
    %68 = vector.shape_cast %67 : vector<18xf32> to vector<18x1xf32>
    %69 = vector.shape_cast %68 : vector<18x1xf32> to vector<18x1xf32>
    %70 = vector.broadcast %69 : vector<18x1xf32> to vector<18x16xf32>
    %c193 = arith.constant 193 : index
    %c0_42 = arith.constant 0 : index
    %71 = vector.load %arg18[%c193, %c0_42] : memref<432x16xf32, #tpu.memory_space<vmem>>, vector<18x16xf32>
    tpu.vector_store %arg18[%c193, %c0_42], %70 {strides = array<i32>} : memref<432x16xf32, #tpu.memory_space<vmem>>, vector<18x16xf32>,
    %c288 = arith.constant 288 : index
    %c0_43 = arith.constant 0 : index
    %72 = vector.load %arg1[%c288, %c0_43] : memref<648x2xf32, #tpu.memory_space<vmem>>, vector<18x2xf32>
    %c306 = arith.constant 306 : index
    %c0_44 = arith.constant 0 : index
    %73 = vector.load %arg1[%c306, %c0_44] : memref<648x2xf32, #tpu.memory_space<vmem>>, vector<18x2xf32>
    %74 = arith.maximumf %72, %73 : vector<18x2xf32>
    %cst_45 = arith.constant dense<0xFF800000> : vector<18xf32>
    %75 = vector.multi_reduction <maximumf>, %74, %cst_45 [1] : vector<18x2xf32> to vector<18xf32>
    %76 = vector.shape_cast %75 : vector<18xf32> to vector<18x1xf32>
    %77 = vector.shape_cast %76 : vector<18x1xf32> to vector<18x1xf32>
    %78 = vector.broadcast %77 : vector<18x1xf32> to vector<18x16xf32>
    %c213 = arith.constant 213 : index
    %c0_46 = arith.constant 0 : index
    %79 = vector.load %arg18[%c213, %c0_46] : memref<432x16xf32, #tpu.memory_space<vmem>>, vector<18x16xf32>
    tpu.vector_store %arg18[%c213, %c0_46], %78 {strides = array<i32>} : memref<432x16xf32, #tpu.memory_space<vmem>>, vector<18x16xf32>,
    %c324 = arith.constant 324 : index
    %c0_47 = arith.constant 0 : index
    %80 = vector.load %arg1[%c324, %c0_47] : memref<648x2xf32, #tpu.memory_space<vmem>>, vector<18x2xf32>
    %c342 = arith.constant 342 : index
    %c0_48 = arith.constant 0 : index
    %81 = vector.load %arg1[%c342, %c0_48] : memref<648x2xf32, #tpu.memory_space<vmem>>, vector<18x2xf32>
    %82 = arith.maximumf %80, %81 : vector<18x2xf32>
    %cst_49 = arith.constant dense<0xFF800000> : vector<18xf32>
    %83 = vector.multi_reduction <maximumf>, %82, %cst_49 [1] : vector<18x2xf32> to vector<18xf32>
    %84 = vector.shape_cast %83 : vector<18xf32> to vector<18x1xf32>
    %85 = vector.shape_cast %84 : vector<18x1xf32> to vector<18x1xf32>
    %86 = vector.broadcast %85 : vector<18x1xf32> to vector<18x16xf32>
    %c233 = arith.constant 233 : index
    %c0_50 = arith.constant 0 : index
    %87 = vector.load %arg18[%c233, %c0_50] : memref<432x16xf32, #tpu.memory_space<vmem>>, vector<18x16xf32>
    tpu.vector_store %arg18[%c233, %c0_50], %86 {strides = array<i32>} : memref<432x16xf32, #tpu.memory_space<vmem>>, vector<18x16xf32>,
    %c360 = arith.constant 360 : index
    %c0_51 = arith.constant 0 : index
    %88 = vector.load %arg1[%c360, %c0_51] : memref<648x2xf32, #tpu.memory_space<vmem>>, vector<18x2xf32>
    %c378 = arith.constant 378 : index
    %c0_52 = arith.constant 0 : index
    %89 = vector.load %arg1[%c378, %c0_52] : memref<648x2xf32, #tpu.memory_space<vmem>>, vector<18x2xf32>
    %90 = arith.maximumf %88, %89 : vector<18x2xf32>
    %cst_53 = arith.constant dense<0xFF800000> : vector<18xf32>
    %91 = vector.multi_reduction <maximumf>, %90, %cst_53 [1] : vector<18x2xf32> to vector<18xf32>
    %92 = vector.shape_cast %91 : vector<18xf32> to vector<18x1xf32>
    %93 = vector.shape_cast %92 : vector<18x1xf32> to vector<18x1xf32>
    %94 = vector.broadcast %93 : vector<18x1xf32> to vector<18x16xf32>
    %c253 = arith.constant 253 : index
    %c0_54 = arith.constant 0 : index
    %95 = vector.load %arg18[%c253, %c0_54] : memref<432x16xf32, #tpu.memory_space<vmem>>, vector<18x16xf32>
    tpu.vector_store %arg18[%c253, %c0_54], %94 {strides = array<i32>} : memref<432x16xf32, #tpu.memory_space<vmem>>, vector<18x16xf32>,
    %c396 = arith.constant 396 : index
    %c0_55 = arith.constant 0 : index
    %96 = vector.load %arg1[%c396, %c0_55] : memref<648x2xf32, #tpu.memory_space<vmem>>, vector<18x2xf32>
    %c414 = arith.constant 414 : index
    %c0_56 = arith.constant 0 : index
    %97 = vector.load %arg1[%c414, %c0_56] : memref<648x2xf32, #tpu.memory_space<vmem>>, vector<18x2xf32>
    %98 = arith.maximumf %96, %97 : vector<18x2xf32>
    %cst_57 = arith.constant dense<0xFF800000> : vector<18xf32>
    %99 = vector.multi_reduction <maximumf>, %98, %cst_57 [1] : vector<18x2xf32> to vector<18xf32>
    %100 = vector.shape_cast %99 : vector<18xf32> to vector<18x1xf32>
    %101 = vector.shape_cast %100 : vector<18x1xf32> to vector<18x1xf32>
    %102 = vector.broadcast %101 : vector<18x1xf32> to vector<18x16xf32>
    %c273 = arith.constant 273 : index
    %c0_58 = arith.constant 0 : index
    %103 = vector.load %arg18[%c273, %c0_58] : memref<432x16xf32, #tpu.memory_space<vmem>>, vector<18x16xf32>
    tpu.vector_store %arg18[%c273, %c0_58], %102 {strides = array<i32>} : memref<432x16xf32, #tpu.memory_space<vmem>>, vector<18x16xf32>,
    %c432 = arith.constant 432 : index
    %c0_59 = arith.constant 0 : index
    %104 = vector.load %arg1[%c432, %c0_59] : memref<648x2xf32, #tpu.memory_space<vmem>>, vector<18x2xf32>
    %c450 = arith.constant 450 : index
    %c0_60 = arith.constant 0 : index
    %105 = vector.load %arg1[%c450, %c0_60] : memref<648x2xf32, #tpu.memory_space<vmem>>, vector<18x2xf32>
    %106 = arith.maximumf %104, %105 : vector<18x2xf32>
    %cst_61 = arith.constant dense<0xFF800000> : vector<18xf32>
    %107 = vector.multi_reduction <maximumf>, %106, %cst_61 [1] : vector<18x2xf32> to vector<18xf32>
    %108 = vector.shape_cast %107 : vector<18xf32> to vector<18x1xf32>
    %109 = vector.shape_cast %108 : vector<18x1xf32> to vector<18x1xf32>
    %110 = vector.broadcast %109 : vector<18x1xf32> to vector<18x16xf32>
    %c293 = arith.constant 293 : index
    %c0_62 = arith.constant 0 : index
    %111 = vector.load %arg18[%c293, %c0_62] : memref<432x16xf32, #tpu.memory_space<vmem>>, vector<18x16xf32>
    tpu.vector_store %arg18[%c293, %c0_62], %110 {strides = array<i32>} : memref<432x16xf32, #tpu.memory_space<vmem>>, vector<18x16xf32>,
    %c468 = arith.constant 468 : index
    %c0_63 = arith.constant 0 : index
    %112 = vector.load %arg1[%c468, %c0_63] : memref<648x2xf32, #tpu.memory_space<vmem>>, vector<18x2xf32>
    %c486 = arith.constant 486 : index
    %c0_64 = arith.constant 0 : index
    %113 = vector.load %arg1[%c486, %c0_64] : memref<648x2xf32, #tpu.memory_space<vmem>>, vector<18x2xf32>
    %114 = arith.maximumf %112, %113 : vector<18x2xf32>
    %cst_65 = arith.constant dense<0xFF800000> : vector<18xf32>
    %115 = vector.multi_reduction <maximumf>, %114, %cst_65 [1] : vector<18x2xf32> to vector<18xf32>
    %116 = vector.shape_cast %115 : vector<18xf32> to vector<18x1xf32>
    %117 = vector.shape_cast %116 : vector<18x1xf32> to vector<18x1xf32>
    %118 = vector.broadcast %117 : vector<18x1xf32> to vector<18x16xf32>
    %c313 = arith.constant 313 : index
    %c0_66 = arith.constant 0 : index
    %119 = vector.load %arg18[%c313, %c0_66] : memref<432x16xf32, #tpu.memory_space<vmem>>, vector<18x16xf32>
    tpu.vector_store %arg18[%c313, %c0_66], %118 {strides = array<i32>} : memref<432x16xf32, #tpu.memory_space<vmem>>, vector<18x16xf32>,
    %c504 = arith.constant 504 : index
    %c0_67 = arith.constant 0 : index
    %120 = vector.load %arg1[%c504, %c0_67] : memref<648x2xf32, #tpu.memory_space<vmem>>, vector<18x2xf32>
    %c522 = arith.constant 522 : index
    %c0_68 = arith.constant 0 : index
    %121 = vector.load %arg1[%c522, %c0_68] : memref<648x2xf32, #tpu.memory_space<vmem>>, vector<18x2xf32>
    %122 = arith.maximumf %120, %121 : vector<18x2xf32>
    %cst_69 = arith.constant dense<0xFF800000> : vector<18xf32>
    %123 = vector.multi_reduction <maximumf>, %122, %cst_69 [1] : vector<18x2xf32> to vector<18xf32>
    %124 = vector.shape_cast %123 : vector<18xf32> to vector<18x1xf32>
    %125 = vector.shape_cast %124 : vector<18x1xf32> to vector<18x1xf32>
    %126 = vector.broadcast %125 : vector<18x1xf32> to vector<18x16xf32>
    %c333 = arith.constant 333 : index
    %c0_70 = arith.constant 0 : index
    %127 = vector.load %arg18[%c333, %c0_70] : memref<432x16xf32, #tpu.memory_space<vmem>>, vector<18x16xf32>
    tpu.vector_store %arg18[%c333, %c0_70], %126 {strides = array<i32>} : memref<432x16xf32, #tpu.memory_space<vmem>>, vector<18x16xf32>,
    %c540 = arith.constant 540 : index
    %c0_71 = arith.constant 0 : index
    %128 = vector.load %arg1[%c540, %c0_71] : memref<648x2xf32, #tpu.memory_space<vmem>>, vector<18x2xf32>
    %c558 = arith.constant 558 : index
    %c0_72 = arith.constant 0 : index
    %129 = vector.load %arg1[%c558, %c0_72] : memref<648x2xf32, #tpu.memory_space<vmem>>, vector<18x2xf32>
    %130 = arith.maximumf %128, %129 : vector<18x2xf32>
    %cst_73 = arith.constant dense<0xFF800000> : vector<18xf32>
    %131 = vector.multi_reduction <maximumf>, %130, %cst_73 [1] : vector<18x2xf32> to vector<18xf32>
    %132 = vector.shape_cast %131 : vector<18xf32> to vector<18x1xf32>
    %133 = vector.shape_cast %132 : vector<18x1xf32> to vector<18x1xf32>
    %134 = vector.broadcast %133 : vector<18x1xf32> to vector<18x16xf32>
    %c353 = arith.constant 353 : index
    %c0_74 = arith.constant 0 : index
    %135 = vector.load %arg18[%c353, %c0_74] : memref<432x16xf32, #tpu.memory_space<vmem>>, vector<18x16xf32>
    tpu.vector_store %arg18[%c353, %c0_74], %134 {strides = array<i32>} : memref<432x16xf32, #tpu.memory_space<vmem>>, vector<18x16xf32>,
    %c576 = arith.constant 576 : index
    %c0_75 = arith.constant 0 : index
    %136 = vector.load %arg1[%c576, %c0_75] : memref<648x2xf32, #tpu.memory_space<vmem>>, vector<18x2xf32>
    %c594 = arith.constant 594 : index
    %c0_76 = arith.constant 0 : index
    %137 = vector.load %arg1[%c594, %c0_76] : memref<648x2xf32, #tpu.memory_space<vmem>>, vector<18x2xf32>
    %138 = arith.maximumf %136, %137 : vector<18x2xf32>
    %cst_77 = arith.constant dense<0xFF800000> : vector<18xf32>
    %139 = vector.multi_reduction <maximumf>, %138, %cst_77 [1] : vector<18x2xf32> to vector<18xf32>
    %140 = vector.shape_cast %139 : vector<18xf32> to vector<18x1xf32>
    %141 = vector.shape_cast %140 : vector<18x1xf32> to vector<18x1xf32>
    %142 = vector.broadcast %141 : vector<18x1xf32> to vector<18x16xf32>
    %c373 = arith.constant 373 : index
    %c0_78 = arith.constant 0 : index
    %143 = vector.load %arg18[%c373, %c0_78] : memref<432x16xf32, #tpu.memory_space<vmem>>, vector<18x16xf32>
    tpu.vector_store %arg18[%c373, %c0_78], %142 {strides = array<i32>} : memref<432x16xf32, #tpu.memory_space<vmem>>, vector<18x16xf32>,
    %c612 = arith.constant 612 : index
    %c0_79 = arith.constant 0 : index
    %144 = vector.load %arg1[%c612, %c0_79] : memref<648x2xf32, #tpu.memory_space<vmem>>, vector<18x2xf32>
    %c630 = arith.constant 630 : index
    %c0_80 = arith.constant 0 : index
    %145 = vector.load %arg1[%c630, %c0_80] : memref<648x2xf32, #tpu.memory_space<vmem>>, vector<18x2xf32>
    %146 = arith.maximumf %144, %145 : vector<18x2xf32>
    %cst_81 = arith.constant dense<0xFF800000> : vector<18xf32>
    %147 = vector.multi_reduction <maximumf>, %146, %cst_81 [1] : vector<18x2xf32> to vector<18xf32>
    %148 = vector.shape_cast %147 : vector<18xf32> to vector<18x1xf32>
    %149 = vector.shape_cast %148 : vector<18x1xf32> to vector<18x1xf32>
    %150 = vector.broadcast %149 : vector<18x1xf32> to vector<18x16xf32>
    %c393 = arith.constant 393 : index
    %c0_82 = arith.constant 0 : index
    %151 = vector.load %arg18[%c393, %c0_82] : memref<432x16xf32, #tpu.memory_space<vmem>>, vector<18x16xf32>
    tpu.vector_store %arg18[%c393, %c0_82], %150 {strides = array<i32>} : memref<432x16xf32, #tpu.memory_space<vmem>>, vector<18x16xf32>,
    %c32 = arith.constant 32 : index
    %c0_83 = arith.constant 0 : index
    %152 = vector.load %arg18[%c32, %c0_83] : memref<432x16xf32, #tpu.memory_space<vmem>>, vector<400x16xf32>
    %153 = arith.truncf %152 : vector<400x16xf32> to vector<400x16xbf16>
    %c0_84 = arith.constant 0 : index
    %c0_85 = arith.constant 0 : index
    %c0_86 = arith.constant 0 : index
    %154 = vector.load %arg2[%c0_84, %c0_85, %c0_86] : memref<9x16x128xbf16, #tpu.memory_space<vmem>>, vector<1x16x128xbf16>
    %155 = vector.shape_cast %154 : vector<1x16x128xbf16> to vector<16x128xbf16>
    %cst_87 = arith.constant dense<0.000000e+00> : vector<400x128xf32>
    %156 = tpu.matmul %153, %155, %cst_87 {dimension_numbers = #tpu.dot_dimension_numbers<[1], [0], [0], [1], [0, 0, 1, 1], [], []>} : vector<400x16xbf16>, vector<16x128xbf16>, vector<400x128xf32> -> vector<400x128xf32>
    %c53_88 = arith.constant 53 : index
    %c0_89 = arith.constant 0 : index
    %157 = vector.load %arg19[%c53_88, %c0_89] : memref<464x128xf32, #tpu.memory_space<vmem>>, vector<400x128xf32>
    %158 = arith.addf %157, %156 : vector<400x128xf32>
    %c53_90 = arith.constant 53 : index
    %c0_91 = arith.constant 0 : index
    %159 = vector.load %arg19[%c53_90, %c0_91] : memref<464x128xf32, #tpu.memory_space<vmem>>, vector<400x128xf32>
    tpu.vector_store %arg19[%c53_90, %c0_91], %158 {strides = array<i32>} : memref<464x128xf32, #tpu.memory_space<vmem>>, vector<400x128xf32>,
    %c1 = arith.constant 1 : index
    %c0_92 = arith.constant 0 : index
    %c0_93 = arith.constant 0 : index
    %160 = vector.load %arg2[%c1, %c0_92, %c0_93] : memref<9x16x128xbf16, #tpu.memory_space<vmem>>, vector<1x16x128xbf16>
    %161 = vector.shape_cast %160 : vector<1x16x128xbf16> to vector<16x128xbf16>
    %cst_94 = arith.constant dense<0.000000e+00> : vector<400x128xf32>
    %162 = tpu.matmul %153, %161, %cst_94 {dimension_numbers = #tpu.dot_dimension_numbers<[1], [0], [0], [1], [0, 0, 1, 1], [], []>} : vector<400x16xbf16>, vector<16x128xbf16>, vector<400x128xf32> -> vector<400x128xf32>
    %c52 = arith.constant 52 : index
    %c0_95 = arith.constant 0 : index
    %163 = vector.load %arg19[%c52, %c0_95] : memref<464x128xf32, #tpu.memory_space<vmem>>, vector<400x128xf32>
    %164 = arith.addf %163, %162 : vector<400x128xf32>
    %c52_96 = arith.constant 52 : index
    %c0_97 = arith.constant 0 : index
    %165 = vector.load %arg19[%c52_96, %c0_97] : memref<464x128xf32, #tpu.memory_space<vmem>>, vector<400x128xf32>
    tpu.vector_store %arg19[%c52_96, %c0_97], %164 {strides = array<i32>} : memref<464x128xf32, #tpu.memory_space<vmem>>, vector<400x128xf32>,
    %c2 = arith.constant 2 : index
    %c0_98 = arith.constant 0 : index
    %c0_99 = arith.constant 0 : index
    %166 = vector.load %arg2[%c2, %c0_98, %c0_99] : memref<9x16x128xbf16, #tpu.memory_space<vmem>>, vector<1x16x128xbf16>
    %167 = vector.shape_cast %166 : vector<1x16x128xbf16> to vector<16x128xbf16>
    %cst_100 = arith.constant dense<0.000000e+00> : vector<400x128xf32>
    %168 = tpu.matmul %153, %167, %cst_100 {dimension_numbers = #tpu.dot_dimension_numbers<[1], [0], [0], [1], [0, 0, 1, 1], [], []>} : vector<400x16xbf16>, vector<16x128xbf16>, vector<400x128xf32> -> vector<400x128xf32>
    %c51 = arith.constant 51 : index
    %c0_101 = arith.constant 0 : index
    %169 = vector.load %arg19[%c51, %c0_101] : memref<464x128xf32, #tpu.memory_space<vmem>>, vector<400x128xf32>
    %170 = arith.addf %169, %168 : vector<400x128xf32>
    %c51_102 = arith.constant 51 : index
    %c0_103 = arith.constant 0 : index
    %171 = vector.load %arg19[%c51_102, %c0_103] : memref<464x128xf32, #tpu.memory_space<vmem>>, vector<400x128xf32>
    tpu.vector_store %arg19[%c51_102, %c0_103], %170 {strides = array<i32>} : memref<464x128xf32, #tpu.memory_space<vmem>>, vector<400x128xf32>,
    %c3 = arith.constant 3 : index
    %c0_104 = arith.constant 0 : index
    %c0_105 = arith.constant 0 : index
    %172 = vector.load %arg2[%c3, %c0_104, %c0_105] : memref<9x16x128xbf16, #tpu.memory_space<vmem>>, vector<1x16x128xbf16>
    %173 = vector.shape_cast %172 : vector<1x16x128xbf16> to vector<16x128xbf16>
    %cst_106 = arith.constant dense<0.000000e+00> : vector<400x128xf32>
    %174 = tpu.matmul %153, %173, %cst_106 {dimension_numbers = #tpu.dot_dimension_numbers<[1], [0], [0], [1], [0, 0, 1, 1], [], []>} : vector<400x16xbf16>, vector<16x128xbf16>, vector<400x128xf32> -> vector<400x128xf32>
    %c33 = arith.constant 33 : index
    %c0_107 = arith.constant 0 : index
    %175 = vector.load %arg19[%c33, %c0_107] : memref<464x128xf32, #tpu.memory_space<vmem>>, vector<400x128xf32>
    %176 = arith.addf %175, %174 : vector<400x128xf32>
    %c33_108 = arith.constant 33 : index
    %c0_109 = arith.constant 0 : index
    %177 = vector.load %arg19[%c33_108, %c0_109] : memref<464x128xf32, #tpu.memory_space<vmem>>, vector<400x128xf32>
    tpu.vector_store %arg19[%c33_108, %c0_109], %176 {strides = array<i32>} : memref<464x128xf32, #tpu.memory_space<vmem>>, vector<400x128xf32>,
    %c4 = arith.constant 4 : index
    %c0_110 = arith.constant 0 : index
    %c0_111 = arith.constant 0 : index
    %178 = vector.load %arg2[%c4, %c0_110, %c0_111] : memref<9x16x128xbf16, #tpu.memory_space<vmem>>, vector<1x16x128xbf16>
    %179 = vector.shape_cast %178 : vector<1x16x128xbf16> to vector<16x128xbf16>
    %cst_112 = arith.constant dense<0.000000e+00> : vector<400x128xf32>
    %180 = tpu.matmul %153, %179, %cst_112 {dimension_numbers = #tpu.dot_dimension_numbers<[1], [0], [0], [1], [0, 0, 1, 1], [], []>} : vector<400x16xbf16>, vector<16x128xbf16>, vector<400x128xf32> -> vector<400x128xf32>
    %c32_113 = arith.constant 32 : index
    %c0_114 = arith.constant 0 : index
    %181 = vector.load %arg19[%c32_113, %c0_114] : memref<464x128xf32, #tpu.memory_space<vmem>>, vector<400x128xf32>
    %182 = arith.addf %181, %180 : vector<400x128xf32>
    %c32_115 = arith.constant 32 : index
    %c0_116 = arith.constant 0 : index
    %183 = vector.load %arg19[%c32_115, %c0_116] : memref<464x128xf32, #tpu.memory_space<vmem>>, vector<400x128xf32>
    tpu.vector_store %arg19[%c32_115, %c0_116], %182 {strides = array<i32>} : memref<464x128xf32, #tpu.memory_space<vmem>>, vector<400x128xf32>,
    %c5 = arith.constant 5 : index
    %c0_117 = arith.constant 0 : index
    %c0_118 = arith.constant 0 : index
    %184 = vector.load %arg2[%c5, %c0_117, %c0_118] : memref<9x16x128xbf16, #tpu.memory_space<vmem>>, vector<1x16x128xbf16>
    %185 = vector.shape_cast %184 : vector<1x16x128xbf16> to vector<16x128xbf16>
    %cst_119 = arith.constant dense<0.000000e+00> : vector<400x128xf32>
    %186 = tpu.matmul %153, %185, %cst_119 {dimension_numbers = #tpu.dot_dimension_numbers<[1], [0], [0], [1], [0, 0, 1, 1], [], []>} : vector<400x16xbf16>, vector<16x128xbf16>, vector<400x128xf32> -> vector<400x128xf32>
    %c31 = arith.constant 31 : index
    %c0_120 = arith.constant 0 : index
    %187 = vector.load %arg19[%c31, %c0_120] : memref<464x128xf32, #tpu.memory_space<vmem>>, vector<400x128xf32>
    %188 = arith.addf %187, %186 : vector<400x128xf32>
    %c31_121 = arith.constant 31 : index
    %c0_122 = arith.constant 0 : index
    %189 = vector.load %arg19[%c31_121, %c0_122] : memref<464x128xf32, #tpu.memory_space<vmem>>, vector<400x128xf32>
    tpu.vector_store %arg19[%c31_121, %c0_122], %188 {strides = array<i32>} : memref<464x128xf32, #tpu.memory_space<vmem>>, vector<400x128xf32>,
    %c6 = arith.constant 6 : index
    %c0_123 = arith.constant 0 : index
    %c0_124 = arith.constant 0 : index
    %190 = vector.load %arg2[%c6, %c0_123, %c0_124] : memref<9x16x128xbf16, #tpu.memory_space<vmem>>, vector<1x16x128xbf16>
    %191 = vector.shape_cast %190 : vector<1x16x128xbf16> to vector<16x128xbf16>
    %cst_125 = arith.constant dense<0.000000e+00> : vector<400x128xf32>
    %192 = tpu.matmul %153, %191, %cst_125 {dimension_numbers = #tpu.dot_dimension_numbers<[1], [0], [0], [1], [0, 0, 1, 1], [], []>} : vector<400x16xbf16>, vector<16x128xbf16>, vector<400x128xf32> -> vector<400x128xf32>
    %c13 = arith.constant 13 : index
    %c0_126 = arith.constant 0 : index
    %193 = vector.load %arg19[%c13, %c0_126] : memref<464x128xf32, #tpu.memory_space<vmem>>, vector<400x128xf32>
    %194 = arith.addf %193, %192 : vector<400x128xf32>
    %c13_127 = arith.constant 13 : index
    %c0_128 = arith.constant 0 : index
    %195 = vector.load %arg19[%c13_127, %c0_128] : memref<464x128xf32, #tpu.memory_space<vmem>>, vector<400x128xf32>
    tpu.vector_store %arg19[%c13_127, %c0_128], %194 {strides = array<i32>} : memref<464x128xf32, #tpu.memory_space<vmem>>, vector<400x128xf32>,
    %c7 = arith.constant 7 : index
    %c0_129 = arith.constant 0 : index
    %c0_130 = arith.constant 0 : index
    %196 = vector.load %arg2[%c7, %c0_129, %c0_130] : memref<9x16x128xbf16, #tpu.memory_space<vmem>>, vector<1x16x128xbf16>
    %197 = vector.shape_cast %196 : vector<1x16x128xbf16> to vector<16x128xbf16>
    %cst_131 = arith.constant dense<0.000000e+00> : vector<400x128xf32>
    %198 = tpu.matmul %153, %197, %cst_131 {dimension_numbers = #tpu.dot_dimension_numbers<[1], [0], [0], [1], [0, 0, 1, 1], [], []>} : vector<400x16xbf16>, vector<16x128xbf16>, vector<400x128xf32> -> vector<400x128xf32>
    %c12 = arith.constant 12 : index
    %c0_132 = arith.constant 0 : index
    %199 = vector.load %arg19[%c12, %c0_132] : memref<464x128xf32, #tpu.memory_space<vmem>>, vector<400x128xf32>
    %200 = arith.addf %199, %198 : vector<400x128xf32>
    %c12_133 = arith.constant 12 : index
    %c0_134 = arith.constant 0 : index
    %201 = vector.load %arg19[%c12_133, %c0_134] : memref<464x128xf32, #tpu.memory_space<vmem>>, vector<400x128xf32>
    tpu.vector_store %arg19[%c12_133, %c0_134], %200 {strides = array<i32>} : memref<464x128xf32, #tpu.memory_space<vmem>>, vector<400x128xf32>,
    %c8 = arith.constant 8 : index
    %c0_135 = arith.constant 0 : index
    %c0_136 = arith.constant 0 : index
    %202 = vector.load %arg2[%c8, %c0_135, %c0_136] : memref<9x16x128xbf16, #tpu.memory_space<vmem>>, vector<1x16x128xbf16>
    %203 = vector.shape_cast %202 : vector<1x16x128xbf16> to vector<16x128xbf16>
    %cst_137 = arith.constant dense<0.000000e+00> : vector<400x128xf32>
    %204 = tpu.matmul %153, %203, %cst_137 {dimension_numbers = #tpu.dot_dimension_numbers<[1], [0], [0], [1], [0, 0, 1, 1], [], []>} : vector<400x16xbf16>, vector<16x128xbf16>, vector<400x128xf32> -> vector<400x128xf32>
    %c11 = arith.constant 11 : index
    %c0_138 = arith.constant 0 : index
    %205 = vector.load %arg19[%c11, %c0_138] : memref<464x128xf32, #tpu.memory_space<vmem>>, vector<400x128xf32>
    %206 = arith.addf %205, %204 : vector<400x128xf32>
    %c11_139 = arith.constant 11 : index
    %c0_140 = arith.constant 0 : index
    %207 = vector.load %arg19[%c11_139, %c0_140] : memref<464x128xf32, #tpu.memory_space<vmem>>, vector<400x128xf32>
    tpu.vector_store %arg19[%c11_139, %c0_140], %206 {strides = array<i32>} : memref<464x128xf32, #tpu.memory_space<vmem>>, vector<400x128xf32>,
    %c32_141 = arith.constant 32 : index
    %c0_142 = arith.constant 0 : index
    %208 = vector.load %arg19[%c32_141, %c0_142] : memref<464x128xf32, #tpu.memory_space<vmem>>, vector<400x128xf32>
    %cst_143 = arith.constant 0.000000e+00 : f32
    %209 = vector.broadcast %cst_143 : f32 to vector<400x128xf32>
    %210 = arith.maximumf %208, %209 : vector<400x128xf32>
    %c0_144 = arith.constant 0 : index
    %c0_145 = arith.constant 0 : index
    %211 = vector.load %arg3[%c0_144, %c0_145] : memref<1x128xf32, #tpu.memory_space<vmem>>, vector<1x128xf32>
    %212 = vector.broadcast %211 : vector<1x128xf32> to vector<400x128xf32>
    %213 = arith.mulf %210, %212 : vector<400x128xf32>
    %c0_146 = arith.constant 0 : index
    %c0_147 = arith.constant 0 : index
    %214 = vector.load %arg4[%c0_146, %c0_147] : memref<1x128xf32, #tpu.memory_space<vmem>>, vector<1x128xf32>
    %215 = vector.broadcast %214 : vector<1x128xf32> to vector<400x128xf32>
    %216 = arith.addf %213, %215 : vector<400x128xf32>
    %c32_148 = arith.constant 32 : index
    %c0_149 = arith.constant 0 : index
    %217 = vector.load %arg19[%c32_148, %c0_149] : memref<464x128xf32, #tpu.memory_space<vmem>>, vector<400x128xf32>
    tpu.vector_store %arg19[%c32_148, %c0_149], %216 {strides = array<i32>} : memref<464x128xf32, #tpu.memory_space<vmem>>, vector<400x128xf32>,
    %c32_150 = arith.constant 32 : index
    %c0_151 = arith.constant 0 : index
    %218 = vector.load %arg19[%c32_150, %c0_151] : memref<464x128xf32, #tpu.memory_space<vmem>>, vector<400x128xf32>
    %c33_152 = arith.constant 33 : index
    %c0_153 = arith.constant 0 : index
    %219 = vector.load %arg19[%c33_152, %c0_153] : memref<464x128xf32, #tpu.memory_space<vmem>>, vector<400x128xf32>
    %220 = arith.maximumf %218, %219 : vector<400x128xf32>
    %c52_154 = arith.constant 52 : index
    %c0_155 = arith.constant 0 : index
    %221 = vector.load %arg19[%c52_154, %c0_155] : memref<464x128xf32, #tpu.memory_space<vmem>>, vector<400x128xf32>
    %222 = arith.maximumf %220, %221 : vector<400x128xf32>
    %c53_156 = arith.constant 53 : index
    %c0_157 = arith.constant 0 : index
    %223 = vector.load %arg19[%c53_156, %c0_157] : memref<464x128xf32, #tpu.memory_space<vmem>>, vector<400x128xf32>
    %224 = arith.maximumf %222, %223 : vector<400x128xf32>
    %c0_158 = arith.constant 0 : index
    %c0_159 = arith.constant 0 : index
    %225 = vector.load %arg5[%c0_158, %c0_159] : memref<121x400xf32, #tpu.memory_space<vmem>>, vector<121x400xf32>
    %cst_160 = arith.constant dense<0.000000e+00> : vector<121x128xf32>
    %226 = tpu.matmul %225, %224, %cst_160 {dimension_numbers = #tpu.dot_dimension_numbers<[1], [0], [0], [1], [0, 0, 1, 1], [], []>} : vector<121x400xf32>, vector<400x128xf32>, vector<121x128xf32> -> vector<121x128xf32>
    %227 = vector.extract_strided_slice %226 {offsets = [0, 0], sizes = [121, 64], strides = [1, 1]} : vector<121x128xf32> to vector<121x64xf32>
    %228 = arith.truncf %227 : vector<121x64xf32> to vector<121x64xbf16>
    %c0_161 = arith.constant 0 : index
    %c0_162 = arith.constant 0 : index
    %c0_163 = arith.constant 0 : index
    %229 = vector.load %arg6[%c0_161, %c0_162, %c0_163] : memref<9x64x128xbf16, #tpu.memory_space<vmem>>, vector<1x64x128xbf16>
    %230 = vector.shape_cast %229 : vector<1x64x128xbf16> to vector<64x128xbf16>
    %cst_164 = arith.constant dense<0.000000e+00> : vector<121x128xf32>
    %231 = tpu.matmul %228, %230, %cst_164 {dimension_numbers = #tpu.dot_dimension_numbers<[1], [0], [0], [1], [0, 0, 1, 1], [], []>} : vector<121x64xbf16>, vector<64x128xbf16>, vector<121x128xf32> -> vector<121x128xf32>
    %c44 = arith.constant 44 : index
    %c0_165 = arith.constant 0 : index
    %232 = vector.load %arg20[%c44, %c0_165] : memref<192x128xf32, #tpu.memory_space<vmem>>, vector<121x128xf32>
    %233 = arith.addf %232, %231 : vector<121x128xf32>
    %c44_166 = arith.constant 44 : index
    %c0_167 = arith.constant 0 : index
    %234 = vector.load %arg20[%c44_166, %c0_167] : memref<192x128xf32, #tpu.memory_space<vmem>>, vector<121x128xf32>
    tpu.vector_store %arg20[%c44_166, %c0_167], %233 {strides = array<i32>} : memref<192x128xf32, #tpu.memory_space<vmem>>, vector<121x128xf32>,
    %c1_168 = arith.constant 1 : index
    %c0_169 = arith.constant 0 : index
    %c0_170 = arith.constant 0 : index
    %235 = vector.load %arg6[%c1_168, %c0_169, %c0_170] : memref<9x64x128xbf16, #tpu.memory_space<vmem>>, vector<1x64x128xbf16>
    %236 = vector.shape_cast %235 : vector<1x64x128xbf16> to vector<64x128xbf16>
    %cst_171 = arith.constant dense<0.000000e+00> : vector<121x128xf32>
    %237 = tpu.matmul %228, %236, %cst_171 {dimension_numbers = #tpu.dot_dimension_numbers<[1], [0], [0], [1], [0, 0, 1, 1], [], []>} : vector<121x64xbf16>, vector<64x128xbf16>, vector<121x128xf32> -> vector<121x128xf32>
    %c43 = arith.constant 43 : index
    %c0_172 = arith.constant 0 : index
    %238 = vector.load %arg20[%c43, %c0_172] : memref<192x128xf32, #tpu.memory_space<vmem>>, vector<121x128xf32>
    %239 = arith.addf %238, %237 : vector<121x128xf32>
    %c43_173 = arith.constant 43 : index
    %c0_174 = arith.constant 0 : index
    %240 = vector.load %arg20[%c43_173, %c0_174] : memref<192x128xf32, #tpu.memory_space<vmem>>, vector<121x128xf32>
    tpu.vector_store %arg20[%c43_173, %c0_174], %239 {strides = array<i32>} : memref<192x128xf32, #tpu.memory_space<vmem>>, vector<121x128xf32>,
    %c2_175 = arith.constant 2 : index
    %c0_176 = arith.constant 0 : index
    %c0_177 = arith.constant 0 : index
    %241 = vector.load %arg6[%c2_175, %c0_176, %c0_177] : memref<9x64x128xbf16, #tpu.memory_space<vmem>>, vector<1x64x128xbf16>
    %242 = vector.shape_cast %241 : vector<1x64x128xbf16> to vector<64x128xbf16>
    %cst_178 = arith.constant dense<0.000000e+00> : vector<121x128xf32>
    %243 = tpu.matmul %228, %242, %cst_178 {dimension_numbers = #tpu.dot_dimension_numbers<[1], [0], [0], [1], [0, 0, 1, 1], [], []>} : vector<121x64xbf16>, vector<64x128xbf16>, vector<121x128xf32> -> vector<121x128xf32>
    %c42 = arith.constant 42 : index
    %c0_179 = arith.constant 0 : index
    %244 = vector.load %arg20[%c42, %c0_179] : memref<192x128xf32, #tpu.memory_space<vmem>>, vector<121x128xf32>
    %245 = arith.addf %244, %243 : vector<121x128xf32>
    %c42_180 = arith.constant 42 : index
    %c0_181 = arith.constant 0 : index
    %246 = vector.load %arg20[%c42_180, %c0_181] : memref<192x128xf32, #tpu.memory_space<vmem>>, vector<121x128xf32>
    tpu.vector_store %arg20[%c42_180, %c0_181], %245 {strides = array<i32>} : memref<192x128xf32, #tpu.memory_space<vmem>>, vector<121x128xf32>,
    %c3_182 = arith.constant 3 : index
    %c0_183 = arith.constant 0 : index
    %c0_184 = arith.constant 0 : index
    %247 = vector.load %arg6[%c3_182, %c0_183, %c0_184] : memref<9x64x128xbf16, #tpu.memory_space<vmem>>, vector<1x64x128xbf16>
    %248 = vector.shape_cast %247 : vector<1x64x128xbf16> to vector<64x128xbf16>
    %cst_185 = arith.constant dense<0.000000e+00> : vector<121x128xf32>
    %249 = tpu.matmul %228, %248, %cst_185 {dimension_numbers = #tpu.dot_dimension_numbers<[1], [0], [0], [1], [0, 0, 1, 1], [], []>} : vector<121x64xbf16>, vector<64x128xbf16>, vector<121x128xf32> -> vector<121x128xf32>
    %c33_186 = arith.constant 33 : index
    %c0_187 = arith.constant 0 : index
    %250 = vector.load %arg20[%c33_186, %c0_187] : memref<192x128xf32, #tpu.memory_space<vmem>>, vector<121x128xf32>
    %251 = arith.addf %250, %249 : vector<121x128xf32>
    %c33_188 = arith.constant 33 : index
    %c0_189 = arith.constant 0 : index
    %252 = vector.load %arg20[%c33_188, %c0_189] : memref<192x128xf32, #tpu.memory_space<vmem>>, vector<121x128xf32>
    tpu.vector_store %arg20[%c33_188, %c0_189], %251 {strides = array<i32>} : memref<192x128xf32, #tpu.memory_space<vmem>>, vector<121x128xf32>,
    %c4_190 = arith.constant 4 : index
    %c0_191 = arith.constant 0 : index
    %c0_192 = arith.constant 0 : index
    %253 = vector.load %arg6[%c4_190, %c0_191, %c0_192] : memref<9x64x128xbf16, #tpu.memory_space<vmem>>, vector<1x64x128xbf16>
    %254 = vector.shape_cast %253 : vector<1x64x128xbf16> to vector<64x128xbf16>
    %cst_193 = arith.constant dense<0.000000e+00> : vector<121x128xf32>
    %255 = tpu.matmul %228, %254, %cst_193 {dimension_numbers = #tpu.dot_dimension_numbers<[1], [0], [0], [1], [0, 0, 1, 1], [], []>} : vector<121x64xbf16>, vector<64x128xbf16>, vector<121x128xf32> -> vector<121x128xf32>
    %c32_194 = arith.constant 32 : index
    %c0_195 = arith.constant 0 : index
    %256 = vector.load %arg20[%c32_194, %c0_195] : memref<192x128xf32, #tpu.memory_space<vmem>>, vector<121x128xf32>
    %257 = arith.addf %256, %255 : vector<121x128xf32>
    %c32_196 = arith.constant 32 : index
    %c0_197 = arith.constant 0 : index
    %258 = vector.load %arg20[%c32_196, %c0_197] : memref<192x128xf32, #tpu.memory_space<vmem>>, vector<121x128xf32>
    tpu.vector_store %arg20[%c32_196, %c0_197], %257 {strides = array<i32>} : memref<192x128xf32, #tpu.memory_space<vmem>>, vector<121x128xf32>,
    %c5_198 = arith.constant 5 : index
    %c0_199 = arith.constant 0 : index
    %c0_200 = arith.constant 0 : index
    %259 = vector.load %arg6[%c5_198, %c0_199, %c0_200] : memref<9x64x128xbf16, #tpu.memory_space<vmem>>, vector<1x64x128xbf16>
    %260 = vector.shape_cast %259 : vector<1x64x128xbf16> to vector<64x128xbf16>
    %cst_201 = arith.constant dense<0.000000e+00> : vector<121x128xf32>
    %261 = tpu.matmul %228, %260, %cst_201 {dimension_numbers = #tpu.dot_dimension_numbers<[1], [0], [0], [1], [0, 0, 1, 1], [], []>} : vector<121x64xbf16>, vector<64x128xbf16>, vector<121x128xf32> -> vector<121x128xf32>
    %c31_202 = arith.constant 31 : index
    %c0_203 = arith.constant 0 : index
    %262 = vector.load %arg20[%c31_202, %c0_203] : memref<192x128xf32, #tpu.memory_space<vmem>>, vector<121x128xf32>
    %263 = arith.addf %262, %261 : vector<121x128xf32>
    %c31_204 = arith.constant 31 : index
    %c0_205 = arith.constant 0 : index
    %264 = vector.load %arg20[%c31_204, %c0_205] : memref<192x128xf32, #tpu.memory_space<vmem>>, vector<121x128xf32>
    tpu.vector_store %arg20[%c31_204, %c0_205], %263 {strides = array<i32>} : memref<192x128xf32, #tpu.memory_space<vmem>>, vector<121x128xf32>,
    %c6_206 = arith.constant 6 : index
    %c0_207 = arith.constant 0 : index
    %c0_208 = arith.constant 0 : index
    %265 = vector.load %arg6[%c6_206, %c0_207, %c0_208] : memref<9x64x128xbf16, #tpu.memory_space<vmem>>, vector<1x64x128xbf16>
    %266 = vector.shape_cast %265 : vector<1x64x128xbf16> to vector<64x128xbf16>
    %cst_209 = arith.constant dense<0.000000e+00> : vector<121x128xf32>
    %267 = tpu.matmul %228, %266, %cst_209 {dimension_numbers = #tpu.dot_dimension_numbers<[1], [0], [0], [1], [0, 0, 1, 1], [], []>} : vector<121x64xbf16>, vector<64x128xbf16>, vector<121x128xf32> -> vector<121x128xf32>
    %c22 = arith.constant 22 : index
    %c0_210 = arith.constant 0 : index
    %268 = vector.load %arg20[%c22, %c0_210] : memref<192x128xf32, #tpu.memory_space<vmem>>, vector<121x128xf32>
    %269 = arith.addf %268, %267 : vector<121x128xf32>
    %c22_211 = arith.constant 22 : index
    %c0_212 = arith.constant 0 : index
    %270 = vector.load %arg20[%c22_211, %c0_212] : memref<192x128xf32, #tpu.memory_space<vmem>>, vector<121x128xf32>
    tpu.vector_store %arg20[%c22_211, %c0_212], %269 {strides = array<i32>} : memref<192x128xf32, #tpu.memory_space<vmem>>, vector<121x128xf32>,
    %c7_213 = arith.constant 7 : index
    %c0_214 = arith.constant 0 : index
    %c0_215 = arith.constant 0 : index
    %271 = vector.load %arg6[%c7_213, %c0_214, %c0_215] : memref<9x64x128xbf16, #tpu.memory_space<vmem>>, vector<1x64x128xbf16>
    %272 = vector.shape_cast %271 : vector<1x64x128xbf16> to vector<64x128xbf16>
    %cst_216 = arith.constant dense<0.000000e+00> : vector<121x128xf32>
    %273 = tpu.matmul %228, %272, %cst_216 {dimension_numbers = #tpu.dot_dimension_numbers<[1], [0], [0], [1], [0, 0, 1, 1], [], []>} : vector<121x64xbf16>, vector<64x128xbf16>, vector<121x128xf32> -> vector<121x128xf32>
    %c21 = arith.constant 21 : index
    %c0_217 = arith.constant 0 : index
    %274 = vector.load %arg20[%c21, %c0_217] : memref<192x128xf32, #tpu.memory_space<vmem>>, vector<121x128xf32>
    %275 = arith.addf %274, %273 : vector<121x128xf32>
    %c21_218 = arith.constant 21 : index
    %c0_219 = arith.constant 0 : index
    %276 = vector.load %arg20[%c21_218, %c0_219] : memref<192x128xf32, #tpu.memory_space<vmem>>, vector<121x128xf32>
    tpu.vector_store %arg20[%c21_218, %c0_219], %275 {strides = array<i32>} : memref<192x128xf32, #tpu.memory_space<vmem>>, vector<121x128xf32>,
    %c8_220 = arith.constant 8 : index
    %c0_221 = arith.constant 0 : index
    %c0_222 = arith.constant 0 : index
    %277 = vector.load %arg6[%c8_220, %c0_221, %c0_222] : memref<9x64x128xbf16, #tpu.memory_space<vmem>>, vector<1x64x128xbf16>
    %278 = vector.shape_cast %277 : vector<1x64x128xbf16> to vector<64x128xbf16>
    %cst_223 = arith.constant dense<0.000000e+00> : vector<121x128xf32>
    %279 = tpu.matmul %228, %278, %cst_223 {dimension_numbers = #tpu.dot_dimension_numbers<[1], [0], [0], [1], [0, 0, 1, 1], [], []>} : vector<121x64xbf16>, vector<64x128xbf16>, vector<121x128xf32> -> vector<121x128xf32>
    %c20 = arith.constant 20 : index
    %c0_224 = arith.constant 0 : index
    %280 = vector.load %arg20[%c20, %c0_224] : memref<192x128xf32, #tpu.memory_space<vmem>>, vector<121x128xf32>
    %281 = arith.addf %280, %279 : vector<121x128xf32>
    %c20_225 = arith.constant 20 : index
    %c0_226 = arith.constant 0 : index
    %282 = vector.load %arg20[%c20_225, %c0_226] : memref<192x128xf32, #tpu.memory_space<vmem>>, vector<121x128xf32>
    tpu.vector_store %arg20[%c20_225, %c0_226], %281 {strides = array<i32>} : memref<192x128xf32, #tpu.memory_space<vmem>>, vector<121x128xf32>,
    %c32_227 = arith.constant 32 : index
    %c0_228 = arith.constant 0 : index
    %283 = vector.load %arg20[%c32_227, %c0_228] : memref<192x128xf32, #tpu.memory_space<vmem>>, vector<121x128xf32>
    %cst_229 = arith.constant 0.000000e+00 : f32
    %284 = vector.broadcast %cst_229 : f32 to vector<121x128xf32>
    %285 = arith.maximumf %283, %284 : vector<121x128xf32>
    %c0_230 = arith.constant 0 : index
    %c0_231 = arith.constant 0 : index
    %286 = vector.load %arg7[%c0_230, %c0_231] : memref<1x128xf32, #tpu.memory_space<vmem>>, vector<1x128xf32>
    %287 = vector.broadcast %286 : vector<1x128xf32> to vector<121x128xf32>
    %288 = arith.mulf %285, %287 : vector<121x128xf32>
    %c0_232 = arith.constant 0 : index
    %c0_233 = arith.constant 0 : index
    %289 = vector.load %arg8[%c0_232, %c0_233] : memref<1x128xf32, #tpu.memory_space<vmem>>, vector<1x128xf32>
    %290 = vector.broadcast %289 : vector<1x128xf32> to vector<121x128xf32>
    %291 = arith.addf %288, %290 : vector<121x128xf32>
    %c32_234 = arith.constant 32 : index
    %c0_235 = arith.constant 0 : index
    %292 = vector.load %arg20[%c32_234, %c0_235] : memref<192x128xf32, #tpu.memory_space<vmem>>, vector<121x128xf32>
    tpu.vector_store %arg20[%c32_234, %c0_235], %291 {strides = array<i32>} : memref<192x128xf32, #tpu.memory_space<vmem>>, vector<121x128xf32>,
    %c32_236 = arith.constant 32 : index
    %c0_237 = arith.constant 0 : index
    %293 = vector.load %arg20[%c32_236, %c0_237] : memref<192x128xf32, #tpu.memory_space<vmem>>, vector<121x128xf32>
    %c33_238 = arith.constant 33 : index
    %c0_239 = arith.constant 0 : index
    %294 = vector.load %arg20[%c33_238, %c0_239] : memref<192x128xf32, #tpu.memory_space<vmem>>, vector<121x128xf32>
    %295 = arith.maximumf %293, %294 : vector<121x128xf32>
    %c34 = arith.constant 34 : index
    %c0_240 = arith.constant 0 : index
    %296 = vector.load %arg20[%c34, %c0_240] : memref<192x128xf32, #tpu.memory_space<vmem>>, vector<121x128xf32>
    %297 = arith.maximumf %295, %296 : vector<121x128xf32>
    %c43_241 = arith.constant 43 : index
    %c0_242 = arith.constant 0 : index
    %298 = vector.load %arg20[%c43_241, %c0_242] : memref<192x128xf32, #tpu.memory_space<vmem>>, vector<121x128xf32>
    %299 = arith.maximumf %297, %298 : vector<121x128xf32>
    %c44_243 = arith.constant 44 : index
    %c0_244 = arith.constant 0 : index
    %300 = vector.load %arg20[%c44_243, %c0_244] : memref<192x128xf32, #tpu.memory_space<vmem>>, vector<121x128xf32>
    %301 = arith.maximumf %299, %300 : vector<121x128xf32>
    %c45 = arith.constant 45 : index
    %c0_245 = arith.constant 0 : index
    %302 = vector.load %arg20[%c45, %c0_245] : memref<192x128xf32, #tpu.memory_space<vmem>>, vector<121x128xf32>
    %303 = arith.maximumf %301, %302 : vector<121x128xf32>
    %c54_246 = arith.constant 54 : index
    %c0_247 = arith.constant 0 : index
    %304 = vector.load %arg20[%c54_246, %c0_247] : memref<192x128xf32, #tpu.memory_space<vmem>>, vector<121x128xf32>
    %305 = arith.maximumf %303, %304 : vector<121x128xf32>
    %c55 = arith.constant 55 : index
    %c0_248 = arith.constant 0 : index
    %306 = vector.load %arg20[%c55, %c0_248] : memref<192x128xf32, #tpu.memory_space<vmem>>, vector<121x128xf32>
    %307 = arith.maximumf %305, %306 : vector<121x128xf32>
    %c56 = arith.constant 56 : index
    %c0_249 = arith.constant 0 : index
    %308 = vector.load %arg20[%c56, %c0_249] : memref<192x128xf32, #tpu.memory_space<vmem>>, vector<121x128xf32>
    %309 = arith.maximumf %307, %308 : vector<121x128xf32>
    %c0_250 = arith.constant 0 : index
    %c0_251 = arith.constant 0 : index
    %310 = vector.load %arg9[%c0_250, %c0_251] : memref<25x121xf32, #tpu.memory_space<vmem>>, vector<25x121xf32>
    %cst_252 = arith.constant dense<0.000000e+00> : vector<25x128xf32>
    %311 = tpu.matmul %310, %309, %cst_252 {dimension_numbers = #tpu.dot_dimension_numbers<[1], [0], [0], [1], [0, 0, 1, 1], [], []>} : vector<25x121xf32>, vector<121x128xf32>, vector<25x128xf32> -> vector<25x128xf32>
    %312 = vector.extract_strided_slice %311 {offsets = [0, 0], sizes = [25, 64], strides = [1, 1]} : vector<25x128xf32> to vector<25x64xf32>
    %313 = arith.truncf %312 : vector<25x64xf32> to vector<25x64xbf16>
    %c0_253 = arith.constant 0 : index
    %c0_254 = arith.constant 0 : index
    %c0_255 = arith.constant 0 : index
    %314 = vector.load %arg10[%c0_253, %c0_254, %c0_255] : memref<9x64x128xbf16, #tpu.memory_space<vmem>>, vector<1x64x128xbf16>
    %315 = vector.shape_cast %314 : vector<1x64x128xbf16> to vector<64x128xbf16>
    %cst_256 = arith.constant dense<0.000000e+00> : vector<25x128xf32>
    %316 = tpu.matmul %313, %315, %cst_256 {dimension_numbers = #tpu.dot_dimension_numbers<[1], [0], [0], [1], [0, 0, 1, 1], [], []>} : vector<25x64xbf16>, vector<64x128xbf16>, vector<25x128xf32> -> vector<25x128xf32>
    %c38 = arith.constant 38 : index
    %c0_257 = arith.constant 0 : index
    %317 = vector.load %arg21[%c38, %c0_257] : memref<96x128xf32, #tpu.memory_space<vmem>>, vector<25x128xf32>
    %318 = arith.addf %317, %316 : vector<25x128xf32>
    %c38_258 = arith.constant 38 : index
    %c0_259 = arith.constant 0 : index
    %319 = vector.load %arg21[%c38_258, %c0_259] : memref<96x128xf32, #tpu.memory_space<vmem>>, vector<25x128xf32>
    tpu.vector_store %arg21[%c38_258, %c0_259], %318 {strides = array<i32>} : memref<96x128xf32, #tpu.memory_space<vmem>>, vector<25x128xf32>,
    %c1_260 = arith.constant 1 : index
    %c0_261 = arith.constant 0 : index
    %c0_262 = arith.constant 0 : index
    %320 = vector.load %arg10[%c1_260, %c0_261, %c0_262] : memref<9x64x128xbf16, #tpu.memory_space<vmem>>, vector<1x64x128xbf16>
    %321 = vector.shape_cast %320 : vector<1x64x128xbf16> to vector<64x128xbf16>
    %cst_263 = arith.constant dense<0.000000e+00> : vector<25x128xf32>
    %322 = tpu.matmul %313, %321, %cst_263 {dimension_numbers = #tpu.dot_dimension_numbers<[1], [0], [0], [1], [0, 0, 1, 1], [], []>} : vector<25x64xbf16>, vector<64x128xbf16>, vector<25x128xf32> -> vector<25x128xf32>
    %c37 = arith.constant 37 : index
    %c0_264 = arith.constant 0 : index
    %323 = vector.load %arg21[%c37, %c0_264] : memref<96x128xf32, #tpu.memory_space<vmem>>, vector<25x128xf32>
    %324 = arith.addf %323, %322 : vector<25x128xf32>
    %c37_265 = arith.constant 37 : index
    %c0_266 = arith.constant 0 : index
    %325 = vector.load %arg21[%c37_265, %c0_266] : memref<96x128xf32, #tpu.memory_space<vmem>>, vector<25x128xf32>
    tpu.vector_store %arg21[%c37_265, %c0_266], %324 {strides = array<i32>} : memref<96x128xf32, #tpu.memory_space<vmem>>, vector<25x128xf32>,
    %c2_267 = arith.constant 2 : index
    %c0_268 = arith.constant 0 : index
    %c0_269 = arith.constant 0 : index
    %326 = vector.load %arg10[%c2_267, %c0_268, %c0_269] : memref<9x64x128xbf16, #tpu.memory_space<vmem>>, vector<1x64x128xbf16>
    %327 = vector.shape_cast %326 : vector<1x64x128xbf16> to vector<64x128xbf16>
    %cst_270 = arith.constant dense<0.000000e+00> : vector<25x128xf32>
    %328 = tpu.matmul %313, %327, %cst_270 {dimension_numbers = #tpu.dot_dimension_numbers<[1], [0], [0], [1], [0, 0, 1, 1], [], []>} : vector<25x64xbf16>, vector<64x128xbf16>, vector<25x128xf32> -> vector<25x128xf32>
    %c36_271 = arith.constant 36 : index
    %c0_272 = arith.constant 0 : index
    %329 = vector.load %arg21[%c36_271, %c0_272] : memref<96x128xf32, #tpu.memory_space<vmem>>, vector<25x128xf32>
    %330 = arith.addf %329, %328 : vector<25x128xf32>
    %c36_273 = arith.constant 36 : index
    %c0_274 = arith.constant 0 : index
    %331 = vector.load %arg21[%c36_273, %c0_274] : memref<96x128xf32, #tpu.memory_space<vmem>>, vector<25x128xf32>
    tpu.vector_store %arg21[%c36_273, %c0_274], %330 {strides = array<i32>} : memref<96x128xf32, #tpu.memory_space<vmem>>, vector<25x128xf32>,
    %c3_275 = arith.constant 3 : index
    %c0_276 = arith.constant 0 : index
    %c0_277 = arith.constant 0 : index
    %332 = vector.load %arg10[%c3_275, %c0_276, %c0_277] : memref<9x64x128xbf16, #tpu.memory_space<vmem>>, vector<1x64x128xbf16>
    %333 = vector.shape_cast %332 : vector<1x64x128xbf16> to vector<64x128xbf16>
    %cst_278 = arith.constant dense<0.000000e+00> : vector<25x128xf32>
    %334 = tpu.matmul %313, %333, %cst_278 {dimension_numbers = #tpu.dot_dimension_numbers<[1], [0], [0], [1], [0, 0, 1, 1], [], []>} : vector<25x64xbf16>, vector<64x128xbf16>, vector<25x128xf32> -> vector<25x128xf32>
    %c33_279 = arith.constant 33 : index
    %c0_280 = arith.constant 0 : index
    %335 = vector.load %arg21[%c33_279, %c0_280] : memref<96x128xf32, #tpu.memory_space<vmem>>, vector<25x128xf32>
    %336 = arith.addf %335, %334 : vector<25x128xf32>
    %c33_281 = arith.constant 33 : index
    %c0_282 = arith.constant 0 : index
    %337 = vector.load %arg21[%c33_281, %c0_282] : memref<96x128xf32, #tpu.memory_space<vmem>>, vector<25x128xf32>
    tpu.vector_store %arg21[%c33_281, %c0_282], %336 {strides = array<i32>} : memref<96x128xf32, #tpu.memory_space<vmem>>, vector<25x128xf32>,
    %c4_283 = arith.constant 4 : index
    %c0_284 = arith.constant 0 : index
    %c0_285 = arith.constant 0 : index
    %338 = vector.load %arg10[%c4_283, %c0_284, %c0_285] : memref<9x64x128xbf16, #tpu.memory_space<vmem>>, vector<1x64x128xbf16>
    %339 = vector.shape_cast %338 : vector<1x64x128xbf16> to vector<64x128xbf16>
    %cst_286 = arith.constant dense<0.000000e+00> : vector<25x128xf32>
    %340 = tpu.matmul %313, %339, %cst_286 {dimension_numbers = #tpu.dot_dimension_numbers<[1], [0], [0], [1], [0, 0, 1, 1], [], []>} : vector<25x64xbf16>, vector<64x128xbf16>, vector<25x128xf32> -> vector<25x128xf32>
    %c32_287 = arith.constant 32 : index
    %c0_288 = arith.constant 0 : index
    %341 = vector.load %arg21[%c32_287, %c0_288] : memref<96x128xf32, #tpu.memory_space<vmem>>, vector<25x128xf32>
    %342 = arith.addf %341, %340 : vector<25x128xf32>
    %c32_289 = arith.constant 32 : index
    %c0_290 = arith.constant 0 : index
    %343 = vector.load %arg21[%c32_289, %c0_290] : memref<96x128xf32, #tpu.memory_space<vmem>>, vector<25x128xf32>
    tpu.vector_store %arg21[%c32_289, %c0_290], %342 {strides = array<i32>} : memref<96x128xf32, #tpu.memory_space<vmem>>, vector<25x128xf32>,
    %c5_291 = arith.constant 5 : index
    %c0_292 = arith.constant 0 : index
    %c0_293 = arith.constant 0 : index
    %344 = vector.load %arg10[%c5_291, %c0_292, %c0_293] : memref<9x64x128xbf16, #tpu.memory_space<vmem>>, vector<1x64x128xbf16>
    %345 = vector.shape_cast %344 : vector<1x64x128xbf16> to vector<64x128xbf16>
    %cst_294 = arith.constant dense<0.000000e+00> : vector<25x128xf32>
    %346 = tpu.matmul %313, %345, %cst_294 {dimension_numbers = #tpu.dot_dimension_numbers<[1], [0], [0], [1], [0, 0, 1, 1], [], []>} : vector<25x64xbf16>, vector<64x128xbf16>, vector<25x128xf32> -> vector<25x128xf32>
    %c31_295 = arith.constant 31 : index
    %c0_296 = arith.constant 0 : index
    %347 = vector.load %arg21[%c31_295, %c0_296] : memref<96x128xf32, #tpu.memory_space<vmem>>, vector<25x128xf32>
    %348 = arith.addf %347, %346 : vector<25x128xf32>
    %c31_297 = arith.constant 31 : index
    %c0_298 = arith.constant 0 : index
    %349 = vector.load %arg21[%c31_297, %c0_298] : memref<96x128xf32, #tpu.memory_space<vmem>>, vector<25x128xf32>
    tpu.vector_store %arg21[%c31_297, %c0_298], %348 {strides = array<i32>} : memref<96x128xf32, #tpu.memory_space<vmem>>, vector<25x128xf32>,
    %c6_299 = arith.constant 6 : index
    %c0_300 = arith.constant 0 : index
    %c0_301 = arith.constant 0 : index
    %350 = vector.load %arg10[%c6_299, %c0_300, %c0_301] : memref<9x64x128xbf16, #tpu.memory_space<vmem>>, vector<1x64x128xbf16>
    %351 = vector.shape_cast %350 : vector<1x64x128xbf16> to vector<64x128xbf16>
    %cst_302 = arith.constant dense<0.000000e+00> : vector<25x128xf32>
    %352 = tpu.matmul %313, %351, %cst_302 {dimension_numbers = #tpu.dot_dimension_numbers<[1], [0], [0], [1], [0, 0, 1, 1], [], []>} : vector<25x64xbf16>, vector<64x128xbf16>, vector<25x128xf32> -> vector<25x128xf32>
    %c28 = arith.constant 28 : index
    %c0_303 = arith.constant 0 : index
    %353 = vector.load %arg21[%c28, %c0_303] : memref<96x128xf32, #tpu.memory_space<vmem>>, vector<25x128xf32>
    %354 = arith.addf %353, %352 : vector<25x128xf32>
    %c28_304 = arith.constant 28 : index
    %c0_305 = arith.constant 0 : index
    %355 = vector.load %arg21[%c28_304, %c0_305] : memref<96x128xf32, #tpu.memory_space<vmem>>, vector<25x128xf32>
    tpu.vector_store %arg21[%c28_304, %c0_305], %354 {strides = array<i32>} : memref<96x128xf32, #tpu.memory_space<vmem>>, vector<25x128xf32>,
    %c7_306 = arith.constant 7 : index
    %c0_307 = arith.constant 0 : index
    %c0_308 = arith.constant 0 : index
    %356 = vector.load %arg10[%c7_306, %c0_307, %c0_308] : memref<9x64x128xbf16, #tpu.memory_space<vmem>>, vector<1x64x128xbf16>
    %357 = vector.shape_cast %356 : vector<1x64x128xbf16> to vector<64x128xbf16>
    %cst_309 = arith.constant dense<0.000000e+00> : vector<25x128xf32>
    %358 = tpu.matmul %313, %357, %cst_309 {dimension_numbers = #tpu.dot_dimension_numbers<[1], [0], [0], [1], [0, 0, 1, 1], [], []>} : vector<25x64xbf16>, vector<64x128xbf16>, vector<25x128xf32> -> vector<25x128xf32>
    %c27 = arith.constant 27 : index
    %c0_310 = arith.constant 0 : index
    %359 = vector.load %arg21[%c27, %c0_310] : memref<96x128xf32, #tpu.memory_space<vmem>>, vector<25x128xf32>
    %360 = arith.addf %359, %358 : vector<25x128xf32>
    %c27_311 = arith.constant 27 : index
    %c0_312 = arith.constant 0 : index
    %361 = vector.load %arg21[%c27_311, %c0_312] : memref<96x128xf32, #tpu.memory_space<vmem>>, vector<25x128xf32>
    tpu.vector_store %arg21[%c27_311, %c0_312], %360 {strides = array<i32>} : memref<96x128xf32, #tpu.memory_space<vmem>>, vector<25x128xf32>,
    %c8_313 = arith.constant 8 : index
    %c0_314 = arith.constant 0 : index
    %c0_315 = arith.constant 0 : index
    %362 = vector.load %arg10[%c8_313, %c0_314, %c0_315] : memref<9x64x128xbf16, #tpu.memory_space<vmem>>, vector<1x64x128xbf16>
    %363 = vector.shape_cast %362 : vector<1x64x128xbf16> to vector<64x128xbf16>
    %cst_316 = arith.constant dense<0.000000e+00> : vector<25x128xf32>
    %364 = tpu.matmul %313, %363, %cst_316 {dimension_numbers = #tpu.dot_dimension_numbers<[1], [0], [0], [1], [0, 0, 1, 1], [], []>} : vector<25x64xbf16>, vector<64x128xbf16>, vector<25x128xf32> -> vector<25x128xf32>
    %c26 = arith.constant 26 : index
    %c0_317 = arith.constant 0 : index
    %365 = vector.load %arg21[%c26, %c0_317] : memref<96x128xf32, #tpu.memory_space<vmem>>, vector<25x128xf32>
    %366 = arith.addf %365, %364 : vector<25x128xf32>
    %c26_318 = arith.constant 26 : index
    %c0_319 = arith.constant 0 : index
    %367 = vector.load %arg21[%c26_318, %c0_319] : memref<96x128xf32, #tpu.memory_space<vmem>>, vector<25x128xf32>
    tpu.vector_store %arg21[%c26_318, %c0_319], %366 {strides = array<i32>} : memref<96x128xf32, #tpu.memory_space<vmem>>, vector<25x128xf32>,
    %c32_320 = arith.constant 32 : index
    %c0_321 = arith.constant 0 : index
    %368 = vector.load %arg21[%c32_320, %c0_321] : memref<96x128xf32, #tpu.memory_space<vmem>>, vector<25x128xf32>
    %cst_322 = arith.constant 0.000000e+00 : f32
    %369 = vector.broadcast %cst_322 : f32 to vector<25x128xf32>
    %370 = arith.maximumf %368, %369 : vector<25x128xf32>
    %c0_323 = arith.constant 0 : index
    %c0_324 = arith.constant 0 : index
    %371 = vector.load %arg11[%c0_323, %c0_324] : memref<1x128xf32, #tpu.memory_space<vmem>>, vector<1x128xf32>
    %372 = vector.broadcast %371 : vector<1x128xf32> to vector<25x128xf32>
    %373 = arith.mulf %370, %372 : vector<25x128xf32>
    %c0_325 = arith.constant 0 : index
    %c0_326 = arith.constant 0 : index
    %374 = vector.load %arg12[%c0_325, %c0_326] : memref<1x128xf32, #tpu.memory_space<vmem>>, vector<1x128xf32>
    %375 = vector.broadcast %374 : vector<1x128xf32> to vector<25x128xf32>
    %376 = arith.addf %373, %375 : vector<25x128xf32>
    %c32_327 = arith.constant 32 : index
    %c0_328 = arith.constant 0 : index
    %377 = vector.load %arg21[%c32_327, %c0_328] : memref<96x128xf32, #tpu.memory_space<vmem>>, vector<25x128xf32>
    tpu.vector_store %arg21[%c32_327, %c0_328], %376 {strides = array<i32>} : memref<96x128xf32, #tpu.memory_space<vmem>>, vector<25x128xf32>,
    %c38_329 = arith.constant 38 : index
    %c0_330 = arith.constant 0 : index
    %378 = vector.load %arg21[%c38_329, %c0_330] : memref<96x128xf32, #tpu.memory_space<vmem>>, vector<3x128xf32>
    %c43_331 = arith.constant 43 : index
    %c0_332 = arith.constant 0 : index
    %379 = vector.load %arg21[%c43_331, %c0_332] : memref<96x128xf32, #tpu.memory_space<vmem>>, vector<3x128xf32>
    %380 = arith.maximumf %378, %379 : vector<3x128xf32>
    %c48 = arith.constant 48 : index
    %c0_333 = arith.constant 0 : index
    %381 = vector.load %arg21[%c48, %c0_333] : memref<96x128xf32, #tpu.memory_space<vmem>>, vector<3x128xf32>
    %382 = arith.maximumf %380, %381 : vector<3x128xf32>
    %cst_334 = arith.constant dense<0xFF800000> : vector<128xf32>
    %383 = vector.multi_reduction <maximumf>, %382, %cst_334 [0] : vector<3x128xf32> to vector<128xf32>
    %384 = vector.shape_cast %383 : vector<128xf32> to vector<1x128xf32>
    %385 = vector.extract_strided_slice %384 {offsets = [0, 0], sizes = [1, 96], strides = [1, 1]} : vector<1x128xf32> to vector<1x96xf32>
    %386 = arith.truncf %385 : vector<1x96xf32> to vector<1x96xbf16>
    %c0_335 = arith.constant 0 : index
    %c0_336 = arith.constant 0 : index
    %387 = vector.load %arg13[%c0_335, %c0_336] : memref<96x128xbf16, #tpu.memory_space<vmem>>, vector<96x128xbf16>
    %cst_337 = arith.constant dense<0.000000e+00> : vector<1x128xf32>
    %388 = tpu.matmul %386, %387, %cst_337 {dimension_numbers = #tpu.dot_dimension_numbers<[1], [0], [0], [1], [0, 0, 1, 1], [], []>} : vector<1x96xbf16>, vector<96x128xbf16>, vector<1x128xf32> -> vector<1x128xf32>
    %c0_338 = arith.constant 0 : index
    %c0_339 = arith.constant 0 : index
    %389 = vector.load %arg14[%c0_338, %c0_339] : memref<1x128xf32, #tpu.memory_space<vmem>>, vector<1x128xf32>
    %390 = arith.addf %388, %389 : vector<1x128xf32>
    %cst_340 = arith.constant 0.000000e+00 : f32
    %391 = vector.broadcast %cst_340 : f32 to vector<1x128xf32>
    %392 = arith.maximumf %390, %391 : vector<1x128xf32>
    %393 = arith.truncf %392 : vector<1x128xf32> to vector<1x128xbf16>
    %c0_341 = arith.constant 0 : index
    %c0_342 = arith.constant 0 : index
    %394 = vector.load %arg15[%c0_341, %c0_342] : memref<128x128xbf16, #tpu.memory_space<vmem>>, vector<128x128xbf16>
    %cst_343 = arith.constant dense<0.000000e+00> : vector<1x128xf32>
    %395 = tpu.matmul %393, %394, %cst_343 {dimension_numbers = #tpu.dot_dimension_numbers<[1], [0], [0], [1], [0, 0, 1, 1], [], []>} : vector<1x128xbf16>, vector<128x128xbf16>, vector<1x128xf32> -> vector<1x128xf32>
    %c0_344 = arith.constant 0 : index
    %c0_345 = arith.constant 0 : index
    %396 = vector.load %arg16[%c0_344, %c0_345] : memref<1x128xf32, #tpu.memory_space<vmem>>, vector<1x128xf32>
    %397 = arith.addf %395, %396 : vector<1x128xf32>
    %c0_346 = arith.constant 0 : index
    %c0_347 = arith.constant 0 : index
    %c0_348 = arith.constant 0 : index
    %398 = vector.load %arg17[%c0_346, %c0_347, %c0_348] : memref<1x1x128xf32, #tpu.memory_space<vmem>>, vector<1x1x128xf32>
    %399 = vector.shape_cast %398 : vector<1x1x128xf32> to vector<1x128xf32>
    %400 = vector.shape_cast %397 : vector<1x128xf32> to vector<1x1x128xf32>
    tpu.vector_store %arg17[%c0_346, %c0_347, %c0_348], %400 {strides = array<i32>} : memref<1x1x128xf32, #tpu.memory_space<vmem>>, vector<1x1x128xf32>,
    return
  }
  func.func @transform_0(%arg0: i32) -> (i32, i32) {
    %c0_i32 = arith.constant 0 : i32
    %c0_i32_0 = arith.constant 0 : i32
    return %arg0, %c0_i32 : i32, i32
  }
  func.func @transform_1(%arg0: i32) -> (i32, i32, i32) {
    %c0_i32 = arith.constant 0 : i32
    %c0_i32_0 = arith.constant 0 : i32
    %c0_i32_1 = arith.constant 0 : i32
    %c0_i32_2 = arith.constant 0 : i32
    return %c0_i32, %c0_i32_0, %c0_i32_1 : i32, i32, i32
  }
  func.func @transform_2(%arg0: i32) -> (i32, i32) {
    %c0_i32 = arith.constant 0 : i32
    %c0_i32_0 = arith.constant 0 : i32
    %c0_i32_1 = arith.constant 0 : i32
    return %c0_i32, %c0_i32_0 : i32, i32
  }
  func.func @transform_3(%arg0: i32) -> (i32, i32) {
    %c0_i32 = arith.constant 0 : i32
    %c0_i32_0 = arith.constant 0 : i32
    %c0_i32_1 = arith.constant 0 : i32
    return %c0_i32, %c0_i32_0 : i32, i32
  }
  func.func @transform_4(%arg0: i32) -> (i32, i32) {
    %c0_i32 = arith.constant 0 : i32
    %c0_i32_0 = arith.constant 0 : i32
    %c0_i32_1 = arith.constant 0 : i32
    return %c0_i32, %c0_i32_0 : i32, i32
  }
  func.func @transform_5(%arg0: i32) -> (i32, i32, i32) {
    %c0_i32 = arith.constant 0 : i32
    %c0_i32_0 = arith.constant 0 : i32
    %c0_i32_1 = arith.constant 0 : i32
    %c0_i32_2 = arith.constant 0 : i32
    return %c0_i32, %c0_i32_0, %c0_i32_1 : i32, i32, i32
  }
  func.func @transform_6(%arg0: i32) -> (i32, i32) {
    %c0_i32 = arith.constant 0 : i32
    %c0_i32_0 = arith.constant 0 : i32
    %c0_i32_1 = arith.constant 0 : i32
    return %c0_i32, %c0_i32_0 : i32, i32
  }
  func.func @transform_7(%arg0: i32) -> (i32, i32) {
    %c0_i32 = arith.constant 0 : i32
    %c0_i32_0 = arith.constant 0 : i32
    %c0_i32_1 = arith.constant 0 : i32
    return %c0_i32, %c0_i32_0 : i32, i32
  }
  func.func @transform_8(%arg0: i32) -> (i32, i32) {
    %c0_i32 = arith.constant 0 : i32
    %c0_i32_0 = arith.constant 0 : i32
    %c0_i32_1 = arith.constant 0 : i32
    return %c0_i32, %c0_i32_0 : i32, i32
  }
  func.func @transform_9(%arg0: i32) -> (i32, i32, i32) {
    %c0_i32 = arith.constant 0 : i32
    %c0_i32_0 = arith.constant 0 : i32
    %c0_i32_1 = arith.constant 0 : i32
    %c0_i32_2 = arith.constant 0 : i32
    return %c0_i32, %c0_i32_0, %c0_i32_1 : i32, i32, i32
  }
  func.func @transform_10(%arg0: i32) -> (i32, i32) {
    %c0_i32 = arith.constant 0 : i32
    %c0_i32_0 = arith.constant 0 : i32
    %c0_i32_1 = arith.constant 0 : i32
    return %c0_i32, %c0_i32_0 : i32, i32
  }
  func.func @transform_11(%arg0: i32) -> (i32, i32) {
    %c0_i32 = arith.constant 0 : i32
    %c0_i32_0 = arith.constant 0 : i32
    %c0_i32_1 = arith.constant 0 : i32
    return %c0_i32, %c0_i32_0 : i32, i32
  }
  func.func @transform_12(%arg0: i32) -> (i32, i32) {
    %c0_i32 = arith.constant 0 : i32
    %c0_i32_0 = arith.constant 0 : i32
    %c0_i32_1 = arith.constant 0 : i32
    return %c0_i32, %c0_i32_0 : i32, i32
  }
  func.func @transform_13(%arg0: i32) -> (i32, i32) {
    %c0_i32 = arith.constant 0 : i32
    %c0_i32_0 = arith.constant 0 : i32
    %c0_i32_1 = arith.constant 0 : i32
    return %c0_i32, %c0_i32_0 : i32, i32
  }
  func.func @transform_14(%arg0: i32) -> (i32, i32) {
    %c0_i32 = arith.constant 0 : i32
    %c0_i32_0 = arith.constant 0 : i32
    %c0_i32_1 = arith.constant 0 : i32
    return %c0_i32, %c0_i32_0 : i32, i32
  }
  func.func @transform_15(%arg0: i32) -> (i32, i32) {
    %c0_i32 = arith.constant 0 : i32
    %c0_i32_0 = arith.constant 0 : i32
    %c0_i32_1 = arith.constant 0 : i32
    return %c0_i32, %c0_i32_0 : i32, i32
  }
  func.func @transform_16(%arg0: i32) -> (i32, i32, i32) {
    %c0_i32 = arith.constant 0 : i32
    %c0_i32_0 = arith.constant 0 : i32
    %c0_i32_1 = arith.constant 0 : i32
    return %arg0, %c0_i32, %c0_i32_0 : i32, i32, i32
  }
}

</mosaic_0001>

<llo_original>
// kernel: single_chan_expert_forward.1
$region0: #{single_chan_expert_forward.1}
  #allocation0 [shape = 'u32[]', space=smem, size = 0x4, offset = 0x4, fixed_abs, tag = 'smem constant byte address 0x4 - core index']
  #allocation1 [shape = 'u32[144,128]{1,0:T(1,128)}', space=vmem, size = 0x12000, scoped, tag = 'internal scratch']
  #allocation2 [shape = 'f32[432,16]{1,0:T(8,128)}', space=vmem, size = 0x36000, scoped, tag = 'scratch operand']
  #allocation3 [shape = 'f32[464,128]{1,0:T(8,128)}', space=vmem, size = 0x3a000, scoped, tag = 'scratch operand']
  #allocation4 [shape = 'f32[192,128]{1,0:T(8,128)}', space=vmem, size = 0x18000, scoped, tag = 'scratch operand']
  #allocation5 [shape = 'f32[96,128]{1,0:T(8,128)}', space=vmem, size = 0xc000, scoped, tag = 'scratch operand']
  %s0 = inlined_call_operand.vmem [shape: f32[1296,2], index: 0, kind: input, shape index: {}]
  %s1 = inlined_call_operand.vmem [shape: bf16[9,16,128], index: 1, kind: input, shape index: {}]
  %s2 = inlined_call_operand.vmem [shape: f32[1,128], index: 2, kind: input, shape index: {}]
  %s3 = inlined_call_operand.vmem [shape: f32[1,128], index: 3, kind: input, shape index: {}]
  %s4 = inlined_call_operand.vmem [shape: f32[121,400], index: 4, kind: input, shape index: {}]
  %s5 = inlined_call_operand.vmem [shape: bf16[9,64,128], index: 5, kind: input, shape index: {}]
  %s6 = inlined_call_operand.vmem [shape: f32[1,128], index: 6, kind: input, shape index: {}]
  %s7 = inlined_call_operand.vmem [shape: f32[1,128], index: 7, kind: input, shape index: {}]
  %s8 = inlined_call_operand.vmem [shape: f32[25,121], index: 8, kind: input, shape index: {}]
  %s9 = inlined_call_operand.vmem [shape: bf16[9,64,128], index: 9, kind: input, shape index: {}]
  %s10 = inlined_call_operand.vmem [shape: f32[1,128], index: 10, kind: input, shape index: {}]
  %s11 = inlined_call_operand.vmem [shape: f32[1,128], index: 11, kind: input, shape index: {}]
  %s12 = inlined_call_operand.vmem [shape: bf16[96,128], index: 12, kind: input, shape index: {}]
  %s13 = inlined_call_operand.vmem [shape: f32[1,128], index: 13, kind: input, shape index: {}]
  %s14 = inlined_call_operand.vmem [shape: bf16[128,128], index: 14, kind: input, shape index: {}]
  %s15 = inlined_call_operand.vmem [shape: f32[1,128], index: 15, kind: input, shape index: {}]
  %s16 = inlined_call_operand.hbm [shape: f32[2,1,128], index: 16, kind: output, shape index: {}]
  %s17 = sld [smem:[#allocation0]]
  $region97: #{single_chan_expert_forward.1} parent=0
    _
  %s19 = ssub.s32 1, %s17
  %s20 = scalar_select 0, %s19, %s17
  $region1: #{single_chan_expert_forward.1} parent=0
    #allocation6 [shape = 'u8[1024]{0}', space=vmem, size = 0x400, scoped, tag = 'output window, operand 0']
    #allocation7 [shape = 's32[2]{0}', space=sflag, size = 0x8, scoped, tag = 'scoped memory for single_chan_expert_forward.1']
    %21 = vsyncpa [#allocation7], 0
    %s22 = scalar_lea.sflag [#allocation7], 1
    %23 = vsyncpa %s22, 0
    loop: start=0, step=1, limit=4
    $region2: #{single_chan_expert_forward.1} parent=1 // loop_pre_header
      _
    $region3: #{single_chan_expert_forward.1} parent=1 // loop_header
      %s25 = sphi 0, %s29
      %p26 = scmp.ge.s32.totalorder %s25, 4
      %s35 = sphi 0, %s37
      %s38 = sphi 0, %s35
      %s39 = sphi 0, %s38
      %s55 = sphi 0, %s39
      %s59 = sphi 0, %s59
      %s61 = sphi 0, %s59
      %s62 = sphi 0, %s61
      %s76 = sphi 0, %s62
      %s80 = sphi 0, %s80
      %s82 = sphi 0, %s80
      %s83 = sphi 0, %s82
      %s97 = sphi 0, %s83
      %s101 = sphi 0, %s101
      %s103 = sphi 0, %s101
      %s104 = sphi 0, %s103
      %s118 = sphi 0, %s104
      %s122 = sphi 0, %s122
      %s124 = sphi 0, %s122
      %s125 = sphi 0, %s124
      %s139 = sphi 0, %s125
      %s143 = sphi 0, %s143
      %s145 = sphi 0, %s143
      %s146 = sphi 0, %s145
      %s160 = sphi 0, %s146
      %s164 = sphi 0, %s164
      %s166 = sphi 0, %s164
      %s167 = sphi 0, %s166
      %s181 = sphi 0, %s167
      %s185 = sphi 0, %s185
      %s187 = sphi 0, %s185
      %s188 = sphi 0, %s187
      %s202 = sphi 0, %s188
      %s206 = sphi 0, %s206
      %s208 = sphi 0, %s206
      %s209 = sphi 0, %s208
      %s223 = sphi 0, %s209
      %s227 = sphi 0, %s227
      %s229 = sphi 0, %s227
      %s230 = sphi 0, %s229
      %s244 = sphi 0, %s230
      %s248 = sphi 0, %s248
      %s250 = sphi 0, %s248
      %s251 = sphi 0, %s250
      %s265 = sphi 0, %s251
      %s269 = sphi 0, %s269
      %s271 = sphi 0, %s269
      %s272 = sphi 0, %s271
      %s286 = sphi 0, %s272
      %s290 = sphi 0, %s290
      %s292 = sphi 0, %s290
      %s293 = sphi 0, %s292
      %s307 = sphi 0, %s293
      %s311 = sphi 0, %s311
      %s313 = sphi 0, %s311
      %s314 = sphi 0, %s313
      %s328 = sphi 0, %s314
      %s332 = sphi 0, %s332
      %s334 = sphi 0, %s332
      %s335 = sphi 0, %s334
      %s349 = sphi 0, %s335
      %s353 = sphi 0, %s353
      %s355 = sphi 0, %s353
      %s356 = sphi 0, %s355
      %s370 = sphi 0, %s356
      %s376 = sphi 0, %s378
      %s379 = sphi 0, %s376
      %s380 = sphi 0, %s379
      %s396 = sphi 0, %s380
    $region4: #{single_chan_expert_forward.1} parent=1 // loop_header_branch
      %28 = sbr.rel (%p26) target = $region8
    $region5: #{single_chan_expert_forward.1} parent=1 // loop_body
      %s30 = ssub.s32 %s25, 1
      %s31 = ssub.s32 %s25, 2
      %s32 = sadd.s32 %s25, 1
      %s33 = ssub.s32 %s25, %s32
      %p34 = scmp.eq.s32.totalorder %s33, 0
      %s36 = sadd.s32 %s35, 1
      %s37 = scalar_select %p34, %s35, %s36
      %p40 = pneg %p34
      %p41 = scmp.eq.s32.totalorder %s25, 1
      %p42 = por %p40, %p41
      %p43 = scmp.ne.s32.totalorder %s35, %s38
      %p44 = scmp.eq.s32.totalorder %s25, 0
      %p45 = por %p43, %p44
      %p46 = scmp.ne.s32.totalorder %s35, %s38
      %p47 = scmp.eq.s32.totalorder %s30, 1
      %p48 = por %p46, %p47
      %p49 = scmp.ne.s32.totalorder %s38, %s39
      %p50 = scmp.eq.s32.totalorder %s30, 0
      %p51 = por %p49, %p50
      %p52 = scmp.ne.s32.totalorder %s38, %s39
      %p53 = scmp.eq.s32.totalorder %s31, 1
      %p54 = por %p52, %p53
      %p56 = scmp.ne.s32.totalorder %s39, %s55
      %p57 = scmp.eq.s32.totalorder %s31, 0
      %p58 = por %p56, %p57
      %s60 = sadd.s32 %s59, 1
      %p63 = scmp.eq.s32.totalorder %s25, 1
      %p64 = scmp.ne.s32.totalorder %s59, %s61
      %p65 = scmp.eq.s32.totalorder %s25, 0
      %p66 = por %p64, %p65
      %p67 = scmp.ne.s32.totalorder %s59, %s61
      %p68 = scmp.eq.s32.totalorder %s30, 1
      %p69 = por %p67, %p68
      %p70 = scmp.ne.s32.totalorder %s61, %s62
      %p71 = scmp.eq.s32.totalorder %s30, 0
      %p72 = por %p70, %p71
      %p73 = scmp.ne.s32.totalorder %s61, %s62
      %p74 = scmp.eq.s32.totalorder %s31, 1
      %p75 = por %p73, %p74
      %p77 = scmp.ne.s32.totalorder %s62, %s76
      %p78 = scmp.eq.s32.totalorder %s31, 0
      %p79 = por %p77, %p78
      %s81 = sadd.s32 %s80, 1
      %p84 = scmp.eq.s32.totalorder %s25, 1
      %p85 = scmp.ne.s32.totalorder %s80, %s82
      %p86 = scmp.eq.s32.totalorder %s25, 0
      %p87 = por %p85, %p86
      %p88 = scmp.ne.s32.totalorder %s80, %s82
      %p89 = scmp.eq.s32.totalorder %s30, 1
      %p90 = por %p88, %p89
      %p91 = scmp.ne.s32.totalorder %s82, %s83
      %p92 = scmp.eq.s32.totalorder %s30, 0
      %p93 = por %p91, %p92
      %p94 = scmp.ne.s32.totalorder %s82, %s83
      %p95 = scmp.eq.s32.totalorder %s31, 1
      %p96 = por %p94, %p95
      %p98 = scmp.ne.s32.totalorder %s83, %s97
      %p99 = scmp.eq.s32.totalorder %s31, 0
      %p100 = por %p98, %p99
      %s102 = sadd.s32 %s101, 1
      %p105 = scmp.eq.s32.totalorder %s25, 1
      %p106 = scmp.ne.s32.totalorder %s101, %s103
      %p107 = scmp.eq.s32.totalorder %s25, 0
      %p108 = por %p106, %p107
      %p109 = scmp.ne.s32.totalorder %s101, %s103
      %p110 = scmp.eq.s32.totalorder %s30, 1
      %p111 = por %p109, %p110
      %p112 = scmp.ne.s32.totalorder %s103, %s104
      %p113 = scmp.eq.s32.totalorder %s30, 0
      %p114 = por %p112, %p113
      %p115 = scmp.ne.s32.totalorder %s103, %s104
      %p116 = scmp.eq.s32.totalorder %s31, 1
      %p117 = por %p115, %p116
      %p119 = scmp.ne.s32.totalorder %s104, %s118
      %p120 = scmp.eq.s32.totalorder %s31, 0
      %p121 = por %p119, %p120
      %s123 = sadd.s32 %s122, 1
      %p126 = scmp.eq.s32.totalorder %s25, 1
      %p127 = scmp.ne.s32.totalorder %s122, %s124
      %p128 = scmp.eq.s32.totalorder %s25, 0
      %p129 = por %p127, %p128
      %p130 = scmp.ne.s32.totalorder %s122, %s124
      %p131 = scmp.eq.s32.totalorder %s30, 1
      %p132 = por %p130, %p131
      %p133 = scmp.ne.s32.totalorder %s124, %s125
      %p134 = scmp.eq.s32.totalorder %s30, 0
      %p135 = por %p133, %p134
      %p136 = scmp.ne.s32.totalorder %s124, %s125
      %p137 = scmp.eq.s32.totalorder %s31, 1
      %p138 = por %p136, %p137
      %p140 = scmp.ne.s32.totalorder %s125, %s139
      %p141 = scmp.eq.s32.totalorder %s31, 0
      %p142 = por %p140, %p141
      %s144 = sadd.s32 %s143, 1
      %p147 = scmp.eq.s32.totalorder %s25, 1
      %p148 = scmp.ne.s32.totalorder %s143, %s145
      %p149 = scmp.eq.s32.totalorder %s25, 0
      %p150 = por %p148, %p149
      %p151 = scmp.ne.s32.totalorder %s143, %s145
      %p152 = scmp.eq.s32.totalorder %s30, 1
      %p153 = por %p151, %p152
      %p154 = scmp.ne.s32.totalorder %s145, %s146
      %p155 = scmp.eq.s32.totalorder %s30, 0
      %p156 = por %p154, %p155
      %p157 = scmp.ne.s32.totalorder %s145, %s146
      %p158 = scmp.eq.s32.totalorder %s31, 1
      %p159 = por %p157, %p158
      %p161 = scmp.ne.s32.totalorder %s146, %s160
      %p162 = scmp.eq.s32.totalorder %s31, 0
      %p163 = por %p161, %p162
      %s165 = sadd.s32 %s164, 1
      %p168 = scmp.eq.s32.totalorder %s25, 1
      %p169 = scmp.ne.s32.totalorder %s164, %s166
      %p170 = scmp.eq.s32.totalorder %s25, 0
      %p171 = por %p169, %p170
      %p172 = scmp.ne.s32.totalorder %s164, %s166
      %p173 = scmp.eq.s32.totalorder %s30, 1
      %p174 = por %p172, %p173
      %p175 = scmp.ne.s32.totalorder %s166, %s167
      %p176 = scmp.eq.s32.totalorder %s30, 0
      %p177 = por %p175, %p176
      %p178 = scmp.ne.s32.totalorder %s166, %s167
      %p179 = scmp.eq.s32.totalorder %s31, 1
      %p180 = por %p178, %p179
      %p182 = scmp.ne.s32.totalorder %s167, %s181
      %p183 = scmp.eq.s32.totalorder %s31, 0
      %p184 = por %p182, %p183
      %s186 = sadd.s32 %s185, 1
      %p189 = scmp.eq.s32.totalorder %s25, 1
      %p190 = scmp.ne.s32.totalorder %s185, %s187
      %p191 = scmp.eq.s32.totalorder %s25, 0
      %p192 = por %p190, %p191
      %p193 = scmp.ne.s32.totalorder %s185, %s187
      %p194 = scmp.eq.s32.totalorder %s30, 1
      %p195 = por %p193, %p194
      %p196 = scmp.ne.s32.totalorder %s187, %s188
      %p197 = scmp.eq.s32.totalorder %s30, 0
      %p198 = por %p196, %p197
      %p199 = scmp.ne.s32.totalorder %s187, %s188
      %p200 = scmp.eq.s32.totalorder %s31, 1
      %p201 = por %p199, %p200
      %p203 = scmp.ne.s32.totalorder %s188, %s202
      %p204 = scmp.eq.s32.totalorder %s31, 0
      %p205 = por %p203, %p204
      %s207 = sadd.s32 %s206, 1
      %p210 = scmp.eq.s32.totalorder %s25, 1
      %p211 = scmp.ne.s32.totalorder %s206, %s208
      %p212 = scmp.eq.s32.totalorder %s25, 0
      %p213 = por %p211, %p212
      %p214 = scmp.ne.s32.totalorder %s206, %s208
      %p215 = scmp.eq.s32.totalorder %s30, 1
      %p216 = por %p214, %p215
      %p217 = scmp.ne.s32.totalorder %s208, %s209
      %p218 = scmp.eq.s32.totalorder %s30, 0
      %p219 = por %p217, %p218
      %p220 = scmp.ne.s32.totalorder %s208, %s209
      %p221 = scmp.eq.s32.totalorder %s31, 1
      %p222 = por %p220, %p221
      %p224 = scmp.ne.s32.totalorder %s209, %s223
      %p225 = scmp.eq.s32.totalorder %s31, 0
      %p226 = por %p224, %p225
      %s228 = sadd.s32 %s227, 1
      %p231 = scmp.eq.s32.totalorder %s25, 1
      %p232 = scmp.ne.s32.totalorder %s227, %s229
      %p233 = scmp.eq.s32.totalorder %s25, 0
      %p234 = por %p232, %p233
      %p235 = scmp.ne.s32.totalorder %s227, %s229
      %p236 = scmp.eq.s32.totalorder %s30, 1
      %p237 = por %p235, %p236
      %p238 = scmp.ne.s32.totalorder %s229, %s230
      %p239 = scmp.eq.s32.totalorder %s30, 0
      %p240 = por %p238, %p239
      %p241 = scmp.ne.s32.totalorder %s229, %s230
      %p242 = scmp.eq.s32.totalorder %s31, 1
      %p243 = por %p241, %p242
      %p245 = scmp.ne.s32.totalorder %s230, %s244
      %p246 = scmp.eq.s32.totalorder %s31, 0
      %p247 = por %p245, %p246
      %s249 = sadd.s32 %s248, 1
      %p252 = scmp.eq.s32.totalorder %s25, 1
      %p253 = scmp.ne.s32.totalorder %s248, %s250
      %p254 = scmp.eq.s32.totalorder %s25, 0
      %p255 = por %p253, %p254
      %p256 = scmp.ne.s32.totalorder %s248, %s250
      %p257 = scmp.eq.s32.totalorder %s30, 1
      %p258 = por %p256, %p257
      %p259 = scmp.ne.s32.totalorder %s250, %s251
      %p260 = scmp.eq.s32.totalorder %s30, 0
      %p261 = por %p259, %p260
      %p262 = scmp.ne.s32.totalorder %s250, %s251
      %p263 = scmp.eq.s32.totalorder %s31, 1
      %p264 = por %p262, %p263
      %p266 = scmp.ne.s32.totalorder %s251, %s265
      %p267 = scmp.eq.s32.totalorder %s31, 0
      %p268 = por %p266, %p267
      %s270 = sadd.s32 %s269, 1
      %p273 = scmp.eq.s32.totalorder %s25, 1
      %p274 = scmp.ne.s32.totalorder %s269, %s271
      %p275 = scmp.eq.s32.totalorder %s25, 0
      %p276 = por %p274, %p275
      %p277 = scmp.ne.s32.totalorder %s269, %s271
      %p278 = scmp.eq.s32.totalorder %s30, 1
      %p279 = por %p277, %p278
      %p280 = scmp.ne.s32.totalorder %s271, %s272
      %p281 = scmp.eq.s32.totalorder %s30, 0
      %p282 = por %p280, %p281
      %p283 = scmp.ne.s32.totalorder %s271, %s272
      %p284 = scmp.eq.s32.totalorder %s31, 1
      %p285 = por %p283, %p284
      %p287 = scmp.ne.s32.totalorder %s272, %s286
      %p288 = scmp.eq.s32.totalorder %s31, 0
      %p289 = por %p287, %p288
      %s291 = sadd.s32 %s290, 1
      %p294 = scmp.eq.s32.totalorder %s25, 1
      %p295 = scmp.ne.s32.totalorder %s290, %s292
      %p296 = scmp.eq.s32.totalorder %s25, 0
      %p297 = por %p295, %p296
      %p298 = scmp.ne.s32.totalorder %s290, %s292
      %p299 = scmp.eq.s32.totalorder %s30, 1
      %p300 = por %p298, %p299
      %p301 = scmp.ne.s32.totalorder %s292, %s293
      %p302 = scmp.eq.s32.totalorder %s30, 0
      %p303 = por %p301, %p302
      %p304 = scmp.ne.s32.totalorder %s292, %s293
      %p305 = scmp.eq.s32.totalorder %s31, 1
      %p306 = por %p304, %p305
      %p308 = scmp.ne.s32.totalorder %s293, %s307
      %p309 = scmp.eq.s32.totalorder %s31, 0
      %p310 = por %p308, %p309
      %s312 = sadd.s32 %s311, 1
      %p315 = scmp.eq.s32.totalorder %s25, 1
      %p316 = scmp.ne.s32.totalorder %s311, %s313
      %p317 = scmp.eq.s32.totalorder %s25, 0
      %p318 = por %p316, %p317
      %p319 = scmp.ne.s32.totalorder %s311, %s313
      %p320 = scmp.eq.s32.totalorder %s30, 1
      %p321 = por %p319, %p320
      %p322 = scmp.ne.s32.totalorder %s313, %s314
      %p323 = scmp.eq.s32.totalorder %s30, 0
      %p324 = por %p322, %p323
      %p325 = scmp.ne.s32.totalorder %s313, %s314
      %p326 = scmp.eq.s32.totalorder %s31, 1
      %p327 = por %p325, %p326
      %p329 = scmp.ne.s32.totalorder %s314, %s328
      %p330 = scmp.eq.s32.totalorder %s31, 0
      %p331 = por %p329, %p330
      %s333 = sadd.s32 %s332, 1
      %p336 = scmp.eq.s32.totalorder %s25, 1
      %p337 = scmp.ne.s32.totalorder %s332, %s334
      %p338 = scmp.eq.s32.totalorder %s25, 0
      %p339 = por %p337, %p338
      %p340 = scmp.ne.s32.totalorder %s332, %s334
      %p341 = scmp.eq.s32.totalorder %s30, 1
      %p342 = por %p340, %p341
      %p343 = scmp.ne.s32.totalorder %s334, %s335
      %p344 = scmp.eq.s32.totalorder %s30, 0
      %p345 = por %p343, %p344
      %p346 = scmp.ne.s32.totalorder %s334, %s335
      %p347 = scmp.eq.s32.totalorder %s31, 1
      %p348 = por %p346, %p347
      %p350 = scmp.ne.s32.totalorder %s335, %s349
      %p351 = scmp.eq.s32.totalorder %s31, 0
      %p352 = por %p350, %p351
      %s354 = sadd.s32 %s353, 1
      %p357 = scmp.eq.s32.totalorder %s25, 1
      %p358 = scmp.ne.s32.totalorder %s353, %s355
      %p359 = scmp.eq.s32.totalorder %s25, 0
      %p360 = por %p358, %p359
      %p361 = scmp.ne.s32.totalorder %s353, %s355
      %p362 = scmp.eq.s32.totalorder %s30, 1
      %p363 = por %p361, %p362
      %p364 = scmp.ne.s32.totalorder %s355, %s356
      %p365 = scmp.eq.s32.totalorder %s30, 0
      %p366 = por %p364, %p365
      %p367 = scmp.ne.s32.totalorder %s355, %s356
      %p368 = scmp.eq.s32.totalorder %s31, 1
      %p369 = por %p367, %p368
      %p371 = scmp.ne.s32.totalorder %s356, %s370
      %p372 = scmp.eq.s32.totalorder %s31, 0
      %p373 = por %p371, %p372
      %s374 = ssub.s32 %s25, %s32
      %p375 = scmp.eq.s32.totalorder %s374, 0
      %s377 = sadd.s32 %s376, 1
      %s378 = scalar_select %p375, %s376, %s377
      %p381 = pneg %p375
      %p382 = scmp.eq.s32.totalorder %s25, 1
      %p383 = por %p381, %p382
      %p384 = scmp.ne.s32.totalorder %s376, %s379
      %p385 = scmp.eq.s32.totalorder %s25, 0
      %p386 = por %p384, %p385
      %p387 = scmp.ne.s32.totalorder %s376, %s379
      %p388 = scmp.eq.s32.totalorder %s30, 1
      %p389 = por %p387, %p388
      %p390 = scmp.ne.s32.totalorder %s379, %s380
      %p391 = scmp.eq.s32.totalorder %s30, 0
      %p392 = por %p390, %p391
      %p393 = scmp.ne.s32.totalorder %s379, %s380
      %p394 = scmp.eq.s32.totalorder %s31, 1
      %p395 = por %p393, %p394
      %p397 = scmp.ne.s32.totalorder %s380, %s396
      %p398 = scmp.eq.s32.totalorder %s31, 0
      %p399 = por %p397, %p398
      %p400 = scmp.le.s32.totalorder 1, %s25
      %p401 = scmp.lt.s32.totalorder %s25, 3
      %p402 = pnand %p400, %p401
      %p403 = pneg %p402
      // Predicated region
      $region9: #{single_chan_expert_forward.1} parent=5 // pred_check
        _
      $region10: #{single_chan_expert_forward.1} parent=5 // pred_check_branch
        %405 = sbr.rel (%p402) target = $region12
      $region11: #{single_chan_expert_forward.1} parent=5 // pred_region
        %s406 = ssub.s32 %s25, 1
        // Predicated region
        $region13: #{single_chan_expert_forward.1} parent=11 // pred_check
          %p407 = pneg %p72
        $region14: #{single_chan_expert_forward.1} parent=11 // pred_check_branch
          %409 = sbr.rel (%p407) target = $region16
        $region15: #{single_chan_expert_forward.1} parent=11 // pred_region
          _
        $region16: #{single_chan_expert_forward.1} parent=11 // pred_fallthru
          _
        // Predicated region
        $region17: #{single_chan_expert_forward.1} parent=11 // pred_check
          %p410 = pneg %p93
        $region18: #{single_chan_expert_forward.1} parent=11 // pred_check_branch
          %412 = sbr.rel (%p410) target = $region20
        $region19: #{single_chan_expert_forward.1} parent=11 // pred_region
          _
        $region20: #{single_chan_expert_forward.1} parent=11 // pred_fallthru
          _
        // Predicated region
        $region21: #{single_chan_expert_forward.1} parent=11 // pred_check
          %p413 = pneg %p114
        $region22: #{single_chan_expert_forward.1} parent=11 // pred_check_branch
          %415 = sbr.rel (%p413) target = $region24
        $region23: #{single_chan_expert_forward.1} parent=11 // pred_region
          _
        $region24: #{single_chan_expert_forward.1} parent=11 // pred_fallthru
          _
        // Predicated region
        $region25: #{single_chan_expert_forward.1} parent=11 // pred_check
          %p416 = pneg %p135
        $region26: #{single_chan_expert_forward.1} parent=11 // pred_check_branch
          %418 = sbr.rel (%p416) target = $region28
        $region27: #{single_chan_expert_forward.1} parent=11 // pred_region
          _
        $region28: #{single_chan_expert_forward.1} parent=11 // pred_fallthru
          _
        // Predicated region
        $region29: #{single_chan_expert_forward.1} parent=11 // pred_check
          %p419 = pneg %p156
        $region30: #{single_chan_expert_forward.1} parent=11 // pred_check_branch
          %421 = sbr.rel (%p419) target = $region32
        $region31: #{single_chan_expert_forward.1} parent=11 // pred_region
          _
        $region32: #{single_chan_expert_forward.1} parent=11 // pred_fallthru
          _
        // Predicated region
        $region33: #{single_chan_expert_forward.1} parent=11 // pred_check
          %p422 = pneg %p177
        $region34: #{single_chan_expert_forward.1} parent=11 // pred_check_branch
          %424 = sbr.rel (%p422) target = $region36
        $region35: #{single_chan_expert_forward.1} parent=11 // pred_region
          _
        $region36: #{single_chan_expert_forward.1} parent=11 // pred_fallthru
          _
        // Predicated region
        $region37: #{single_chan_expert_forward.1} parent=11 // pred_check
          %p425 = pneg %p198
        $region38: #{single_chan_expert_forward.1} parent=11 // pred_check_branch
          %427 = sbr.rel (%p425) target = $region40
        $region39: #{single_chan_expert_forward.1} parent=11 // pred_region
          _
        $region40: #{single_chan_expert_forward.1} parent=11 // pred_fallthru
          _
        // Predicated region
        $region41: #{single_chan_expert_forward.1} parent=11 // pred_check
          %p428 = pneg %p219
        $region42: #{single_chan_expert_forward.1} parent=11 // pred_check_branch
          %430 = sbr.rel (%p428) target = $region44
        $region43: #{single_chan_expert_forward.1} parent=11 // pred_region
          _
        $region44: #{single_chan_expert_forward.1} parent=11 // pred_fallthru
          _
        // Predicated region
        $region45: #{single_chan_expert_forward.1} parent=11 // pred_check
          %p431 = pneg %p240
        $region46: #{single_chan_expert_forward.1} parent=11 // pred_check_branch
          %433 = sbr.rel (%p431) target = $region48
        $region47: #{single_chan_expert_forward.1} parent=11 // pred_region
          _
        $region48: #{single_chan_expert_forward.1} parent=11 // pred_fallthru
          _
        // Predicated region
        $region49: #{single_chan_expert_forward.1} parent=11 // pred_check
          %p434 = pneg %p261
        $region50: #{single_chan_expert_forward.1} parent=11 // pred_check_branch
          %436 = sbr.rel (%p434) target = $region52
        $region51: #{single_chan_expert_forward.1} parent=11 // pred_region
          _
        $region52: #{single_chan_expert_forward.1} parent=11 // pred_fallthru
          _
        // Predicated region
        $region53: #{single_chan_expert_forward.1} parent=11 // pred_check
          %p437 = pneg %p282
        $region54: #{single_chan_expert_forward.1} parent=11 // pred_check_branch
          %439 = sbr.rel (%p437) target = $region56
        $region55: #{single_chan_expert_forward.1} parent=11 // pred_region
          _
        $region56: #{single_chan_expert_forward.1} parent=11 // pred_fallthru
          _
        // Predicated region
        $region57: #{single_chan_expert_forward.1} parent=11 // pred_check
          %p440 = pneg %p303
        $region58: #{single_chan_expert_forward.1} parent=11 // pred_check_branch
          %442 = sbr.rel (%p440) target = $region60
        $region59: #{single_chan_expert_forward.1} parent=11 // pred_region
          _
        $region60: #{single_chan_expert_forward.1} parent=11 // pred_fallthru
          _
        // Predicated region
        $region61: #{single_chan_expert_forward.1} parent=11 // pred_check
          %p443 = pneg %p324
        $region62: #{single_chan_expert_forward.1} parent=11 // pred_check_branch
          %445 = sbr.rel (%p443) target = $region64
        $region63: #{single_chan_expert_forward.1} parent=11 // pred_region
          _
        $region64: #{single_chan_expert_forward.1} parent=11 // pred_fallthru
          _
        // Predicated region
        $region65: #{single_chan_expert_forward.1} parent=11 // pred_check
          %p446 = pneg %p345
        $region66: #{single_chan_expert_forward.1} parent=11 // pred_check_branch
          %448 = sbr.rel (%p446) target = $region68
        $region67: #{single_chan_expert_forward.1} parent=11 // pred_region
          _
        $region68: #{single_chan_expert_forward.1} parent=11 // pred_fallthru
          _
        // Predicated region
        $region69: #{single_chan_expert_forward.1} parent=11 // pred_check
          %p449 = pneg %p366
        $region70: #{single_chan_expert_forward.1} parent=11 // pred_check_branch
          %451 = sbr.rel (%p449) target = $region72
        $region71: #{single_chan_expert_forward.1} parent=11 // pred_region
          _
        $region72: #{single_chan_expert_forward.1} parent=11 // pred_fallthru
          _
      $region12: #{single_chan_expert_forward.1} parent=5 // pred_fallthru
        _
      %p452 = scmp.lt.s32.totalorder %s25, 2
      // Predicated region
      $region73: #{single_chan_expert_forward.1} parent=5 // pred_check
        %p453 = pneg %p452
      $region74: #{single_chan_expert_forward.1} parent=5 // pred_check_branch
        %455 = sbr.rel (%p453) target = $region76
      $region75: #{single_chan_expert_forward.1} parent=5 // pred_region
        // Predicated region
        $region77: #{single_chan_expert_forward.1} parent=75 // pred_check
          %p456 = pneg %p45
        $region78: #{single_chan_expert_forward.1} parent=75 // pred_check_branch
          %458 = sbr.rel (%p456) target = $region80
        $region79: #{single_chan_expert_forward.1} parent=75 // pred_region
          %s459 = smul.u32 81, %s25
          %p460 = scmp.lt.s32.totalorder %s459, 161
          %s461 = scalar_select %p460, %s459, 161
          %s462 = smul.addr %s461, 8
          %s463 = scalar_lea.vmem %s0, %s462
          %s464 = smul.u32 81, %s25
        $region80: #{single_chan_expert_forward.1} parent=75 // pred_fallthru
          _
      $region76: #{single_chan_expert_forward.1} parent=5 // pred_fallthru
        _
      %p465 = scmp.le.s32.totalorder 1, %s25
      %p466 = scmp.lt.s32.totalorder %s25, 3
      %p467 = pnand %p465, %p466
      %p468 = pneg %p467
      // Predicated region
      $region81: #{single_chan_expert_forward.1} parent=5 // pred_check
        _
      $region82: #{single_chan_expert_forward.1} parent=5 // pred_check_branch
        %470 = sbr.rel (%p467) target = $region84
      $region83: #{single_chan_expert_forward.1} parent=5 // pred_region
        %s471 = ssub.s32 %s25, 1
        %s472 = smul.u32 81, %s30
        %p473 = scmp.lt.s32.totalorder %s472, 161
        %s474 = scalar_select %p473, %s472, 161
        %s475 = smul.addr %s474, 8
        %s476 = scalar_lea.vmem %s0, %s475
        %p477 = pneg %p51
        %p478 = pneg %p48
        %p479 = pneg %p72
        %p480 = pneg %p69
        %p481 = pneg %p93
        %p482 = pneg %p90
        %p483 = pneg %p114
        %p484 = pneg %p111
        %p485 = pneg %p135
        %p486 = pneg %p132
        %p487 = pneg %p156
        %p488 = pneg %p153
        %p489 = pneg %p177
        %p490 = pneg %p174
        %p491 = pneg %p198
        %p492 = pneg %p195
        %p493 = pneg %p219
        %p494 = pneg %p216
        %p495 = pneg %p240
        %p496 = pneg %p237
        %p497 = pneg %p261
        %p498 = pneg %p258
        %p499 = pneg %p282
        %p500 = pneg %p279
        %p501 = pneg %p303
        %p502 = pneg %p300
        %p503 = pneg %p324
        %p504 = pneg %p321
        %p505 = pneg %p345
        %p506 = pneg %p342
        %p507 = pneg %p366
        %p508 = pneg %p363
        %p509 = pneg %p392
        %p510 = pneg %p389
        %s511 = sand.u32 %s379, 1
        %s512 = scalar_lea.sflag [#allocation7], %s511
        %s513 = sand.u32 %s379, 1
        %s514 = scalar_lea.vmem [#allocation6], %s513
        %s515 = smul.u32 81, %s30
        %p516 = scmp.lt.s32.totalorder %s515, 161
        %s517 = scalar_select %p516, %s515, 161
        %s518 = smul.addr %s517, 8
        %s519 = scalar_lea.vmem %s0, %s518
        %s520 = smul.u32 81, %s30
        %vm522 = vcmask 130048
        %523 = vst.msk [vmem:[#allocation2] sm:$0xff] %vm522, 0.0
        %524 = vst.msk [vmem:[#allocation2 + $0x8] sm:$0xff] %vm522, 0.0
        %525 = vst.msk [vmem:[#allocation2 + $0x10] sm:$0xff] %vm522, 0.0
        %526 = vst.msk [vmem:[#allocation2 + $0x18] sm:$0xff] %vm522, 0.0
        %527 = vst.msk [vmem:[#allocation2 + $0x20] sm:$0xff] %vm522, 0.0
        %528 = vst.msk [vmem:[#allocation2 + $0x28] sm:$0xff] %vm522, 0.0
        %529 = vst.msk [vmem:[#allocation2 + $0x30] sm:$0xff] %vm522, 0.0
        %530 = vst.msk [vmem:[#allocation2 + $0x38] sm:$0xff] %vm522, 0.0
        %531 = vst.msk [vmem:[#allocation2 + $0x40] sm:$0xff] %vm522, 0.0
        %532 = vst.msk [vmem:[#allocation2 + $0x48] sm:$0xff] %vm522, 0.0
        %533 = vst.msk [vmem:[#allocation2 + $0x50] sm:$0xff] %vm522, 0.0
        %534 = vst.msk [vmem:[#allocation2 + $0x58] sm:$0xff] %vm522, 0.0
        %535 = vst.msk [vmem:[#allocation2 + $0x60] sm:$0xff] %vm522, 0.0
        %536 = vst.msk [vmem:[#allocation2 + $0x68] sm:$0xff] %vm522, 0.0
        %537 = vst.msk [vmem:[#allocation2 + $0x70] sm:$0xff] %vm522, 0.0
        %538 = vst.msk [vmem:[#allocation2 + $0x78] sm:$0xff] %vm522, 0.0
        %539 = vst.msk [vmem:[#allocation2 + $0x80] sm:$0xff] %vm522, 0.0
        %540 = vst.msk [vmem:[#allocation2 + $0x88] sm:$0xff] %vm522, 0.0
        %541 = vst.msk [vmem:[#allocation2 + $0x90] sm:$0xff] %vm522, 0.0
        %542 = vst.msk [vmem:[#allocation2 + $0x98] sm:$0xff] %vm522, 0.0
        %543 = vst.msk [vmem:[#allocation2 + $0xa0] sm:$0xff] %vm522, 0.0
        %544 = vst.msk [vmem:[#allocation2 + $0xa8] sm:$0xff] %vm522, 0.0
        %545 = vst.msk [vmem:[#allocation2 + $0xb0] sm:$0xff] %vm522, 0.0
        %546 = vst.msk [vmem:[#allocation2 + $0xb8] sm:$0xff] %vm522, 0.0
        %547 = vst.msk [vmem:[#allocation2 + $0xc0] sm:$0xff] %vm522, 0.0
        %548 = vst.msk [vmem:[#allocation2 + $0xc8] sm:$0xff] %vm522, 0.0
        %549 = vst.msk [vmem:[#allocation2 + $0xd0] sm:$0xff] %vm522, 0.0
        %550 = vst.msk [vmem:[#allocation2 + $0xd8] sm:$0xff] %vm522, 0.0
        %551 = vst.msk [vmem:[#allocation2 + $0xe0] sm:$0xff] %vm522, 0.0
        %552 = vst.msk [vmem:[#allocation2 + $0xe8] sm:$0xff] %vm522, 0.0
        %553 = vst.msk [vmem:[#allocation2 + $0xf0] sm:$0xff] %vm522, 0.0
        %554 = vst.msk [vmem:[#allocation2 + $0xf8] sm:$0xff] %vm522, 0.0
        %555 = vst.msk [vmem:[#allocation2 + $0x100] sm:$0xff] %vm522, 0.0
        %556 = vst.msk [vmem:[#allocation2 + $0x108] sm:$0xff] %vm522, 0.0
        %557 = vst.msk [vmem:[#allocation2 + $0x110] sm:$0xff] %vm522, 0.0
        %558 = vst.msk [vmem:[#allocation2 + $0x118] sm:$0xff] %vm522, 0.0
        %559 = vst.msk [vmem:[#allocation2 + $0x120] sm:$0xff] %vm522, 0.0
        %560 = vst.msk [vmem:[#allocation2 + $0x128] sm:$0xff] %vm522, 0.0
        %561 = vst.msk [vmem:[#allocation2 + $0x130] sm:$0xff] %vm522, 0.0
        %562 = vst.msk [vmem:[#allocation2 + $0x138] sm:$0xff] %vm522, 0.0
        %563 = vst.msk [vmem:[#allocation2 + $0x140] sm:$0xff] %vm522, 0.0
        %564 = vst.msk [vmem:[#allocation2 + $0x148] sm:$0xff] %vm522, 0.0
        %565 = vst.msk [vmem:[#allocation2 + $0x150] sm:$0xff] %vm522, 0.0
        %566 = vst.msk [vmem:[#allocation2 + $0x158] sm:$0xff] %vm522, 0.0
        %567 = vst.msk [vmem:[#allocation2 + $0x160] sm:$0xff] %vm522, 0.0
        %568 = vst.msk [vmem:[#allocation2 + $0x168] sm:$0xff] %vm522, 0.0
        %569 = vst.msk [vmem:[#allocation2 + $0x170] sm:$0xff] %vm522, 0.0
        %570 = vst.msk [vmem:[#allocation2 + $0x178] sm:$0xff] %vm522, 0.0
        %571 = vst.msk [vmem:[#allocation2 + $0x180] sm:$0xff] %vm522, 0.0
        %572 = vst.msk [vmem:[#allocation2 + $0x188] sm:$0xff] %vm522, 0.0
        %573 = vst.msk [vmem:[#allocation2 + $0x190] sm:$0xff] %vm522, 0.0
        %574 = vst.msk [vmem:[#allocation2 + $0x198] sm:$0xff] %vm522, 0.0
        %575 = vst.msk [vmem:[#allocation2 + $0x1a0] sm:$0xff] %vm522, 0.0
        %576 = vst.msk [vmem:[#allocation2 + $0x1a8] sm:$0xff] %vm522, 0.0
        %577 = vst [vmem:[#allocation3] sm:$0xff] 0.0
        %578 = vst [vmem:[#allocation3 + $0x8] sm:$0xff] 0.0
        %579 = vst [vmem:[#allocation3 + $0x10] sm:$0xff] 0.0
        %580 = vst [vmem:[#allocation3 + $0x18] sm:$0xff] 0.0
        %581 = vst [vmem:[#allocation3 + $0x20] sm:$0xff] 0.0
        %582 = vst [vmem:[#allocation3 + $0x28] sm:$0xff] 0.0
        %583 = vst [vmem:[#allocation3 + $0x30] sm:$0xff] 0.0
        %584 = vst [vmem:[#allocation3 + $0x38] sm:$0xff] 0.0
        %585 = vst [vmem:[#allocation3 + $0x40] sm:$0xff] 0.0
        %586 = vst [vmem:[#allocation3 + $0x48] sm:$0xff] 0.0
        %587 = vst [vmem:[#allocation3 + $0x50] sm:$0xff] 0.0
        %588 = vst [vmem:[#allocation3 + $0x58] sm:$0xff] 0.0
        %589 = vst [vmem:[#allocation3 + $0x60] sm:$0xff] 0.0
        %590 = vst [vmem:[#allocation3 + $0x68] sm:$0xff] 0.0
        %591 = vst [vmem:[#allocation3 + $0x70] sm:$0xff] 0.0
        %592 = vst [vmem:[#allocation3 + $0x78] sm:$0xff] 0.0
        %593 = vst [vmem:[#allocation3 + $0x80] sm:$0xff] 0.0
        %594 = vst [vmem:[#allocation3 + $0x88] sm:$0xff] 0.0
        %595 = vst [vmem:[#allocation3 + $0x90] sm:$0xff] 0.0
        %596 = vst [vmem:[#allocation3 + $0x98] sm:$0xff] 0.0
        %597 = vst [vmem:[#allocation3 + $0xa0] sm:$0xff] 0.0
        %598 = vst [vmem:[#allocation3 + $0xa8] sm:$0xff] 0.0
        %599 = vst [vmem:[#allocation3 + $0xb0] sm:$0xff] 0.0
        %600 = vst [vmem:[#allocation3 + $0xb8] sm:$0xff] 0.0
        %601 = vst [vmem:[#allocation3 + $0xc0] sm:$0xff] 0.0
        %602 = vst [vmem:[#allocation3 + $0xc8] sm:$0xff] 0.0
        %603 = vst [vmem:[#allocation3 + $0xd0] sm:$0xff] 0.0
        %604 = vst [vmem:[#allocation3 + $0xd8] sm:$0xff] 0.0
        %605 = vst [vmem:[#allocation3 + $0xe0] sm:$0xff] 0.0
        %606 = vst [vmem:[#allocation3 + $0xe8] sm:$0xff] 0.0
        %607 = vst [vmem:[#allocation3 + $0xf0] sm:$0xff] 0.0
        %608 = vst [vmem:[#allocation3 + $0xf8] sm:$0xff] 0.0
        %609 = vst [vmem:[#allocation3 + $0x100] sm:$0xff] 0.0
        %610 = vst [vmem:[#allocation3 + $0x108] sm:$0xff] 0.0
        %611 = vst [vmem:[#allocation3 + $0x110] sm:$0xff] 0.0
        %612 = vst [vmem:[#allocation3 + $0x118] sm:$0xff] 0.0
        %613 = vst [vmem:[#allocation3 + $0x120] sm:$0xff] 0.0
        %614 = vst [vmem:[#allocation3 + $0x128] sm:$0xff] 0.0
        %615 = vst [vmem:[#allocation3 + $0x130] sm:$0xff] 0.0
        %616 = vst [vmem:[#allocation3 + $0x138] sm:$0xff] 0.0
        %617 = vst [vmem:[#allocation3 + $0x140] sm:$0xff] 0.0
        %618 = vst [vmem:[#allocation3 + $0x148] sm:$0xff] 0.0
        %619 = vst [vmem:[#allocation3 + $0x150] sm:$0xff] 0.0
        %620 = vst [vmem:[#allocation3 + $0x158] sm:$0xff] 0.0
        %621 = vst [vmem:[#allocation3 + $0x160] sm:$0xff] 0.0
        %622 = vst [vmem:[#allocation3 + $0x168] sm:$0xff] 0.0
        %623 = vst [vmem:[#allocation3 + $0x170] sm:$0xff] 0.0
        %624 = vst [vmem:[#allocation3 + $0x178] sm:$0xff] 0.0
        %625 = vst [vmem:[#allocation3 + $0x180] sm:$0xff] 0.0
        %626 = vst [vmem:[#allocation3 + $0x188] sm:$0xff] 0.0
        %627 = vst [vmem:[#allocation3 + $0x190] sm:$0xff] 0.0
        %628 = vst [vmem:[#allocation3 + $0x198] sm:$0xff] 0.0
        %629 = vst [vmem:[#allocation3 + $0x1a0] sm:$0xff] 0.0
        %630 = vst [vmem:[#allocation3 + $0x1a8] sm:$0xff] 0.0
        %631 = vst [vmem:[#allocation3 + $0x1b0] sm:$0xff] 0.0
        %632 = vst [vmem:[#allocation3 + $0x1b8] sm:$0xff] 0.0
        %633 = vst [vmem:[#allocation3 + $0x1c0] sm:$0xff] 0.0
        %634 = vst [vmem:[#allocation3 + $0x1c8] sm:$0xff] 0.0
        %635 = vst [vmem:[#allocation4] sm:$0xff] 0.0
        %636 = vst [vmem:[#allocation4 + $0x8] sm:$0xff] 0.0
        %637 = vst [vmem:[#allocation4 + $0x10] sm:$0xff] 0.0
        %638 = vst [vmem:[#allocation4 + $0x18] sm:$0xff] 0.0
        %639 = vst [vmem:[#allocation4 + $0x20] sm:$0xff] 0.0
        %640 = vst [vmem:[#allocation4 + $0x28] sm:$0xff] 0.0
        %641 = vst [vmem:[#allocation4 + $0x30] sm:$0xff] 0.0
        %642 = vst [vmem:[#allocation4 + $0x38] sm:$0xff] 0.0
        %643 = vst [vmem:[#allocation4 + $0x40] sm:$0xff] 0.0
        %644 = vst [vmem:[#allocation4 + $0x48] sm:$0xff] 0.0
        %645 = vst [vmem:[#allocation4 + $0x50] sm:$0xff] 0.0
        %646 = vst [vmem:[#allocation4 + $0x58] sm:$0xff] 0.0
        %647 = vst [vmem:[#allocation4 + $0x60] sm:$0xff] 0.0
        %648 = vst [vmem:[#allocation4 + $0x68] sm:$0xff] 0.0
        %649 = vst [vmem:[#allocation4 + $0x70] sm:$0xff] 0.0
        %650 = vst [vmem:[#allocation4 + $0x78] sm:$0xff] 0.0
        %651 = vst [vmem:[#allocation4 + $0x80] sm:$0xff] 0.0
        %652 = vst [vmem:[#allocation4 + $0x88] sm:$0xff] 0.0
        %653 = vst [vmem:[#allocation4 + $0x90] sm:$0xff] 0.0
        %654 = vst [vmem:[#allocation4 + $0x98] sm:$0xff] 0.0
        %655 = vst [vmem:[#allocation4 + $0xa0] sm:$0xff] 0.0
        %656 = vst [vmem:[#allocation4 + $0xa8] sm:$0xff] 0.0
        %657 = vst [vmem:[#allocation4 + $0xb0] sm:$0xff] 0.0
        %658 = vst [vmem:[#allocation4 + $0xb8] sm:$0xff] 0.0
        %659 = vst [vmem:[#allocation5] sm:$0xff] 0.0
        %660 = vst [vmem:[#allocation5 + $0x8] sm:$0xff] 0.0
        %661 = vst [vmem:[#allocation5 + $0x10] sm:$0xff] 0.0
        %662 = vst [vmem:[#allocation5 + $0x18] sm:$0xff] 0.0
        %663 = vst [vmem:[#allocation5 + $0x20] sm:$0xff] 0.0
        %664 = vst [vmem:[#allocation5 + $0x28] sm:$0xff] 0.0
        %665 = vst [vmem:[#allocation5 + $0x30] sm:$0xff] 0.0
        %666 = vst [vmem:[#allocation5 + $0x38] sm:$0xff] 0.0
        %667 = vst [vmem:[#allocation5 + $0x40] sm:$0xff] 0.0
        %668 = vst [vmem:[#allocation5 + $0x48] sm:$0xff] 0.0
        %669 = vst [vmem:[#allocation5 + $0x50] sm:$0xff] 0.0
        %670 = vst [vmem:[#allocation5 + $0x58] sm:$0xff] 0.0
        %v671 = vld [vmem:[%s519] sm:$0xff]
        %v672 = vld [vmem:[%s519 + $0x8] sm:$0xff]
        %v673 = vld [vmem:[%s519 + $0x10] sm:$0x3]
        %v674 = vld [vmem:[%s519 + $0x12] sm:$0xff]
        %v675 = vld [vmem:[%s519 + $0x1a] sm:$0xff]
        %v676 = vld [vmem:[%s519 + $0x22] sm:$0x3]
        %v677 = vmax.f32 %v671, %v674
        %v678 = vmax.f32 %v672, %v675
        %v679 = vmax.f32 %v673, %v676
        %vm680 = vcmask 15360
        %v681 = vsel %vm680, %v677, -inf
        %682 = vmax.xlane.f32.xlu0 %v681
        %v683 = vpop.xlane.xlu0 %682
        %v684 = vsel %vm680, %v678, -inf
        %685 = vmax.xlane.f32.xlu0 %v684
        %v686 = vpop.xlane.xlu0 %685
        %vm687 = vcmask 9216
        %v688 = vsel %vm687, %v679, -inf
        %689 = vmax.xlane.f32.xlu0 %v688
        %v690 = vpop.xlane.xlu0 %689
        %691 = vst.msk [vmem:[#allocation2 + $0x35] sm:$0xff] %vm522, %v683
        %692 = vst.msk [vmem:[#allocation2 + $0x3d] sm:$0xff] %vm522, %v686
        %vm693 = vcmask 123904
        %694 = vst.msk [vmem:[#allocation2 + $0x45] sm:$0x3] %vm693, %v690
        %v695 = vld [vmem:[%s519 + $0x24] sm:$0xff]
        %v696 = vld [vmem:[%s519 + $0x2c] sm:$0xff]
        %v697 = vld [vmem:[%s519 + $0x34] sm:$0x3]
        %v698 = vld [vmem:[%s519 + $0x36] sm:$0xff]
        %v699 = vld [vmem:[%s519 + $0x3e] sm:$0xff]
        %v700 = vld [vmem:[%s519 + $0x46] sm:$0x3]
        %v701 = vmax.f32 %v695, %v698
        %v702 = vmax.f32 %v696, %v699
        %v703 = vmax.f32 %v697, %v700
        %v704 = vsel %vm680, %v701, -inf
        %705 = vmax.xlane.f32.xlu0 %v704
        %v706 = vpop.xlane.xlu0 %705
        %v707 = vsel %vm680, %v702, -inf
        %708 = vmax.xlane.f32.xlu0 %v707
        %v709 = vpop.xlane.xlu0 %708
        %v710 = vsel %vm687, %v703, -inf
        %711 = vmax.xlane.f32.xlu0 %v710
        %v712 = vpop.xlane.xlu0 %711
        %713 = vst.msk [vmem:[#allocation2 + $0x49] sm:$0xff] %vm522, %v706
        %714 = vst.msk [vmem:[#allocation2 + $0x51] sm:$0xff] %vm522, %v709
        %715 = vst.msk [vmem:[#allocation2 + $0x59] sm:$0x3] %vm693, %v712
        %v716 = vld [vmem:[%s519 + $0x48] sm:$0xff]
        %v717 = vld [vmem:[%s519 + $0x50] sm:$0xff]
        %v718 = vld [vmem:[%s519 + $0x58] sm:$0x3]
        %v719 = vld [vmem:[%s519 + $0x5a] sm:$0xff]
        %v720 = vld [vmem:[%s519 + $0x62] sm:$0xff]
        %v721 = vld [vmem:[%s519 + $0x6a] sm:$0x3]
        %v722 = vmax.f32 %v716, %v719
        %v723 = vmax.f32 %v717, %v720
        %v724 = vmax.f32 %v718, %v721
        %v725 = vsel %vm680, %v722, -inf
        %726 = vmax.xlane.f32.xlu0 %v725
        %v727 = vpop.xlane.xlu0 %726
        %v728 = vsel %vm680, %v723, -inf
        %729 = vmax.xlane.f32.xlu0 %v728
        %v730 = vpop.xlane.xlu0 %729
        %v731 = vsel %vm687, %v724, -inf
        %732 = vmax.xlane.f32.xlu0 %v731
        %v733 = vpop.xlane.xlu0 %732
        %734 = vst.msk [vmem:[#allocation2 + $0x5d] sm:$0xff] %vm522, %v727
        %735 = vst.msk [vmem:[#allocation2 + $0x65] sm:$0xff] %vm522, %v730
        %736 = vst.msk [vmem:[#allocation2 + $0x6d] sm:$0x3] %vm693, %v733
        %v737 = vld [vmem:[%s519 + $0x6c] sm:$0xff]
        %v738 = vld [vmem:[%s519 + $0x74] sm:$0xff]
        %v739 = vld [vmem:[%s519 + $0x7c] sm:$0x3]
        %v740 = vld [vmem:[%s519 + $0x7e] sm:$0xff]
        %v741 = vld [vmem:[%s519 + $0x86] sm:$0xff]
        %v742 = vld [vmem:[%s519 + $0x8e] sm:$0x3]
        %v743 = vmax.f32 %v737, %v740
        %v744 = vmax.f32 %v738, %v741
        %v745 = vmax.f32 %v739, %v742
        %v746 = vsel %vm680, %v743, -inf
        %747 = vmax.xlane.f32.xlu0 %v746
        %v748 = vpop.xlane.xlu0 %747
        %v749 = vsel %vm680, %v744, -inf
        %750 = vmax.xlane.f32.xlu0 %v749
        %v751 = vpop.xlane.xlu0 %750
        %v752 = vsel %vm687, %v745, -inf
        %753 = vmax.xlane.f32.xlu0 %v752
        %v754 = vpop.xlane.xlu0 %753
        %755 = vst.msk [vmem:[#allocation2 + $0x71] sm:$0xff] %vm522, %v748
        %756 = vst.msk [vmem:[#allocation2 + $0x79] sm:$0xff] %vm522, %v751
        %757 = vst.msk [vmem:[#allocation2 + $0x81] sm:$0x3] %vm693, %v754
        %v758 = vld [vmem:[%s519 + $0x90] sm:$0xff]
        %v759 = vld [vmem:[%s519 + $0x98] sm:$0xff]
        %v760 = vld [vmem:[%s519 + $0xa0] sm:$0x3]
        %v761 = vld [vmem:[%s519 + $0xa2] sm:$0xff]
        %v762 = vld [vmem:[%s519 + $0xaa] sm:$0xff]
        %v763 = vld [vmem:[%s519 + $0xb2] sm:$0x3]
        %v764 = vmax.f32 %v758, %v761
        %v765 = vmax.f32 %v759, %v762
        %v766 = vmax.f32 %v760, %v763
        %v767 = vsel %vm680, %v764, -inf
        %768 = vmax.xlane.f32.xlu0 %v767
        %v769 = vpop.xlane.xlu0 %768
        %v770 = vsel %vm680, %v765, -inf
        %771 = vmax.xlane.f32.xlu0 %v770
        %v772 = vpop.xlane.xlu0 %771
        %v773 = vsel %vm687, %v766, -inf
        %774 = vmax.xlane.f32.xlu0 %v773
        %v775 = vpop.xlane.xlu0 %774
        %776 = vst.msk [vmem:[#allocation2 + $0x85] sm:$0xff] %vm522, %v769
        %777 = vst.msk [vmem:[#allocation2 + $0x8d] sm:$0xff] %vm522, %v772
        %778 = vst.msk [vmem:[#allocation2 + $0x95] sm:$0x3] %vm693, %v775
        %v779 = vld [vmem:[%s519 + $0xb4] sm:$0xff]
        %v780 = vld [vmem:[%s519 + $0xbc] sm:$0xff]
        %v781 = vld [vmem:[%s519 + $0xc4] sm:$0x3]
        %v782 = vld [vmem:[%s519 + $0xc6] sm:$0xff]
        %v783 = vld [vmem:[%s519 + $0xce] sm:$0xff]
        %v784 = vld [vmem:[%s519 + $0xd6] sm:$0x3]
        %v785 = vmax.f32 %v779, %v782
        %v786 = vmax.f32 %v780, %v783
        %v787 = vmax.f32 %v781, %v784
        %v788 = vsel %vm680, %v785, -inf
        %789 = vmax.xlane.f32.xlu0 %v788
        %v790 = vpop.xlane.xlu0 %789
        %v791 = vsel %vm680, %v786, -inf
        %792 = vmax.xlane.f32.xlu0 %v791
        %v793 = vpop.xlane.xlu0 %792
        %v794 = vsel %vm687, %v787, -inf
        %795 = vmax.xlane.f32.xlu0 %v794
        %v796 = vpop.xlane.xlu0 %795
        %797 = vst.msk [vmem:[#allocation2 + $0x99] sm:$0xff] %vm522, %v790
        %798 = vst.msk [vmem:[#allocation2 + $0xa1] sm:$0xff] %vm522, %v793
        %799 = vst.msk [vmem:[#allocation2 + $0xa9] sm:$0x3] %vm693, %v796
        %v800 = vld [vmem:[%s519 + $0xd8] sm:$0xff]
        %v801 = vld [vmem:[%s519 + $0xe0] sm:$0xff]
        %v802 = vld [vmem:[%s519 + $0xe8] sm:$0x3]
        %v803 = vld [vmem:[%s519 + $0xea] sm:$0xff]
        %v804 = vld [vmem:[%s519 + $0xf2] sm:$0xff]
        %v805 = vld [vmem:[%s519 + $0xfa] sm:$0x3]
        %v806 = vmax.f32 %v800, %v803
        %v807 = vmax.f32 %v801, %v804
        %v808 = vmax.f32 %v802, %v805
        %v809 = vsel %vm680, %v806, -inf
        %810 = vmax.xlane.f32.xlu0 %v809
        %v811 = vpop.xlane.xlu0 %810
        %v812 = vsel %vm680, %v807, -inf
        %813 = vmax.xlane.f32.xlu0 %v812
        %v814 = vpop.xlane.xlu0 %813
        %v815 = vsel %vm687, %v808, -inf
        %816 = vmax.xlane.f32.xlu0 %v815
        %v817 = vpop.xlane.xlu0 %816
        %818 = vst.msk [vmem:[#allocation2 + $0xad] sm:$0xff] %vm522, %v811
        %819 = vst.msk [vmem:[#allocation2 + $0xb5] sm:$0xff] %vm522, %v814
        %820 = vst.msk [vmem:[#allocation2 + $0xbd] sm:$0x3] %vm693, %v817
        %v821 = vld [vmem:[%s519 + $0xfc] sm:$0xff]
        %v822 = vld [vmem:[%s519 + $0x104] sm:$0xff]
        %v823 = vld [vmem:[%s519 + $0x10c] sm:$0x3]
        %v824 = vld [vmem:[%s519 + $0x10e] sm:$0xff]
        %v825 = vld [vmem:[%s519 + $0x116] sm:$0xff]
        %v826 = vld [vmem:[%s519 + $0x11e] sm:$0x3]
        %v827 = vmax.f32 %v821, %v824
        %v828 = vmax.f32 %v822, %v825
        %v829 = vmax.f32 %v823, %v826
        %v830 = vsel %vm680, %v827, -inf
        %831 = vmax.xlane.f32.xlu0 %v830
        %v832 = vpop.xlane.xlu0 %831
        %v833 = vsel %vm680, %v828, -inf
        %834 = vmax.xlane.f32.xlu0 %v833
        %v835 = vpop.xlane.xlu0 %834
        %v836 = vsel %vm687, %v829, -inf
        %837 = vmax.xlane.f32.xlu0 %v836
        %v838 = vpop.xlane.xlu0 %837
        %839 = vst.msk [vmem:[#allocation2 + $0xc1] sm:$0xff] %vm522, %v832
        %840 = vst.msk [vmem:[#allocation2 + $0xc9] sm:$0xff] %vm522, %v835
        %841 = vst.msk [vmem:[#allocation2 + $0xd1] sm:$0x3] %vm693, %v838
        %v842 = vld [vmem:[%s519 + $0x120] sm:$0xff]
        %v843 = vld [vmem:[%s519 + $0x128] sm:$0xff]
        %v844 = vld [vmem:[%s519 + $0x130] sm:$0x3]
        %v845 = vld [vmem:[%s519 + $0x132] sm:$0xff]
        %v846 = vld [vmem:[%s519 + $0x13a] sm:$0xff]
        %v847 = vld [vmem:[%s519 + $0x142] sm:$0x3]
        %v848 = vmax.f32 %v842, %v845
        %v849 = vmax.f32 %v843, %v846
        %v850 = vmax.f32 %v844, %v847
        %v851 = vsel %vm680, %v848, -inf
        %852 = vmax.xlane.f32.xlu0 %v851
        %v853 = vpop.xlane.xlu0 %852
        %v854 = vsel %vm680, %v849, -inf
        %855 = vmax.xlane.f32.xlu0 %v854
        %v856 = vpop.xlane.xlu0 %855
        %v857 = vsel %vm687, %v850, -inf
        %858 = vmax.xlane.f32.xlu0 %v857
        %v859 = vpop.xlane.xlu0 %858
        %860 = vst.msk [vmem:[#allocation2 + $0xd5] sm:$0xff] %vm522, %v853
        %861 = vst.msk [vmem:[#allocation2 + $0xdd] sm:$0xff] %vm522, %v856
        %862 = vst.msk [vmem:[#allocation2 + $0xe5] sm:$0x3] %vm693, %v859
        %v863 = vld [vmem:[%s519 + $0x144] sm:$0xff]
        %v864 = vld [vmem:[%s519 + $0x14c] sm:$0xff]
        %v865 = vld [vmem:[%s519 + $0x154] sm:$0x3]
        %v866 = vld [vmem:[%s519 + $0x156] sm:$0xff]
        %v867 = vld [vmem:[%s519 + $0x15e] sm:$0xff]
        %v868 = vld [vmem:[%s519 + $0x166] sm:$0x3]
        %v869 = vmax.f32 %v863, %v866
        %v870 = vmax.f32 %v864, %v867
        %v871 = vmax.f32 %v865, %v868
        %v872 = vsel %vm680, %v869, -inf
        %873 = vmax.xlane.f32.xlu0 %v872
        %v874 = vpop.xlane.xlu0 %873
        %v875 = vsel %vm680, %v870, -inf
        %876 = vmax.xlane.f32.xlu0 %v875
        %v877 = vpop.xlane.xlu0 %876
        %v878 = vsel %vm687, %v871, -inf
        %879 = vmax.xlane.f32.xlu0 %v878
        %v880 = vpop.xlane.xlu0 %879
        %881 = vst.msk [vmem:[#allocation2 + $0xe9] sm:$0xff] %vm522, %v874
        %882 = vst.msk [vmem:[#allocation2 + $0xf1] sm:$0xff] %vm522, %v877
        %883 = vst.msk [vmem:[#allocation2 + $0xf9] sm:$0x3] %vm693, %v880
        %v884 = vld [vmem:[%s519 + $0x168] sm:$0xff]
        %v885 = vld [vmem:[%s519 + $0x170] sm:$0xff]
        %v886 = vld [vmem:[%s519 + $0x178] sm:$0x3]
        %v887 = vld [vmem:[%s519 + $0x17a] sm:$0xff]
        %v888 = vld [vmem:[%s519 + $0x182] sm:$0xff]
        %v889 = vld [vmem:[%s519 + $0x18a] sm:$0x3]
        %v890 = vmax.f32 %v884, %v887
        %v891 = vmax.f32 %v885, %v888
        %v892 = vmax.f32 %v886, %v889
        %v893 = vsel %vm680, %v890, -inf
        %894 = vmax.xlane.f32.xlu0 %v893
        %v895 = vpop.xlane.xlu0 %894
        %v896 = vsel %vm680, %v891, -inf
        %897 = vmax.xlane.f32.xlu0 %v896
        %v898 = vpop.xlane.xlu0 %897
        %v899 = vsel %vm687, %v892, -inf
        %900 = vmax.xlane.f32.xlu0 %v899
        %v901 = vpop.xlane.xlu0 %900
        %902 = vst.msk [vmem:[#allocation2 + $0xfd] sm:$0xff] %vm522, %v895
        %903 = vst.msk [vmem:[#allocation2 + $0x105] sm:$0xff] %vm522, %v898
        %904 = vst.msk [vmem:[#allocation2 + $0x10d] sm:$0x3] %vm693, %v901
        %v905 = vld [vmem:[%s519 + $0x18c] sm:$0xff]
        %v906 = vld [vmem:[%s519 + $0x194] sm:$0xff]
        %v907 = vld [vmem:[%s519 + $0x19c] sm:$0x3]
        %v908 = vld [vmem:[%s519 + $0x19e] sm:$0xff]
        %v909 = vld [vmem:[%s519 + $0x1a6] sm:$0xff]
        %v910 = vld [vmem:[%s519 + $0x1ae] sm:$0x3]
        %v911 = vmax.f32 %v905, %v908
        %v912 = vmax.f32 %v906, %v909
        %v913 = vmax.f32 %v907, %v910
        %v914 = vsel %vm680, %v911, -inf
        %915 = vmax.xlane.f32.xlu0 %v914
        %v916 = vpop.xlane.xlu0 %915
        %v917 = vsel %vm680, %v912, -inf
        %918 = vmax.xlane.f32.xlu0 %v917
        %v919 = vpop.xlane.xlu0 %918
        %v920 = vsel %vm687, %v913, -inf
        %921 = vmax.xlane.f32.xlu0 %v920
        %v922 = vpop.xlane.xlu0 %921
        %923 = vst.msk [vmem:[#allocation2 + $0x111] sm:$0xff] %vm522, %v916
        %924 = vst.msk [vmem:[#allocation2 + $0x119] sm:$0xff] %vm522, %v919
        %925 = vst.msk [vmem:[#allocation2 + $0x121] sm:$0x3] %vm693, %v922
        %v926 = vld [vmem:[%s519 + $0x1b0] sm:$0xff]
        %v927 = vld [vmem:[%s519 + $0x1b8] sm:$0xff]
        %v928 = vld [vmem:[%s519 + $0x1c0] sm:$0x3]
        %v929 = vld [vmem:[%s519 + $0x1c2] sm:$0xff]
        %v930 = vld [vmem:[%s519 + $0x1ca] sm:$0xff]
        %v931 = vld [vmem:[%s519 + $0x1d2] sm:$0x3]
        %v932 = vmax.f32 %v926, %v929
        %v933 = vmax.f32 %v927, %v930
        %v934 = vmax.f32 %v928, %v931
        %v935 = vsel %vm680, %v932, -inf
        %936 = vmax.xlane.f32.xlu0 %v935
        %v937 = vpop.xlane.xlu0 %936
        %v938 = vsel %vm680, %v933, -inf
        %939 = vmax.xlane.f32.xlu0 %v938
        %v940 = vpop.xlane.xlu0 %939
        %v941 = vsel %vm687, %v934, -inf
        %942 = vmax.xlane.f32.xlu0 %v941
        %v943 = vpop.xlane.xlu0 %942
        %944 = vst.msk [vmem:[#allocation2 + $0x125] sm:$0xff] %vm522, %v937
        %945 = vst.msk [vmem:[#allocation2 + $0x12d] sm:$0xff] %vm522, %v940
        %946 = vst.msk [vmem:[#allocation2 + $0x135] sm:$0x3] %vm693, %v943
        %v947 = vld [vmem:[%s519 + $0x1d4] sm:$0xff]
        %v948 = vld [vmem:[%s519 + $0x1dc] sm:$0xff]
        %v949 = vld [vmem:[%s519 + $0x1e4] sm:$0x3]
        %v950 = vld [vmem:[%s519 + $0x1e6] sm:$0xff]
        %v951 = vld [vmem:[%s519 + $0x1ee] sm:$0xff]
        %v952 = vld [vmem:[%s519 + $0x1f6] sm:$0x3]
        %v953 = vmax.f32 %v947, %v950
        %v954 = vmax.f32 %v948, %v951
        %v955 = vmax.f32 %v949, %v952
        %v956 = vsel %vm680, %v953, -inf
        %957 = vmax.xlane.f32.xlu0 %v956
        %v958 = vpop.xlane.xlu0 %957
        %v959 = vsel %vm680, %v954, -inf
        %960 = vmax.xlane.f32.xlu0 %v959
        %v961 = vpop.xlane.xlu0 %960
        %v962 = vsel %vm687, %v955, -inf
        %963 = vmax.xlane.f32.xlu0 %v962
        %v964 = vpop.xlane.xlu0 %963
        %965 = vst.msk [vmem:[#allocation2 + $0x139] sm:$0xff] %vm522, %v958
        %966 = vst.msk [vmem:[#allocation2 + $0x141] sm:$0xff] %vm522, %v961
        %967 = vst.msk [vmem:[#allocation2 + $0x149] sm:$0x3] %vm693, %v964
        %v968 = vld [vmem:[%s519 + $0x1f8] sm:$0xff]
        %v969 = vld [vmem:[%s519 + $0x200] sm:$0xff]
        %v970 = vld [vmem:[%s519 + $0x208] sm:$0x3]
        %v971 = vld [vmem:[%s519 + $0x20a] sm:$0xff]
        %v972 = vld [vmem:[%s519 + $0x212] sm:$0xff]
        %v973 = vld [vmem:[%s519 + $0x21a] sm:$0x3]
        %v974 = vmax.f32 %v968, %v971
        %v975 = vmax.f32 %v969, %v972
        %v976 = vmax.f32 %v970, %v973
        %v977 = vsel %vm680, %v974, -inf
        %978 = vmax.xlane.f32.xlu0 %v977
        %v979 = vpop.xlane.xlu0 %978
        %v980 = vsel %vm680, %v975, -inf
        %981 = vmax.xlane.f32.xlu0 %v980
        %v982 = vpop.xlane.xlu0 %981
        %v983 = vsel %vm687, %v976, -inf
        %984 = vmax.xlane.f32.xlu0 %v983
        %v985 = vpop.xlane.xlu0 %984
        %986 = vst.msk [vmem:[#allocation2 + $0x14d] sm:$0xff] %vm522, %v979
        %987 = vst.msk [vmem:[#allocation2 + $0x155] sm:$0xff] %vm522, %v982
        %988 = vst.msk [vmem:[#allocation2 + $0x15d] sm:$0x3] %vm693, %v985
        %v989 = vld [vmem:[%s519 + $0x21c] sm:$0xff]
        %v990 = vld [vmem:[%s519 + $0x224] sm:$0xff]
        %v991 = vld [vmem:[%s519 + $0x22c] sm:$0x3]
        %v992 = vld [vmem:[%s519 + $0x22e] sm:$0xff]
        %v993 = vld [vmem:[%s519 + $0x236] sm:$0xff]
        %v994 = vld [vmem:[%s519 + $0x23e] sm:$0x3]
        %v995 = vmax.f32 %v989, %v992
        %v996 = vmax.f32 %v990, %v993
        %v997 = vmax.f32 %v991, %v994
        %v998 = vsel %vm680, %v995, -inf
        %999 = vmax.xlane.f32.xlu0 %v998
        %v1000 = vpop.xlane.xlu0 %999
        %v1001 = vsel %vm680, %v996, -inf
        %1002 = vmax.xlane.f32.xlu0 %v1001
        %v1003 = vpop.xlane.xlu0 %1002
        %v1004 = vsel %vm687, %v997, -inf
        %1005 = vmax.xlane.f32.xlu0 %v1004
        %v1006 = vpop.xlane.xlu0 %1005
        %1007 = vst.msk [vmem:[#allocation2 + $0x161] sm:$0xff] %vm522, %v1000
        %1008 = vst.msk [vmem:[#allocation2 + $0x169] sm:$0xff] %vm522, %v1003
        %1009 = vst.msk [vmem:[#allocation2 + $0x171] sm:$0x3] %vm693, %v1006
        %v1010 = vld [vmem:[%s519 + $0x240] sm:$0xff]
        %v1011 = vld [vmem:[%s519 + $0x248] sm:$0xff]
        %v1012 = vld [vmem:[%s519 + $0x250] sm:$0x3]
        %v1013 = vld [vmem:[%s519 + $0x252] sm:$0xff]
        %v1014 = vld [vmem:[%s519 + $0x25a] sm:$0xff]
        %v1015 = vld [vmem:[%s519 + $0x262] sm:$0x3]
        %v1016 = vmax.f32 %v1010, %v1013
        %v1017 = vmax.f32 %v1011, %v1014
        %v1018 = vmax.f32 %v1012, %v1015
        %v1019 = vsel %vm680, %v1016, -inf
        %1020 = vmax.xlane.f32.xlu0 %v1019
        %v1021 = vpop.xlane.xlu0 %1020
        %v1022 = vsel %vm680, %v1017, -inf
        %1023 = vmax.xlane.f32.xlu0 %v1022
        %v1024 = vpop.xlane.xlu0 %1023
        %v1025 = vsel %vm687, %v1018, -inf
        %1026 = vmax.xlane.f32.xlu0 %v1025
        %v1027 = vpop.xlane.xlu0 %1026
        %1028 = vst.msk [vmem:[#allocation2 + $0x175] sm:$0xff] %vm522, %v1021
        %1029 = vst.msk [vmem:[#allocation2 + $0x17d] sm:$0xff] %vm522, %v1024
        %1030 = vst.msk [vmem:[#allocation2 + $0x185] sm:$0x3] %vm693, %v1027
        %v1031 = vld [vmem:[%s519 + $0x264] sm:$0xff]
        %v1032 = vld [vmem:[%s519 + $0x26c] sm:$0xff]
        %v1033 = vld [vmem:[%s519 + $0x274] sm:$0x3]
        %v1034 = vld [vmem:[%s519 + $0x276] sm:$0xff]
        %v1035 = vld [vmem:[%s519 + $0x27e] sm:$0xff]
        %v1036 = vld [vmem:[%s519 + $0x286] sm:$0x3]
        %v1037 = vmax.f32 %v1031, %v1034
        %v1038 = vmax.f32 %v1032, %v1035
        %v1039 = vmax.f32 %v1033, %v1036
        %v1040 = vsel %vm680, %v1037, -inf
        %1041 = vmax.xlane.f32.xlu0 %v1040
        %v1042 = vpop.xlane.xlu0 %1041
        %v1043 = vsel %vm680, %v1038, -inf
        %1044 = vmax.xlane.f32.xlu0 %v1043
        %v1045 = vpop.xlane.xlu0 %1044
        %v1046 = vsel %vm687, %v1039, -inf
        %1047 = vmax.xlane.f32.xlu0 %v1046
        %v1048 = vpop.xlane.xlu0 %1047
        %1049 = vst.msk [vmem:[#allocation2 + $0x189] sm:$0xff] %vm522, %v1042
        %1050 = vst.msk [vmem:[#allocation2 + $0x191] sm:$0xff] %vm522, %v1045
        %1051 = vst.msk [vmem:[#allocation2 + $0x199] sm:$0x3] %vm693, %v1048
        %v1052 = vld [vmem:[#allocation2 + $0x20] sm:$0xff]
        %v1053 = vld [vmem:[#allocation2 + $0x28] sm:$0xff]
        %v1054 = vld [vmem:[#allocation2 + $0x30] sm:$0xff]
        %v1055 = vld [vmem:[#allocation2 + $0x38] sm:$0xff]
        %v1056 = vld [vmem:[#allocation2 + $0x40] sm:$0xff]
        %v1057 = vld [vmem:[#allocation2 + $0x48] sm:$0xff]
        %v1058 = vld [vmem:[#allocation2 + $0x50] sm:$0xff]
        %v1059 = vld [vmem:[#allocation2 + $0x58] sm:$0xff]
        %v1060 = vld [vmem:[#allocation2 + $0x60] sm:$0xff]
        %v1061 = vld [vmem:[#allocation2 + $0x68] sm:$0xff]
        %v1062 = vld [vmem:[#allocation2 + $0x70] sm:$0xff]
        %v1063 = vld [vmem:[#allocation2 + $0x78] sm:$0xff]
        %v1064 = vld [vmem:[#allocation2 + $0x80] sm:$0xff]
        %v1065 = vld [vmem:[#allocation2 + $0x88] sm:$0xff]
        %v1066 = vld [vmem:[#allocation2 + $0x90] sm:$0xff]
        %v1067 = vld [vmem:[#allocation2 + $0x98] sm:$0xff]
        %v1068 = vld [vmem:[#allocation2 + $0xa0] sm:$0xff]
        %v1069 = vld [vmem:[#allocation2 + $0xa8] sm:$0xff]
        %v1070 = vld [vmem:[#allocation2 + $0xb0] sm:$0xff]
        %v1071 = vld [vmem:[#allocation2 + $0xb8] sm:$0xff]
        %v1072 = vld [vmem:[#allocation2 + $0xc0] sm:$0xff]
        %v1073 = vld [vmem:[#allocation2 + $0xc8] sm:$0xff]
        %v1074 = vld [vmem:[#allocation2 + $0xd0] sm:$0xff]
        %v1075 = vld [vmem:[#allocation2 + $0xd8] sm:$0xff]
        %v1076 = vld [vmem:[#allocation2 + $0xe0] sm:$0xff]
        %v1077 = vld [vmem:[#allocation2 + $0xe8] sm:$0xff]
        %v1078 = vld [vmem:[#allocation2 + $0xf0] sm:$0xff]
        %v1079 = vld [vmem:[#allocation2 + $0xf8] sm:$0xff]
        %v1080 = vld [vmem:[#allocation2 + $0x100] sm:$0xff]
        %v1081 = vld [vmem:[#allocation2 + $0x108] sm:$0xff]
        %v1082 = vld [vmem:[#allocation2 + $0x110] sm:$0xff]
        %v1083 = vld [vmem:[#allocation2 + $0x118] sm:$0xff]
        %v1084 = vld [vmem:[#allocation2 + $0x120] sm:$0xff]
        %v1085 = vld [vmem:[#allocation2 + $0x128] sm:$0xff]
        %v1086 = vld [vmem:[#allocation2 + $0x130] sm:$0xff]
        %v1087 = vld [vmem:[#allocation2 + $0x138] sm:$0xff]
        %v1088 = vld [vmem:[#allocation2 + $0x140] sm:$0xff]
        %v1089 = vld [vmem:[#allocation2 + $0x148] sm:$0xff]
        %v1090 = vld [vmem:[#allocation2 + $0x150] sm:$0xff]
        %v1091 = vld [vmem:[#allocation2 + $0x158] sm:$0xff]
        %v1092 = vld [vmem:[#allocation2 + $0x160] sm:$0xff]
        %v1093 = vld [vmem:[#allocation2 + $0x168] sm:$0xff]
        %v1094 = vld [vmem:[#allocation2 + $0x170] sm:$0xff]
        %v1095 = vld [vmem:[#allocation2 + $0x178] sm:$0xff]
        %v1096 = vld [vmem:[#allocation2 + $0x180] sm:$0xff]
        %v1097 = vld [vmem:[#allocation2 + $0x188] sm:$0xff]
        %v1098 = vld [vmem:[#allocation2 + $0x190] sm:$0xff]
        %v1099 = vld [vmem:[#allocation2 + $0x198] sm:$0xff]
        %v1100 = vld [vmem:[#allocation2 + $0x1a0] sm:$0xff]
        %v1101 = vld [vmem:[#allocation2 + $0x1a8] sm:$0xff]
        %v1102 = vpack.c.bf16 %v1053, %v1052
        %v1103 = vpack.c.bf16 %v1055, %v1054
        %v1104 = vpack.c.bf16 %v1057, %v1056
        %v1105 = vpack.c.bf16 %v1059, %v1058
        %v1106 = vpack.c.bf16 %v1061, %v1060
        %v1107 = vpack.c.bf16 %v1063, %v1062
        %v1108 = vpack.c.bf16 %v1065, %v1064
        %v1109 = vpack.c.bf16 %v1067, %v1066
        %v1110 = vpack.c.bf16 %v1069, %v1068
        %v1111 = vpack.c.bf16 %v1071, %v1070
        %v1112 = vpack.c.bf16 %v1073, %v1072
        %v1113 = vpack.c.bf16 %v1075, %v1074
        %v1114 = vpack.c.bf16 %v1077, %v1076
        %v1115 = vpack.c.bf16 %v1079, %v1078
        %v1116 = vpack.c.bf16 %v1081, %v1080
        %v1117 = vpack.c.bf16 %v1083, %v1082
        %v1118 = vpack.c.bf16 %v1085, %v1084
        %v1119 = vpack.c.bf16 %v1087, %v1086
        %v1120 = vpack.c.bf16 %v1089, %v1088
        %v1121 = vpack.c.bf16 %v1091, %v1090
        %v1122 = vpack.c.bf16 %v1093, %v1092
        %v1123 = vpack.c.bf16 %v1095, %v1094
        %v1124 = vpack.c.bf16 %v1097, %v1096
        %v1125 = vpack.c.bf16 %v1099, %v1098
        %v1126 = vpack.c.bf16 %v1101, %v1100
        %v1127 = vld [vmem:[%s1] sm:$0xf]
        %v1128 = vld [vmem:[%s1 + $0x4] sm:$0xf]
        %v1131 = vunpack.c.l.b16 %v1127
        %v1132 = vunpack.c.l.b16 %v1128
        %v1133 = vpack.c.b16 %v1132, %v1131
        %v1136 = vsel %vm522, %v1102, 0
        %v1139 = vsel %vm522, %v1103, 0
        %v1142 = vsel %vm522, %v1104, 0
        %v1145 = vsel %vm522, %v1105, 0
        %v1148 = vsel %vm522, %v1106, 0
        %v1151 = vsel %vm522, %v1107, 0
        %v1154 = vsel %vm522, %v1108, 0
        %v1157 = vsel %vm522, %v1109, 0
        %v1160 = vsel %vm522, %v1110, 0
        %v1163 = vsel %vm522, %v1111, 0
        %v1166 = vsel %vm522, %v1112, 0
        %v1169 = vsel %vm522, %v1113, 0
        %v1172 = vsel %vm522, %v1114, 0
        %v1175 = vsel %vm522, %v1115, 0
        %v1178 = vsel %vm522, %v1116, 0
        %v1181 = vsel %vm522, %v1117, 0
        %v1184 = vsel %vm522, %v1118, 0
        %v1187 = vsel %vm522, %v1119, 0
        %v1190 = vsel %vm522, %v1120, 0
        %v1193 = vsel %vm522, %v1121, 0
        %v1196 = vsel %vm522, %v1122, 0
        %v1199 = vsel %vm522, %v1123, 0
        %v1202 = vsel %vm522, %v1124, 0
        %v1205 = vsel %vm522, %v1125, 0
        %v1208 = vsel %vm522, %v1126, 0
        %1210 = vmatprep.subr.bf16.mxu0 0
        %1211 = vmatpush1.bf16.msra.mxu0 %v1133
        %1212 = vmatprep.subr.bf16.mxu0 0
        %1213 = vmatpush1.bf16.msra.mxu0 0
        %1214 = vmatprep.subr.bf16.mxu0 0
        %1215 = vmatpush1.bf16.msra.mxu0 0
        %1216 = vmatprep.subr.bf16.mxu0 0
        %1217 = vmatpush1.bf16.msra.mxu0 0
        %1218 = vmatprep.subr.bf16.mxu0 0
        %1219 = vmatpush1.bf16.msra.mxu0 0
        %1220 = vmatprep.subr.bf16.mxu0 0
        %1221 = vmatpush1.bf16.msra.mxu0 0
        %1222 = vmatprep.subr.bf16.mxu0 0
        %1223 = vmatpush1.bf16.msra.mxu0 0
        %1224 = vmatprep.subr.bf16.mxu0 0
        %1225 = vmatpush1.bf16.msra.mxu0 0
        %1226 = vmatprep.subr.bf16.mxu0 0
        %1227 = vmatpush1.bf16.msra.mxu0 0
        %1228 = vmatprep.subr.bf16.mxu0 0
        %1229 = vmatpush1.bf16.msra.mxu0 0
        %1230 = vmatprep.subr.bf16.mxu0 0
        %1231 = vmatpush1.bf16.msra.mxu0 0
        %1232 = vmatprep.subr.bf16.mxu0 0
        %1233 = vmatpush1.bf16.msra.mxu0 0
        %1234 = vmatprep.subr.bf16.mxu0 0
        %1235 = vmatpush1.bf16.msra.mxu0 0
        %1236 = vmatprep.subr.bf16.mxu0 0
        %1237 = vmatpush1.bf16.msra.mxu0 0
        %1238 = vmatprep.subr.bf16.mxu0 0
        %1239 = vmatpush1.bf16.msra.mxu0 0
        %1240 = vmatprep.subr.bf16.mxu0 0
        %1241 = vmatpush1.bf16.msra.mxu0 0
        %1242 = vmatprep.mubr.bf16.mxu0 0
        %1243 = vmatmul.mubr.bf16.gmra.mrb[0].mxu0 %v1136
        %v1244 = vpop.f32.mrb[0].mxu0
        %v1245 = vadd.f32 0.0, %v1244
        %v1246 = vpop.f32.mrb[0].mxu0
        %v1247 = vpop.f32.mrb[0].mxu0
        %v1248 = vadd.f32 0.0, %v1247
        %v1249 = vpop.f32.mrb[0].mxu0
        %1250 = vmatprep.mubr.bf16.mxu0 0
        %1251 = vmatmul.mubr.bf16.gmra.mrb[0].mxu0 %v1139
        %v1252 = vpop.f32.mrb[0].mxu0
        %v1253 = vadd.f32 0.0, %v1252
        %v1254 = vpop.f32.mrb[0].mxu0
        %v1255 = vpop.f32.mrb[0].mxu0
        %v1256 = vadd.f32 0.0, %v1255
        %v1257 = vpop.f32.mrb[0].mxu0
        %1258 = vmatprep.mubr.bf16.mxu0 0
        %1259 = vmatmul.mubr.bf16.gmra.mrb[0].mxu0 %v1142
        %v1260 = vpop.f32.mrb[0].mxu0
        %v1261 = vadd.f32 0.0, %v1260
        %v1262 = vpop.f32.mrb[0].mxu0
        %v1263 = vpop.f32.mrb[0].mxu0
        %v1264 = vadd.f32 0.0, %v1263
        %v1265 = vpop.f32.mrb[0].mxu0
        %1266 = vmatprep.mubr.bf16.mxu0 0
        %1267 = vmatmul.mubr.bf16.gmra.mrb[0].mxu0 %v1145
        %v1268 = vpop.f32.mrb[0].mxu0
        %v1269 = vadd.f32 0.0, %v1268
        %v1270 = vpop.f32.mrb[0].mxu0
        %v1271 = vpop.f32.mrb[0].mxu0
        %v1272 = vadd.f32 0.0, %v1271
        %v1273 = vpop.f32.mrb[0].mxu0
        %1274 = vmatprep.mubr.bf16.mxu0 0
        %1275 = vmatmul.mubr.bf16.gmra.mrb[0].mxu0 %v1148
        %v1276 = vpop.f32.mrb[0].mxu0
        %v1277 = vadd.f32 0.0, %v1276
        %v1278 = vpop.f32.mrb[0].mxu0
        %v1279 = vpop.f32.mrb[0].mxu0
        %v1280 = vadd.f32 0.0, %v1279
        %v1281 = vpop.f32.mrb[0].mxu0
        %1282 = vmatprep.mubr.bf16.mxu0 0
        %1283 = vmatmul.mubr.bf16.gmra.mrb[0].mxu0 %v1151
        %v1284 = vpop.f32.mrb[0].mxu0
        %v1285 = vadd.f32 0.0, %v1284
        %v1286 = vpop.f32.mrb[0].mxu0
        %v1287 = vpop.f32.mrb[0].mxu0
        %v1288 = vadd.f32 0.0, %v1287
        %v1289 = vpop.f32.mrb[0].mxu0
        %1290 = vmatprep.mubr.bf16.mxu0 0
        %1291 = vmatmul.mubr.bf16.gmra.mrb[0].mxu0 %v1154
        %v1292 = vpop.f32.mrb[0].mxu0
        %v1293 = vadd.f32 0.0, %v1292
        %v1294 = vpop.f32.mrb[0].mxu0
        %v1295 = vpop.f32.mrb[0].mxu0
        %v1296 = vadd.f32 0.0, %v1295
        %v1297 = vpop.f32.mrb[0].mxu0
        %1298 = vmatprep.mubr.bf16.mxu0 0
        %1299 = vmatmul.mubr.bf16.gmra.mrb[0].mxu0 %v1157
        %v1300 = vpop.f32.mrb[0].mxu0
        %v1301 = vadd.f32 0.0, %v1300
        %v1302 = vpop.f32.mrb[0].mxu0
        %v1303 = vpop.f32.mrb[0].mxu0
        %v1304 = vadd.f32 0.0, %v1303
        %v1305 = vpop.f32.mrb[0].mxu0
        %1306 = vmatprep.mubr.bf16.mxu0 0
        %1307 = vmatmul.mubr.bf16.gmra.mrb[0].mxu0 %v1160
        %v1308 = vpop.f32.mrb[0].mxu0
        %v1309 = vadd.f32 0.0, %v1308
        %v1310 = vpop.f32.mrb[0].mxu0
        %v1311 = vpop.f32.mrb[0].mxu0
        %v1312 = vadd.f32 0.0, %v1311
        %v1313 = vpop.f32.mrb[0].mxu0
        %1314 = vmatprep.mubr.bf16.mxu0 0
        %1315 = vmatmul.mubr.bf16.gmra.mrb[0].mxu0 %v1163
        %v1316 = vpop.f32.mrb[0].mxu0
        %v1317 = vadd.f32 0.0, %v1316
        %v1318 = vpop.f32.mrb[0].mxu0
        %v1319 = vpop.f32.mrb[0].mxu0
        %v1320 = vadd.f32 0.0, %v1319
        %v1321 = vpop.f32.mrb[0].mxu0
        %1322 = vmatprep.mubr.bf16.mxu0 0
        %1323 = vmatmul.mubr.bf16.gmra.mrb[0].mxu0 %v1166
        %v1324 = vpop.f32.mrb[0].mxu0
        %v1325 = vadd.f32 0.0, %v1324
        %v1326 = vpop.f32.mrb[0].mxu0
        %v1327 = vpop.f32.mrb[0].mxu0
        %v1328 = vadd.f32 0.0, %v1327
        %v1329 = vpop.f32.mrb[0].mxu0
        %1330 = vmatprep.mubr.bf16.mxu0 0
        %1331 = vmatmul.mubr.bf16.gmra.mrb[0].mxu0 %v1169
        %v1332 = vpop.f32.mrb[0].mxu0
        %v1333 = vadd.f32 0.0, %v1332
        %v1334 = vpop.f32.mrb[0].mxu0
        %v1335 = vpop.f32.mrb[0].mxu0
        %v1336 = vadd.f32 0.0, %v1335
        %v1337 = vpop.f32.mrb[0].mxu0
        %1338 = vmatprep.mubr.bf16.mxu0 0
        %1339 = vmatmul.mubr.bf16.gmra.mrb[0].mxu0 %v1172
        %v1340 = vpop.f32.mrb[0].mxu0
        %v1341 = vadd.f32 0.0, %v1340
        %v1342 = vpop.f32.mrb[0].mxu0
        %v1343 = vpop.f32.mrb[0].mxu0
        %v1344 = vadd.f32 0.0, %v1343
        %v1345 = vpop.f32.mrb[0].mxu0
        %1346 = vmatprep.mubr.bf16.mxu0 0
        %1347 = vmatmul.mubr.bf16.gmra.mrb[0].mxu0 %v1175
        %v1348 = vpop.f32.mrb[0].mxu0
        %v1349 = vadd.f32 0.0, %v1348
        %v1350 = vpop.f32.mrb[0].mxu0
        %v1351 = vpop.f32.mrb[0].mxu0
        %v1352 = vadd.f32 0.0, %v1351
        %v1353 = vpop.f32.mrb[0].mxu0
        %1354 = vmatprep.mubr.bf16.mxu0 0
        %1355 = vmatmul.mubr.bf16.gmra.mrb[0].mxu0 %v1178
        %v1356 = vpop.f32.mrb[0].mxu0
        %v1357 = vadd.f32 0.0, %v1356
        %v1358 = vpop.f32.mrb[0].mxu0
        %v1359 = vpop.f32.mrb[0].mxu0
        %v1360 = vadd.f32 0.0, %v1359
        %v1361 = vpop.f32.mrb[0].mxu0
        %1362 = vmatprep.mubr.bf16.mxu0 0
        %1363 = vmatmul.mubr.bf16.gmra.mrb[0].mxu0 %v1181
        %v1364 = vpop.f32.mrb[0].mxu0
        %v1365 = vadd.f32 0.0, %v1364
        %v1366 = vpop.f32.mrb[0].mxu0
        %v1367 = vpop.f32.mrb[0].mxu0
        %v1368 = vadd.f32 0.0, %v1367
        %v1369 = vpop.f32.mrb[0].mxu0
        %1370 = vmatprep.mubr.bf16.mxu0 0
        %1371 = vmatmul.mubr.bf16.gmra.mrb[0].mxu0 %v1184
        %v1372 = vpop.f32.mrb[0].mxu0
        %v1373 = vadd.f32 0.0, %v1372
        %v1374 = vpop.f32.mrb[0].mxu0
        %v1375 = vpop.f32.mrb[0].mxu0
        %v1376 = vadd.f32 0.0, %v1375
        %v1377 = vpop.f32.mrb[0].mxu0
        %1378 = vmatprep.mubr.bf16.mxu0 0
        %1379 = vmatmul.mubr.bf16.gmra.mrb[0].mxu0 %v1187
        %v1380 = vpop.f32.mrb[0].mxu0
        %v1381 = vadd.f32 0.0, %v1380
        %v1382 = vpop.f32.mrb[0].mxu0
        %v1383 = vpop.f32.mrb[0].mxu0
        %v1384 = vadd.f32 0.0, %v1383
        %v1385 = vpop.f32.mrb[0].mxu0
        %1386 = vmatprep.mubr.bf16.mxu0 0
        %1387 = vmatmul.mubr.bf16.gmra.mrb[0].mxu0 %v1190
        %v1388 = vpop.f32.mrb[0].mxu0
        %v1389 = vadd.f32 0.0, %v1388
        %v1390 = vpop.f32.mrb[0].mxu0
        %v1391 = vpop.f32.mrb[0].mxu0
        %v1392 = vadd.f32 0.0, %v1391
        %v1393 = vpop.f32.mrb[0].mxu0
        %1394 = vmatprep.mubr.bf16.mxu0 0
        %1395 = vmatmul.mubr.bf16.gmra.mrb[0].mxu0 %v1193
        %v1396 = vpop.f32.mrb[0].mxu0
        %v1397 = vadd.f32 0.0, %v1396
        %v1398 = vpop.f32.mrb[0].mxu0
        %v1399 = vpop.f32.mrb[0].mxu0
        %v1400 = vadd.f32 0.0, %v1399
        %v1401 = vpop.f32.mrb[0].mxu0
        %1402 = vmatprep.mubr.bf16.mxu0 0
        %1403 = vmatmul.mubr.bf16.gmra.mrb[0].mxu0 %v1196
        %v1404 = vpop.f32.mrb[0].mxu0
        %v1405 = vadd.f32 0.0, %v1404
        %v1406 = vpop.f32.mrb[0].mxu0
        %v1407 = vpop.f32.mrb[0].mxu0
        %v1408 = vadd.f32 0.0, %v1407
        %v1409 = vpop.f32.mrb[0].mxu0
        %1410 = vmatprep.mubr.bf16.mxu0 0
        %1411 = vmatmul.mubr.bf16.gmra.mrb[0].mxu0 %v1199
        %v1412 = vpop.f32.mrb[0].mxu0
        %v1413 = vadd.f32 0.0, %v1412
        %v1414 = vpop.f32.mrb[0].mxu0
        %v1415 = vpop.f32.mrb[0].mxu0
        %v1416 = vadd.f32 0.0, %v1415
        %v1417 = vpop.f32.mrb[0].mxu0
        %1418 = vmatprep.mubr.bf16.mxu0 0
        %1419 = vmatmul.mubr.bf16.gmra.mrb[0].mxu0 %v1202
        %v1420 = vpop.f32.mrb[0].mxu0
        %v1421 = vadd.f32 0.0, %v1420
        %v1422 = vpop.f32.mrb[0].mxu0
        %v1423 = vpop.f32.mrb[0].mxu0
        %v1424 = vadd.f32 0.0, %v1423
        %v1425 = vpop.f32.mrb[0].mxu0
        %1426 = vmatprep.mubr.bf16.mxu0 0
        %1427 = vmatmul.mubr.bf16.gmra.mrb[0].mxu0 %v1205
        %v1428 = vpop.f32.mrb[0].mxu0
        %v1429 = vadd.f32 0.0, %v1428
        %v1430 = vpop.f32.mrb[0].mxu0
        %v1431 = vpop.f32.mrb[0].mxu0
        %v1432 = vadd.f32 0.0, %v1431
        %v1433 = vpop.f32.mrb[0].mxu0
        %1434 = vmatprep.mubr.bf16.mxu0 0
        %1435 = vmatmul.mubr.bf16.gmra.mrb[0].mxu0 %v1208
        %v1436 = vpop.f32.mrb[0].mxu0
        %v1437 = vadd.f32 0.0, %v1436
        %v1438 = vpop.f32.mrb[0].mxu0
        %v1439 = vpop.f32.mrb[0].mxu0
        %v1440 = vadd.f32 0.0, %v1439
        %v1441 = vpop.f32.mrb[0].mxu0
        %1442 = vdwg.mxu0
        %v1443 = vld [vmem:[#allocation3 + $0x35] sm:$0xff]
        %v1444 = vld [vmem:[#allocation3 + $0x3d] sm:$0xff]
        %v1445 = vld [vmem:[#allocation3 + $0x45] sm:$0xff]
        %v1446 = vld [vmem:[#allocation3 + $0x4d] sm:$0xff]
        %v1447 = vld [vmem:[#allocation3 + $0x55] sm:$0xff]
        %v1448 = vld [vmem:[#allocation3 + $0x5d] sm:$0xff]
        %v1449 = vld [vmem:[#allocation3 + $0x65] sm:$0xff]
        %v1450 = vld [vmem:[#allocation3 + $0x6d] sm:$0xff]
        %v1451 = vld [vmem:[#allocation3 + $0x75] sm:$0xff]
        %v1452 = vld [vmem:[#allocation3 + $0x7d] sm:$0xff]
        %v1453 = vld [vmem:[#allocation3 + $0x85] sm:$0xff]
        %v1454 = vld [vmem:[#allocation3 + $0x8d] sm:$0xff]
        %v1455 = vld [vmem:[#allocation3 + $0x95] sm:$0xff]
        %v1456 = vld [vmem:[#allocation3 + $0x9d] sm:$0xff]
        %v1457 = vld [vmem:[#allocation3 + $0xa5] sm:$0xff]
        %v1458 = vld [vmem:[#allocation3 + $0xad] sm:$0xff]
        %v1459 = vld [vmem:[#allocation3 + $0xb5] sm:$0xff]
        %v1460 = vld [vmem:[#allocation3 + $0xbd] sm:$0xff]
        %v1461 = vld [vmem:[#allocation3 + $0xc5] sm:$0xff]
        %v1462 = vld [vmem:[#allocation3 + $0xcd] sm:$0xff]
        %v1463 = vld [vmem:[#allocation3 + $0xd5] sm:$0xff]
        %v1464 = vld [vmem:[#allocation3 + $0xdd] sm:$0xff]
        %v1465 = vld [vmem:[#allocation3 + $0xe5] sm:$0xff]
        %v1466 = vld [vmem:[#allocation3 + $0xed] sm:$0xff]
        %v1467 = vld [vmem:[#allocation3 + $0xf5] sm:$0xff]
        %v1468 = vld [vmem:[#allocation3 + $0xfd] sm:$0xff]
        %v1469 = vld [vmem:[#allocation3 + $0x105] sm:$0xff]
        %v1470 = vld [vmem:[#allocation3 + $0x10d] sm:$0xff]
        %v1471 = vld [vmem:[#allocation3 + $0x115] sm:$0xff]
        %v1472 = vld [vmem:[#allocation3 + $0x11d] sm:$0xff]
        %v1473 = vld [vmem:[#allocation3 + $0x125] sm:$0xff]
        %v1474 = vld [vmem:[#allocation3 + $0x12d] sm:$0xff]
        %v1475 = vld [vmem:[#allocation3 + $0x135] sm:$0xff]
        %v1476 = vld [vmem:[#allocation3 + $0x13d] sm:$0xff]
        %v1477 = vld [vmem:[#allocation3 + $0x145] sm:$0xff]
        %v1478 = vld [vmem:[#allocation3 + $0x14d] sm:$0xff]
        %v1479 = vld [vmem:[#allocation3 + $0x155] sm:$0xff]
        %v1480 = vld [vmem:[#allocation3 + $0x15d] sm:$0xff]
        %v1481 = vld [vmem:[#allocation3 + $0x165] sm:$0xff]
        %v1482 = vld [vmem:[#allocation3 + $0x16d] sm:$0xff]
        %v1483 = vld [vmem:[#allocation3 + $0x175] sm:$0xff]
        %v1484 = vld [vmem:[#allocation3 + $0x17d] sm:$0xff]
        %v1485 = vld [vmem:[#allocation3 + $0x185] sm:$0xff]
        %v1486 = vld [vmem:[#allocation3 + $0x18d] sm:$0xff]
        %v1487 = vld [vmem:[#allocation3 + $0x195] sm:$0xff]
        %v1488 = vld [vmem:[#allocation3 + $0x19d] sm:$0xff]
        %v1489 = vld [vmem:[#allocation3 + $0x1a5] sm:$0xff]
        %v1490 = vld [vmem:[#allocation3 + $0x1ad] sm:$0xff]
        %v1491 = vld [vmem:[#allocation3 + $0x1b5] sm:$0xff]
        %v1492 = vld [vmem:[#allocation3 + $0x1bd] sm:$0xff]
        %v1493 = vadd.f32 %v1443, %v1245
        %v1494 = vadd.f32 %v1444, %v1248
        %v1495 = vadd.f32 %v1445, %v1253
        %v1496 = vadd.f32 %v1446, %v1256
        %v1497 = vadd.f32 %v1447, %v1261
        %v1498 = vadd.f32 %v1448, %v1264
        %v1499 = vadd.f32 %v1449, %v1269
        %v1500 = vadd.f32 %v1450, %v1272
        %v1501 = vadd.f32 %v1451, %v1277
        %v1502 = vadd.f32 %v1452, %v1280
        %v1503 = vadd.f32 %v1453, %v1285
        %v1504 = vadd.f32 %v1454, %v1288
        %v1505 = vadd.f32 %v1455, %v1293
        %v1506 = vadd.f32 %v1456, %v1296
        %v1507 = vadd.f32 %v1457, %v1301
        %v1508 = vadd.f32 %v1458, %v1304
        %v1509 = vadd.f32 %v1459, %v1309
        %v1510 = vadd.f32 %v1460, %v1312
        %v1511 = vadd.f32 %v1461, %v1317
        %v1512 = vadd.f32 %v1462, %v1320
        %v1513 = vadd.f32 %v1463, %v1325
        %v1514 = vadd.f32 %v1464, %v1328
        %v1515 = vadd.f32 %v1465, %v1333
        %v1516 = vadd.f32 %v1466, %v1336
        %v1517 = vadd.f32 %v1467, %v1341
        %v1518 = vadd.f32 %v1468, %v1344
        %v1519 = vadd.f32 %v1469, %v1349
        %v1520 = vadd.f32 %v1470, %v1352
        %v1521 = vadd.f32 %v1471, %v1357
        %v1522 = vadd.f32 %v1472, %v1360
        %v1523 = vadd.f32 %v1473, %v1365
        %v1524 = vadd.f32 %v1474, %v1368
        %v1525 = vadd.f32 %v1475, %v1373
        %v1526 = vadd.f32 %v1476, %v1376
        %v1527 = vadd.f32 %v1477, %v1381
        %v1528 = vadd.f32 %v1478, %v1384
        %v1529 = vadd.f32 %v1479, %v1389
        %v1530 = vadd.f32 %v1480, %v1392
        %v1531 = vadd.f32 %v1481, %v1397
        %v1532 = vadd.f32 %v1482, %v1400
        %v1533 = vadd.f32 %v1483, %v1405
        %v1534 = vadd.f32 %v1484, %v1408
        %v1535 = vadd.f32 %v1485, %v1413
        %v1536 = vadd.f32 %v1486, %v1416
        %v1537 = vadd.f32 %v1487, %v1421
        %v1538 = vadd.f32 %v1488, %v1424
        %v1539 = vadd.f32 %v1489, %v1429
        %v1540 = vadd.f32 %v1490, %v1432
        %v1541 = vadd.f32 %v1491, %v1437
        %v1542 = vadd.f32 %v1492, %v1440
        %1543 = vst [vmem:[#allocation3 + $0x35] sm:$0xff] %v1493
        %1544 = vst [vmem:[#allocation3 + $0x3d] sm:$0xff] %v1494
        %1545 = vst [vmem:[#allocation3 + $0x45] sm:$0xff] %v1495
        %1546 = vst [vmem:[#allocation3 + $0x4d] sm:$0xff] %v1496
        %1547 = vst [vmem:[#allocation3 + $0x55] sm:$0xff] %v1497
        %1548 = vst [vmem:[#allocation3 + $0x5d] sm:$0xff] %v1498
        %1549 = vst [vmem:[#allocation3 + $0x65] sm:$0xff] %v1499
        %1550 = vst [vmem:[#allocation3 + $0x6d] sm:$0xff] %v1500
        %1551 = vst [vmem:[#allocation3 + $0x75] sm:$0xff] %v1501
        %1552 = vst [vmem:[#allocation3 + $0x7d] sm:$0xff] %v1502
        %1553 = vst [vmem:[#allocation3 + $0x85] sm:$0xff] %v1503
        %1554 = vst [vmem:[#allocation3 + $0x8d] sm:$0xff] %v1504
        %1555 = vst [vmem:[#allocation3 + $0x95] sm:$0xff] %v1505
        %1556 = vst [vmem:[#allocation3 + $0x9d] sm:$0xff] %v1506
        %1557 = vst [vmem:[#allocation3 + $0xa5] sm:$0xff] %v1507
        %1558 = vst [vmem:[#allocation3 + $0xad] sm:$0xff] %v1508
        %1559 = vst [vmem:[#allocation3 + $0xb5] sm:$0xff] %v1509
        %1560 = vst [vmem:[#allocation3 + $0xbd] sm:$0xff] %v1510
        %1561 = vst [vmem:[#allocation3 + $0xc5] sm:$0xff] %v1511
        %1562 = vst [vmem:[#allocation3 + $0xcd] sm:$0xff] %v1512
        %1563 = vst [vmem:[#allocation3 + $0xd5] sm:$0xff] %v1513
        %1564 = vst [vmem:[#allocation3 + $0xdd] sm:$0xff] %v1514
        %1565 = vst [vmem:[#allocation3 + $0xe5] sm:$0xff] %v1515
        %1566 = vst [vmem:[#allocation3 + $0xed] sm:$0xff] %v1516
        %1567 = vst [vmem:[#allocation3 + $0xf5] sm:$0xff] %v1517
        %1568 = vst [vmem:[#allocation3 + $0xfd] sm:$0xff] %v1518
        %1569 = vst [vmem:[#allocation3 + $0x105] sm:$0xff] %v1519
        %1570 = vst [vmem:[#allocation3 + $0x10d] sm:$0xff] %v1520
        %1571 = vst [vmem:[#allocation3 + $0x115] sm:$0xff] %v1521
        %1572 = vst [vmem:[#allocation3 + $0x11d] sm:$0xff] %v1522
        %1573 = vst [vmem:[#allocation3 + $0x125] sm:$0xff] %v1523
        %1574 = vst [vmem:[#allocation3 + $0x12d] sm:$0xff] %v1524
        %1575 = vst [vmem:[#allocation3 + $0x135] sm:$0xff] %v1525
        %1576 = vst [vmem:[#allocation3 + $0x13d] sm:$0xff] %v1526
        %1577 = vst [vmem:[#allocation3 + $0x145] sm:$0xff] %v1527
        %1578 = vst [vmem:[#allocation3 + $0x14d] sm:$0xff] %v1528
        %1579 = vst [vmem:[#allocation3 + $0x155] sm:$0xff] %v1529
        %1580 = vst [vmem:[#allocation3 + $0x15d] sm:$0xff] %v1530
        %1581 = vst [vmem:[#allocation3 + $0x165] sm:$0xff] %v1531
        %1582 = vst [vmem:[#allocation3 + $0x16d] sm:$0xff] %v1532
        %1583 = vst [vmem:[#allocation3 + $0x175] sm:$0xff] %v1533
        %1584 = vst [vmem:[#allocation3 + $0x17d] sm:$0xff] %v1534
        %1585 = vst [vmem:[#allocation3 + $0x185] sm:$0xff] %v1535
        %1586 = vst [vmem:[#allocation3 + $0x18d] sm:$0xff] %v1536
        %1587 = vst [vmem:[#allocation3 + $0x195] sm:$0xff] %v1537
        %1588 = vst [vmem:[#allocation3 + $0x19d] sm:$0xff] %v1538
        %1589 = vst [vmem:[#allocation3 + $0x1a5] sm:$0xff] %v1539
        %1590 = vst [vmem:[#allocation3 + $0x1ad] sm:$0xff] %v1540
        %1591 = vst [vmem:[#allocation3 + $0x1b5] sm:$0xff] %v1541
        %1592 = vst [vmem:[#allocation3 + $0x1bd] sm:$0xff] %v1542
        %s1593 = scalar_lea.vmem %s1, 8
        %v1594 = vld [vmem:[%s1593] sm:$0xf]
        %v1595 = vld [vmem:[%s1593 + $0x4] sm:$0xf]
        %v1598 = vunpack.c.l.b16 %v1594
        %v1599 = vunpack.c.l.b16 %v1595
        %v1600 = vpack.c.b16 %v1599, %v1598
        %1602 = vmatprep.subr.bf16.mxu0 0
        %1603 = vmatpush1.bf16.msra.mxu0 %v1600
        %1604 = vmatprep.subr.bf16.mxu0 0
        %1605 = vmatpush1.bf16.msra.mxu0 0
        %1606 = vmatprep.subr.bf16.mxu0 0
        %1607 = vmatpush1.bf16.msra.mxu0 0
        %1608 = vmatprep.subr.bf16.mxu0 0
        %1609 = vmatpush1.bf16.msra.mxu0 0
        %1610 = vmatprep.subr.bf16.mxu0 0
        %1611 = vmatpush1.bf16.msra.mxu0 0
        %1612 = vmatprep.subr.bf16.mxu0 0
        %1613 = vmatpush1.bf16.msra.mxu0 0
        %1614 = vmatprep.subr.bf16.mxu0 0
        %1615 = vmatpush1.bf16.msra.mxu0 0
        %1616 = vmatprep.subr.bf16.mxu0 0
        %1617 = vmatpush1.bf16.msra.mxu0 0
        %1618 = vmatprep.subr.bf16.mxu0 0
        %1619 = vmatpush1.bf16.msra.mxu0 0
        %1620 = vmatprep.subr.bf16.mxu0 0
        %1621 = vmatpush1.bf16.msra.mxu0 0
        %1622 = vmatprep.subr.bf16.mxu0 0
        %1623 = vmatpush1.bf16.msra.mxu0 0
        %1624 = vmatprep.subr.bf16.mxu0 0
        %1625 = vmatpush1.bf16.msra.mxu0 0
        %1626 = vmatprep.subr.bf16.mxu0 0
        %1627 = vmatpush1.bf16.msra.mxu0 0
        %1628 = vmatprep.subr.bf16.mxu0 0
        %1629 = vmatpush1.bf16.msra.mxu0 0
        %1630 = vmatprep.subr.bf16.mxu0 0
        %1631 = vmatpush1.bf16.msra.mxu0 0
        %1632 = vmatprep.subr.bf16.mxu0 0
        %1633 = vmatpush1.bf16.msra.mxu0 0
        %1634 = vmatprep.mubr.bf16.mxu0 0
        %1635 = vmatmul.mubr.bf16.gmra.mrb[0].mxu0 %v1136
        %v1636 = vpop.f32.mrb[0].mxu0
        %v1637 = vadd.f32 0.0, %v1636
        %v1638 = vpop.f32.mrb[0].mxu0
        %v1639 = vpop.f32.mrb[0].mxu0
        %v1640 = vadd.f32 0.0, %v1639
        %v1641 = vpop.f32.mrb[0].mxu0
        %1642 = vmatprep.mubr.bf16.mxu0 0
        %1643 = vmatmul.mubr.bf16.gmra.mrb[0].mxu0 %v1139
        %v1644 = vpop.f32.mrb[0].mxu0
        %v1645 = vadd.f32 0.0, %v1644
        %v1646 = vpop.f32.mrb[0].mxu0
        %v1647 = vpop.f32.mrb[0].mxu0
        %v1648 = vadd.f32 0.0, %v1647
        %v1649 = vpop.f32.mrb[0].mxu0
        %1650 = vmatprep.mubr.bf16.mxu0 0
        %1651 = vmatmul.mubr.bf16.gmra.mrb[0].mxu0 %v1142
        %v1652 = vpop.f32.mrb[0].mxu0
        %v1653 = vadd.f32 0.0, %v1652
        %v1654 = vpop.f32.mrb[0].mxu0
        %v1655 = vpop.f32.mrb[0].mxu0
        %v1656 = vadd.f32 0.0, %v1655
        %v1657 = vpop.f32.mrb[0].mxu0
        %1658 = vmatprep.mubr.bf16.mxu0 0
        %1659 = vmatmul.mubr.bf16.gmra.mrb[0].mxu0 %v1145
        %v1660 = vpop.f32.mrb[0].mxu0
        %v1661 = vadd.f32 0.0, %v1660
        %v1662 = vpop.f32.mrb[0].mxu0
        %v1663 = vpop.f32.mrb[0].mxu0
        %v1664 = vadd.f32 0.0, %v1663
        %v1665 = vpop.f32.mrb[0].mxu0
        %1666 = vmatprep.mubr.bf16.mxu0 0
        %1667 = vmatmul.mubr.bf16.gmra.mrb[0].mxu0 %v1148
        %v1668 = vpop.f32.mrb[0].mxu0
        %v1669 = vadd.f32 0.0, %v1668
        %v1670 = vpop.f32.mrb[0].mxu0
        %v1671 = vpop.f32.mrb[0].mxu0
        %v1672 = vadd.f32 0.0, %v1671
        %v1673 = vpop.f32.mrb[0].mxu0
        %1674 = vmatprep.mubr.bf16.mxu0 0
        %1675 = vmatmul.mubr.bf16.gmra.mrb[0].mxu0 %v1151
        %v1676 = vpop.f32.mrb[0].mxu0
        %v1677 = vadd.f32 0.0, %v1676
        %v1678 = vpop.f32.mrb[0].mxu0
        %v1679 = vpop.f32.mrb[0].mxu0
        %v1680 = vadd.f32 0.0, %v1679
        %v1681 = vpop.f32.mrb[0].mxu0
        %1682 = vmatprep.mubr.bf16.mxu0 0
        %1683 = vmatmul.mubr.bf16.gmra.mrb[0].mxu0 %v1154
        %v1684 = vpop.f32.mrb[0].mxu0
        %v1685 = vadd.f32 0.0, %v1684
        %v1686 = vpop.f32.mrb[0].mxu0
        %v1687 = vpop.f32.mrb[0].mxu0
        %v1688 = vadd.f32 0.0, %v1687
        %v1689 = vpop.f32.mrb[0].mxu0
        %1690 = vmatprep.mubr.bf16.mxu0 0
        %1691 = vmatmul.mubr.bf16.gmra.mrb[0].mxu0 %v1157
        %v1692 = vpop.f32.mrb[0].mxu0
        %v1693 = vadd.f32 0.0, %v1692
        %v1694 = vpop.f32.mrb[0].mxu0
        %v1695 = vpop.f32.mrb[0].mxu0
        %v1696 = vadd.f32 0.0, %v1695
        %v1697 = vpop.f32.mrb[0].mxu0
        %1698 = vmatprep.mubr.bf16.mxu0 0
        %1699 = vmatmul.mubr.bf16.gmra.mrb[0].mxu0 %v1160
        %v1700 = vpop.f32.mrb[0].mxu0
        %v1701 = vadd.f32 0.0, %v1700
        %v1702 = vpop.f32.mrb[0].mxu0
        %v1703 = vpop.f32.mrb[0].mxu0
        %v1704 = vadd.f32 0.0, %v1703
        %v1705 = vpop.f32.mrb[0].mxu0
        %1706 = vmatprep.mubr.bf16.mxu0 0
        %1707 = vmatmul.mubr.bf16.gmra.mrb[0].mxu0 %v1163
        %v1708 = vpop.f32.mrb[0].mxu0
        %v1709 = vadd.f32 0.0, %v1708
        %v1710 = vpop.f32.mrb[0].mxu0
        %v1711 = vpop.f32.mrb[0].mxu0
        %v1712 = vadd.f32 0.0, %v1711
        %v1713 = vpop.f32.mrb[0].mxu0
        %1714 = vmatprep.mubr.bf16.mxu0 0
        %1715 = vmatmul.mubr.bf16.gmra.mrb[0].mxu0 %v1166
        %v1716 = vpop.f32.mrb[0].mxu0
        %v1717 = vadd.f32 0.0, %v1716
        %v1718 = vpop.f32.mrb[0].mxu0
        %v1719 = vpop.f32.mrb[0].mxu0
        %v1720 = vadd.f32 0.0, %v1719
        %v1721 = vpop.f32.mrb[0].mxu0
        %1722 = vmatprep.mubr.bf16.mxu0 0
        %1723 = vmatmul.mubr.bf16.gmra.mrb[0].mxu0 %v1169
        %v1724 = vpop.f32.mrb[0].mxu0
        %v1725 = vadd.f32 0.0, %v1724
        %v1726 = vpop.f32.mrb[0].mxu0
        %v1727 = vpop.f32.mrb[0].mxu0
        %v1728 = vadd.f32 0.0, %v1727
        %v1729 = vpop.f32.mrb[0].mxu0
        %1730 = vmatprep.mubr.bf16.mxu0 0
        %1731 = vmatmul.mubr.bf16.gmra.mrb[0].mxu0 %v1172
        %v1732 = vpop.f32.mrb[0].mxu0
        %v1733 = vadd.f32 0.0, %v1732
        %v1734 = vpop.f32.mrb[0].mxu0
        %v1735 = vpop.f32.mrb[0].mxu0
        %v1736 = vadd.f32 0.0, %v1735
        %v1737 = vpop.f32.mrb[0].mxu0
        %1738 = vmatprep.mubr.bf16.mxu0 0
        %1739 = vmatmul.mubr.bf16.gmra.mrb[0].mxu0 %v1175
        %v1740 = vpop.f32.mrb[0].mxu0
        %v1741 = vadd.f32 0.0, %v1740
        %v1742 = vpop.f32.mrb[0].mxu0
        %v1743 = vpop.f32.mrb[0].mxu0
        %v1744 = vadd.f32 0.0, %v1743
        %v1745 = vpop.f32.mrb[0].mxu0
        %1746 = vmatprep.mubr.bf16.mxu0 0
        %1747 = vmatmul.mubr.bf16.gmra.mrb[0].mxu0 %v1178
        %v1748 = vpop.f32.mrb[0].mxu0
        %v1749 = vadd.f32 0.0, %v1748
        %v1750 = vpop.f32.mrb[0].mxu0
        %v1751 = vpop.f32.mrb[0].mxu0
        %v1752 = vadd.f32 0.0, %v1751
        %v1753 = vpop.f32.mrb[0].mxu0
        %1754 = vmatprep.mubr.bf16.mxu0 0
        %1755 = vmatmul.mubr.bf16.gmra.mrb[0].mxu0 %v1181
        %v1756 = vpop.f32.mrb[0].mxu0
        %v1757 = vadd.f32 0.0, %v1756
        %v1758 = vpop.f32.mrb[0].mxu0
        %v1759 = vpop.f32.mrb[0].mxu0
        %v1760 = vadd.f32 0.0, %v1759
        %v1761 = vpop.f32.mrb[0].mxu0
        %1762 = vmatprep.mubr.bf16.mxu0 0
        %1763 = vmatmul.mubr.bf16.gmra.mrb[0].mxu0 %v1184
        %v1764 = vpop.f32.mrb[0].mxu0
        %v1765 = vadd.f32 0.0, %v1764
        %v1766 = vpop.f32.mrb[0].mxu0
        %v1767 = vpop.f32.mrb[0].mxu0
        %v1768 = vadd.f32 0.0, %v1767
        %v1769 = vpop.f32.mrb[0].mxu0
        %1770 = vmatprep.mubr.bf16.mxu0 0
        %1771 = vmatmul.mubr.bf16.gmra.mrb[0].mxu0 %v1187
        %v1772 = vpop.f32.mrb[0].mxu0
        %v1773 = vadd.f32 0.0, %v1772
        %v1774 = vpop.f32.mrb[0].mxu0
        %v1775 = vpop.f32.mrb[0].mxu0
        %v1776 = vadd.f32 0.0, %v1775
        %v1777 = vpop.f32.mrb[0].mxu0
        %1778 = vmatprep.mubr.bf16.mxu0 0
        %1779 = vmatmul.mubr.bf16.gmra.mrb[0].mxu0 %v1190
        %v1780 = vpop.f32.mrb[0].mxu0
        %v1781 = vadd.f32 0.0, %v1780
        %v1782 = vpop.f32.mrb[0].mxu0
        %v1783 = vpop.f32.mrb[0].mxu0
        %v1784 = vadd.f32 0.0, %v1783
        %v1785 = vpop.f32.mrb[0].mxu0
        %1786 = vmatprep.mubr.bf16.mxu0 0
        %1787 = vmatmul.mubr.bf16.gmra.mrb[0].mxu0 %v1193
        %v1788 = vpop.f32.mrb[0].mxu0
        %v1789 = vadd.f32 0.0, %v1788
        %v1790 = vpop.f32.mrb[0].mxu0
        %v1791 = vpop.f32.mrb[0].mxu0
        %v1792 = vadd.f32 0.0, %v1791
        %v1793 = vpop.f32.mrb[0].mxu0
        %1794 = vmatprep.mubr.bf16.mxu0 0
        %1795 = vmatmul.mubr.bf16.gmra.mrb[0].mxu0 %v1196
        %v1796 = vpop.f32.mrb[0].mxu0
        %v1797 = vadd.f32 0.0, %v1796
        %v1798 = vpop.f32.mrb[0].mxu0
        %v1799 = vpop.f32.mrb[0].mxu0
        %v1800 = vadd.f32 0.0, %v1799
        %v1801 = vpop.f32.mrb[0].mxu0
        %1802 = vmatprep.mubr.bf16.mxu0 0
        %1803 = vmatmul.mubr.bf16.gmra.mrb[0].mxu0 %v1199
        %v1804 = vpop.f32.mrb[0].mxu0
        %v1805 = vadd.f32 0.0, %v1804
        %v1806 = vpop.f32.mrb[0].mxu0
        %v1807 = vpop.f32.mrb[0].mxu0
        %v1808 = vadd.f32 0.0, %v1807
        %v1809 = vpop.f32.mrb[0].mxu0
        %1810 = vmatprep.mubr.bf16.mxu0 0
        %1811 = vmatmul.mubr.bf16.gmra.mrb[0].mxu0 %v1202
        %v1812 = vpop.f32.mrb[0].mxu0
        %v1813 = vadd.f32 0.0, %v1812
        %v1814 = vpop.f32.mrb[0].mxu0
        %v1815 = vpop.f32.mrb[0].mxu0
        %v1816 = vadd.f32 0.0, %v1815
        %v1817 = vpop.f32.mrb[0].mxu0
        %1818 = vmatprep.mubr.bf16.mxu0 0
        %1819 = vmatmul.mubr.bf16.gmra.mrb[0].mxu0 %v1205
        %v1820 = vpop.f32.mrb[0].mxu0
        %v1821 = vadd.f32 0.0, %v1820
        %v1822 = vpop.f32.mrb[0].mxu0
        %v1823 = vpop.f32.mrb[0].mxu0
        %v1824 = vadd.f32 0.0, %v1823
        %v1825 = vpop.f32.mrb[0].mxu0
        %1826 = vmatprep.mubr.bf16.mxu0 0
        %1827 = vmatmul.mubr.bf16.gmra.mrb[0].mxu0 %v1208
        %v1828 = vpop.f32.mrb[0].mxu0
        %v1829 = vadd.f32 0.0, %v1828
        %v1830 = vpop.f32.mrb[0].mxu0
        %v1831 = vpop.f32.mrb[0].mxu0
        %v1832 = vadd.f32 0.0, %v1831
        %v1833 = vpop.f32.mrb[0].mxu0
        %1834 = vdwg.mxu0
        %v1835 = vld [vmem:[#allocation3 + $0x34] sm:$0xff]
        %v1836 = vld [vmem:[#allocation3 + $0x3c] sm:$0xff]
        %v1837 = vld [vmem:[#allocation3 + $0x44] sm:$0xff]
        %v1838 = vld [vmem:[#allocation3 + $0x4c] sm:$0xff]
        %v1839 = vld [vmem:[#allocation3 + $0x54] sm:$0xff]
        %v1840 = vld [vmem:[#allocation3 + $0x5c] sm:$0xff]
        %v1841 = vld [vmem:[#allocation3 + $0x64] sm:$0xff]
        %v1842 = vld [vmem:[#allocation3 + $0x6c] sm:$0xff]
        %v1843 = vld [vmem:[#allocation3 + $0x74] sm:$0xff]
        %v1844 = vld [vmem:[#allocation3 + $0x7c] sm:$0xff]
        %v1845 = vld [vmem:[#allocation3 + $0x84] sm:$0xff]
        %v1846 = vld [vmem:[#allocation3 + $0x8c] sm:$0xff]
        %v1847 = vld [vmem:[#allocation3 + $0x94] sm:$0xff]
        %v1848 = vld [vmem:[#allocation3 + $0x9c] sm:$0xff]
        %v1849 = vld [vmem:[#allocation3 + $0xa4] sm:$0xff]
        %v1850 = vld [vmem:[#allocation3 + $0xac] sm:$0xff]
        %v1851 = vld [vmem:[#allocation3 + $0xb4] sm:$0xff]
        %v1852 = vld [vmem:[#allocation3 + $0xbc] sm:$0xff]
        %v1853 = vld [vmem:[#allocation3 + $0xc4] sm:$0xff]
        %v1854 = vld [vmem:[#allocation3 + $0xcc] sm:$0xff]
        %v1855 = vld [vmem:[#allocation3 + $0xd4] sm:$0xff]
        %v1856 = vld [vmem:[#allocation3 + $0xdc] sm:$0xff]
        %v1857 = vld [vmem:[#allocation3 + $0xe4] sm:$0xff]
        %v1858 = vld [vmem:[#allocation3 + $0xec] sm:$0xff]
        %v1859 = vld [vmem:[#allocation3 + $0xf4] sm:$0xff]
        %v1860 = vld [vmem:[#allocation3 + $0xfc] sm:$0xff]
        %v1861 = vld [vmem:[#allocation3 + $0x104] sm:$0xff]
        %v1862 = vld [vmem:[#allocation3 + $0x10c] sm:$0xff]
        %v1863 = vld [vmem:[#allocation3 + $0x114] sm:$0xff]
        %v1864 = vld [vmem:[#allocation3 + $0x11c] sm:$0xff]
        %v1865 = vld [vmem:[#allocation3 + $0x124] sm:$0xff]
        %v1866 = vld [vmem:[#allocation3 + $0x12c] sm:$0xff]
        %v1867 = vld [vmem:[#allocation3 + $0x134] sm:$0xff]
        %v1868 = vld [vmem:[#allocation3 + $0x13c] sm:$0xff]
        %v1869 = vld [vmem:[#allocation3 + $0x144] sm:$0xff]
        %v1870 = vld [vmem:[#allocation3 + $0x14c] sm:$0xff]
        %v1871 = vld [vmem:[#allocation3 + $0x154] sm:$0xff]
        %v1872 = vld [vmem:[#allocation3 + $0x15c] sm:$0xff]
        %v1873 = vld [vmem:[#allocation3 + $0x164] sm:$0xff]
        %v1874 = vld [vmem:[#allocation3 + $0x16c] sm:$0xff]
        %v1875 = vld [vmem:[#allocation3 + $0x174] sm:$0xff]
        %v1876 = vld [vmem:[#allocation3 + $0x17c] sm:$0xff]
        %v1877 = vld [vmem:[#allocation3 + $0x184] sm:$0xff]
        %v1878 = vld [vmem:[#allocation3 + $0x18c] sm:$0xff]
        %v1879 = vld [vmem:[#allocation3 + $0x194] sm:$0xff]
        %v1880 = vld [vmem:[#allocation3 + $0x19c] sm:$0xff]
        %v1881 = vld [vmem:[#allocation3 + $0x1a4] sm:$0xff]
        %v1882 = vld [vmem:[#allocation3 + $0x1ac] sm:$0xff]
        %v1883 = vld [vmem:[#allocation3 + $0x1b4] sm:$0xff]
        %v1884 = vld [vmem:[#allocation3 + $0x1bc] sm:$0xff]
        %v1885 = vadd.f32 %v1835, %v1637
        %v1886 = vadd.f32 %v1836, %v1640
        %v1887 = vadd.f32 %v1837, %v1645
        %v1888 = vadd.f32 %v1838, %v1648
        %v1889 = vadd.f32 %v1839, %v1653
        %v1890 = vadd.f32 %v1840, %v1656
        %v1891 = vadd.f32 %v1841, %v1661
        %v1892 = vadd.f32 %v1842, %v1664
        %v1893 = vadd.f32 %v1843, %v1669
        %v1894 = vadd.f32 %v1844, %v1672
        %v1895 = vadd.f32 %v1845, %v1677
        %v1896 = vadd.f32 %v1846, %v1680
        %v1897 = vadd.f32 %v1847, %v1685
        %v1898 = vadd.f32 %v1848, %v1688
        %v1899 = vadd.f32 %v1849, %v1693
        %v1900 = vadd.f32 %v1850, %v1696
        %v1901 = vadd.f32 %v1851, %v1701
        %v1902 = vadd.f32 %v1852, %v1704
        %v1903 = vadd.f32 %v1853, %v1709
        %v1904 = vadd.f32 %v1854, %v1712
        %v1905 = vadd.f32 %v1855, %v1717
        %v1906 = vadd.f32 %v1856, %v1720
        %v1907 = vadd.f32 %v1857, %v1725
        %v1908 = vadd.f32 %v1858, %v1728
        %v1909 = vadd.f32 %v1859, %v1733
        %v1910 = vadd.f32 %v1860, %v1736
        %v1911 = vadd.f32 %v1861, %v1741
        %v1912 = vadd.f32 %v1862, %v1744
        %v1913 = vadd.f32 %v1863, %v1749
        %v1914 = vadd.f32 %v1864, %v1752
        %v1915 = vadd.f32 %v1865, %v1757
        %v1916 = vadd.f32 %v1866, %v1760
        %v1917 = vadd.f32 %v1867, %v1765
        %v1918 = vadd.f32 %v1868, %v1768
        %v1919 = vadd.f32 %v1869, %v1773
        %v1920 = vadd.f32 %v1870, %v1776
        %v1921 = vadd.f32 %v1871, %v1781
        %v1922 = vadd.f32 %v1872, %v1784
        %v1923 = vadd.f32 %v1873, %v1789
        %v1924 = vadd.f32 %v1874, %v1792
        %v1925 = vadd.f32 %v1875, %v1797
        %v1926 = vadd.f32 %v1876, %v1800
        %v1927 = vadd.f32 %v1877, %v1805
        %v1928 = vadd.f32 %v1878, %v1808
        %v1929 = vadd.f32 %v1879, %v1813
        %v1930 = vadd.f32 %v1880, %v1816
        %v1931 = vadd.f32 %v1881, %v1821
        %v1932 = vadd.f32 %v1882, %v1824
        %v1933 = vadd.f32 %v1883, %v1829
        %v1934 = vadd.f32 %v1884, %v1832
        %1935 = vst [vmem:[#allocation3 + $0x34] sm:$0xff] %v1885
        %1936 = vst [vmem:[#allocation3 + $0x3c] sm:$0xff] %v1886
        %1937 = vst [vmem:[#allocation3 + $0x44] sm:$0xff] %v1887
        %1938 = vst [vmem:[#allocation3 + $0x4c] sm:$0xff] %v1888
        %1939 = vst [vmem:[#allocation3 + $0x54] sm:$0xff] %v1889
        %1940 = vst [vmem:[#allocation3 + $0x5c] sm:$0xff] %v1890
        %1941 = vst [vmem:[#allocation3 + $0x64] sm:$0xff] %v1891
        %1942 = vst [vmem:[#allocation3 + $0x6c] sm:$0xff] %v1892
        %1943 = vst [vmem:[#allocation3 + $0x74] sm:$0xff] %v1893
        %1944 = vst [vmem:[#allocation3 + $0x7c] sm:$0xff] %v1894
        %1945 = vst [vmem:[#allocation3 + $0x84] sm:$0xff] %v1895
        %1946 = vst [vmem:[#allocation3 + $0x8c] sm:$0xff] %v1896
        %1947 = vst [vmem:[#allocation3 + $0x94] sm:$0xff] %v1897
        %1948 = vst [vmem:[#allocation3 + $0x9c] sm:$0xff] %v1898
        %1949 = vst [vmem:[#allocation3 + $0xa4] sm:$0xff] %v1899
        %1950 = vst [vmem:[#allocation3 + $0xac] sm:$0xff] %v1900
        %1951 = vst [vmem:[#allocation3 + $0xb4] sm:$0xff] %v1901
        %1952 = vst [vmem:[#allocation3 + $0xbc] sm:$0xff] %v1902
        %1953 = vst [vmem:[#allocation3 + $0xc4] sm:$0xff] %v1903
        %1954 = vst [vmem:[#allocation3 + $0xcc] sm:$0xff] %v1904
        %1955 = vst [vmem:[#allocation3 + $0xd4] sm:$0xff] %v1905
        %1956 = vst [vmem:[#allocation3 + $0xdc] sm:$0xff] %v1906
        %1957 = vst [vmem:[#allocation3 + $0xe4] sm:$0xff] %v1907
        %1958 = vst [vmem:[#allocation3 + $0xec] sm:$0xff] %v1908
        %1959 = vst [vmem:[#allocation3 + $0xf4] sm:$0xff] %v1909
        %1960 = vst [vmem:[#allocation3 + $0xfc] sm:$0xff] %v1910
        %1961 = vst [vmem:[#allocation3 + $0x104] sm:$0xff] %v1911
        %1962 = vst [vmem:[#allocation3 + $0x10c] sm:$0xff] %v1912
        %1963 = vst [vmem:[#allocation3 + $0x114] sm:$0xff] %v1913
        %1964 = vst [vmem:[#allocation3 + $0x11c] sm:$0xff] %v1914
        %1965 = vst [vmem:[#allocation3 + $0x124] sm:$0xff] %v1915
        %1966 = vst [vmem:[#allocation3 + $0x12c] sm:$0xff] %v1916
        %1967 = vst [vmem:[#allocation3 + $0x134] sm:$0xff] %v1917
        %1968 = vst [vmem:[#allocation3 + $0x13c] sm:$0xff] %v1918
        %1969 = vst [vmem:[#allocation3 + $0x144] sm:$0xff] %v1919
        %1970 = vst [vmem:[#allocation3 + $0x14c] sm:$0xff] %v1920
        %1971 = vst [vmem:[#allocation3 + $0x154] sm:$0xff] %v1921
        %1972 = vst [vmem:[#allocation3 + $0x15c] sm:$0xff] %v1922
        %1973 = vst [vmem:[#allocation3 + $0x164] sm:$0xff] %v1923
        %1974 = vst [vmem:[#allocation3 + $0x16c] sm:$0xff] %v1924
        %1975 = vst [vmem:[#allocation3 + $0x174] sm:$0xff] %v1925
        %1976 = vst [vmem:[#allocation3 + $0x17c] sm:$0xff] %v1926
        %1977 = vst [vmem:[#allocation3 + $0x184] sm:$0xff] %v1927
        %1978 = vst [vmem:[#allocation3 + $0x18c] sm:$0xff] %v1928
        %1979 = vst [vmem:[#allocation3 + $0x194] sm:$0xff] %v1929
        %1980 = vst [vmem:[#allocation3 + $0x19c] sm:$0xff] %v1930
        %1981 = vst [vmem:[#allocation3 + $0x1a4] sm:$0xff] %v1931
        %1982 = vst [vmem:[#allocation3 + $0x1ac] sm:$0xff] %v1932
        %1983 = vst [vmem:[#allocation3 + $0x1b4] sm:$0xff] %v1933
        %1984 = vst [vmem:[#allocation3 + $0x1bc] sm:$0xff] %v1934
        %s1985 = scalar_lea.vmem %s1, 16
        %v1986 = vld [vmem:[%s1985] sm:$0xf]
        %v1987 = vld [vmem:[%s1985 + $0x4] sm:$0xf]
        %v1990 = vunpack.c.l.b16 %v1986
        %v1991 = vunpack.c.l.b16 %v1987
        %v1992 = vpack.c.b16 %v1991, %v1990
        %1994 = vmatprep.subr.bf16.mxu0 0
        %1995 = vmatpush1.bf16.msra.mxu0 %v1992
        %1996 = vmatprep.subr.bf16.mxu0 0
        %1997 = vmatpush1.bf16.msra.mxu0 0
        %1998 = vmatprep.subr.bf16.mxu0 0
        %1999 = vmatpush1.bf16.msra.mxu0 0
        %2000 = vmatprep.subr.bf16.mxu0 0
        %2001 = vmatpush1.bf16.msra.mxu0 0
        %2002 = vmatprep.subr.bf16.mxu0 0
        %2003 = vmatpush1.bf16.msra.mxu0 0
        %2004 = vmatprep.subr.bf16.mxu0 0
        %2005 = vmatpush1.bf16.msra.mxu0 0
        %2006 = vmatprep.subr.bf16.mxu0 0
        %2007 = vmatpush1.bf16.msra.mxu0 0
        %2008 = vmatprep.subr.bf16.mxu0 0
        %2009 = vmatpush1.bf16.msra.mxu0 0
        %2010 = vmatprep.subr.bf16.mxu0 0
        %2011 = vmatpush1.bf16.msra.mxu0 0
        %2012 = vmatprep.subr.bf16.mxu0 0
        %2013 = vmatpush1.bf16.msra.mxu0 0
        %2014 = vmatprep.subr.bf16.mxu0 0
        %2015 = vmatpush1.bf16.msra.mxu0 0
        %2016 = vmatprep.subr.bf16.mxu0 0
        %2017 = vmatpush1.bf16.msra.mxu0 0
        %2018 = vmatprep.subr.bf16.mxu0 0
        %2019 = vmatpush1.bf16.msra.mxu0 0
        %2020 = vmatprep.subr.bf16.mxu0 0
        %2021 = vmatpush1.bf16.msra.mxu0 0
        %2022 = vmatprep.subr.bf16.mxu0 0
        %2023 = vmatpush1.bf16.msra.mxu0 0
        %2024 = vmatprep.subr.bf16.mxu0 0
        %2025 = vmatpush1.bf16.msra.mxu0 0
        %2026 = vmatprep.mubr.bf16.mxu0 0
        %2027 = vmatmul.mubr.bf16.gmra.mrb[0].mxu0 %v1136
        %v2028 = vpop.f32.mrb[0].mxu0
        %v2029 = vadd.f32 0.0, %v2028
        %v2030 = vpop.f32.mrb[0].mxu0
        %v2031 = vpop.f32.mrb[0].mxu0
        %v2032 = vadd.f32 0.0, %v2031
        %v2033 = vpop.f32.mrb[0].mxu0
        %2034 = vmatprep.mubr.bf16.mxu0 0
        %2035 = vmatmul.mubr.bf16.gmra.mrb[0].mxu0 %v1139
        %v2036 = vpop.f32.mrb[0].mxu0
        %v2037 = vadd.f32 0.0, %v2036
        %v2038 = vpop.f32.mrb[0].mxu0
        %v2039 = vpop.f32.mrb[0].mxu0
        %v2040 = vadd.f32 0.0, %v2039
        %v2041 = vpop.f32.mrb[0].mxu0
        %2042 = vmatprep.mubr.bf16.mxu0 0
        %2043 = vmatmul.mubr.bf16.gmra.mrb[0].mxu0 %v1142
        %v2044 = vpop.f32.mrb[0].mxu0
        %v2045 = vadd.f32 0.0, %v2044
        %v2046 = vpop.f32.mrb[0].mxu0
        %v2047 = vpop.f32.mrb[0].mxu0
        %v2048 = vadd.f32 0.0, %v2047
        %v2049 = vpop.f32.mrb[0].mxu0
        %2050 = vmatprep.mubr.bf16.mxu0 0
        %2051 = vmatmul.mubr.bf16.gmra.mrb[0].mxu0 %v1145
        %v2052 = vpop.f32.mrb[0].mxu0
        %v2053 = vadd.f32 0.0, %v2052
        %v2054 = vpop.f32.mrb[0].mxu0
        %v2055 = vpop.f32.mrb[0].mxu0
        %v2056 = vadd.f32 0.0, %v2055
        %v2057 = vpop.f32.mrb[0].mxu0
        %2058 = vmatprep.mubr.bf16.mxu0 0
        %2059 = vmatmul.mubr.bf16.gmra.mrb[0].mxu0 %v1148
        %v2060 = vpop.f32.mrb[0].mxu0
        %v2061 = vadd.f32 0.0, %v2060
        %v2062 = vpop.f32.mrb[0].mxu0
        %v2063 = vpop.f32.mrb[0].mxu0
        %v2064 = vadd.f32 0.0, %v2063
        %v2065 = vpop.f32.mrb[0].mxu0
        %2066 = vmatprep.mubr.bf16.mxu0 0
        %2067 = vmatmul.mubr.bf16.gmra.mrb[0].mxu0 %v1151
        %v2068 = vpop.f32.mrb[0].mxu0
        %v2069 = vadd.f32 0.0, %v2068
        %v2070 = vpop.f32.mrb[0].mxu0
        %v2071 = vpop.f32.mrb[0].mxu0
        %v2072 = vadd.f32 0.0, %v2071
        %v2073 = vpop.f32.mrb[0].mxu0
        %2074 = vmatprep.mubr.bf16.mxu0 0
        %2075 = vmatmul.mubr.bf16.gmra.mrb[0].mxu0 %v1154
        %v2076 = vpop.f32.mrb[0].mxu0
        %v2077 = vadd.f32 0.0, %v2076
        %v2078 = vpop.f32.mrb[0].mxu0
        %v2079 = vpop.f32.mrb[0].mxu0
        %v2080 = vadd.f32 0.0, %v2079
        %v2081 = vpop.f32.mrb[0].mxu0
        %2082 = vmatprep.mubr.bf16.mxu0 0
        %2083 = vmatmul.mubr.bf16.gmra.mrb[0].mxu0 %v1157
        %v2084 = vpop.f32.mrb[0].mxu0
        %v2085 = vadd.f32 0.0, %v2084
        %v2086 = vpop.f32.mrb[0].mxu0
        %v2087 = vpop.f32.mrb[0].mxu0
        %v2088 = vadd.f32 0.0, %v2087
        %v2089 = vpop.f32.mrb[0].mxu0
        %2090 = vmatprep.mubr.bf16.mxu0 0
        %2091 = vmatmul.mubr.bf16.gmra.mrb[0].mxu0 %v1160
        %v2092 = vpop.f32.mrb[0].mxu0
        %v2093 = vadd.f32 0.0, %v2092
        %v2094 = vpop.f32.mrb[0].mxu0
        %v2095 = vpop.f32.mrb[0].mxu0
        %v2096 = vadd.f32 0.0, %v2095
        %v2097 = vpop.f32.mrb[0].mxu0
        %2098 = vmatprep.mubr.bf16.mxu0 0
        %2099 = vmatmul.mubr.bf16.gmra.mrb[0].mxu0 %v1163
        %v2100 = vpop.f32.mrb[0].mxu0
        %v2101 = vadd.f32 0.0, %v2100
        %v2102 = vpop.f32.mrb[0].mxu0
        %v2103 = vpop.f32.mrb[0].mxu0
        %v2104 = vadd.f32 0.0, %v2103
        %v2105 = vpop.f32.mrb[0].mxu0
        %2106 = vmatprep.mubr.bf16.mxu0 0
        %2107 = vmatmul.mubr.bf16.gmra.mrb[0].mxu0 %v1166
        %v2108 = vpop.f32.mrb[0].mxu0
        %v2109 = vadd.f32 0.0, %v2108
        %v2110 = vpop.f32.mrb[0].mxu0
        %v2111 = vpop.f32.mrb[0].mxu0
        %v2112 = vadd.f32 0.0, %v2111
        %v2113 = vpop.f32.mrb[0].mxu0
        %2114 = vmatprep.mubr.bf16.mxu0 0
        %2115 = vmatmul.mubr.bf16.gmra.mrb[0].mxu0 %v1169
        %v2116 = vpop.f32.mrb[0].mxu0
        %v2117 = vadd.f32 0.0, %v2116
        %v2118 = vpop.f32.mrb[0].mxu0
        %v2119 = vpop.f32.mrb[0].mxu0
        %v2120 = vadd.f32 0.0, %v2119
        %v2121 = vpop.f32.mrb[0].mxu0
        %2122 = vmatprep.mubr.bf16.mxu0 0
        %2123 = vmatmul.mubr.bf16.gmra.mrb[0].mxu0 %v1172
        %v2124 = vpop.f32.mrb[0].mxu0
        %v2125 = vadd.f32 0.0, %v2124
        %v2126 = vpop.f32.mrb[0].mxu0
        %v2127 = vpop.f32.mrb[0].mxu0
        %v2128 = vadd.f32 0.0, %v2127
        %v2129 = vpop.f32.mrb[0].mxu0
        %2130 = vmatprep.mubr.bf16.mxu0 0
        %2131 = vmatmul.mubr.bf16.gmra.mrb[0].mxu0 %v1175
        %v2132 = vpop.f32.mrb[0].mxu0
        %v2133 = vadd.f32 0.0, %v2132
        %v2134 = vpop.f32.mrb[0].mxu0
        %v2135 = vpop.f32.mrb[0].mxu0
        %v2136 = vadd.f32 0.0, %v2135
        %v2137 = vpop.f32.mrb[0].mxu0
        %2138 = vmatprep.mubr.bf16.mxu0 0
        %2139 = vmatmul.mubr.bf16.gmra.mrb[0].mxu0 %v1178
        %v2140 = vpop.f32.mrb[0].mxu0
        %v2141 = vadd.f32 0.0, %v2140
        %v2142 = vpop.f32.mrb[0].mxu0
        %v2143 = vpop.f32.mrb[0].mxu0
        %v2144 = vadd.f32 0.0, %v2143
        %v2145 = vpop.f32.mrb[0].mxu0
        %2146 = vmatprep.mubr.bf16.mxu0 0
        %2147 = vmatmul.mubr.bf16.gmra.mrb[0].mxu0 %v1181
        %v2148 = vpop.f32.mrb[0].mxu0
        %v2149 = vadd.f32 0.0, %v2148
        %v2150 = vpop.f32.mrb[0].mxu0
        %v2151 = vpop.f32.mrb[0].mxu0
        %v2152 = vadd.f32 0.0, %v2151
        %v2153 = vpop.f32.mrb[0].mxu0
        %2154 = vmatprep.mubr.bf16.mxu0 0
        %2155 = vmatmul.mubr.bf16.gmra.mrb[0].mxu0 %v1184
        %v2156 = vpop.f32.mrb[0].mxu0
        %v2157 = vadd.f32 0.0, %v2156
        %v2158 = vpop.f32.mrb[0].mxu0
        %v2159 = vpop.f32.mrb[0].mxu0
        %v2160 = vadd.f32 0.0, %v2159
        %v2161 = vpop.f32.mrb[0].mxu0
        %2162 = vmatprep.mubr.bf16.mxu0 0
        %2163 = vmatmul.mubr.bf16.gmra.mrb[0].mxu0 %v1187
        %v2164 = vpop.f32.mrb[0].mxu0
        %v2165 = vadd.f32 0.0, %v2164
        %v2166 = vpop.f32.mrb[0].mxu0
        %v2167 = vpop.f32.mrb[0].mxu0
        %v2168 = vadd.f32 0.0, %v2167
        %v2169 = vpop.f32.mrb[0].mxu0
        %2170 = vmatprep.mubr.bf16.mxu0 0
        %2171 = vmatmul.mubr.bf16.gmra.mrb[0].mxu0 %v1190
        %v2172 = vpop.f32.mrb[0].mxu0
        %v2173 = vadd.f32 0.0, %v2172
        %v2174 = vpop.f32.mrb[0].mxu0
        %v2175 = vpop.f32.mrb[0].mxu0
        %v2176 = vadd.f32 0.0, %v2175
        %v2177 = vpop.f32.mrb[0].mxu0
        %2178 = vmatprep.mubr.bf16.mxu0 0
        %2179 = vmatmul.mubr.bf16.gmra.mrb[0].mxu0 %v1193
        %v2180 = vpop.f32.mrb[0].mxu0
        %v2181 = vadd.f32 0.0, %v2180
        %v2182 = vpop.f32.mrb[0].mxu0
        %v2183 = vpop.f32.mrb[0].mxu0
        %v2184 = vadd.f32 0.0, %v2183
        %v2185 = vpop.f32.mrb[0].mxu0
        %2186 = vmatprep.mubr.bf16.mxu0 0
        %2187 = vmatmul.mubr.bf16.gmra.mrb[0].mxu0 %v1196
        %v2188 = vpop.f32.mrb[0].mxu0
        %v2189 = vadd.f32 0.0, %v2188
        %v2190 = vpop.f32.mrb[0].mxu0
        %v2191 = vpop.f32.mrb[0].mxu0
        %v2192 = vadd.f32 0.0, %v2191
        %v2193 = vpop.f32.mrb[0].mxu0
        %2194 = vmatprep.mubr.bf16.mxu0 0
        %2195 = vmatmul.mubr.bf16.gmra.mrb[0].mxu0 %v1199
        %v2196 = vpop.f32.mrb[0].mxu0
        %v2197 = vadd.f32 0.0, %v2196
        %v2198 = vpop.f32.mrb[0].mxu0
        %v2199 = vpop.f32.mrb[0].mxu0
        %v2200 = vadd.f32 0.0, %v2199
        %v2201 = vpop.f32.mrb[0].mxu0
        %2202 = vmatprep.mubr.bf16.mxu0 0
        %2203 = vmatmul.mubr.bf16.gmra.mrb[0].mxu0 %v1202
        %v2204 = vpop.f32.mrb[0].mxu0
        %v2205 = vadd.f32 0.0, %v2204
        %v2206 = vpop.f32.mrb[0].mxu0
        %v2207 = vpop.f32.mrb[0].mxu0
        %v2208 = vadd.f32 0.0, %v2207
        %v2209 = vpop.f32.mrb[0].mxu0
        %2210 = vmatprep.mubr.bf16.mxu0 0
        %2211 = vmatmul.mubr.bf16.gmra.mrb[0].mxu0 %v1205
        %v2212 = vpop.f32.mrb[0].mxu0
        %v2213 = vadd.f32 0.0, %v2212
        %v2214 = vpop.f32.mrb[0].mxu0
        %v2215 = vpop.f32.mrb[0].mxu0
        %v2216 = vadd.f32 0.0, %v2215
        %v2217 = vpop.f32.mrb[0].mxu0
        %2218 = vmatprep.mubr.bf16.mxu0 0
        %2219 = vmatmul.mubr.bf16.gmra.mrb[0].mxu0 %v1208
        %v2220 = vpop.f32.mrb[0].mxu0
        %v2221 = vadd.f32 0.0, %v2220
        %v2222 = vpop.f32.mrb[0].mxu0
        %v2223 = vpop.f32.mrb[0].mxu0
        %v2224 = vadd.f32 0.0, %v2223
        %v2225 = vpop.f32.mrb[0].mxu0
        %2226 = vdwg.mxu0
        %v2227 = vld [vmem:[#allocation3 + $0x33] sm:$0xff]
        %v2228 = vld [vmem:[#allocation3 + $0x3b] sm:$0xff]
        %v2229 = vld [vmem:[#allocation3 + $0x43] sm:$0xff]
        %v2230 = vld [vmem:[#allocation3 + $0x4b] sm:$0xff]
        %v2231 = vld [vmem:[#allocation3 + $0x53] sm:$0xff]
        %v2232 = vld [vmem:[#allocation3 + $0x5b] sm:$0xff]
        %v2233 = vld [vmem:[#allocation3 + $0x63] sm:$0xff]
        %v2234 = vld [vmem:[#allocation3 + $0x6b] sm:$0xff]
        %v2235 = vld [vmem:[#allocation3 + $0x73] sm:$0xff]
        %v2236 = vld [vmem:[#allocation3 + $0x7b] sm:$0xff]
        %v2237 = vld [vmem:[#allocation3 + $0x83] sm:$0xff]
        %v2238 = vld [vmem:[#allocation3 + $0x8b] sm:$0xff]
        %v2239 = vld [vmem:[#allocation3 + $0x93] sm:$0xff]
        %v2240 = vld [vmem:[#allocation3 + $0x9b] sm:$0xff]
        %v2241 = vld [vmem:[#allocation3 + $0xa3] sm:$0xff]
        %v2242 = vld [vmem:[#allocation3 + $0xab] sm:$0xff]
        %v2243 = vld [vmem:[#allocation3 + $0xb3] sm:$0xff]
        %v2244 = vld [vmem:[#allocation3 + $0xbb] sm:$0xff]
        %v2245 = vld [vmem:[#allocation3 + $0xc3] sm:$0xff]
        %v2246 = vld [vmem:[#allocation3 + $0xcb] sm:$0xff]
        %v2247 = vld [vmem:[#allocation3 + $0xd3] sm:$0xff]
        %v2248 = vld [vmem:[#allocation3 + $0xdb] sm:$0xff]
        %v2249 = vld [vmem:[#allocation3 + $0xe3] sm:$0xff]
        %v2250 = vld [vmem:[#allocation3 + $0xeb] sm:$0xff]
        %v2251 = vld [vmem:[#allocation3 + $0xf3] sm:$0xff]
        %v2252 = vld [vmem:[#allocation3 + $0xfb] sm:$0xff]
        %v2253 = vld [vmem:[#allocation3 + $0x103] sm:$0xff]
        %v2254 = vld [vmem:[#allocation3 + $0x10b] sm:$0xff]
        %v2255 = vld [vmem:[#allocation3 + $0x113] sm:$0xff]
        %v2256 = vld [vmem:[#allocation3 + $0x11b] sm:$0xff]
        %v2257 = vld [vmem:[#allocation3 + $0x123] sm:$0xff]
        %v2258 = vld [vmem:[#allocation3 + $0x12b] sm:$0xff]
        %v2259 = vld [vmem:[#allocation3 + $0x133] sm:$0xff]
        %v2260 = vld [vmem:[#allocation3 + $0x13b] sm:$0xff]
        %v2261 = vld [vmem:[#allocation3 + $0x143] sm:$0xff]
        %v2262 = vld [vmem:[#allocation3 + $0x14b] sm:$0xff]
        %v2263 = vld [vmem:[#allocation3 + $0x153] sm:$0xff]
        %v2264 = vld [vmem:[#allocation3 + $0x15b] sm:$0xff]
        %v2265 = vld [vmem:[#allocation3 + $0x163] sm:$0xff]
        %v2266 = vld [vmem:[#allocation3 + $0x16b] sm:$0xff]
        %v2267 = vld [vmem:[#allocation3 + $0x173] sm:$0xff]
        %v2268 = vld [vmem:[#allocation3 + $0x17b] sm:$0xff]
        %v2269 = vld [vmem:[#allocation3 + $0x183] sm:$0xff]
        %v2270 = vld [vmem:[#allocation3 + $0x18b] sm:$0xff]
        %v2271 = vld [vmem:[#allocation3 + $0x193] sm:$0xff]
        %v2272 = vld [vmem:[#allocation3 + $0x19b] sm:$0xff]
        %v2273 = vld [vmem:[#allocation3 + $0x1a3] sm:$0xff]
        %v2274 = vld [vmem:[#allocation3 + $0x1ab] sm:$0xff]
        %v2275 = vld [vmem:[#allocation3 + $0x1b3] sm:$0xff]
        %v2276 = vld [vmem:[#allocation3 + $0x1bb] sm:$0xff]
        %v2277 = vadd.f32 %v2227, %v2029
        %v2278 = vadd.f32 %v2228, %v2032
        %v2279 = vadd.f32 %v2229, %v2037
        %v2280 = vadd.f32 %v2230, %v2040
        %v2281 = vadd.f32 %v2231, %v2045
        %v2282 = vadd.f32 %v2232, %v2048
        %v2283 = vadd.f32 %v2233, %v2053
        %v2284 = vadd.f32 %v2234, %v2056
        %v2285 = vadd.f32 %v2235, %v2061
        %v2286 = vadd.f32 %v2236, %v2064
        %v2287 = vadd.f32 %v2237, %v2069
        %v2288 = vadd.f32 %v2238, %v2072
        %v2289 = vadd.f32 %v2239, %v2077
        %v2290 = vadd.f32 %v2240, %v2080
        %v2291 = vadd.f32 %v2241, %v2085
        %v2292 = vadd.f32 %v2242, %v2088
        %v2293 = vadd.f32 %v2243, %v2093
        %v2294 = vadd.f32 %v2244, %v2096
        %v2295 = vadd.f32 %v2245, %v2101
        %v2296 = vadd.f32 %v2246, %v2104
        %v2297 = vadd.f32 %v2247, %v2109
        %v2298 = vadd.f32 %v2248, %v2112
        %v2299 = vadd.f32 %v2249, %v2117
        %v2300 = vadd.f32 %v2250, %v2120
        %v2301 = vadd.f32 %v2251, %v2125
        %v2302 = vadd.f32 %v2252, %v2128
        %v2303 = vadd.f32 %v2253, %v2133
        %v2304 = vadd.f32 %v2254, %v2136
        %v2305 = vadd.f32 %v2255, %v2141
        %v2306 = vadd.f32 %v2256, %v2144
        %v2307 = vadd.f32 %v2257, %v2149
        %v2308 = vadd.f32 %v2258, %v2152
        %v2309 = vadd.f32 %v2259, %v2157
        %v2310 = vadd.f32 %v2260, %v2160
        %v2311 = vadd.f32 %v2261, %v2165
        %v2312 = vadd.f32 %v2262, %v2168
        %v2313 = vadd.f32 %v2263, %v2173
        %v2314 = vadd.f32 %v2264, %v2176
        %v2315 = vadd.f32 %v2265, %v2181
        %v2316 = vadd.f32 %v2266, %v2184
        %v2317 = vadd.f32 %v2267, %v2189
        %v2318 = vadd.f32 %v2268, %v2192
        %v2319 = vadd.f32 %v2269, %v2197
        %v2320 = vadd.f32 %v2270, %v2200
        %v2321 = vadd.f32 %v2271, %v2205
        %v2322 = vadd.f32 %v2272, %v2208
        %v2323 = vadd.f32 %v2273, %v2213
        %v2324 = vadd.f32 %v2274, %v2216
        %v2325 = vadd.f32 %v2275, %v2221
        %v2326 = vadd.f32 %v2276, %v2224
        %2327 = vst [vmem:[#allocation3 + $0x33] sm:$0xff] %v2277
        %2328 = vst [vmem:[#allocation3 + $0x3b] sm:$0xff] %v2278
        %2329 = vst [vmem:[#allocation3 + $0x43] sm:$0xff] %v2279
        %2330 = vst [vmem:[#allocation3 + $0x4b] sm:$0xff] %v2280
        %2331 = vst [vmem:[#allocation3 + $0x53] sm:$0xff] %v2281
        %2332 = vst [vmem:[#allocation3 + $0x5b] sm:$0xff] %v2282
        %2333 = vst [vmem:[#allocation3 + $0x63] sm:$0xff] %v2283
        %2334 = vst [vmem:[#allocation3 + $0x6b] sm:$0xff] %v2284
        %2335 = vst [vmem:[#allocation3 + $0x73] sm:$0xff] %v2285
        %2336 = vst [vmem:[#allocation3 + $0x7b] sm:$0xff] %v2286
        %2337 = vst [vmem:[#allocation3 + $0x83] sm:$0xff] %v2287
        %2338 = vst [vmem:[#allocation3 + $0x8b] sm:$0xff] %v2288
        %2339 = vst [vmem:[#allocation3 + $0x93] sm:$0xff] %v2289
        %2340 = vst [vmem:[#allocation3 + $0x9b] sm:$0xff] %v2290
        %2341 = vst [vmem:[#allocation3 + $0xa3] sm:$0xff] %v2291
        %2342 = vst [vmem:[#allocation3 + $0xab] sm:$0xff] %v2292
        %2343 = vst [vmem:[#allocation3 + $0xb3] sm:$0xff] %v2293
        %2344 = vst [vmem:[#allocation3 + $0xbb] sm:$0xff] %v2294
        %2345 = vst [vmem:[#allocation3 + $0xc3] sm:$0xff] %v2295
        %2346 = vst [vmem:[#allocation3 + $0xcb] sm:$0xff] %v2296
        %2347 = vst [vmem:[#allocation3 + $0xd3] sm:$0xff] %v2297
        %2348 = vst [vmem:[#allocation3 + $0xdb] sm:$0xff] %v2298
        %2349 = vst [vmem:[#allocation3 + $0xe3] sm:$0xff] %v2299
        %2350 = vst [vmem:[#allocation3 + $0xeb] sm:$0xff] %v2300
        %2351 = vst [vmem:[#allocation3 + $0xf3] sm:$0xff] %v2301
        %2352 = vst [vmem:[#allocation3 + $0xfb] sm:$0xff] %v2302
        %2353 = vst [vmem:[#allocation3 + $0x103] sm:$0xff] %v2303
        %2354 = vst [vmem:[#allocation3 + $0x10b] sm:$0xff] %v2304
        %2355 = vst [vmem:[#allocation3 + $0x113] sm:$0xff] %v2305
        %2356 = vst [vmem:[#allocation3 + $0x11b] sm:$0xff] %v2306
        %2357 = vst [vmem:[#allocation3 + $0x123] sm:$0xff] %v2307
        %2358 = vst [vmem:[#allocation3 + $0x12b] sm:$0xff] %v2308
        %2359 = vst [vmem:[#allocation3 + $0x133] sm:$0xff] %v2309
        %2360 = vst [vmem:[#allocation3 + $0x13b] sm:$0xff] %v2310
        %2361 = vst [vmem:[#allocation3 + $0x143] sm:$0xff] %v2311
        %2362 = vst [vmem:[#allocation3 + $0x14b] sm:$0xff] %v2312
        %2363 = vst [vmem:[#allocation3 + $0x153] sm:$0xff] %v2313
        %2364 = vst [vmem:[#allocation3 + $0x15b] sm:$0xff] %v2314
        %2365 = vst [vmem:[#allocation3 + $0x163] sm:$0xff] %v2315
        %2366 = vst [vmem:[#allocation3 + $0x16b] sm:$0xff] %v2316
        %2367 = vst [vmem:[#allocation3 + $0x173] sm:$0xff] %v2317
        %2368 = vst [vmem:[#allocation3 + $0x17b] sm:$0xff] %v2318
        %2369 = vst [vmem:[#allocation3 + $0x183] sm:$0xff] %v2319
        %2370 = vst [vmem:[#allocation3 + $0x18b] sm:$0xff] %v2320
        %2371 = vst [vmem:[#allocation3 + $0x193] sm:$0xff] %v2321
        %2372 = vst [vmem:[#allocation3 + $0x19b] sm:$0xff] %v2322
        %2373 = vst [vmem:[#allocation3 + $0x1a3] sm:$0xff] %v2323
        %2374 = vst [vmem:[#allocation3 + $0x1ab] sm:$0xff] %v2324
        %2375 = vst [vmem:[#allocation3 + $0x1b3] sm:$0xff] %v2325
        %2376 = vst [vmem:[#allocation3 + $0x1bb] sm:$0xff] %v2326
        %s2377 = scalar_lea.vmem %s1, 24
        %v2378 = vld [vmem:[%s2377] sm:$0xf]
        %v2379 = vld [vmem:[%s2377 + $0x4] sm:$0xf]
        %v2382 = vunpack.c.l.b16 %v2378
        %v2383 = vunpack.c.l.b16 %v2379
        %v2384 = vpack.c.b16 %v2383, %v2382
        %2386 = vmatprep.subr.bf16.mxu0 0
        %2387 = vmatpush1.bf16.msra.mxu0 %v2384
        %2388 = vmatprep.subr.bf16.mxu0 0
        %2389 = vmatpush1.bf16.msra.mxu0 0
        %2390 = vmatprep.subr.bf16.mxu0 0
        %2391 = vmatpush1.bf16.msra.mxu0 0
        %2392 = vmatprep.subr.bf16.mxu0 0
        %2393 = vmatpush1.bf16.msra.mxu0 0
        %2394 = vmatprep.subr.bf16.mxu0 0
        %2395 = vmatpush1.bf16.msra.mxu0 0
        %2396 = vmatprep.subr.bf16.mxu0 0
        %2397 = vmatpush1.bf16.msra.mxu0 0
        %2398 = vmatprep.subr.bf16.mxu0 0
        %2399 = vmatpush1.bf16.msra.mxu0 0
        %2400 = vmatprep.subr.bf16.mxu0 0
        %2401 = vmatpush1.bf16.msra.mxu0 0
        %2402 = vmatprep.subr.bf16.mxu0 0
        %2403 = vmatpush1.bf16.msra.mxu0 0
        %2404 = vmatprep.subr.bf16.mxu0 0
        %2405 = vmatpush1.bf16.msra.mxu0 0
        %2406 = vmatprep.subr.bf16.mxu0 0
        %2407 = vmatpush1.bf16.msra.mxu0 0
        %2408 = vmatprep.subr.bf16.mxu0 0
        %2409 = vmatpush1.bf16.msra.mxu0 0
        %2410 = vmatprep.subr.bf16.mxu0 0
        %2411 = vmatpush1.bf16.msra.mxu0 0
        %2412 = vmatprep.subr.bf16.mxu0 0
        %2413 = vmatpush1.bf16.msra.mxu0 0
        %2414 = vmatprep.subr.bf16.mxu0 0
        %2415 = vmatpush1.bf16.msra.mxu0 0
        %2416 = vmatprep.subr.bf16.mxu0 0
        %2417 = vmatpush1.bf16.msra.mxu0 0
        %2418 = vmatprep.mubr.bf16.mxu0 0
        %2419 = vmatmul.mubr.bf16.gmra.mrb[0].mxu0 %v1136
        %v2420 = vpop.f32.mrb[0].mxu0
        %v2421 = vadd.f32 0.0, %v2420
        %v2422 = vpop.f32.mrb[0].mxu0
        %v2423 = vpop.f32.mrb[0].mxu0
        %v2424 = vadd.f32 0.0, %v2423
        %v2425 = vpop.f32.mrb[0].mxu0
        %2426 = vmatprep.mubr.bf16.mxu0 0
        %2427 = vmatmul.mubr.bf16.gmra.mrb[0].mxu0 %v1139
        %v2428 = vpop.f32.mrb[0].mxu0
        %v2429 = vadd.f32 0.0, %v2428
        %v2430 = vpop.f32.mrb[0].mxu0
        %v2431 = vpop.f32.mrb[0].mxu0
        %v2432 = vadd.f32 0.0, %v2431
        %v2433 = vpop.f32.mrb[0].mxu0
        %2434 = vmatprep.mubr.bf16.mxu0 0
        %2435 = vmatmul.mubr.bf16.gmra.mrb[0].mxu0 %v1142
        %v2436 = vpop.f32.mrb[0].mxu0
        %v2437 = vadd.f32 0.0, %v2436
        %v2438 = vpop.f32.mrb[0].mxu0
        %v2439 = vpop.f32.mrb[0].mxu0
        %v2440 = vadd.f32 0.0, %v2439
        %v2441 = vpop.f32.mrb[0].mxu0
        %2442 = vmatprep.mubr.bf16.mxu0 0
        %2443 = vmatmul.mubr.bf16.gmra.mrb[0].mxu0 %v1145
        %v2444 = vpop.f32.mrb[0].mxu0
        %v2445 = vadd.f32 0.0, %v2444
        %v2446 = vpop.f32.mrb[0].mxu0
        %v2447 = vpop.f32.mrb[0].mxu0
        %v2448 = vadd.f32 0.0, %v2447
        %v2449 = vpop.f32.mrb[0].mxu0
        %2450 = vmatprep.mubr.bf16.mxu0 0
        %2451 = vmatmul.mubr.bf16.gmra.mrb[0].mxu0 %v1148
        %v2452 = vpop.f32.mrb[0].mxu0
        %v2453 = vadd.f32 0.0, %v2452
        %v2454 = vpop.f32.mrb[0].mxu0
        %v2455 = vpop.f32.mrb[0].mxu0
        %v2456 = vadd.f32 0.0, %v2455
        %v2457 = vpop.f32.mrb[0].mxu0
        %2458 = vmatprep.mubr.bf16.mxu0 0
        %2459 = vmatmul.mubr.bf16.gmra.mrb[0].mxu0 %v1151
        %v2460 = vpop.f32.mrb[0].mxu0
        %v2461 = vadd.f32 0.0, %v2460
        %v2462 = vpop.f32.mrb[0].mxu0
        %v2463 = vpop.f32.mrb[0].mxu0
        %v2464 = vadd.f32 0.0, %v2463
        %v2465 = vpop.f32.mrb[0].mxu0
        %2466 = vmatprep.mubr.bf16.mxu0 0
        %2467 = vmatmul.mubr.bf16.gmra.mrb[0].mxu0 %v1154
        %v2468 = vpop.f32.mrb[0].mxu0
        %v2469 = vadd.f32 0.0, %v2468
        %v2470 = vpop.f32.mrb[0].mxu0
        %v2471 = vpop.f32.mrb[0].mxu0
        %v2472 = vadd.f32 0.0, %v2471
        %v2473 = vpop.f32.mrb[0].mxu0
        %2474 = vmatprep.mubr.bf16.mxu0 0
        %2475 = vmatmul.mubr.bf16.gmra.mrb[0].mxu0 %v1157
        %v2476 = vpop.f32.mrb[0].mxu0
        %v2477 = vadd.f32 0.0, %v2476
        %v2478 = vpop.f32.mrb[0].mxu0
        %v2479 = vpop.f32.mrb[0].mxu0
        %v2480 = vadd.f32 0.0, %v2479
        %v2481 = vpop.f32.mrb[0].mxu0
        %2482 = vmatprep.mubr.bf16.mxu0 0
        %2483 = vmatmul.mubr.bf16.gmra.mrb[0].mxu0 %v1160
        %v2484 = vpop.f32.mrb[0].mxu0
        %v2485 = vadd.f32 0.0, %v2484
        %v2486 = vpop.f32.mrb[0].mxu0
        %v2487 = vpop.f32.mrb[0].mxu0
        %v2488 = vadd.f32 0.0, %v2487
        %v2489 = vpop.f32.mrb[0].mxu0
        %2490 = vmatprep.mubr.bf16.mxu0 0
        %2491 = vmatmul.mubr.bf16.gmra.mrb[0].mxu0 %v1163
        %v2492 = vpop.f32.mrb[0].mxu0
        %v2493 = vadd.f32 0.0, %v2492
        %v2494 = vpop.f32.mrb[0].mxu0
        %v2495 = vpop.f32.mrb[0].mxu0
        %v2496 = vadd.f32 0.0, %v2495
        %v2497 = vpop.f32.mrb[0].mxu0
        %2498 = vmatprep.mubr.bf16.mxu0 0
        %2499 = vmatmul.mubr.bf16.gmra.mrb[0].mxu0 %v1166
        %v2500 = vpop.f32.mrb[0].mxu0
        %v2501 = vadd.f32 0.0, %v2500
        %v2502 = vpop.f32.mrb[0].mxu0
        %v2503 = vpop.f32.mrb[0].mxu0
        %v2504 = vadd.f32 0.0, %v2503
        %v2505 = vpop.f32.mrb[0].mxu0
        %2506 = vmatprep.mubr.bf16.mxu0 0
        %2507 = vmatmul.mubr.bf16.gmra.mrb[0].mxu0 %v1169
        %v2508 = vpop.f32.mrb[0].mxu0
        %v2509 = vadd.f32 0.0, %v2508
        %v2510 = vpop.f32.mrb[0].mxu0
        %v2511 = vpop.f32.mrb[0].mxu0
        %v2512 = vadd.f32 0.0, %v2511
        %v2513 = vpop.f32.mrb[0].mxu0
        %2514 = vmatprep.mubr.bf16.mxu0 0
        %2515 = vmatmul.mubr.bf16.gmra.mrb[0].mxu0 %v1172
        %v2516 = vpop.f32.mrb[0].mxu0
        %v2517 = vadd.f32 0.0, %v2516
        %v2518 = vpop.f32.mrb[0].mxu0
        %v2519 = vpop.f32.mrb[0].mxu0
        %v2520 = vadd.f32 0.0, %v2519
        %v2521 = vpop.f32.mrb[0].mxu0
        %2522 = vmatprep.mubr.bf16.mxu0 0
        %2523 = vmatmul.mubr.bf16.gmra.mrb[0].mxu0 %v1175
        %v2524 = vpop.f32.mrb[0].mxu0
        %v2525 = vadd.f32 0.0, %v2524
        %v2526 = vpop.f32.mrb[0].mxu0
        %v2527 = vpop.f32.mrb[0].mxu0
        %v2528 = vadd.f32 0.0, %v2527
        %v2529 = vpop.f32.mrb[0].mxu0
        %2530 = vmatprep.mubr.bf16.mxu0 0
        %2531 = vmatmul.mubr.bf16.gmra.mrb[0].mxu0 %v1178
        %v2532 = vpop.f32.mrb[0].mxu0
        %v2533 = vadd.f32 0.0, %v2532
        %v2534 = vpop.f32.mrb[0].mxu0
        %v2535 = vpop.f32.mrb[0].mxu0
        %v2536 = vadd.f32 0.0, %v2535
        %v2537 = vpop.f32.mrb[0].mxu0
        %2538 = vmatprep.mubr.bf16.mxu0 0
        %2539 = vmatmul.mubr.bf16.gmra.mrb[0].mxu0 %v1181
        %v2540 = vpop.f32.mrb[0].mxu0
        %v2541 = vadd.f32 0.0, %v2540
        %v2542 = vpop.f32.mrb[0].mxu0
        %v2543 = vpop.f32.mrb[0].mxu0
        %v2544 = vadd.f32 0.0, %v2543
        %v2545 = vpop.f32.mrb[0].mxu0
        %2546 = vmatprep.mubr.bf16.mxu0 0
        %2547 = vmatmul.mubr.bf16.gmra.mrb[0].mxu0 %v1184
        %v2548 = vpop.f32.mrb[0].mxu0
        %v2549 = vadd.f32 0.0, %v2548
        %v2550 = vpop.f32.mrb[0].mxu0
        %v2551 = vpop.f32.mrb[0].mxu0
        %v2552 = vadd.f32 0.0, %v2551
        %v2553 = vpop.f32.mrb[0].mxu0
        %2554 = vmatprep.mubr.bf16.mxu0 0
        %2555 = vmatmul.mubr.bf16.gmra.mrb[0].mxu0 %v1187
        %v2556 = vpop.f32.mrb[0].mxu0
        %v2557 = vadd.f32 0.0, %v2556
        %v2558 = vpop.f32.mrb[0].mxu0
        %v2559 = vpop.f32.mrb[0].mxu0
        %v2560 = vadd.f32 0.0, %v2559
        %v2561 = vpop.f32.mrb[0].mxu0
        %2562 = vmatprep.mubr.bf16.mxu0 0
        %2563 = vmatmul.mubr.bf16.gmra.mrb[0].mxu0 %v1190
        %v2564 = vpop.f32.mrb[0].mxu0
        %v2565 = vadd.f32 0.0, %v2564
        %v2566 = vpop.f32.mrb[0].mxu0
        %v2567 = vpop.f32.mrb[0].mxu0
        %v2568 = vadd.f32 0.0, %v2567
        %v2569 = vpop.f32.mrb[0].mxu0
        %2570 = vmatprep.mubr.bf16.mxu0 0
        %2571 = vmatmul.mubr.bf16.gmra.mrb[0].mxu0 %v1193
        %v2572 = vpop.f32.mrb[0].mxu0
        %v2573 = vadd.f32 0.0, %v2572
        %v2574 = vpop.f32.mrb[0].mxu0
        %v2575 = vpop.f32.mrb[0].mxu0
        %v2576 = vadd.f32 0.0, %v2575
        %v2577 = vpop.f32.mrb[0].mxu0
        %2578 = vmatprep.mubr.bf16.mxu0 0
        %2579 = vmatmul.mubr.bf16.gmra.mrb[0].mxu0 %v1196
        %v2580 = vpop.f32.mrb[0].mxu0
        %v2581 = vadd.f32 0.0, %v2580
        %v2582 = vpop.f32.mrb[0].mxu0
        %v2583 = vpop.f32.mrb[0].mxu0
        %v2584 = vadd.f32 0.0, %v2583
        %v2585 = vpop.f32.mrb[0].mxu0
        %2586 = vmatprep.mubr.bf16.mxu0 0
        %2587 = vmatmul.mubr.bf16.gmra.mrb[0].mxu0 %v1199
        %v2588 = vpop.f32.mrb[0].mxu0
        %v2589 = vadd.f32 0.0, %v2588
        %v2590 = vpop.f32.mrb[0].mxu0
        %v2591 = vpop.f32.mrb[0].mxu0
        %v2592 = vadd.f32 0.0, %v2591
        %v2593 = vpop.f32.mrb[0].mxu0
        %2594 = vmatprep.mubr.bf16.mxu0 0
        %2595 = vmatmul.mubr.bf16.gmra.mrb[0].mxu0 %v1202
        %v2596 = vpop.f32.mrb[0].mxu0
        %v2597 = vadd.f32 0.0, %v2596
        %v2598 = vpop.f32.mrb[0].mxu0
        %v2599 = vpop.f32.mrb[0].mxu0
        %v2600 = vadd.f32 0.0, %v2599
        %v2601 = vpop.f32.mrb[0].mxu0
        %2602 = vmatprep.mubr.bf16.mxu0 0
        %2603 = vmatmul.mubr.bf16.gmra.mrb[0].mxu0 %v1205
        %v2604 = vpop.f32.mrb[0].mxu0
        %v2605 = vadd.f32 0.0, %v2604
        %v2606 = vpop.f32.mrb[0].mxu0
        %v2607 = vpop.f32.mrb[0].mxu0
        %v2608 = vadd.f32 0.0, %v2607
        %v2609 = vpop.f32.mrb[0].mxu0
        %2610 = vmatprep.mubr.bf16.mxu0 0
        %2611 = vmatmul.mubr.bf16.gmra.mrb[0].mxu0 %v1208
        %v2612 = vpop.f32.mrb[0].mxu0
        %v2613 = vadd.f32 0.0, %v2612
        %v2614 = vpop.f32.mrb[0].mxu0
        %v2615 = vpop.f32.mrb[0].mxu0
        %v2616 = vadd.f32 0.0, %v2615
        %v2617 = vpop.f32.mrb[0].mxu0
        %2618 = vdwg.mxu0
        %v2619 = vld [vmem:[#allocation3 + $0x21] sm:$0xff]
        %v2620 = vld [vmem:[#allocation3 + $0x29] sm:$0xff]
        %v2621 = vld [vmem:[#allocation3 + $0x31] sm:$0xff]
        %v2622 = vld [vmem:[#allocation3 + $0x39] sm:$0xff]
        %v2623 = vld [vmem:[#allocation3 + $0x41] sm:$0xff]
        %v2624 = vld [vmem:[#allocation3 + $0x49] sm:$0xff]
        %v2625 = vld [vmem:[#allocation3 + $0x51] sm:$0xff]
        %v2626 = vld [vmem:[#allocation3 + $0x59] sm:$0xff]
        %v2627 = vld [vmem:[#allocation3 + $0x61] sm:$0xff]
        %v2628 = vld [vmem:[#allocation3 + $0x69] sm:$0xff]
        %v2629 = vld [vmem:[#allocation3 + $0x71] sm:$0xff]
        %v2630 = vld [vmem:[#allocation3 + $0x79] sm:$0xff]
        %v2631 = vld [vmem:[#allocation3 + $0x81] sm:$0xff]
        %v2632 = vld [vmem:[#allocation3 + $0x89] sm:$0xff]
        %v2633 = vld [vmem:[#allocation3 + $0x91] sm:$0xff]
        %v2634 = vld [vmem:[#allocation3 + $0x99] sm:$0xff]
        %v2635 = vld [vmem:[#allocation3 + $0xa1] sm:$0xff]
        %v2636 = vld [vmem:[#allocation3 + $0xa9] sm:$0xff]
        %v2637 = vld [vmem:[#allocation3 + $0xb1] sm:$0xff]
        %v2638 = vld [vmem:[#allocation3 + $0xb9] sm:$0xff]
        %v2639 = vld [vmem:[#allocation3 + $0xc1] sm:$0xff]
        %v2640 = vld [vmem:[#allocation3 + $0xc9] sm:$0xff]
        %v2641 = vld [vmem:[#allocation3 + $0xd1] sm:$0xff]
        %v2642 = vld [vmem:[#allocation3 + $0xd9] sm:$0xff]
        %v2643 = vld [vmem:[#allocation3 + $0xe1] sm:$0xff]
        %v2644 = vld [vmem:[#allocation3 + $0xe9] sm:$0xff]
        %v2645 = vld [vmem:[#allocation3 + $0xf1] sm:$0xff]
        %v2646 = vld [vmem:[#allocation3 + $0xf9] sm:$0xff]
        %v2647 = vld [vmem:[#allocation3 + $0x101] sm:$0xff]
        %v2648 = vld [vmem:[#allocation3 + $0x109] sm:$0xff]
        %v2649 = vld [vmem:[#allocation3 + $0x111] sm:$0xff]
        %v2650 = vld [vmem:[#allocation3 + $0x119] sm:$0xff]
        %v2651 = vld [vmem:[#allocation3 + $0x121] sm:$0xff]
        %v2652 = vld [vmem:[#allocation3 + $0x129] sm:$0xff]
        %v2653 = vld [vmem:[#allocation3 + $0x131] sm:$0xff]
        %v2654 = vld [vmem:[#allocation3 + $0x139] sm:$0xff]
        %v2655 = vld [vmem:[#allocation3 + $0x141] sm:$0xff]
        %v2656 = vld [vmem:[#allocation3 + $0x149] sm:$0xff]
        %v2657 = vld [vmem:[#allocation3 + $0x151] sm:$0xff]
        %v2658 = vld [vmem:[#allocation3 + $0x159] sm:$0xff]
        %v2659 = vld [vmem:[#allocation3 + $0x161] sm:$0xff]
        %v2660 = vld [vmem:[#allocation3 + $0x169] sm:$0xff]
        %v2661 = vld [vmem:[#allocation3 + $0x171] sm:$0xff]
        %v2662 = vld [vmem:[#allocation3 + $0x179] sm:$0xff]
        %v2663 = vld [vmem:[#allocation3 + $0x181] sm:$0xff]
        %v2664 = vld [vmem:[#allocation3 + $0x189] sm:$0xff]
        %v2665 = vld [vmem:[#allocation3 + $0x191] sm:$0xff]
        %v2666 = vld [vmem:[#allocation3 + $0x199] sm:$0xff]
        %v2667 = vld [vmem:[#allocation3 + $0x1a1] sm:$0xff]
        %v2668 = vld [vmem:[#allocation3 + $0x1a9] sm:$0xff]
        %v2669 = vadd.f32 %v2619, %v2421
        %v2670 = vadd.f32 %v2620, %v2424
        %v2671 = vadd.f32 %v2621, %v2429
        %v2672 = vadd.f32 %v2622, %v2432
        %v2673 = vadd.f32 %v2623, %v2437
        %v2674 = vadd.f32 %v2624, %v2440
        %v2675 = vadd.f32 %v2625, %v2445
        %v2676 = vadd.f32 %v2626, %v2448
        %v2677 = vadd.f32 %v2627, %v2453
        %v2678 = vadd.f32 %v2628, %v2456
        %v2679 = vadd.f32 %v2629, %v2461
        %v2680 = vadd.f32 %v2630, %v2464
        %v2681 = vadd.f32 %v2631, %v2469
        %v2682 = vadd.f32 %v2632, %v2472
        %v2683 = vadd.f32 %v2633, %v2477
        %v2684 = vadd.f32 %v2634, %v2480
        %v2685 = vadd.f32 %v2635, %v2485
        %v2686 = vadd.f32 %v2636, %v2488
        %v2687 = vadd.f32 %v2637, %v2493
        %v2688 = vadd.f32 %v2638, %v2496
        %v2689 = vadd.f32 %v2639, %v2501
        %v2690 = vadd.f32 %v2640, %v2504
        %v2691 = vadd.f32 %v2641, %v2509
        %v2692 = vadd.f32 %v2642, %v2512
        %v2693 = vadd.f32 %v2643, %v2517
        %v2694 = vadd.f32 %v2644, %v2520
        %v2695 = vadd.f32 %v2645, %v2525
        %v2696 = vadd.f32 %v2646, %v2528
        %v2697 = vadd.f32 %v2647, %v2533
        %v2698 = vadd.f32 %v2648, %v2536
        %v2699 = vadd.f32 %v2649, %v2541
        %v2700 = vadd.f32 %v2650, %v2544
        %v2701 = vadd.f32 %v2651, %v2549
        %v2702 = vadd.f32 %v2652, %v2552
        %v2703 = vadd.f32 %v2653, %v2557
        %v2704 = vadd.f32 %v2654, %v2560
        %v2705 = vadd.f32 %v2655, %v2565
        %v2706 = vadd.f32 %v2656, %v2568
        %v2707 = vadd.f32 %v2657, %v2573
        %v2708 = vadd.f32 %v2658, %v2576
        %v2709 = vadd.f32 %v2659, %v2581
        %v2710 = vadd.f32 %v2660, %v2584
        %v2711 = vadd.f32 %v2661, %v2589
        %v2712 = vadd.f32 %v2662, %v2592
        %v2713 = vadd.f32 %v2663, %v2597
        %v2714 = vadd.f32 %v2664, %v2600
        %v2715 = vadd.f32 %v2665, %v2605
        %v2716 = vadd.f32 %v2666, %v2608
        %v2717 = vadd.f32 %v2667, %v2613
        %v2718 = vadd.f32 %v2668, %v2616
        %2719 = vst [vmem:[#allocation3 + $0x21] sm:$0xff] %v2669
        %2720 = vst [vmem:[#allocation3 + $0x29] sm:$0xff] %v2670
        %2721 = vst [vmem:[#allocation3 + $0x31] sm:$0xff] %v2671
        %2722 = vst [vmem:[#allocation3 + $0x39] sm:$0xff] %v2672
        %2723 = vst [vmem:[#allocation3 + $0x41] sm:$0xff] %v2673
        %2724 = vst [vmem:[#allocation3 + $0x49] sm:$0xff] %v2674
        %2725 = vst [vmem:[#allocation3 + $0x51] sm:$0xff] %v2675
        %2726 = vst [vmem:[#allocation3 + $0x59] sm:$0xff] %v2676
        %2727 = vst [vmem:[#allocation3 + $0x61] sm:$0xff] %v2677
        %2728 = vst [vmem:[#allocation3 + $0x69] sm:$0xff] %v2678
        %2729 = vst [vmem:[#allocation3 + $0x71] sm:$0xff] %v2679
        %2730 = vst [vmem:[#allocation3 + $0x79] sm:$0xff] %v2680
        %2731 = vst [vmem:[#allocation3 + $0x81] sm:$0xff] %v2681
        %2732 = vst [vmem:[#allocation3 + $0x89] sm:$0xff] %v2682
        %2733 = vst [vmem:[#allocation3 + $0x91] sm:$0xff] %v2683
        %2734 = vst [vmem:[#allocation3 + $0x99] sm:$0xff] %v2684
        %2735 = vst [vmem:[#allocation3 + $0xa1] sm:$0xff] %v2685
        %2736 = vst [vmem:[#allocation3 + $0xa9] sm:$0xff] %v2686
        %2737 = vst [vmem:[#allocation3 + $0xb1] sm:$0xff] %v2687
        %2738 = vst [vmem:[#allocation3 + $0xb9] sm:$0xff] %v2688
        %2739 = vst [vmem:[#allocation3 + $0xc1] sm:$0xff] %v2689
        %2740 = vst [vmem:[#allocation3 + $0xc9] sm:$0xff] %v2690
        %2741 = vst [vmem:[#allocation3 + $0xd1] sm:$0xff] %v2691
        %2742 = vst [vmem:[#allocation3 + $0xd9] sm:$0xff] %v2692
        %2743 = vst [vmem:[#allocation3 + $0xe1] sm:$0xff] %v2693
        %2744 = vst [vmem:[#allocation3 + $0xe9] sm:$0xff] %v2694
        %2745 = vst [vmem:[#allocation3 + $0xf1] sm:$0xff] %v2695
        %2746 = vst [vmem:[#allocation3 + $0xf9] sm:$0xff] %v2696
        %2747 = vst [vmem:[#allocation3 + $0x101] sm:$0xff] %v2697
        %2748 = vst [vmem:[#allocation3 + $0x109] sm:$0xff] %v2698
        %2749 = vst [vmem:[#allocation3 + $0x111] sm:$0xff] %v2699
        %2750 = vst [vmem:[#allocation3 + $0x119] sm:$0xff] %v2700
        %2751 = vst [vmem:[#allocation3 + $0x121] sm:$0xff] %v2701
        %2752 = vst [vmem:[#allocation3 + $0x129] sm:$0xff] %v2702
        %2753 = vst [vmem:[#allocation3 + $0x131] sm:$0xff] %v2703
        %2754 = vst [vmem:[#allocation3 + $0x139] sm:$0xff] %v2704
        %2755 = vst [vmem:[#allocation3 + $0x141] sm:$0xff] %v2705
        %2756 = vst [vmem:[#allocation3 + $0x149] sm:$0xff] %v2706
        %2757 = vst [vmem:[#allocation3 + $0x151] sm:$0xff] %v2707
        %2758 = vst [vmem:[#allocation3 + $0x159] sm:$0xff] %v2708
        %2759 = vst [vmem:[#allocation3 + $0x161] sm:$0xff] %v2709
        %2760 = vst [vmem:[#allocation3 + $0x169] sm:$0xff] %v2710
        %2761 = vst [vmem:[#allocation3 + $0x171] sm:$0xff] %v2711
        %2762 = vst [vmem:[#allocation3 + $0x179] sm:$0xff] %v2712
        %2763 = vst [vmem:[#allocation3 + $0x181] sm:$0xff] %v2713
        %2764 = vst [vmem:[#allocation3 + $0x189] sm:$0xff] %v2714
        %2765 = vst [vmem:[#allocation3 + $0x191] sm:$0xff] %v2715
        %2766 = vst [vmem:[#allocation3 + $0x199] sm:$0xff] %v2716
        %2767 = vst [vmem:[#allocation3 + $0x1a1] sm:$0xff] %v2717
        %2768 = vst [vmem:[#allocation3 + $0x1a9] sm:$0xff] %v2718
        %s2769 = scalar_lea.vmem %s1, 32
        %v2770 = vld [vmem:[%s2769] sm:$0xf]
        %v2771 = vld [vmem:[%s2769 + $0x4] sm:$0xf]
        %v2774 = vunpack.c.l.b16 %v2770
        %v2775 = vunpack.c.l.b16 %v2771
        %v2776 = vpack.c.b16 %v2775, %v2774
        %2778 = vmatprep.subr.bf16.mxu0 0
        %2779 = vmatpush1.bf16.msra.mxu0 %v2776
        %2780 = vmatprep.subr.bf16.mxu0 0
        %2781 = vmatpush1.bf16.msra.mxu0 0
        %2782 = vmatprep.subr.bf16.mxu0 0
        %2783 = vmatpush1.bf16.msra.mxu0 0
        %2784 = vmatprep.subr.bf16.mxu0 0
        %2785 = vmatpush1.bf16.msra.mxu0 0
        %2786 = vmatprep.subr.bf16.mxu0 0
        %2787 = vmatpush1.bf16.msra.mxu0 0
        %2788 = vmatprep.subr.bf16.mxu0 0
        %2789 = vmatpush1.bf16.msra.mxu0 0
        %2790 = vmatprep.subr.bf16.mxu0 0
        %2791 = vmatpush1.bf16.msra.mxu0 0
        %2792 = vmatprep.subr.bf16.mxu0 0
        %2793 = vmatpush1.bf16.msra.mxu0 0
        %2794 = vmatprep.subr.bf16.mxu0 0
        %2795 = vmatpush1.bf16.msra.mxu0 0
        %2796 = vmatprep.subr.bf16.mxu0 0
        %2797 = vmatpush1.bf16.msra.mxu0 0
        %2798 = vmatprep.subr.bf16.mxu0 0
        %2799 = vmatpush1.bf16.msra.mxu0 0
        %2800 = vmatprep.subr.bf16.mxu0 0
        %2801 = vmatpush1.bf16.msra.mxu0 0
        %2802 = vmatprep.subr.bf16.mxu0 0
        %2803 = vmatpush1.bf16.msra.mxu0 0
        %2804 = vmatprep.subr.bf16.mxu0 0
        %2805 = vmatpush1.bf16.msra.mxu0 0
        %2806 = vmatprep.subr.bf16.mxu0 0
        %2807 = vmatpush1.bf16.msra.mxu0 0
        %2808 = vmatprep.subr.bf16.mxu0 0
        %2809 = vmatpush1.bf16.msra.mxu0 0
        %2810 = vmatprep.mubr.bf16.mxu0 0
        %2811 = vmatmul.mubr.bf16.gmra.mrb[0].mxu0 %v1136
        %v2812 = vpop.f32.mrb[0].mxu0
        %v2813 = vadd.f32 0.0, %v2812
        %v2814 = vpop.f32.mrb[0].mxu0
        %v2815 = vpop.f32.mrb[0].mxu0
        %v2816 = vadd.f32 0.0, %v2815
        %v2817 = vpop.f32.mrb[0].mxu0
        %2818 = vmatprep.mubr.bf16.mxu0 0
        %2819 = vmatmul.mubr.bf16.gmra.mrb[0].mxu0 %v1139
        %v2820 = vpop.f32.mrb[0].mxu0
        %v2821 = vadd.f32 0.0, %v2820
        %v2822 = vpop.f32.mrb[0].mxu0
        %v2823 = vpop.f32.mrb[0].mxu0
        %v2824 = vadd.f32 0.0, %v2823
        %v2825 = vpop.f32.mrb[0].mxu0
        %2826 = vmatprep.mubr.bf16.mxu0 0
        %2827 = vmatmul.mubr.bf16.gmra.mrb[0].mxu0 %v1142
        %v2828 = vpop.f32.mrb[0].mxu0
        %v2829 = vadd.f32 0.0, %v2828
        %v2830 = vpop.f32.mrb[0].mxu0
        %v2831 = vpop.f32.mrb[0].mxu0
        %v2832 = vadd.f32 0.0, %v2831
        %v2833 = vpop.f32.mrb[0].mxu0
        %2834 = vmatprep.mubr.bf16.mxu0 0
        %2835 = vmatmul.mubr.bf16.gmra.mrb[0].mxu0 %v1145
        %v2836 = vpop.f32.mrb[0].mxu0
        %v2837 = vadd.f32 0.0, %v2836
        %v2838 = vpop.f32.mrb[0].mxu0
        %v2839 = vpop.f32.mrb[0].mxu0
        %v2840 = vadd.f32 0.0, %v2839
        %v2841 = vpop.f32.mrb[0].mxu0
        %2842 = vmatprep.mubr.bf16.mxu0 0
        %2843 = vmatmul.mubr.bf16.gmra.mrb[0].mxu0 %v1148
        %v2844 = vpop.f32.mrb[0].mxu0
        %v2845 = vadd.f32 0.0, %v2844
        %v2846 = vpop.f32.mrb[0].mxu0
        %v2847 = vpop.f32.mrb[0].mxu0
        %v2848 = vadd.f32 0.0, %v2847
        %v2849 = vpop.f32.mrb[0].mxu0
        %2850 = vmatprep.mubr.bf16.mxu0 0
        %2851 = vmatmul.mubr.bf16.gmra.mrb[0].mxu0 %v1151
        %v2852 = vpop.f32.mrb[0].mxu0
        %v2853 = vadd.f32 0.0, %v2852
        %v2854 = vpop.f32.mrb[0].mxu0
        %v2855 = vpop.f32.mrb[0].mxu0
        %v2856 = vadd.f32 0.0, %v2855
        %v2857 = vpop.f32.mrb[0].mxu0
        %2858 = vmatprep.mubr.bf16.mxu0 0
        %2859 = vmatmul.mubr.bf16.gmra.mrb[0].mxu0 %v1154
        %v2860 = vpop.f32.mrb[0].mxu0
        %v2861 = vadd.f32 0.0, %v2860
        %v2862 = vpop.f32.mrb[0].mxu0
        %v2863 = vpop.f32.mrb[0].mxu0
        %v2864 = vadd.f32 0.0, %v2863
        %v2865 = vpop.f32.mrb[0].mxu0
        %2866 = vmatprep.mubr.bf16.mxu0 0
        %2867 = vmatmul.mubr.bf16.gmra.mrb[0].mxu0 %v1157
        %v2868 = vpop.f32.mrb[0].mxu0
        %v2869 = vadd.f32 0.0, %v2868
        %v2870 = vpop.f32.mrb[0].mxu0
        %v2871 = vpop.f32.mrb[0].mxu0
        %v2872 = vadd.f32 0.0, %v2871
        %v2873 = vpop.f32.mrb[0].mxu0
        %2874 = vmatprep.mubr.bf16.mxu0 0
        %2875 = vmatmul.mubr.bf16.gmra.mrb[0].mxu0 %v1160
        %v2876 = vpop.f32.mrb[0].mxu0
        %v2877 = vadd.f32 0.0, %v2876
        %v2878 = vpop.f32.mrb[0].mxu0
        %v2879 = vpop.f32.mrb[0].mxu0
        %v2880 = vadd.f32 0.0, %v2879
        %v2881 = vpop.f32.mrb[0].mxu0
        %2882 = vmatprep.mubr.bf16.mxu0 0
        %2883 = vmatmul.mubr.bf16.gmra.mrb[0].mxu0 %v1163
        %v2884 = vpop.f32.mrb[0].mxu0
        %v2885 = vadd.f32 0.0, %v2884
        %v2886 = vpop.f32.mrb[0].mxu0
        %v2887 = vpop.f32.mrb[0].mxu0
        %v2888 = vadd.f32 0.0, %v2887
        %v2889 = vpop.f32.mrb[0].mxu0
        %2890 = vmatprep.mubr.bf16.mxu0 0
        %2891 = vmatmul.mubr.bf16.gmra.mrb[0].mxu0 %v1166
        %v2892 = vpop.f32.mrb[0].mxu0
        %v2893 = vadd.f32 0.0, %v2892
        %v2894 = vpop.f32.mrb[0].mxu0
        %v2895 = vpop.f32.mrb[0].mxu0
        %v2896 = vadd.f32 0.0, %v2895
        %v2897 = vpop.f32.mrb[0].mxu0
        %2898 = vmatprep.mubr.bf16.mxu0 0
        %2899 = vmatmul.mubr.bf16.gmra.mrb[0].mxu0 %v1169
        %v2900 = vpop.f32.mrb[0].mxu0
        %v2901 = vadd.f32 0.0, %v2900
        %v2902 = vpop.f32.mrb[0].mxu0
        %v2903 = vpop.f32.mrb[0].mxu0
        %v2904 = vadd.f32 0.0, %v2903
        %v2905 = vpop.f32.mrb[0].mxu0
        %2906 = vmatprep.mubr.bf16.mxu0 0
        %2907 = vmatmul.mubr.bf16.gmra.mrb[0].mxu0 %v1172
        %v2908 = vpop.f32.mrb[0].mxu0
        %v2909 = vadd.f32 0.0, %v2908
        %v2910 = vpop.f32.mrb[0].mxu0
        %v2911 = vpop.f32.mrb[0].mxu0
        %v2912 = vadd.f32 0.0, %v2911
        %v2913 = vpop.f32.mrb[0].mxu0
        %2914 = vmatprep.mubr.bf16.mxu0 0
        %2915 = vmatmul.mubr.bf16.gmra.mrb[0].mxu0 %v1175
        %v2916 = vpop.f32.mrb[0].mxu0
        %v2917 = vadd.f32 0.0, %v2916
        %v2918 = vpop.f32.mrb[0].mxu0
        %v2919 = vpop.f32.mrb[0].mxu0
        %v2920 = vadd.f32 0.0, %v2919
        %v2921 = vpop.f32.mrb[0].mxu0
        %2922 = vmatprep.mubr.bf16.mxu0 0
        %2923 = vmatmul.mubr.bf16.gmra.mrb[0].mxu0 %v1178
        %v2924 = vpop.f32.mrb[0].mxu0
        %v2925 = vadd.f32 0.0, %v2924
        %v2926 = vpop.f32.mrb[0].mxu0
        %v2927 = vpop.f32.mrb[0].mxu0
        %v2928 = vadd.f32 0.0, %v2927
        %v2929 = vpop.f32.mrb[0].mxu0
        %2930 = vmatprep.mubr.bf16.mxu0 0
        %2931 = vmatmul.mubr.bf16.gmra.mrb[0].mxu0 %v1181
        %v2932 = vpop.f32.mrb[0].mxu0
        %v2933 = vadd.f32 0.0, %v2932
        %v2934 = vpop.f32.mrb[0].mxu0
        %v2935 = vpop.f32.mrb[0].mxu0
        %v2936 = vadd.f32 0.0, %v2935
        %v2937 = vpop.f32.mrb[0].mxu0
        %2938 = vmatprep.mubr.bf16.mxu0 0
        %2939 = vmatmul.mubr.bf16.gmra.mrb[0].mxu0 %v1184
        %v2940 = vpop.f32.mrb[0].mxu0
        %v2941 = vadd.f32 0.0, %v2940
        %v2942 = vpop.f32.mrb[0].mxu0
        %v2943 = vpop.f32.mrb[0].mxu0
        %v2944 = vadd.f32 0.0, %v2943
        %v2945 = vpop.f32.mrb[0].mxu0
        %2946 = vmatprep.mubr.bf16.mxu0 0
        %2947 = vmatmul.mubr.bf16.gmra.mrb[0].mxu0 %v1187
        %v2948 = vpop.f32.mrb[0].mxu0
        %v2949 = vadd.f32 0.0, %v2948
        %v2950 = vpop.f32.mrb[0].mxu0
        %v2951 = vpop.f32.mrb[0].mxu0
        %v2952 = vadd.f32 0.0, %v2951
        %v2953 = vpop.f32.mrb[0].mxu0
        %2954 = vmatprep.mubr.bf16.mxu0 0
        %2955 = vmatmul.mubr.bf16.gmra.mrb[0].mxu0 %v1190
        %v2956 = vpop.f32.mrb[0].mxu0
        %v2957 = vadd.f32 0.0, %v2956
        %v2958 = vpop.f32.mrb[0].mxu0
        %v2959 = vpop.f32.mrb[0].mxu0
        %v2960 = vadd.f32 0.0, %v2959
        %v2961 = vpop.f32.mrb[0].mxu0
        %2962 = vmatprep.mubr.bf16.mxu0 0
        %2963 = vmatmul.mubr.bf16.gmra.mrb[0].mxu0 %v1193
        %v2964 = vpop.f32.mrb[0].mxu0
        %v2965 = vadd.f32 0.0, %v2964
        %v2966 = vpop.f32.mrb[0].mxu0
        %v2967 = vpop.f32.mrb[0].mxu0
        %v2968 = vadd.f32 0.0, %v2967
        %v2969 = vpop.f32.mrb[0].mxu0
        %2970 = vmatprep.mubr.bf16.mxu0 0
        %2971 = vmatmul.mubr.bf16.gmra.mrb[0].mxu0 %v1196
        %v2972 = vpop.f32.mrb[0].mxu0
        %v2973 = vadd.f32 0.0, %v2972
        %v2974 = vpop.f32.mrb[0].mxu0
        %v2975 = vpop.f32.mrb[0].mxu0
        %v2976 = vadd.f32 0.0, %v2975
        %v2977 = vpop.f32.mrb[0].mxu0
        %2978 = vmatprep.mubr.bf16.mxu0 0
        %2979 = vmatmul.mubr.bf16.gmra.mrb[0].mxu0 %v1199
        %v2980 = vpop.f32.mrb[0].mxu0
        %v2981 = vadd.f32 0.0, %v2980
        %v2982 = vpop.f32.mrb[0].mxu0
        %v2983 = vpop.f32.mrb[0].mxu0
        %v2984 = vadd.f32 0.0, %v2983
        %v2985 = vpop.f32.mrb[0].mxu0
        %2986 = vmatprep.mubr.bf16.mxu0 0
        %2987 = vmatmul.mubr.bf16.gmra.mrb[0].mxu0 %v1202
        %v2988 = vpop.f32.mrb[0].mxu0
        %v2989 = vadd.f32 0.0, %v2988
        %v2990 = vpop.f32.mrb[0].mxu0
        %v2991 = vpop.f32.mrb[0].mxu0
        %v2992 = vadd.f32 0.0, %v2991
        %v2993 = vpop.f32.mrb[0].mxu0
        %2994 = vmatprep.mubr.bf16.mxu0 0
        %2995 = vmatmul.mubr.bf16.gmra.mrb[0].mxu0 %v1205
        %v2996 = vpop.f32.mrb[0].mxu0
        %v2997 = vadd.f32 0.0, %v2996
        %v2998 = vpop.f32.mrb[0].mxu0
        %v2999 = vpop.f32.mrb[0].mxu0
        %v3000 = vadd.f32 0.0, %v2999
        %v3001 = vpop.f32.mrb[0].mxu0
        %3002 = vmatprep.mubr.bf16.mxu0 0
        %3003 = vmatmul.mubr.bf16.gmra.mrb[0].mxu0 %v1208
        %v3004 = vpop.f32.mrb[0].mxu0
        %v3005 = vadd.f32 0.0, %v3004
        %v3006 = vpop.f32.mrb[0].mxu0
        %v3007 = vpop.f32.mrb[0].mxu0
        %v3008 = vadd.f32 0.0, %v3007
        %v3009 = vpop.f32.mrb[0].mxu0
        %3010 = vdwg.mxu0
        %v3011 = vld [vmem:[#allocation3 + $0x20] sm:$0xff]
        %v3012 = vld [vmem:[#allocation3 + $0x28] sm:$0xff]
        %v3013 = vld [vmem:[#allocation3 + $0x30] sm:$0xff]
        %v3014 = vld [vmem:[#allocation3 + $0x38] sm:$0xff]
        %v3015 = vld [vmem:[#allocation3 + $0x40] sm:$0xff]
        %v3016 = vld [vmem:[#allocation3 + $0x48] sm:$0xff]
        %v3017 = vld [vmem:[#allocation3 + $0x50] sm:$0xff]
        %v3018 = vld [vmem:[#allocation3 + $0x58] sm:$0xff]
        %v3019 = vld [vmem:[#allocation3 + $0x60] sm:$0xff]
        %v3020 = vld [vmem:[#allocation3 + $0x68] sm:$0xff]
        %v3021 = vld [vmem:[#allocation3 + $0x70] sm:$0xff]
        %v3022 = vld [vmem:[#allocation3 + $0x78] sm:$0xff]
        %v3023 = vld [vmem:[#allocation3 + $0x80] sm:$0xff]
        %v3024 = vld [vmem:[#allocation3 + $0x88] sm:$0xff]
        %v3025 = vld [vmem:[#allocation3 + $0x90] sm:$0xff]
        %v3026 = vld [vmem:[#allocation3 + $0x98] sm:$0xff]
        %v3027 = vld [vmem:[#allocation3 + $0xa0] sm:$0xff]
        %v3028 = vld [vmem:[#allocation3 + $0xa8] sm:$0xff]
        %v3029 = vld [vmem:[#allocation3 + $0xb0] sm:$0xff]
        %v3030 = vld [vmem:[#allocation3 + $0xb8] sm:$0xff]
        %v3031 = vld [vmem:[#allocation3 + $0xc0] sm:$0xff]
        %v3032 = vld [vmem:[#allocation3 + $0xc8] sm:$0xff]
        %v3033 = vld [vmem:[#allocation3 + $0xd0] sm:$0xff]
        %v3034 = vld [vmem:[#allocation3 + $0xd8] sm:$0xff]
        %v3035 = vld [vmem:[#allocation3 + $0xe0] sm:$0xff]
        %v3036 = vld [vmem:[#allocation3 + $0xe8] sm:$0xff]
        %v3037 = vld [vmem:[#allocation3 + $0xf0] sm:$0xff]
        %v3038 = vld [vmem:[#allocation3 + $0xf8] sm:$0xff]
        %v3039 = vld [vmem:[#allocation3 + $0x100] sm:$0xff]
        %v3040 = vld [vmem:[#allocation3 + $0x108] sm:$0xff]
        %v3041 = vld [vmem:[#allocation3 + $0x110] sm:$0xff]
        %v3042 = vld [vmem:[#allocation3 + $0x118] sm:$0xff]
        %v3043 = vld [vmem:[#allocation3 + $0x120] sm:$0xff]
        %v3044 = vld [vmem:[#allocation3 + $0x128] sm:$0xff]
        %v3045 = vld [vmem:[#allocation3 + $0x130] sm:$0xff]
        %v3046 = vld [vmem:[#allocation3 + $0x138] sm:$0xff]
        %v3047 = vld [vmem:[#allocation3 + $0x140] sm:$0xff]
        %v3048 = vld [vmem:[#allocation3 + $0x148] sm:$0xff]
        %v3049 = vld [vmem:[#allocation3 + $0x150] sm:$0xff]
        %v3050 = vld [vmem:[#allocation3 + $0x158] sm:$0xff]
        %v3051 = vld [vmem:[#allocation3 + $0x160] sm:$0xff]
        %v3052 = vld [vmem:[#allocation3 + $0x168] sm:$0xff]
        %v3053 = vld [vmem:[#allocation3 + $0x170] sm:$0xff]
        %v3054 = vld [vmem:[#allocation3 + $0x178] sm:$0xff]
        %v3055 = vld [vmem:[#allocation3 + $0x180] sm:$0xff]
        %v3056 = vld [vmem:[#allocation3 + $0x188] sm:$0xff]
        %v3057 = vld [vmem:[#allocation3 + $0x190] sm:$0xff]
        %v3058 = vld [vmem:[#allocation3 + $0x198] sm:$0xff]
        %v3059 = vld [vmem:[#allocation3 + $0x1a0] sm:$0xff]
        %v3060 = vld [vmem:[#allocation3 + $0x1a8] sm:$0xff]
        %v3061 = vadd.f32 %v3011, %v2813
        %v3062 = vadd.f32 %v3012, %v2816
        %v3063 = vadd.f32 %v3013, %v2821
        %v3064 = vadd.f32 %v3014, %v2824
        %v3065 = vadd.f32 %v3015, %v2829
        %v3066 = vadd.f32 %v3016, %v2832
        %v3067 = vadd.f32 %v3017, %v2837
        %v3068 = vadd.f32 %v3018, %v2840
        %v3069 = vadd.f32 %v3019, %v2845
        %v3070 = vadd.f32 %v3020, %v2848
        %v3071 = vadd.f32 %v3021, %v2853
        %v3072 = vadd.f32 %v3022, %v2856
        %v3073 = vadd.f32 %v3023, %v2861
        %v3074 = vadd.f32 %v3024, %v2864
        %v3075 = vadd.f32 %v3025, %v2869
        %v3076 = vadd.f32 %v3026, %v2872
        %v3077 = vadd.f32 %v3027, %v2877
        %v3078 = vadd.f32 %v3028, %v2880
        %v3079 = vadd.f32 %v3029, %v2885
        %v3080 = vadd.f32 %v3030, %v2888
        %v3081 = vadd.f32 %v3031, %v2893
        %v3082 = vadd.f32 %v3032, %v2896
        %v3083 = vadd.f32 %v3033, %v2901
        %v3084 = vadd.f32 %v3034, %v2904
        %v3085 = vadd.f32 %v3035, %v2909
        %v3086 = vadd.f32 %v3036, %v2912
        %v3087 = vadd.f32 %v3037, %v2917
        %v3088 = vadd.f32 %v3038, %v2920
        %v3089 = vadd.f32 %v3039, %v2925
        %v3090 = vadd.f32 %v3040, %v2928
        %v3091 = vadd.f32 %v3041, %v2933
        %v3092 = vadd.f32 %v3042, %v2936
        %v3093 = vadd.f32 %v3043, %v2941
        %v3094 = vadd.f32 %v3044, %v2944
        %v3095 = vadd.f32 %v3045, %v2949
        %v3096 = vadd.f32 %v3046, %v2952
        %v3097 = vadd.f32 %v3047, %v2957
        %v3098 = vadd.f32 %v3048, %v2960
        %v3099 = vadd.f32 %v3049, %v2965
        %v3100 = vadd.f32 %v3050, %v2968
        %v3101 = vadd.f32 %v3051, %v2973
        %v3102 = vadd.f32 %v3052, %v2976
        %v3103 = vadd.f32 %v3053, %v2981
        %v3104 = vadd.f32 %v3054, %v2984
        %v3105 = vadd.f32 %v3055, %v2989
        %v3106 = vadd.f32 %v3056, %v2992
        %v3107 = vadd.f32 %v3057, %v2997
        %v3108 = vadd.f32 %v3058, %v3000
        %v3109 = vadd.f32 %v3059, %v3005
        %v3110 = vadd.f32 %v3060, %v3008
        %3111 = vst [vmem:[#allocation3 + $0x20] sm:$0xff] %v3061
        %3112 = vst [vmem:[#allocation3 + $0x28] sm:$0xff] %v3062
        %3113 = vst [vmem:[#allocation3 + $0x30] sm:$0xff] %v3063
        %3114 = vst [vmem:[#allocation3 + $0x38] sm:$0xff] %v3064
        %3115 = vst [vmem:[#allocation3 + $0x40] sm:$0xff] %v3065
        %3116 = vst [vmem:[#allocation3 + $0x48] sm:$0xff] %v3066
        %3117 = vst [vmem:[#allocation3 + $0x50] sm:$0xff] %v3067
        %3118 = vst [vmem:[#allocation3 + $0x58] sm:$0xff] %v3068
        %3119 = vst [vmem:[#allocation3 + $0x60] sm:$0xff] %v3069
        %3120 = vst [vmem:[#allocation3 + $0x68] sm:$0xff] %v3070
        %3121 = vst [vmem:[#allocation3 + $0x70] sm:$0xff] %v3071
        %3122 = vst [vmem:[#allocation3 + $0x78] sm:$0xff] %v3072
        %3123 = vst [vmem:[#allocation3 + $0x80] sm:$0xff] %v3073
        %3124 = vst [vmem:[#allocation3 + $0x88] sm:$0xff] %v3074
        %3125 = vst [vmem:[#allocation3 + $0x90] sm:$0xff] %v3075
        %3126 = vst [vmem:[#allocation3 + $0x98] sm:$0xff] %v3076
        %3127 = vst [vmem:[#allocation3 + $0xa0] sm:$0xff] %v3077
        %3128 = vst [vmem:[#allocation3 + $0xa8] sm:$0xff] %v3078
        %3129 = vst [vmem:[#allocation3 + $0xb0] sm:$0xff] %v3079
        %3130 = vst [vmem:[#allocation3 + $0xb8] sm:$0xff] %v3080
        %3131 = vst [vmem:[#allocation3 + $0xc0] sm:$0xff] %v3081
        %3132 = vst [vmem:[#allocation3 + $0xc8] sm:$0xff] %v3082
        %3133 = vst [vmem:[#allocation3 + $0xd0] sm:$0xff] %v3083
        %3134 = vst [vmem:[#allocation3 + $0xd8] sm:$0xff] %v3084
        %3135 = vst [vmem:[#allocation3 + $0xe0] sm:$0xff] %v3085
        %3136 = vst [vmem:[#allocation3 + $0xe8] sm:$0xff] %v3086
        %3137 = vst [vmem:[#allocation3 + $0xf0] sm:$0xff] %v3087
        %3138 = vst [vmem:[#allocation3 + $0xf8] sm:$0xff] %v3088
        %3139 = vst [vmem:[#allocation3 + $0x100] sm:$0xff] %v3089
        %3140 = vst [vmem:[#allocation3 + $0x108] sm:$0xff] %v3090
        %3141 = vst [vmem:[#allocation3 + $0x110] sm:$0xff] %v3091
        %3142 = vst [vmem:[#allocation3 + $0x118] sm:$0xff] %v3092
        %3143 = vst [vmem:[#allocation3 + $0x120] sm:$0xff] %v3093
        %3144 = vst [vmem:[#allocation3 + $0x128] sm:$0xff] %v3094
        %3145 = vst [vmem:[#allocation3 + $0x130] sm:$0xff] %v3095
        %3146 = vst [vmem:[#allocation3 + $0x138] sm:$0xff] %v3096
        %3147 = vst [vmem:[#allocation3 + $0x140] sm:$0xff] %v3097
        %3148 = vst [vmem:[#allocation3 + $0x148] sm:$0xff] %v3098
        %3149 = vst [vmem:[#allocation3 + $0x150] sm:$0xff] %v3099
        %3150 = vst [vmem:[#allocation3 + $0x158] sm:$0xff] %v3100
        %3151 = vst [vmem:[#allocation3 + $0x160] sm:$0xff] %v3101
        %3152 = vst [vmem:[#allocation3 + $0x168] sm:$0xff] %v3102
        %3153 = vst [vmem:[#allocation3 + $0x170] sm:$0xff] %v3103
        %3154 = vst [vmem:[#allocation3 + $0x178] sm:$0xff] %v3104
        %3155 = vst [vmem:[#allocation3 + $0x180] sm:$0xff] %v3105
        %3156 = vst [vmem:[#allocation3 + $0x188] sm:$0xff] %v3106
        %3157 = vst [vmem:[#allocation3 + $0x190] sm:$0xff] %v3107
        %3158 = vst [vmem:[#allocation3 + $0x198] sm:$0xff] %v3108
        %3159 = vst [vmem:[#allocation3 + $0x1a0] sm:$0xff] %v3109
        %3160 = vst [vmem:[#allocation3 + $0x1a8] sm:$0xff] %v3110
        %s3161 = scalar_lea.vmem %s1, 40
        %v3162 = vld [vmem:[%s3161] sm:$0xf]
        %v3163 = vld [vmem:[%s3161 + $0x4] sm:$0xf]
        %v3166 = vunpack.c.l.b16 %v3162
        %v3167 = vunpack.c.l.b16 %v3163
        %v3168 = vpack.c.b16 %v3167, %v3166
        %3170 = vmatprep.subr.bf16.mxu0 0
        %3171 = vmatpush1.bf16.msra.mxu0 %v3168
        %3172 = vmatprep.subr.bf16.mxu0 0
        %3173 = vmatpush1.bf16.msra.mxu0 0
        %3174 = vmatprep.subr.bf16.mxu0 0
        %3175 = vmatpush1.bf16.msra.mxu0 0
        %3176 = vmatprep.subr.bf16.mxu0 0
        %3177 = vmatpush1.bf16.msra.mxu0 0
        %3178 = vmatprep.subr.bf16.mxu0 0
        %3179 = vmatpush1.bf16.msra.mxu0 0
        %3180 = vmatprep.subr.bf16.mxu0 0
        %3181 = vmatpush1.bf16.msra.mxu0 0
        %3182 = vmatprep.subr.bf16.mxu0 0
        %3183 = vmatpush1.bf16.msra.mxu0 0
        %3184 = vmatprep.subr.bf16.mxu0 0
        %3185 = vmatpush1.bf16.msra.mxu0 0
        %3186 = vmatprep.subr.bf16.mxu0 0
        %3187 = vmatpush1.bf16.msra.mxu0 0
        %3188 = vmatprep.subr.bf16.mxu0 0
        %3189 = vmatpush1.bf16.msra.mxu0 0
        %3190 = vmatprep.subr.bf16.mxu0 0
        %3191 = vmatpush1.bf16.msra.mxu0 0
        %3192 = vmatprep.subr.bf16.mxu0 0
        %3193 = vmatpush1.bf16.msra.mxu0 0
        %3194 = vmatprep.subr.bf16.mxu0 0
        %3195 = vmatpush1.bf16.msra.mxu0 0
        %3196 = vmatprep.subr.bf16.mxu0 0
        %3197 = vmatpush1.bf16.msra.mxu0 0
        %3198 = vmatprep.subr.bf16.mxu0 0
        %3199 = vmatpush1.bf16.msra.mxu0 0
        %3200 = vmatprep.subr.bf16.mxu0 0
        %3201 = vmatpush1.bf16.msra.mxu0 0
        %3202 = vmatprep.mubr.bf16.mxu0 0
        %3203 = vmatmul.mubr.bf16.gmra.mrb[0].mxu0 %v1136
        %v3204 = vpop.f32.mrb[0].mxu0
        %v3205 = vadd.f32 0.0, %v3204
        %v3206 = vpop.f32.mrb[0].mxu0
        %v3207 = vpop.f32.mrb[0].mxu0
        %v3208 = vadd.f32 0.0, %v3207
        %v3209 = vpop.f32.mrb[0].mxu0
        %3210 = vmatprep.mubr.bf16.mxu0 0
        %3211 = vmatmul.mubr.bf16.gmra.mrb[0].mxu0 %v1139
        %v3212 = vpop.f32.mrb[0].mxu0
        %v3213 = vadd.f32 0.0, %v3212
        %v3214 = vpop.f32.mrb[0].mxu0
        %v3215 = vpop.f32.mrb[0].mxu0
        %v3216 = vadd.f32 0.0, %v3215
        %v3217 = vpop.f32.mrb[0].mxu0
        %3218 = vmatprep.mubr.bf16.mxu0 0
        %3219 = vmatmul.mubr.bf16.gmra.mrb[0].mxu0 %v1142
        %v3220 = vpop.f32.mrb[0].mxu0
        %v3221 = vadd.f32 0.0, %v3220
        %v3222 = vpop.f32.mrb[0].mxu0
        %v3223 = vpop.f32.mrb[0].mxu0
        %v3224 = vadd.f32 0.0, %v3223
        %v3225 = vpop.f32.mrb[0].mxu0
        %3226 = vmatprep.mubr.bf16.mxu0 0
        %3227 = vmatmul.mubr.bf16.gmra.mrb[0].mxu0 %v1145
        %v3228 = vpop.f32.mrb[0].mxu0
        %v3229 = vadd.f32 0.0, %v3228
        %v3230 = vpop.f32.mrb[0].mxu0
        %v3231 = vpop.f32.mrb[0].mxu0
        %v3232 = vadd.f32 0.0, %v3231
        %v3233 = vpop.f32.mrb[0].mxu0
        %3234 = vmatprep.mubr.bf16.mxu0 0
        %3235 = vmatmul.mubr.bf16.gmra.mrb[0].mxu0 %v1148
        %v3236 = vpop.f32.mrb[0].mxu0
        %v3237 = vadd.f32 0.0, %v3236
        %v3238 = vpop.f32.mrb[0].mxu0
        %v3239 = vpop.f32.mrb[0].mxu0
        %v3240 = vadd.f32 0.0, %v3239
        %v3241 = vpop.f32.mrb[0].mxu0
        %3242 = vmatprep.mubr.bf16.mxu0 0
        %3243 = vmatmul.mubr.bf16.gmra.mrb[0].mxu0 %v1151
        %v3244 = vpop.f32.mrb[0].mxu0
        %v3245 = vadd.f32 0.0, %v3244
        %v3246 = vpop.f32.mrb[0].mxu0
        %v3247 = vpop.f32.mrb[0].mxu0
        %v3248 = vadd.f32 0.0, %v3247
        %v3249 = vpop.f32.mrb[0].mxu0
        %3250 = vmatprep.mubr.bf16.mxu0 0
        %3251 = vmatmul.mubr.bf16.gmra.mrb[0].mxu0 %v1154
        %v3252 = vpop.f32.mrb[0].mxu0
        %v3253 = vadd.f32 0.0, %v3252
        %v3254 = vpop.f32.mrb[0].mxu0
        %v3255 = vpop.f32.mrb[0].mxu0
        %v3256 = vadd.f32 0.0, %v3255
        %v3257 = vpop.f32.mrb[0].mxu0
        %3258 = vmatprep.mubr.bf16.mxu0 0
        %3259 = vmatmul.mubr.bf16.gmra.mrb[0].mxu0 %v1157
        %v3260 = vpop.f32.mrb[0].mxu0
        %v3261 = vadd.f32 0.0, %v3260
        %v3262 = vpop.f32.mrb[0].mxu0
        %v3263 = vpop.f32.mrb[0].mxu0
        %v3264 = vadd.f32 0.0, %v3263
        %v3265 = vpop.f32.mrb[0].mxu0
        %3266 = vmatprep.mubr.bf16.mxu0 0
        %3267 = vmatmul.mubr.bf16.gmra.mrb[0].mxu0 %v1160
        %v3268 = vpop.f32.mrb[0].mxu0
        %v3269 = vadd.f32 0.0, %v3268
        %v3270 = vpop.f32.mrb[0].mxu0
        %v3271 = vpop.f32.mrb[0].mxu0
        %v3272 = vadd.f32 0.0, %v3271
        %v3273 = vpop.f32.mrb[0].mxu0
        %3274 = vmatprep.mubr.bf16.mxu0 0
        %3275 = vmatmul.mubr.bf16.gmra.mrb[0].mxu0 %v1163
        %v3276 = vpop.f32.mrb[0].mxu0
        %v3277 = vadd.f32 0.0, %v3276
        %v3278 = vpop.f32.mrb[0].mxu0
        %v3279 = vpop.f32.mrb[0].mxu0
        %v3280 = vadd.f32 0.0, %v3279
        %v3281 = vpop.f32.mrb[0].mxu0
        %3282 = vmatprep.mubr.bf16.mxu0 0
        %3283 = vmatmul.mubr.bf16.gmra.mrb[0].mxu0 %v1166
        %v3284 = vpop.f32.mrb[0].mxu0
        %v3285 = vadd.f32 0.0, %v3284
        %v3286 = vpop.f32.mrb[0].mxu0
        %v3287 = vpop.f32.mrb[0].mxu0
        %v3288 = vadd.f32 0.0, %v3287
        %v3289 = vpop.f32.mrb[0].mxu0
        %3290 = vmatprep.mubr.bf16.mxu0 0
        %3291 = vmatmul.mubr.bf16.gmra.mrb[0].mxu0 %v1169
        %v3292 = vpop.f32.mrb[0].mxu0
        %v3293 = vadd.f32 0.0, %v3292
        %v3294 = vpop.f32.mrb[0].mxu0
        %v3295 = vpop.f32.mrb[0].mxu0
        %v3296 = vadd.f32 0.0, %v3295
        %v3297 = vpop.f32.mrb[0].mxu0
        %3298 = vmatprep.mubr.bf16.mxu0 0
        %3299 = vmatmul.mubr.bf16.gmra.mrb[0].mxu0 %v1172
        %v3300 = vpop.f32.mrb[0].mxu0
        %v3301 = vadd.f32 0.0, %v3300
        %v3302 = vpop.f32.mrb[0].mxu0
        %v3303 = vpop.f32.mrb[0].mxu0
        %v3304 = vadd.f32 0.0, %v3303
        %v3305 = vpop.f32.mrb[0].mxu0
        %3306 = vmatprep.mubr.bf16.mxu0 0
        %3307 = vmatmul.mubr.bf16.gmra.mrb[0].mxu0 %v1175
        %v3308 = vpop.f32.mrb[0].mxu0
        %v3309 = vadd.f32 0.0, %v3308
        %v3310 = vpop.f32.mrb[0].mxu0
        %v3311 = vpop.f32.mrb[0].mxu0
        %v3312 = vadd.f32 0.0, %v3311
        %v3313 = vpop.f32.mrb[0].mxu0
        %3314 = vmatprep.mubr.bf16.mxu0 0
        %3315 = vmatmul.mubr.bf16.gmra.mrb[0].mxu0 %v1178
        %v3316 = vpop.f32.mrb[0].mxu0
        %v3317 = vadd.f32 0.0, %v3316
        %v3318 = vpop.f32.mrb[0].mxu0
        %v3319 = vpop.f32.mrb[0].mxu0
        %v3320 = vadd.f32 0.0, %v3319
        %v3321 = vpop.f32.mrb[0].mxu0
        %3322 = vmatprep.mubr.bf16.mxu0 0
        %3323 = vmatmul.mubr.bf16.gmra.mrb[0].mxu0 %v1181
        %v3324 = vpop.f32.mrb[0].mxu0
        %v3325 = vadd.f32 0.0, %v3324
        %v3326 = vpop.f32.mrb[0].mxu0
        %v3327 = vpop.f32.mrb[0].mxu0
        %v3328 = vadd.f32 0.0, %v3327
        %v3329 = vpop.f32.mrb[0].mxu0
        %3330 = vmatprep.mubr.bf16.mxu0 0
        %3331 = vmatmul.mubr.bf16.gmra.mrb[0].mxu0 %v1184
        %v3332 = vpop.f32.mrb[0].mxu0
        %v3333 = vadd.f32 0.0, %v3332
        %v3334 = vpop.f32.mrb[0].mxu0
        %v3335 = vpop.f32.mrb[0].mxu0
        %v3336 = vadd.f32 0.0, %v3335
        %v3337 = vpop.f32.mrb[0].mxu0
        %3338 = vmatprep.mubr.bf16.mxu0 0
        %3339 = vmatmul.mubr.bf16.gmra.mrb[0].mxu0 %v1187
        %v3340 = vpop.f32.mrb[0].mxu0
        %v3341 = vadd.f32 0.0, %v3340
        %v3342 = vpop.f32.mrb[0].mxu0
        %v3343 = vpop.f32.mrb[0].mxu0
        %v3344 = vadd.f32 0.0, %v3343
        %v3345 = vpop.f32.mrb[0].mxu0
        %3346 = vmatprep.mubr.bf16.mxu0 0
        %3347 = vmatmul.mubr.bf16.gmra.mrb[0].mxu0 %v1190
        %v3348 = vpop.f32.mrb[0].mxu0
        %v3349 = vadd.f32 0.0, %v3348
        %v3350 = vpop.f32.mrb[0].mxu0
        %v3351 = vpop.f32.mrb[0].mxu0
        %v3352 = vadd.f32 0.0, %v3351
        %v3353 = vpop.f32.mrb[0].mxu0
        %3354 = vmatprep.mubr.bf16.mxu0 0
        %3355 = vmatmul.mubr.bf16.gmra.mrb[0].mxu0 %v1193
        %v3356 = vpop.f32.mrb[0].mxu0
        %v3357 = vadd.f32 0.0, %v3356
        %v3358 = vpop.f32.mrb[0].mxu0
        %v3359 = vpop.f32.mrb[0].mxu0
        %v3360 = vadd.f32 0.0, %v3359
        %v3361 = vpop.f32.mrb[0].mxu0
        %3362 = vmatprep.mubr.bf16.mxu0 0
        %3363 = vmatmul.mubr.bf16.gmra.mrb[0].mxu0 %v1196
        %v3364 = vpop.f32.mrb[0].mxu0
        %v3365 = vadd.f32 0.0, %v3364
        %v3366 = vpop.f32.mrb[0].mxu0
        %v3367 = vpop.f32.mrb[0].mxu0
        %v3368 = vadd.f32 0.0, %v3367
        %v3369 = vpop.f32.mrb[0].mxu0
        %3370 = vmatprep.mubr.bf16.mxu0 0
        %3371 = vmatmul.mubr.bf16.gmra.mrb[0].mxu0 %v1199
        %v3372 = vpop.f32.mrb[0].mxu0
        %v3373 = vadd.f32 0.0, %v3372
        %v3374 = vpop.f32.mrb[0].mxu0
        %v3375 = vpop.f32.mrb[0].mxu0
        %v3376 = vadd.f32 0.0, %v3375
        %v3377 = vpop.f32.mrb[0].mxu0
        %3378 = vmatprep.mubr.bf16.mxu0 0
        %3379 = vmatmul.mubr.bf16.gmra.mrb[0].mxu0 %v1202
        %v3380 = vpop.f32.mrb[0].mxu0
        %v3381 = vadd.f32 0.0, %v3380
        %v3382 = vpop.f32.mrb[0].mxu0
        %v3383 = vpop.f32.mrb[0].mxu0
        %v3384 = vadd.f32 0.0, %v3383
        %v3385 = vpop.f32.mrb[0].mxu0
        %3386 = vmatprep.mubr.bf16.mxu0 0
        %3387 = vmatmul.mubr.bf16.gmra.mrb[0].mxu0 %v1205
        %v3388 = vpop.f32.mrb[0].mxu0
        %v3389 = vadd.f32 0.0, %v3388
        %v3390 = vpop.f32.mrb[0].mxu0
        %v3391 = vpop.f32.mrb[0].mxu0
        %v3392 = vadd.f32 0.0, %v3391
        %v3393 = vpop.f32.mrb[0].mxu0
        %3394 = vmatprep.mubr.bf16.mxu0 0
        %3395 = vmatmul.mubr.bf16.gmra.mrb[0].mxu0 %v1208
        %v3396 = vpop.f32.mrb[0].mxu0
        %v3397 = vadd.f32 0.0, %v3396
        %v3398 = vpop.f32.mrb[0].mxu0
        %v3399 = vpop.f32.mrb[0].mxu0
        %v3400 = vadd.f32 0.0, %v3399
        %v3401 = vpop.f32.mrb[0].mxu0
        %3402 = vdwg.mxu0
        %v3403 = vld [vmem:[#allocation3 + $0x1f] sm:$0xff]
        %v3404 = vld [vmem:[#allocation3 + $0x27] sm:$0xff]
        %v3405 = vld [vmem:[#allocation3 + $0x2f] sm:$0xff]
        %v3406 = vld [vmem:[#allocation3 + $0x37] sm:$0xff]
        %v3407 = vld [vmem:[#allocation3 + $0x3f] sm:$0xff]
        %v3408 = vld [vmem:[#allocation3 + $0x47] sm:$0xff]
        %v3409 = vld [vmem:[#allocation3 + $0x4f] sm:$0xff]
        %v3410 = vld [vmem:[#allocation3 + $0x57] sm:$0xff]
        %v3411 = vld [vmem:[#allocation3 + $0x5f] sm:$0xff]
        %v3412 = vld [vmem:[#allocation3 + $0x67] sm:$0xff]
        %v3413 = vld [vmem:[#allocation3 + $0x6f] sm:$0xff]
        %v3414 = vld [vmem:[#allocation3 + $0x77] sm:$0xff]
        %v3415 = vld [vmem:[#allocation3 + $0x7f] sm:$0xff]
        %v3416 = vld [vmem:[#allocation3 + $0x87] sm:$0xff]
        %v3417 = vld [vmem:[#allocation3 + $0x8f] sm:$0xff]
        %v3418 = vld [vmem:[#allocation3 + $0x97] sm:$0xff]
        %v3419 = vld [vmem:[#allocation3 + $0x9f] sm:$0xff]
        %v3420 = vld [vmem:[#allocation3 + $0xa7] sm:$0xff]
        %v3421 = vld [vmem:[#allocation3 + $0xaf] sm:$0xff]
        %v3422 = vld [vmem:[#allocation3 + $0xb7] sm:$0xff]
        %v3423 = vld [vmem:[#allocation3 + $0xbf] sm:$0xff]
        %v3424 = vld [vmem:[#allocation3 + $0xc7] sm:$0xff]
        %v3425 = vld [vmem:[#allocation3 + $0xcf] sm:$0xff]
        %v3426 = vld [vmem:[#allocation3 + $0xd7] sm:$0xff]
        %v3427 = vld [vmem:[#allocation3 + $0xdf] sm:$0xff]
        %v3428 = vld [vmem:[#allocation3 + $0xe7] sm:$0xff]
        %v3429 = vld [vmem:[#allocation3 + $0xef] sm:$0xff]
        %v3430 = vld [vmem:[#allocation3 + $0xf7] sm:$0xff]
        %v3431 = vld [vmem:[#allocation3 + $0xff] sm:$0xff]
        %v3432 = vld [vmem:[#allocation3 + $0x107] sm:$0xff]
        %v3433 = vld [vmem:[#allocation3 + $0x10f] sm:$0xff]
        %v3434 = vld [vmem:[#allocation3 + $0x117] sm:$0xff]
        %v3435 = vld [vmem:[#allocation3 + $0x11f] sm:$0xff]
        %v3436 = vld [vmem:[#allocation3 + $0x127] sm:$0xff]
        %v3437 = vld [vmem:[#allocation3 + $0x12f] sm:$0xff]
        %v3438 = vld [vmem:[#allocation3 + $0x137] sm:$0xff]
        %v3439 = vld [vmem:[#allocation3 + $0x13f] sm:$0xff]
        %v3440 = vld [vmem:[#allocation3 + $0x147] sm:$0xff]
        %v3441 = vld [vmem:[#allocation3 + $0x14f] sm:$0xff]
        %v3442 = vld [vmem:[#allocation3 + $0x157] sm:$0xff]
        %v3443 = vld [vmem:[#allocation3 + $0x15f] sm:$0xff]
        %v3444 = vld [vmem:[#allocation3 + $0x167] sm:$0xff]
        %v3445 = vld [vmem:[#allocation3 + $0x16f] sm:$0xff]
        %v3446 = vld [vmem:[#allocation3 + $0x177] sm:$0xff]
        %v3447 = vld [vmem:[#allocation3 + $0x17f] sm:$0xff]
        %v3448 = vld [vmem:[#allocation3 + $0x187] sm:$0xff]
        %v3449 = vld [vmem:[#allocation3 + $0x18f] sm:$0xff]
        %v3450 = vld [vmem:[#allocation3 + $0x197] sm:$0xff]
        %v3451 = vld [vmem:[#allocation3 + $0x19f] sm:$0xff]
        %v3452 = vld [vmem:[#allocation3 + $0x1a7] sm:$0xff]
        %v3453 = vadd.f32 %v3403, %v3205
        %v3454 = vadd.f32 %v3404, %v3208
        %v3455 = vadd.f32 %v3405, %v3213
        %v3456 = vadd.f32 %v3406, %v3216
        %v3457 = vadd.f32 %v3407, %v3221
        %v3458 = vadd.f32 %v3408, %v3224
        %v3459 = vadd.f32 %v3409, %v3229
        %v3460 = vadd.f32 %v3410, %v3232
        %v3461 = vadd.f32 %v3411, %v3237
        %v3462 = vadd.f32 %v3412, %v3240
        %v3463 = vadd.f32 %v3413, %v3245
        %v3464 = vadd.f32 %v3414, %v3248
        %v3465 = vadd.f32 %v3415, %v3253
        %v3466 = vadd.f32 %v3416, %v3256
        %v3467 = vadd.f32 %v3417, %v3261
        %v3468 = vadd.f32 %v3418, %v3264
        %v3469 = vadd.f32 %v3419, %v3269
        %v3470 = vadd.f32 %v3420, %v3272
        %v3471 = vadd.f32 %v3421, %v3277
        %v3472 = vadd.f32 %v3422, %v3280
        %v3473 = vadd.f32 %v3423, %v3285
        %v3474 = vadd.f32 %v3424, %v3288
        %v3475 = vadd.f32 %v3425, %v3293
        %v3476 = vadd.f32 %v3426, %v3296
        %v3477 = vadd.f32 %v3427, %v3301
        %v3478 = vadd.f32 %v3428, %v3304
        %v3479 = vadd.f32 %v3429, %v3309
        %v3480 = vadd.f32 %v3430, %v3312
        %v3481 = vadd.f32 %v3431, %v3317
        %v3482 = vadd.f32 %v3432, %v3320
        %v3483 = vadd.f32 %v3433, %v3325
        %v3484 = vadd.f32 %v3434, %v3328
        %v3485 = vadd.f32 %v3435, %v3333
        %v3486 = vadd.f32 %v3436, %v3336
        %v3487 = vadd.f32 %v3437, %v3341
        %v3488 = vadd.f32 %v3438, %v3344
        %v3489 = vadd.f32 %v3439, %v3349
        %v3490 = vadd.f32 %v3440, %v3352
        %v3491 = vadd.f32 %v3441, %v3357
        %v3492 = vadd.f32 %v3442, %v3360
        %v3493 = vadd.f32 %v3443, %v3365
        %v3494 = vadd.f32 %v3444, %v3368
        %v3495 = vadd.f32 %v3445, %v3373
        %v3496 = vadd.f32 %v3446, %v3376
        %v3497 = vadd.f32 %v3447, %v3381
        %v3498 = vadd.f32 %v3448, %v3384
        %v3499 = vadd.f32 %v3449, %v3389
        %v3500 = vadd.f32 %v3450, %v3392
        %v3501 = vadd.f32 %v3451, %v3397
        %v3502 = vadd.f32 %v3452, %v3400
        %3503 = vst [vmem:[#allocation3 + $0x1f] sm:$0xff] %v3453
        %3504 = vst [vmem:[#allocation3 + $0x27] sm:$0xff] %v3454
        %3505 = vst [vmem:[#allocation3 + $0x2f] sm:$0xff] %v3455
        %3506 = vst [vmem:[#allocation3 + $0x37] sm:$0xff] %v3456
        %3507 = vst [vmem:[#allocation3 + $0x3f] sm:$0xff] %v3457
        %3508 = vst [vmem:[#allocation3 + $0x47] sm:$0xff] %v3458
        %3509 = vst [vmem:[#allocation3 + $0x4f] sm:$0xff] %v3459
        %3510 = vst [vmem:[#allocation3 + $0x57] sm:$0xff] %v3460
        %3511 = vst [vmem:[#allocation3 + $0x5f] sm:$0xff] %v3461
        %3512 = vst [vmem:[#allocation3 + $0x67] sm:$0xff] %v3462
        %3513 = vst [vmem:[#allocation3 + $0x6f] sm:$0xff] %v3463
        %3514 = vst [vmem:[#allocation3 + $0x77] sm:$0xff] %v3464
        %3515 = vst [vmem:[#allocation3 + $0x7f] sm:$0xff] %v3465
        %3516 = vst [vmem:[#allocation3 + $0x87] sm:$0xff] %v3466
        %3517 = vst [vmem:[#allocation3 + $0x8f] sm:$0xff] %v3467
        %3518 = vst [vmem:[#allocation3 + $0x97] sm:$0xff] %v3468
        %3519 = vst [vmem:[#allocation3 + $0x9f] sm:$0xff] %v3469
        %3520 = vst [vmem:[#allocation3 + $0xa7] sm:$0xff] %v3470
        %3521 = vst [vmem:[#allocation3 + $0xaf] sm:$0xff] %v3471
        %3522 = vst [vmem:[#allocation3 + $0xb7] sm:$0xff] %v3472
        %3523 = vst [vmem:[#allocation3 + $0xbf] sm:$0xff] %v3473
        %3524 = vst [vmem:[#allocation3 + $0xc7] sm:$0xff] %v3474
        %3525 = vst [vmem:[#allocation3 + $0xcf] sm:$0xff] %v3475
        %3526 = vst [vmem:[#allocation3 + $0xd7] sm:$0xff] %v3476
        %3527 = vst [vmem:[#allocation3 + $0xdf] sm:$0xff] %v3477
        %3528 = vst [vmem:[#allocation3 + $0xe7] sm:$0xff] %v3478
        %3529 = vst [vmem:[#allocation3 + $0xef] sm:$0xff] %v3479
        %3530 = vst [vmem:[#allocation3 + $0xf7] sm:$0xff] %v3480
        %3531 = vst [vmem:[#allocation3 + $0xff] sm:$0xff] %v3481
        %3532 = vst [vmem:[#allocation3 + $0x107] sm:$0xff] %v3482
        %3533 = vst [vmem:[#allocation3 + $0x10f] sm:$0xff] %v3483
        %3534 = vst [vmem:[#allocation3 + $0x117] sm:$0xff] %v3484
        %3535 = vst [vmem:[#allocation3 + $0x11f] sm:$0xff] %v3485
        %3536 = vst [vmem:[#allocation3 + $0x127] sm:$0xff] %v3486
        %3537 = vst [vmem:[#allocation3 + $0x12f] sm:$0xff] %v3487
        %3538 = vst [vmem:[#allocation3 + $0x137] sm:$0xff] %v3488
        %3539 = vst [vmem:[#allocation3 + $0x13f] sm:$0xff] %v3489
        %3540 = vst [vmem:[#allocation3 + $0x147] sm:$0xff] %v3490
        %3541 = vst [vmem:[#allocation3 + $0x14f] sm:$0xff] %v3491
        %3542 = vst [vmem:[#allocation3 + $0x157] sm:$0xff] %v3492
        %3543 = vst [vmem:[#allocation3 + $0x15f] sm:$0xff] %v3493
        %3544 = vst [vmem:[#allocation3 + $0x167] sm:$0xff] %v3494
        %3545 = vst [vmem:[#allocation3 + $0x16f] sm:$0xff] %v3495
        %3546 = vst [vmem:[#allocation3 + $0x177] sm:$0xff] %v3496
        %3547 = vst [vmem:[#allocation3 + $0x17f] sm:$0xff] %v3497
        %3548 = vst [vmem:[#allocation3 + $0x187] sm:$0xff] %v3498
        %3549 = vst [vmem:[#allocation3 + $0x18f] sm:$0xff] %v3499
        %3550 = vst [vmem:[#allocation3 + $0x197] sm:$0xff] %v3500
        %3551 = vst [vmem:[#allocation3 + $0x19f] sm:$0xff] %v3501
        %3552 = vst [vmem:[#allocation3 + $0x1a7] sm:$0xff] %v3502
        %s3553 = scalar_lea.vmem %s1, 48
        %v3554 = vld [vmem:[%s3553] sm:$0xf]
        %v3555 = vld [vmem:[%s3553 + $0x4] sm:$0xf]
        %v3558 = vunpack.c.l.b16 %v3554
        %v3559 = vunpack.c.l.b16 %v3555
        %v3560 = vpack.c.b16 %v3559, %v3558
        %3562 = vmatprep.subr.bf16.mxu0 0
        %3563 = vmatpush1.bf16.msra.mxu0 %v3560
        %3564 = vmatprep.subr.bf16.mxu0 0
        %3565 = vmatpush1.bf16.msra.mxu0 0
        %3566 = vmatprep.subr.bf16.mxu0 0
        %3567 = vmatpush1.bf16.msra.mxu0 0
        %3568 = vmatprep.subr.bf16.mxu0 0
        %3569 = vmatpush1.bf16.msra.mxu0 0
        %3570 = vmatprep.subr.bf16.mxu0 0
        %3571 = vmatpush1.bf16.msra.mxu0 0
        %3572 = vmatprep.subr.bf16.mxu0 0
        %3573 = vmatpush1.bf16.msra.mxu0 0
        %3574 = vmatprep.subr.bf16.mxu0 0
        %3575 = vmatpush1.bf16.msra.mxu0 0
        %3576 = vmatprep.subr.bf16.mxu0 0
        %3577 = vmatpush1.bf16.msra.mxu0 0
        %3578 = vmatprep.subr.bf16.mxu0 0
        %3579 = vmatpush1.bf16.msra.mxu0 0
        %3580 = vmatprep.subr.bf16.mxu0 0
        %3581 = vmatpush1.bf16.msra.mxu0 0
        %3582 = vmatprep.subr.bf16.mxu0 0
        %3583 = vmatpush1.bf16.msra.mxu0 0
        %3584 = vmatprep.subr.bf16.mxu0 0
        %3585 = vmatpush1.bf16.msra.mxu0 0
        %3586 = vmatprep.subr.bf16.mxu0 0
        %3587 = vmatpush1.bf16.msra.mxu0 0
        %3588 = vmatprep.subr.bf16.mxu0 0
        %3589 = vmatpush1.bf16.msra.mxu0 0
        %3590 = vmatprep.subr.bf16.mxu0 0
        %3591 = vmatpush1.bf16.msra.mxu0 0
        %3592 = vmatprep.subr.bf16.mxu0 0
        %3593 = vmatpush1.bf16.msra.mxu0 0
        %3594 = vmatprep.mubr.bf16.mxu0 0
        %3595 = vmatmul.mubr.bf16.gmra.mrb[0].mxu0 %v1136
        %v3596 = vpop.f32.mrb[0].mxu0
        %v3597 = vadd.f32 0.0, %v3596
        %v3598 = vpop.f32.mrb[0].mxu0
        %v3599 = vpop.f32.mrb[0].mxu0
        %v3600 = vadd.f32 0.0, %v3599
        %v3601 = vpop.f32.mrb[0].mxu0
        %3602 = vmatprep.mubr.bf16.mxu0 0
        %3603 = vmatmul.mubr.bf16.gmra.mrb[0].mxu0 %v1139
        %v3604 = vpop.f32.mrb[0].mxu0
        %v3605 = vadd.f32 0.0, %v3604
        %v3606 = vpop.f32.mrb[0].mxu0
        %v3607 = vpop.f32.mrb[0].mxu0
        %v3608 = vadd.f32 0.0, %v3607
        %v3609 = vpop.f32.mrb[0].mxu0
        %3610 = vmatprep.mubr.bf16.mxu0 0
        %3611 = vmatmul.mubr.bf16.gmra.mrb[0].mxu0 %v1142
        %v3612 = vpop.f32.mrb[0].mxu0
        %v3613 = vadd.f32 0.0, %v3612
        %v3614 = vpop.f32.mrb[0].mxu0
        %v3615 = vpop.f32.mrb[0].mxu0
        %v3616 = vadd.f32 0.0, %v3615
        %v3617 = vpop.f32.mrb[0].mxu0
        %3618 = vmatprep.mubr.bf16.mxu0 0
        %3619 = vmatmul.mubr.bf16.gmra.mrb[0].mxu0 %v1145
        %v3620 = vpop.f32.mrb[0].mxu0
        %v3621 = vadd.f32 0.0, %v3620
        %v3622 = vpop.f32.mrb[0].mxu0
        %v3623 = vpop.f32.mrb[0].mxu0
        %v3624 = vadd.f32 0.0, %v3623
        %v3625 = vpop.f32.mrb[0].mxu0
        %3626 = vmatprep.mubr.bf16.mxu0 0
        %3627 = vmatmul.mubr.bf16.gmra.mrb[0].mxu0 %v1148
        %v3628 = vpop.f32.mrb[0].mxu0
        %v3629 = vadd.f32 0.0, %v3628
        %v3630 = vpop.f32.mrb[0].mxu0
        %v3631 = vpop.f32.mrb[0].mxu0
        %v3632 = vadd.f32 0.0, %v3631
        %v3633 = vpop.f32.mrb[0].mxu0
        %3634 = vmatprep.mubr.bf16.mxu0 0
        %3635 = vmatmul.mubr.bf16.gmra.mrb[0].mxu0 %v1151
        %v3636 = vpop.f32.mrb[0].mxu0
        %v3637 = vadd.f32 0.0, %v3636
        %v3638 = vpop.f32.mrb[0].mxu0
        %v3639 = vpop.f32.mrb[0].mxu0
        %v3640 = vadd.f32 0.0, %v3639
        %v3641 = vpop.f32.mrb[0].mxu0
        %3642 = vmatprep.mubr.bf16.mxu0 0
        %3643 = vmatmul.mubr.bf16.gmra.mrb[0].mxu0 %v1154
        %v3644 = vpop.f32.mrb[0].mxu0
        %v3645 = vadd.f32 0.0, %v3644
        %v3646 = vpop.f32.mrb[0].mxu0
        %v3647 = vpop.f32.mrb[0].mxu0
        %v3648 = vadd.f32 0.0, %v3647
        %v3649 = vpop.f32.mrb[0].mxu0
        %3650 = vmatprep.mubr.bf16.mxu0 0
        %3651 = vmatmul.mubr.bf16.gmra.mrb[0].mxu0 %v1157
        %v3652 = vpop.f32.mrb[0].mxu0
        %v3653 = vadd.f32 0.0, %v3652
        %v3654 = vpop.f32.mrb[0].mxu0
        %v3655 = vpop.f32.mrb[0].mxu0
        %v3656 = vadd.f32 0.0, %v3655
        %v3657 = vpop.f32.mrb[0].mxu0
        %3658 = vmatprep.mubr.bf16.mxu0 0
        %3659 = vmatmul.mubr.bf16.gmra.mrb[0].mxu0 %v1160
        %v3660 = vpop.f32.mrb[0].mxu0
        %v3661 = vadd.f32 0.0, %v3660
        %v3662 = vpop.f32.mrb[0].mxu0
        %v3663 = vpop.f32.mrb[0].mxu0
        %v3664 = vadd.f32 0.0, %v3663
        %v3665 = vpop.f32.mrb[0].mxu0
        %3666 = vmatprep.mubr.bf16.mxu0 0
        %3667 = vmatmul.mubr.bf16.gmra.mrb[0].mxu0 %v1163
        %v3668 = vpop.f32.mrb[0].mxu0
        %v3669 = vadd.f32 0.0, %v3668
        %v3670 = vpop.f32.mrb[0].mxu0
        %v3671 = vpop.f32.mrb[0].mxu0
        %v3672 = vadd.f32 0.0, %v3671
        %v3673 = vpop.f32.mrb[0].mxu0
        %3674 = vmatprep.mubr.bf16.mxu0 0
        %3675 = vmatmul.mubr.bf16.gmra.mrb[0].mxu0 %v1166
        %v3676 = vpop.f32.mrb[0].mxu0
        %v3677 = vadd.f32 0.0, %v3676
        %v3678 = vpop.f32.mrb[0].mxu0
        %v3679 = vpop.f32.mrb[0].mxu0
        %v3680 = vadd.f32 0.0, %v3679
        %v3681 = vpop.f32.mrb[0].mxu0
        %3682 = vmatprep.mubr.bf16.mxu0 0
        %3683 = vmatmul.mubr.bf16.gmra.mrb[0].mxu0 %v1169
        %v3684 = vpop.f32.mrb[0].mxu0
        %v3685 = vadd.f32 0.0, %v3684
        %v3686 = vpop.f32.mrb[0].mxu0
        %v3687 = vpop.f32.mrb[0].mxu0
        %v3688 = vadd.f32 0.0, %v3687
        %v3689 = vpop.f32.mrb[0].mxu0
        %3690 = vmatprep.mubr.bf16.mxu0 0
        %3691 = vmatmul.mubr.bf16.gmra.mrb[0].mxu0 %v1172
        %v3692 = vpop.f32.mrb[0].mxu0
        %v3693 = vadd.f32 0.0, %v3692
        %v3694 = vpop.f32.mrb[0].mxu0
        %v3695 = vpop.f32.mrb[0].mxu0
        %v3696 = vadd.f32 0.0, %v3695
        %v3697 = vpop.f32.mrb[0].mxu0
        %3698 = vmatprep.mubr.bf16.mxu0 0
        %3699 = vmatmul.mubr.bf16.gmra.mrb[0].mxu0 %v1175
        %v3700 = vpop.f32.mrb[0].mxu0
        %v3701 = vadd.f32 0.0, %v3700
        %v3702 = vpop.f32.mrb[0].mxu0
        %v3703 = vpop.f32.mrb[0].mxu0
        %v3704 = vadd.f32 0.0, %v3703
        %v3705 = vpop.f32.mrb[0].mxu0
        %3706 = vmatprep.mubr.bf16.mxu0 0
        %3707 = vmatmul.mubr.bf16.gmra.mrb[0].mxu0 %v1178
        %v3708 = vpop.f32.mrb[0].mxu0
        %v3709 = vadd.f32 0.0, %v3708
        %v3710 = vpop.f32.mrb[0].mxu0
        %v3711 = vpop.f32.mrb[0].mxu0
        %v3712 = vadd.f32 0.0, %v3711
        %v3713 = vpop.f32.mrb[0].mxu0
        %3714 = vmatprep.mubr.bf16.mxu0 0
        %3715 = vmatmul.mubr.bf16.gmra.mrb[0].mxu0 %v1181
        %v3716 = vpop.f32.mrb[0].mxu0
        %v3717 = vadd.f32 0.0, %v3716
        %v3718 = vpop.f32.mrb[0].mxu0
        %v3719 = vpop.f32.mrb[0].mxu0
        %v3720 = vadd.f32 0.0, %v3719
        %v3721 = vpop.f32.mrb[0].mxu0
        %3722 = vmatprep.mubr.bf16.mxu0 0
        %3723 = vmatmul.mubr.bf16.gmra.mrb[0].mxu0 %v1184
        %v3724 = vpop.f32.mrb[0].mxu0
        %v3725 = vadd.f32 0.0, %v3724
        %v3726 = vpop.f32.mrb[0].mxu0
        %v3727 = vpop.f32.mrb[0].mxu0
        %v3728 = vadd.f32 0.0, %v3727
        %v3729 = vpop.f32.mrb[0].mxu0
        %3730 = vmatprep.mubr.bf16.mxu0 0
        %3731 = vmatmul.mubr.bf16.gmra.mrb[0].mxu0 %v1187
        %v3732 = vpop.f32.mrb[0].mxu0
        %v3733 = vadd.f32 0.0, %v3732
        %v3734 = vpop.f32.mrb[0].mxu0
        %v3735 = vpop.f32.mrb[0].mxu0
        %v3736 = vadd.f32 0.0, %v3735
        %v3737 = vpop.f32.mrb[0].mxu0
        %3738 = vmatprep.mubr.bf16.mxu0 0
        %3739 = vmatmul.mubr.bf16.gmra.mrb[0].mxu0 %v1190
        %v3740 = vpop.f32.mrb[0].mxu0
        %v3741 = vadd.f32 0.0, %v3740
        %v3742 = vpop.f32.mrb[0].mxu0
        %v3743 = vpop.f32.mrb[0].mxu0
        %v3744 = vadd.f32 0.0, %v3743
        %v3745 = vpop.f32.mrb[0].mxu0
        %3746 = vmatprep.mubr.bf16.mxu0 0
        %3747 = vmatmul.mubr.bf16.gmra.mrb[0].mxu0 %v1193
        %v3748 = vpop.f32.mrb[0].mxu0
        %v3749 = vadd.f32 0.0, %v3748
        %v3750 = vpop.f32.mrb[0].mxu0
        %v3751 = vpop.f32.mrb[0].mxu0
        %v3752 = vadd.f32 0.0, %v3751
        %v3753 = vpop.f32.mrb[0].mxu0
        %3754 = vmatprep.mubr.bf16.mxu0 0
        %3755 = vmatmul.mubr.bf16.gmra.mrb[0].mxu0 %v1196
        %v3756 = vpop.f32.mrb[0].mxu0
        %v3757 = vadd.f32 0.0, %v3756
        %v3758 = vpop.f32.mrb[0].mxu0
        %v3759 = vpop.f32.mrb[0].mxu0
        %v3760 = vadd.f32 0.0, %v3759
        %v3761 = vpop.f32.mrb[0].mxu0
        %3762 = vmatprep.mubr.bf16.mxu0 0
        %3763 = vmatmul.mubr.bf16.gmra.mrb[0].mxu0 %v1199
        %v3764 = vpop.f32.mrb[0].mxu0
        %v3765 = vadd.f32 0.0, %v3764
        %v3766 = vpop.f32.mrb[0].mxu0
        %v3767 = vpop.f32.mrb[0].mxu0
        %v3768 = vadd.f32 0.0, %v3767
        %v3769 = vpop.f32.mrb[0].mxu0
        %3770 = vmatprep.mubr.bf16.mxu0 0
        %3771 = vmatmul.mubr.bf16.gmra.mrb[0].mxu0 %v1202
        %v3772 = vpop.f32.mrb[0].mxu0
        %v3773 = vadd.f32 0.0, %v3772
        %v3774 = vpop.f32.mrb[0].mxu0
        %v3775 = vpop.f32.mrb[0].mxu0
        %v3776 = vadd.f32 0.0, %v3775
        %v3777 = vpop.f32.mrb[0].mxu0
        %3778 = vmatprep.mubr.bf16.mxu0 0
        %3779 = vmatmul.mubr.bf16.gmra.mrb[0].mxu0 %v1205
        %v3780 = vpop.f32.mrb[0].mxu0
        %v3781 = vadd.f32 0.0, %v3780
        %v3782 = vpop.f32.mrb[0].mxu0
        %v3783 = vpop.f32.mrb[0].mxu0
        %v3784 = vadd.f32 0.0, %v3783
        %v3785 = vpop.f32.mrb[0].mxu0
        %3786 = vmatprep.mubr.bf16.mxu0 0
        %3787 = vmatmul.mubr.bf16.gmra.mrb[0].mxu0 %v1208
        %v3788 = vpop.f32.mrb[0].mxu0
        %v3789 = vadd.f32 0.0, %v3788
        %v3790 = vpop.f32.mrb[0].mxu0
        %v3791 = vpop.f32.mrb[0].mxu0
        %v3792 = vadd.f32 0.0, %v3791
        %v3793 = vpop.f32.mrb[0].mxu0
        %3794 = vdwg.mxu0
        %v3795 = vld [vmem:[#allocation3 + $0xd] sm:$0xff]
        %v3796 = vld [vmem:[#allocation3 + $0x15] sm:$0xff]
        %v3797 = vld [vmem:[#allocation3 + $0x1d] sm:$0xff]
        %v3798 = vld [vmem:[#allocation3 + $0x25] sm:$0xff]
        %v3799 = vld [vmem:[#allocation3 + $0x2d] sm:$0xff]
        %v3800 = vld [vmem:[#allocation3 + $0x35] sm:$0xff]
        %v3801 = vld [vmem:[#allocation3 + $0x3d] sm:$0xff]
        %v3802 = vld [vmem:[#allocation3 + $0x45] sm:$0xff]
        %v3803 = vld [vmem:[#allocation3 + $0x4d] sm:$0xff]
        %v3804 = vld [vmem:[#allocation3 + $0x55] sm:$0xff]
        %v3805 = vld [vmem:[#allocation3 + $0x5d] sm:$0xff]
        %v3806 = vld [vmem:[#allocation3 + $0x65] sm:$0xff]
        %v3807 = vld [vmem:[#allocation3 + $0x6d] sm:$0xff]
        %v3808 = vld [vmem:[#allocation3 + $0x75] sm:$0xff]
        %v3809 = vld [vmem:[#allocation3 + $0x7d] sm:$0xff]
        %v3810 = vld [vmem:[#allocation3 + $0x85] sm:$0xff]
        %v3811 = vld [vmem:[#allocation3 + $0x8d] sm:$0xff]
        %v3812 = vld [vmem:[#allocation3 + $0x95] sm:$0xff]
        %v3813 = vld [vmem:[#allocation3 + $0x9d] sm:$0xff]
        %v3814 = vld [vmem:[#allocation3 + $0xa5] sm:$0xff]
        %v3815 = vld [vmem:[#allocation3 + $0xad] sm:$0xff]
        %v3816 = vld [vmem:[#allocation3 + $0xb5] sm:$0xff]
        %v3817 = vld [vmem:[#allocation3 + $0xbd] sm:$0xff]
        %v3818 = vld [vmem:[#allocation3 + $0xc5] sm:$0xff]
        %v3819 = vld [vmem:[#allocation3 + $0xcd] sm:$0xff]
        %v3820 = vld [vmem:[#allocation3 + $0xd5] sm:$0xff]
        %v3821 = vld [vmem:[#allocation3 + $0xdd] sm:$0xff]
        %v3822 = vld [vmem:[#allocation3 + $0xe5] sm:$0xff]
        %v3823 = vld [vmem:[#allocation3 + $0xed] sm:$0xff]
        %v3824 = vld [vmem:[#allocation3 + $0xf5] sm:$0xff]
        %v3825 = vld [vmem:[#allocation3 + $0xfd] sm:$0xff]
        %v3826 = vld [vmem:[#allocation3 + $0x105] sm:$0xff]
        %v3827 = vld [vmem:[#allocation3 + $0x10d] sm:$0xff]
        %v3828 = vld [vmem:[#allocation3 + $0x115] sm:$0xff]
        %v3829 = vld [vmem:[#allocation3 + $0x11d] sm:$0xff]
        %v3830 = vld [vmem:[#allocation3 + $0x125] sm:$0xff]
        %v3831 = vld [vmem:[#allocation3 + $0x12d] sm:$0xff]
        %v3832 = vld [vmem:[#allocation3 + $0x135] sm:$0xff]
        %v3833 = vld [vmem:[#allocation3 + $0x13d] sm:$0xff]
        %v3834 = vld [vmem:[#allocation3 + $0x145] sm:$0xff]
        %v3835 = vld [vmem:[#allocation3 + $0x14d] sm:$0xff]
        %v3836 = vld [vmem:[#allocation3 + $0x155] sm:$0xff]
        %v3837 = vld [vmem:[#allocation3 + $0x15d] sm:$0xff]
        %v3838 = vld [vmem:[#allocation3 + $0x165] sm:$0xff]
        %v3839 = vld [vmem:[#allocation3 + $0x16d] sm:$0xff]
        %v3840 = vld [vmem:[#allocation3 + $0x175] sm:$0xff]
        %v3841 = vld [vmem:[#allocation3 + $0x17d] sm:$0xff]
        %v3842 = vld [vmem:[#allocation3 + $0x185] sm:$0xff]
        %v3843 = vld [vmem:[#allocation3 + $0x18d] sm:$0xff]
        %v3844 = vld [vmem:[#allocation3 + $0x195] sm:$0xff]
        %v3845 = vadd.f32 %v3795, %v3597
        %v3846 = vadd.f32 %v3796, %v3600
        %v3847 = vadd.f32 %v3797, %v3605
        %v3848 = vadd.f32 %v3798, %v3608
        %v3849 = vadd.f32 %v3799, %v3613
        %v3850 = vadd.f32 %v3800, %v3616
        %v3851 = vadd.f32 %v3801, %v3621
        %v3852 = vadd.f32 %v3802, %v3624
        %v3853 = vadd.f32 %v3803, %v3629
        %v3854 = vadd.f32 %v3804, %v3632
        %v3855 = vadd.f32 %v3805, %v3637
        %v3856 = vadd.f32 %v3806, %v3640
        %v3857 = vadd.f32 %v3807, %v3645
        %v3858 = vadd.f32 %v3808, %v3648
        %v3859 = vadd.f32 %v3809, %v3653
        %v3860 = vadd.f32 %v3810, %v3656
        %v3861 = vadd.f32 %v3811, %v3661
        %v3862 = vadd.f32 %v3812, %v3664
        %v3863 = vadd.f32 %v3813, %v3669
        %v3864 = vadd.f32 %v3814, %v3672
        %v3865 = vadd.f32 %v3815, %v3677
        %v3866 = vadd.f32 %v3816, %v3680
        %v3867 = vadd.f32 %v3817, %v3685
        %v3868 = vadd.f32 %v3818, %v3688
        %v3869 = vadd.f32 %v3819, %v3693
        %v3870 = vadd.f32 %v3820, %v3696
        %v3871 = vadd.f32 %v3821, %v3701
        %v3872 = vadd.f32 %v3822, %v3704
        %v3873 = vadd.f32 %v3823, %v3709
        %v3874 = vadd.f32 %v3824, %v3712
        %v3875 = vadd.f32 %v3825, %v3717
        %v3876 = vadd.f32 %v3826, %v3720
        %v3877 = vadd.f32 %v3827, %v3725
        %v3878 = vadd.f32 %v3828, %v3728
        %v3879 = vadd.f32 %v3829, %v3733
        %v3880 = vadd.f32 %v3830, %v3736
        %v3881 = vadd.f32 %v3831, %v3741
        %v3882 = vadd.f32 %v3832, %v3744
        %v3883 = vadd.f32 %v3833, %v3749
        %v3884 = vadd.f32 %v3834, %v3752
        %v3885 = vadd.f32 %v3835, %v3757
        %v3886 = vadd.f32 %v3836, %v3760
        %v3887 = vadd.f32 %v3837, %v3765
        %v3888 = vadd.f32 %v3838, %v3768
        %v3889 = vadd.f32 %v3839, %v3773
        %v3890 = vadd.f32 %v3840, %v3776
        %v3891 = vadd.f32 %v3841, %v3781
        %v3892 = vadd.f32 %v3842, %v3784
        %v3893 = vadd.f32 %v3843, %v3789
        %v3894 = vadd.f32 %v3844, %v3792
        %3895 = vst [vmem:[#allocation3 + $0xd] sm:$0xff] %v3845
        %3896 = vst [vmem:[#allocation3 + $0x15] sm:$0xff] %v3846
        %3897 = vst [vmem:[#allocation3 + $0x1d] sm:$0xff] %v3847
        %3898 = vst [vmem:[#allocation3 + $0x25] sm:$0xff] %v3848
        %3899 = vst [vmem:[#allocation3 + $0x2d] sm:$0xff] %v3849
        %3900 = vst [vmem:[#allocation3 + $0x35] sm:$0xff] %v3850
        %3901 = vst [vmem:[#allocation3 + $0x3d] sm:$0xff] %v3851
        %3902 = vst [vmem:[#allocation3 + $0x45] sm:$0xff] %v3852
        %3903 = vst [vmem:[#allocation3 + $0x4d] sm:$0xff] %v3853
        %3904 = vst [vmem:[#allocation3 + $0x55] sm:$0xff] %v3854
        %3905 = vst [vmem:[#allocation3 + $0x5d] sm:$0xff] %v3855
        %3906 = vst [vmem:[#allocation3 + $0x65] sm:$0xff] %v3856
        %3907 = vst [vmem:[#allocation3 + $0x6d] sm:$0xff] %v3857
        %3908 = vst [vmem:[#allocation3 + $0x75] sm:$0xff] %v3858
        %3909 = vst [vmem:[#allocation3 + $0x7d] sm:$0xff] %v3859
        %3910 = vst [vmem:[#allocation3 + $0x85] sm:$0xff] %v3860
        %3911 = vst [vmem:[#allocation3 + $0x8d] sm:$0xff] %v3861
        %3912 = vst [vmem:[#allocation3 + $0x95] sm:$0xff] %v3862
        %3913 = vst [vmem:[#allocation3 + $0x9d] sm:$0xff] %v3863
        %3914 = vst [vmem:[#allocation3 + $0xa5] sm:$0xff] %v3864
        %3915 = vst [vmem:[#allocation3 + $0xad] sm:$0xff] %v3865
        %3916 = vst [vmem:[#allocation3 + $0xb5] sm:$0xff] %v3866
        %3917 = vst [vmem:[#allocation3 + $0xbd] sm:$0xff] %v3867
        %3918 = vst [vmem:[#allocation3 + $0xc5] sm:$0xff] %v3868
        %3919 = vst [vmem:[#allocation3 + $0xcd] sm:$0xff] %v3869
        %3920 = vst [vmem:[#allocation3 + $0xd5] sm:$0xff] %v3870
        %3921 = vst [vmem:[#allocation3 + $0xdd] sm:$0xff] %v3871
        %3922 = vst [vmem:[#allocation3 + $0xe5] sm:$0xff] %v3872
        %3923 = vst [vmem:[#allocation3 + $0xed] sm:$0xff] %v3873
        %3924 = vst [vmem:[#allocation3 + $0xf5] sm:$0xff] %v3874
        %3925 = vst [vmem:[#allocation3 + $0xfd] sm:$0xff] %v3875
        %3926 = vst [vmem:[#allocation3 + $0x105] sm:$0xff] %v3876
        %3927 = vst [vmem:[#allocation3 + $0x10d] sm:$0xff] %v3877
        %3928 = vst [vmem:[#allocation3 + $0x115] sm:$0xff] %v3878
        %3929 = vst [vmem:[#allocation3 + $0x11d] sm:$0xff] %v3879
        %3930 = vst [vmem:[#allocation3 + $0x125] sm:$0xff] %v3880
        %3931 = vst [vmem:[#allocation3 + $0x12d] sm:$0xff] %v3881
        %3932 = vst [vmem:[#allocation3 + $0x135] sm:$0xff] %v3882
        %3933 = vst [vmem:[#allocation3 + $0x13d] sm:$0xff] %v3883
        %3934 = vst [vmem:[#allocation3 + $0x145] sm:$0xff] %v3884
        %3935 = vst [vmem:[#allocation3 + $0x14d] sm:$0xff] %v3885
        %3936 = vst [vmem:[#allocation3 + $0x155] sm:$0xff] %v3886
        %3937 = vst [vmem:[#allocation3 + $0x15d] sm:$0xff] %v3887
        %3938 = vst [vmem:[#allocation3 + $0x165] sm:$0xff] %v3888
        %3939 = vst [vmem:[#allocation3 + $0x16d] sm:$0xff] %v3889
        %3940 = vst [vmem:[#allocation3 + $0x175] sm:$0xff] %v3890
        %3941 = vst [vmem:[#allocation3 + $0x17d] sm:$0xff] %v3891
        %3942 = vst [vmem:[#allocation3 + $0x185] sm:$0xff] %v3892
        %3943 = vst [vmem:[#allocation3 + $0x18d] sm:$0xff] %v3893
        %3944 = vst [vmem:[#allocation3 + $0x195] sm:$0xff] %v3894
        %s3945 = scalar_lea.vmem %s1, 56
        %v3946 = vld [vmem:[%s3945] sm:$0xf]
        %v3947 = vld [vmem:[%s3945 + $0x4] sm:$0xf]
        %v3950 = vunpack.c.l.b16 %v3946
        %v3951 = vunpack.c.l.b16 %v3947
        %v3952 = vpack.c.b16 %v3951, %v3950
        %3954 = vmatprep.subr.bf16.mxu0 0
        %3955 = vmatpush1.bf16.msra.mxu0 %v3952
        %3956 = vmatprep.subr.bf16.mxu0 0
        %3957 = vmatpush1.bf16.msra.mxu0 0
        %3958 = vmatprep.subr.bf16.mxu0 0
        %3959 = vmatpush1.bf16.msra.mxu0 0
        %3960 = vmatprep.subr.bf16.mxu0 0
        %3961 = vmatpush1.bf16.msra.mxu0 0
        %3962 = vmatprep.subr.bf16.mxu0 0
        %3963 = vmatpush1.bf16.msra.mxu0 0
        %3964 = vmatprep.subr.bf16.mxu0 0
        %3965 = vmatpush1.bf16.msra.mxu0 0
        %3966 = vmatprep.subr.bf16.mxu0 0
        %3967 = vmatpush1.bf16.msra.mxu0 0
        %3968 = vmatprep.subr.bf16.mxu0 0
        %3969 = vmatpush1.bf16.msra.mxu0 0
        %3970 = vmatprep.subr.bf16.mxu0 0
        %3971 = vmatpush1.bf16.msra.mxu0 0
        %3972 = vmatprep.subr.bf16.mxu0 0
        %3973 = vmatpush1.bf16.msra.mxu0 0
        %3974 = vmatprep.subr.bf16.mxu0 0
        %3975 = vmatpush1.bf16.msra.mxu0 0
        %3976 = vmatprep.subr.bf16.mxu0 0
        %3977 = vmatpush1.bf16.msra.mxu0 0
        %3978 = vmatprep.subr.bf16.mxu0 0
        %3979 = vmatpush1.bf16.msra.mxu0 0
        %3980 = vmatprep.subr.bf16.mxu0 0
        %3981 = vmatpush1.bf16.msra.mxu0 0
        %3982 = vmatprep.subr.bf16.mxu0 0
        %3983 = vmatpush1.bf16.msra.mxu0 0
        %3984 = vmatprep.subr.bf16.mxu0 0
        %3985 = vmatpush1.bf16.msra.mxu0 0
        %3986 = vmatprep.mubr.bf16.mxu0 0
        %3987 = vmatmul.mubr.bf16.gmra.mrb[0].mxu0 %v1136
        %v3988 = vpop.f32.mrb[0].mxu0
        %v3989 = vadd.f32 0.0, %v3988
        %v3990 = vpop.f32.mrb[0].mxu0
        %v3991 = vpop.f32.mrb[0].mxu0
        %v3992 = vadd.f32 0.0, %v3991
        %v3993 = vpop.f32.mrb[0].mxu0
        %3994 = vmatprep.mubr.bf16.mxu0 0
        %3995 = vmatmul.mubr.bf16.gmra.mrb[0].mxu0 %v1139
        %v3996 = vpop.f32.mrb[0].mxu0
        %v3997 = vadd.f32 0.0, %v3996
        %v3998 = vpop.f32.mrb[0].mxu0
        %v3999 = vpop.f32.mrb[0].mxu0
        %v4000 = vadd.f32 0.0, %v3999
        %v4001 = vpop.f32.mrb[0].mxu0
        %4002 = vmatprep.mubr.bf16.mxu0 0
        %4003 = vmatmul.mubr.bf16.gmra.mrb[0].mxu0 %v1142
        %v4004 = vpop.f32.mrb[0].mxu0
        %v4005 = vadd.f32 0.0, %v4004
        %v4006 = vpop.f32.mrb[0].mxu0
        %v4007 = vpop.f32.mrb[0].mxu0
        %v4008 = vadd.f32 0.0, %v4007
        %v4009 = vpop.f32.mrb[0].mxu0
        %4010 = vmatprep.mubr.bf16.mxu0 0
        %4011 = vmatmul.mubr.bf16.gmra.mrb[0].mxu0 %v1145
        %v4012 = vpop.f32.mrb[0].mxu0
        %v4013 = vadd.f32 0.0, %v4012
        %v4014 = vpop.f32.mrb[0].mxu0
        %v4015 = vpop.f32.mrb[0].mxu0
        %v4016 = vadd.f32 0.0, %v4015
        %v4017 = vpop.f32.mrb[0].mxu0
        %4018 = vmatprep.mubr.bf16.mxu0 0
        %4019 = vmatmul.mubr.bf16.gmra.mrb[0].mxu0 %v1148
        %v4020 = vpop.f32.mrb[0].mxu0
        %v4021 = vadd.f32 0.0, %v4020
        %v4022 = vpop.f32.mrb[0].mxu0
        %v4023 = vpop.f32.mrb[0].mxu0
        %v4024 = vadd.f32 0.0, %v4023
        %v4025 = vpop.f32.mrb[0].mxu0
        %4026 = vmatprep.mubr.bf16.mxu0 0
        %4027 = vmatmul.mubr.bf16.gmra.mrb[0].mxu0 %v1151
        %v4028 = vpop.f32.mrb[0].mxu0
        %v4029 = vadd.f32 0.0, %v4028
        %v4030 = vpop.f32.mrb[0].mxu0
        %v4031 = vpop.f32.mrb[0].mxu0
        %v4032 = vadd.f32 0.0, %v4031
        %v4033 = vpop.f32.mrb[0].mxu0
        %4034 = vmatprep.mubr.bf16.mxu0 0
        %4035 = vmatmul.mubr.bf16.gmra.mrb[0].mxu0 %v1154
        %v4036 = vpop.f32.mrb[0].mxu0
        %v4037 = vadd.f32 0.0, %v4036
        %v4038 = vpop.f32.mrb[0].mxu0
        %v4039 = vpop.f32.mrb[0].mxu0
        %v4040 = vadd.f32 0.0, %v4039
        %v4041 = vpop.f32.mrb[0].mxu0
        %4042 = vmatprep.mubr.bf16.mxu0 0
        %4043 = vmatmul.mubr.bf16.gmra.mrb[0].mxu0 %v1157
        %v4044 = vpop.f32.mrb[0].mxu0
        %v4045 = vadd.f32 0.0, %v4044
        %v4046 = vpop.f32.mrb[0].mxu0
        %v4047 = vpop.f32.mrb[0].mxu0
        %v4048 = vadd.f32 0.0, %v4047
        %v4049 = vpop.f32.mrb[0].mxu0
        %4050 = vmatprep.mubr.bf16.mxu0 0
        %4051 = vmatmul.mubr.bf16.gmra.mrb[0].mxu0 %v1160
        %v4052 = vpop.f32.mrb[0].mxu0
        %v4053 = vadd.f32 0.0, %v4052
        %v4054 = vpop.f32.mrb[0].mxu0
        %v4055 = vpop.f32.mrb[0].mxu0
        %v4056 = vadd.f32 0.0, %v4055
        %v4057 = vpop.f32.mrb[0].mxu0
        %4058 = vmatprep.mubr.bf16.mxu0 0
        %4059 = vmatmul.mubr.bf16.gmra.mrb[0].mxu0 %v1163
        %v4060 = vpop.f32.mrb[0].mxu0
        %v4061 = vadd.f32 0.0, %v4060
        %v4062 = vpop.f32.mrb[0].mxu0
        %v4063 = vpop.f32.mrb[0].mxu0
        %v4064 = vadd.f32 0.0, %v4063
        %v4065 = vpop.f32.mrb[0].mxu0
        %4066 = vmatprep.mubr.bf16.mxu0 0
        %4067 = vmatmul.mubr.bf16.gmra.mrb[0].mxu0 %v1166
        %v4068 = vpop.f32.mrb[0].mxu0
        %v4069 = vadd.f32 0.0, %v4068
        %v4070 = vpop.f32.mrb[0].mxu0
        %v4071 = vpop.f32.mrb[0].mxu0
        %v4072 = vadd.f32 0.0, %v4071
        %v4073 = vpop.f32.mrb[0].mxu0
        %4074 = vmatprep.mubr.bf16.mxu0 0
        %4075 = vmatmul.mubr.bf16.gmra.mrb[0].mxu0 %v1169
        %v4076 = vpop.f32.mrb[0].mxu0
        %v4077 = vadd.f32 0.0, %v4076
        %v4078 = vpop.f32.mrb[0].mxu0
        %v4079 = vpop.f32.mrb[0].mxu0
        %v4080 = vadd.f32 0.0, %v4079
        %v4081 = vpop.f32.mrb[0].mxu0
        %4082 = vmatprep.mubr.bf16.mxu0 0
        %4083 = vmatmul.mubr.bf16.gmra.mrb[0].mxu0 %v1172
        %v4084 = vpop.f32.mrb[0].mxu0
        %v4085 = vadd.f32 0.0, %v4084
        %v4086 = vpop.f32.mrb[0].mxu0
        %v4087 = vpop.f32.mrb[0].mxu0
        %v4088 = vadd.f32 0.0, %v4087
        %v4089 = vpop.f32.mrb[0].mxu0
        %4090 = vmatprep.mubr.bf16.mxu0 0
        %4091 = vmatmul.mubr.bf16.gmra.mrb[0].mxu0 %v1175
        %v4092 = vpop.f32.mrb[0].mxu0
        %v4093 = vadd.f32 0.0, %v4092
        %v4094 = vpop.f32.mrb[0].mxu0
        %v4095 = vpop.f32.mrb[0].mxu0
        %v4096 = vadd.f32 0.0, %v4095
        %v4097 = vpop.f32.mrb[0].mxu0
        %4098 = vmatprep.mubr.bf16.mxu0 0
        %4099 = vmatmul.mubr.bf16.gmra.mrb[0].mxu0 %v1178
        %v4100 = vpop.f32.mrb[0].mxu0
        %v4101 = vadd.f32 0.0, %v4100
        %v4102 = vpop.f32.mrb[0].mxu0
        %v4103 = vpop.f32.mrb[0].mxu0
        %v4104 = vadd.f32 0.0, %v4103
        %v4105 = vpop.f32.mrb[0].mxu0
        %4106 = vmatprep.mubr.bf16.mxu0 0
        %4107 = vmatmul.mubr.bf16.gmra.mrb[0].mxu0 %v1181
        %v4108 = vpop.f32.mrb[0].mxu0
        %v4109 = vadd.f32 0.0, %v4108
        %v4110 = vpop.f32.mrb[0].mxu0
        %v4111 = vpop.f32.mrb[0].mxu0
        %v4112 = vadd.f32 0.0, %v4111
        %v4113 = vpop.f32.mrb[0].mxu0
        %4114 = vmatprep.mubr.bf16.mxu0 0
        %4115 = vmatmul.mubr.bf16.gmra.mrb[0].mxu0 %v1184
        %v4116 = vpop.f32.mrb[0].mxu0
        %v4117 = vadd.f32 0.0, %v4116
        %v4118 = vpop.f32.mrb[0].mxu0
        %v4119 = vpop.f32.mrb[0].mxu0
        %v4120 = vadd.f32 0.0, %v4119
        %v4121 = vpop.f32.mrb[0].mxu0
        %4122 = vmatprep.mubr.bf16.mxu0 0
        %4123 = vmatmul.mubr.bf16.gmra.mrb[0].mxu0 %v1187
        %v4124 = vpop.f32.mrb[0].mxu0
        %v4125 = vadd.f32 0.0, %v4124
        %v4126 = vpop.f32.mrb[0].mxu0
        %v4127 = vpop.f32.mrb[0].mxu0
        %v4128 = vadd.f32 0.0, %v4127
        %v4129 = vpop.f32.mrb[0].mxu0
        %4130 = vmatprep.mubr.bf16.mxu0 0
        %4131 = vmatmul.mubr.bf16.gmra.mrb[0].mxu0 %v1190
        %v4132 = vpop.f32.mrb[0].mxu0
        %v4133 = vadd.f32 0.0, %v4132
        %v4134 = vpop.f32.mrb[0].mxu0
        %v4135 = vpop.f32.mrb[0].mxu0
        %v4136 = vadd.f32 0.0, %v4135
        %v4137 = vpop.f32.mrb[0].mxu0
        %4138 = vmatprep.mubr.bf16.mxu0 0
        %4139 = vmatmul.mubr.bf16.gmra.mrb[0].mxu0 %v1193
        %v4140 = vpop.f32.mrb[0].mxu0
        %v4141 = vadd.f32 0.0, %v4140
        %v4142 = vpop.f32.mrb[0].mxu0
        %v4143 = vpop.f32.mrb[0].mxu0
        %v4144 = vadd.f32 0.0, %v4143
        %v4145 = vpop.f32.mrb[0].mxu0
        %4146 = vmatprep.mubr.bf16.mxu0 0
        %4147 = vmatmul.mubr.bf16.gmra.mrb[0].mxu0 %v1196
        %v4148 = vpop.f32.mrb[0].mxu0
        %v4149 = vadd.f32 0.0, %v4148
        %v4150 = vpop.f32.mrb[0].mxu0
        %v4151 = vpop.f32.mrb[0].mxu0
        %v4152 = vadd.f32 0.0, %v4151
        %v4153 = vpop.f32.mrb[0].mxu0
        %4154 = vmatprep.mubr.bf16.mxu0 0
        %4155 = vmatmul.mubr.bf16.gmra.mrb[0].mxu0 %v1199
        %v4156 = vpop.f32.mrb[0].mxu0
        %v4157 = vadd.f32 0.0, %v4156
        %v4158 = vpop.f32.mrb[0].mxu0
        %v4159 = vpop.f32.mrb[0].mxu0
        %v4160 = vadd.f32 0.0, %v4159
        %v4161 = vpop.f32.mrb[0].mxu0
        %4162 = vmatprep.mubr.bf16.mxu0 0
        %4163 = vmatmul.mubr.bf16.gmra.mrb[0].mxu0 %v1202
        %v4164 = vpop.f32.mrb[0].mxu0
        %v4165 = vadd.f32 0.0, %v4164
        %v4166 = vpop.f32.mrb[0].mxu0
        %v4167 = vpop.f32.mrb[0].mxu0
        %v4168 = vadd.f32 0.0, %v4167
        %v4169 = vpop.f32.mrb[0].mxu0
        %4170 = vmatprep.mubr.bf16.mxu0 0
        %4171 = vmatmul.mubr.bf16.gmra.mrb[0].mxu0 %v1205
        %v4172 = vpop.f32.mrb[0].mxu0
        %v4173 = vadd.f32 0.0, %v4172
        %v4174 = vpop.f32.mrb[0].mxu0
        %v4175 = vpop.f32.mrb[0].mxu0
        %v4176 = vadd.f32 0.0, %v4175
        %v4177 = vpop.f32.mrb[0].mxu0
        %4178 = vmatprep.mubr.bf16.mxu0 0
        %4179 = vmatmul.mubr.bf16.gmra.mrb[0].mxu0 %v1208
        %v4180 = vpop.f32.mrb[0].mxu0
        %v4181 = vadd.f32 0.0, %v4180
        %v4182 = vpop.f32.mrb[0].mxu0
        %v4183 = vpop.f32.mrb[0].mxu0
        %v4184 = vadd.f32 0.0, %v4183
        %v4185 = vpop.f32.mrb[0].mxu0
        %4186 = vdwg.mxu0
        %v4187 = vld [vmem:[#allocation3 + $0xc] sm:$0xff]
        %v4188 = vld [vmem:[#allocation3 + $0x14] sm:$0xff]
        %v4189 = vld [vmem:[#allocation3 + $0x1c] sm:$0xff]
        %v4190 = vld [vmem:[#allocation3 + $0x24] sm:$0xff]
        %v4191 = vld [vmem:[#allocation3 + $0x2c] sm:$0xff]
        %v4192 = vld [vmem:[#allocation3 + $0x34] sm:$0xff]
        %v4193 = vld [vmem:[#allocation3 + $0x3c] sm:$0xff]
        %v4194 = vld [vmem:[#allocation3 + $0x44] sm:$0xff]
        %v4195 = vld [vmem:[#allocation3 + $0x4c] sm:$0xff]
        %v4196 = vld [vmem:[#allocation3 + $0x54] sm:$0xff]
        %v4197 = vld [vmem:[#allocation3 + $0x5c] sm:$0xff]
        %v4198 = vld [vmem:[#allocation3 + $0x64] sm:$0xff]
        %v4199 = vld [vmem:[#allocation3 + $0x6c] sm:$0xff]
        %v4200 = vld [vmem:[#allocation3 + $0x74] sm:$0xff]
        %v4201 = vld [vmem:[#allocation3 + $0x7c] sm:$0xff]
        %v4202 = vld [vmem:[#allocation3 + $0x84] sm:$0xff]
        %v4203 = vld [vmem:[#allocation3 + $0x8c] sm:$0xff]
        %v4204 = vld [vmem:[#allocation3 + $0x94] sm:$0xff]
        %v4205 = vld [vmem:[#allocation3 + $0x9c] sm:$0xff]
        %v4206 = vld [vmem:[#allocation3 + $0xa4] sm:$0xff]
        %v4207 = vld [vmem:[#allocation3 + $0xac] sm:$0xff]
        %v4208 = vld [vmem:[#allocation3 + $0xb4] sm:$0xff]
        %v4209 = vld [vmem:[#allocation3 + $0xbc] sm:$0xff]
        %v4210 = vld [vmem:[#allocation3 + $0xc4] sm:$0xff]
        %v4211 = vld [vmem:[#allocation3 + $0xcc] sm:$0xff]
        %v4212 = vld [vmem:[#allocation3 + $0xd4] sm:$0xff]
        %v4213 = vld [vmem:[#allocation3 + $0xdc] sm:$0xff]
        %v4214 = vld [vmem:[#allocation3 + $0xe4] sm:$0xff]
        %v4215 = vld [vmem:[#allocation3 + $0xec] sm:$0xff]
        %v4216 = vld [vmem:[#allocation3 + $0xf4] sm:$0xff]
        %v4217 = vld [vmem:[#allocation3 + $0xfc] sm:$0xff]
        %v4218 = vld [vmem:[#allocation3 + $0x104] sm:$0xff]
        %v4219 = vld [vmem:[#allocation3 + $0x10c] sm:$0xff]
        %v4220 = vld [vmem:[#allocation3 + $0x114] sm:$0xff]
        %v4221 = vld [vmem:[#allocation3 + $0x11c] sm:$0xff]
        %v4222 = vld [vmem:[#allocation3 + $0x124] sm:$0xff]
        %v4223 = vld [vmem:[#allocation3 + $0x12c] sm:$0xff]
        %v4224 = vld [vmem:[#allocation3 + $0x134] sm:$0xff]
        %v4225 = vld [vmem:[#allocation3 + $0x13c] sm:$0xff]
        %v4226 = vld [vmem:[#allocation3 + $0x144] sm:$0xff]
        %v4227 = vld [vmem:[#allocation3 + $0x14c] sm:$0xff]
        %v4228 = vld [vmem:[#allocation3 + $0x154] sm:$0xff]
        %v4229 = vld [vmem:[#allocation3 + $0x15c] sm:$0xff]
        %v4230 = vld [vmem:[#allocation3 + $0x164] sm:$0xff]
        %v4231 = vld [vmem:[#allocation3 + $0x16c] sm:$0xff]
        %v4232 = vld [vmem:[#allocation3 + $0x174] sm:$0xff]
        %v4233 = vld [vmem:[#allocation3 + $0x17c] sm:$0xff]
        %v4234 = vld [vmem:[#allocation3 + $0x184] sm:$0xff]
        %v4235 = vld [vmem:[#allocation3 + $0x18c] sm:$0xff]
        %v4236 = vld [vmem:[#allocation3 + $0x194] sm:$0xff]
        %v4237 = vadd.f32 %v4187, %v3989
        %v4238 = vadd.f32 %v4188, %v3992
        %v4239 = vadd.f32 %v4189, %v3997
        %v4240 = vadd.f32 %v4190, %v4000
        %v4241 = vadd.f32 %v4191, %v4005
        %v4242 = vadd.f32 %v4192, %v4008
        %v4243 = vadd.f32 %v4193, %v4013
        %v4244 = vadd.f32 %v4194, %v4016
        %v4245 = vadd.f32 %v4195, %v4021
        %v4246 = vadd.f32 %v4196, %v4024
        %v4247 = vadd.f32 %v4197, %v4029
        %v4248 = vadd.f32 %v4198, %v4032
        %v4249 = vadd.f32 %v4199, %v4037
        %v4250 = vadd.f32 %v4200, %v4040
        %v4251 = vadd.f32 %v4201, %v4045
        %v4252 = vadd.f32 %v4202, %v4048
        %v4253 = vadd.f32 %v4203, %v4053
        %v4254 = vadd.f32 %v4204, %v4056
        %v4255 = vadd.f32 %v4205, %v4061
        %v4256 = vadd.f32 %v4206, %v4064
        %v4257 = vadd.f32 %v4207, %v4069
        %v4258 = vadd.f32 %v4208, %v4072
        %v4259 = vadd.f32 %v4209, %v4077
        %v4260 = vadd.f32 %v4210, %v4080
        %v4261 = vadd.f32 %v4211, %v4085
        %v4262 = vadd.f32 %v4212, %v4088
        %v4263 = vadd.f32 %v4213, %v4093
        %v4264 = vadd.f32 %v4214, %v4096
        %v4265 = vadd.f32 %v4215, %v4101
        %v4266 = vadd.f32 %v4216, %v4104
        %v4267 = vadd.f32 %v4217, %v4109
        %v4268 = vadd.f32 %v4218, %v4112
        %v4269 = vadd.f32 %v4219, %v4117
        %v4270 = vadd.f32 %v4220, %v4120
        %v4271 = vadd.f32 %v4221, %v4125
        %v4272 = vadd.f32 %v4222, %v4128
        %v4273 = vadd.f32 %v4223, %v4133
        %v4274 = vadd.f32 %v4224, %v4136
        %v4275 = vadd.f32 %v4225, %v4141
        %v4276 = vadd.f32 %v4226, %v4144
        %v4277 = vadd.f32 %v4227, %v4149
        %v4278 = vadd.f32 %v4228, %v4152
        %v4279 = vadd.f32 %v4229, %v4157
        %v4280 = vadd.f32 %v4230, %v4160
        %v4281 = vadd.f32 %v4231, %v4165
        %v4282 = vadd.f32 %v4232, %v4168
        %v4283 = vadd.f32 %v4233, %v4173
        %v4284 = vadd.f32 %v4234, %v4176
        %v4285 = vadd.f32 %v4235, %v4181
        %v4286 = vadd.f32 %v4236, %v4184
        %4287 = vst [vmem:[#allocation3 + $0xc] sm:$0xff] %v4237
        %4288 = vst [vmem:[#allocation3 + $0x14] sm:$0xff] %v4238
        %4289 = vst [vmem:[#allocation3 + $0x1c] sm:$0xff] %v4239
        %4290 = vst [vmem:[#allocation3 + $0x24] sm:$0xff] %v4240
        %4291 = vst [vmem:[#allocation3 + $0x2c] sm:$0xff] %v4241
        %4292 = vst [vmem:[#allocation3 + $0x34] sm:$0xff] %v4242
        %4293 = vst [vmem:[#allocation3 + $0x3c] sm:$0xff] %v4243
        %4294 = vst [vmem:[#allocation3 + $0x44] sm:$0xff] %v4244
        %4295 = vst [vmem:[#allocation3 + $0x4c] sm:$0xff] %v4245
        %4296 = vst [vmem:[#allocation3 + $0x54] sm:$0xff] %v4246
        %4297 = vst [vmem:[#allocation3 + $0x5c] sm:$0xff] %v4247
        %4298 = vst [vmem:[#allocation3 + $0x64] sm:$0xff] %v4248
        %4299 = vst [vmem:[#allocation3 + $0x6c] sm:$0xff] %v4249
        %4300 = vst [vmem:[#allocation3 + $0x74] sm:$0xff] %v4250
        %4301 = vst [vmem:[#allocation3 + $0x7c] sm:$0xff] %v4251
        %4302 = vst [vmem:[#allocation3 + $0x84] sm:$0xff] %v4252
        %4303 = vst [vmem:[#allocation3 + $0x8c] sm:$0xff] %v4253
        %4304 = vst [vmem:[#allocation3 + $0x94] sm:$0xff] %v4254
        %4305 = vst [vmem:[#allocation3 + $0x9c] sm:$0xff] %v4255
        %4306 = vst [vmem:[#allocation3 + $0xa4] sm:$0xff] %v4256
        %4307 = vst [vmem:[#allocation3 + $0xac] sm:$0xff] %v4257
        %4308 = vst [vmem:[#allocation3 + $0xb4] sm:$0xff] %v4258
        %4309 = vst [vmem:[#allocation3 + $0xbc] sm:$0xff] %v4259
        %4310 = vst [vmem:[#allocation3 + $0xc4] sm:$0xff] %v4260
        %4311 = vst [vmem:[#allocation3 + $0xcc] sm:$0xff] %v4261
        %4312 = vst [vmem:[#allocation3 + $0xd4] sm:$0xff] %v4262
        %4313 = vst [vmem:[#allocation3 + $0xdc] sm:$0xff] %v4263
        %4314 = vst [vmem:[#allocation3 + $0xe4] sm:$0xff] %v4264
        %4315 = vst [vmem:[#allocation3 + $0xec] sm:$0xff] %v4265
        %4316 = vst [vmem:[#allocation3 + $0xf4] sm:$0xff] %v4266
        %4317 = vst [vmem:[#allocation3 + $0xfc] sm:$0xff] %v4267
        %4318 = vst [vmem:[#allocation3 + $0x104] sm:$0xff] %v4268
        %4319 = vst [vmem:[#allocation3 + $0x10c] sm:$0xff] %v4269
        %4320 = vst [vmem:[#allocation3 + $0x114] sm:$0xff] %v4270
        %4321 = vst [vmem:[#allocation3 + $0x11c] sm:$0xff] %v4271
        %4322 = vst [vmem:[#allocation3 + $0x124] sm:$0xff] %v4272
        %4323 = vst [vmem:[#allocation3 + $0x12c] sm:$0xff] %v4273
        %4324 = vst [vmem:[#allocation3 + $0x134] sm:$0xff] %v4274
        %4325 = vst [vmem:[#allocation3 + $0x13c] sm:$0xff] %v4275
        %4326 = vst [vmem:[#allocation3 + $0x144] sm:$0xff] %v4276
        %4327 = vst [vmem:[#allocation3 + $0x14c] sm:$0xff] %v4277
        %4328 = vst [vmem:[#allocation3 + $0x154] sm:$0xff] %v4278
        %4329 = vst [vmem:[#allocation3 + $0x15c] sm:$0xff] %v4279
        %4330 = vst [vmem:[#allocation3 + $0x164] sm:$0xff] %v4280
        %4331 = vst [vmem:[#allocation3 + $0x16c] sm:$0xff] %v4281
        %4332 = vst [vmem:[#allocation3 + $0x174] sm:$0xff] %v4282
        %4333 = vst [vmem:[#allocation3 + $0x17c] sm:$0xff] %v4283
        %4334 = vst [vmem:[#allocation3 + $0x184] sm:$0xff] %v4284
        %4335 = vst [vmem:[#allocation3 + $0x18c] sm:$0xff] %v4285
        %4336 = vst [vmem:[#allocation3 + $0x194] sm:$0xff] %v4286
        %s4337 = scalar_lea.vmem %s1, 64
        %v4338 = vld [vmem:[%s4337] sm:$0xf]
        %v4339 = vld [vmem:[%s4337 + $0x4] sm:$0xf]
        %v4342 = vunpack.c.l.b16 %v4338
        %v4343 = vunpack.c.l.b16 %v4339
        %v4344 = vpack.c.b16 %v4343, %v4342
        %4346 = vmatprep.subr.bf16.mxu0 0
        %4347 = vmatpush1.bf16.msra.mxu0 %v4344
        %4348 = vmatprep.subr.bf16.mxu0 0
        %4349 = vmatpush1.bf16.msra.mxu0 0
        %4350 = vmatprep.subr.bf16.mxu0 0
        %4351 = vmatpush1.bf16.msra.mxu0 0
        %4352 = vmatprep.subr.bf16.mxu0 0
        %4353 = vmatpush1.bf16.msra.mxu0 0
        %4354 = vmatprep.subr.bf16.mxu0 0
        %4355 = vmatpush1.bf16.msra.mxu0 0
        %4356 = vmatprep.subr.bf16.mxu0 0
        %4357 = vmatpush1.bf16.msra.mxu0 0
        %4358 = vmatprep.subr.bf16.mxu0 0
        %4359 = vmatpush1.bf16.msra.mxu0 0
        %4360 = vmatprep.subr.bf16.mxu0 0
        %4361 = vmatpush1.bf16.msra.mxu0 0
        %4362 = vmatprep.subr.bf16.mxu0 0
        %4363 = vmatpush1.bf16.msra.mxu0 0
        %4364 = vmatprep.subr.bf16.mxu0 0
        %4365 = vmatpush1.bf16.msra.mxu0 0
        %4366 = vmatprep.subr.bf16.mxu0 0
        %4367 = vmatpush1.bf16.msra.mxu0 0
        %4368 = vmatprep.subr.bf16.mxu0 0
        %4369 = vmatpush1.bf16.msra.mxu0 0
        %4370 = vmatprep.subr.bf16.mxu0 0
        %4371 = vmatpush1.bf16.msra.mxu0 0
        %4372 = vmatprep.subr.bf16.mxu0 0
        %4373 = vmatpush1.bf16.msra.mxu0 0
        %4374 = vmatprep.subr.bf16.mxu0 0
        %4375 = vmatpush1.bf16.msra.mxu0 0
        %4376 = vmatprep.subr.bf16.mxu0 0
        %4377 = vmatpush1.bf16.msra.mxu0 0
        %4378 = vmatprep.mubr.bf16.mxu0 0
        %4379 = vmatmul.mubr.bf16.gmra.mrb[0].mxu0 %v1136
        %v4380 = vpop.f32.mrb[0].mxu0
        %v4381 = vadd.f32 0.0, %v4380
        %v4382 = vpop.f32.mrb[0].mxu0
        %v4383 = vpop.f32.mrb[0].mxu0
        %v4384 = vadd.f32 0.0, %v4383
        %v4385 = vpop.f32.mrb[0].mxu0
        %4386 = vmatprep.mubr.bf16.mxu0 0
        %4387 = vmatmul.mubr.bf16.gmra.mrb[0].mxu0 %v1139
        %v4388 = vpop.f32.mrb[0].mxu0
        %v4389 = vadd.f32 0.0, %v4388
        %v4390 = vpop.f32.mrb[0].mxu0
        %v4391 = vpop.f32.mrb[0].mxu0
        %v4392 = vadd.f32 0.0, %v4391
        %v4393 = vpop.f32.mrb[0].mxu0
        %4394 = vmatprep.mubr.bf16.mxu0 0
        %4395 = vmatmul.mubr.bf16.gmra.mrb[0].mxu0 %v1142
        %v4396 = vpop.f32.mrb[0].mxu0
        %v4397 = vadd.f32 0.0, %v4396
        %v4398 = vpop.f32.mrb[0].mxu0
        %v4399 = vpop.f32.mrb[0].mxu0
        %v4400 = vadd.f32 0.0, %v4399
        %v4401 = vpop.f32.mrb[0].mxu0
        %4402 = vmatprep.mubr.bf16.mxu0 0
        %4403 = vmatmul.mubr.bf16.gmra.mrb[0].mxu0 %v1145
        %v4404 = vpop.f32.mrb[0].mxu0
        %v4405 = vadd.f32 0.0, %v4404
        %v4406 = vpop.f32.mrb[0].mxu0
        %v4407 = vpop.f32.mrb[0].mxu0
        %v4408 = vadd.f32 0.0, %v4407
        %v4409 = vpop.f32.mrb[0].mxu0
        %4410 = vmatprep.mubr.bf16.mxu0 0
        %4411 = vmatmul.mubr.bf16.gmra.mrb[0].mxu0 %v1148
        %v4412 = vpop.f32.mrb[0].mxu0
        %v4413 = vadd.f32 0.0, %v4412
        %v4414 = vpop.f32.mrb[0].mxu0
        %v4415 = vpop.f32.mrb[0].mxu0
        %v4416 = vadd.f32 0.0, %v4415
        %v4417 = vpop.f32.mrb[0].mxu0
        %4418 = vmatprep.mubr.bf16.mxu0 0
        %4419 = vmatmul.mubr.bf16.gmra.mrb[0].mxu0 %v1151
        %v4420 = vpop.f32.mrb[0].mxu0
        %v4421 = vadd.f32 0.0, %v4420
        %v4422 = vpop.f32.mrb[0].mxu0
        %v4423 = vpop.f32.mrb[0].mxu0
        %v4424 = vadd.f32 0.0, %v4423
        %v4425 = vpop.f32.mrb[0].mxu0
        %4426 = vmatprep.mubr.bf16.mxu0 0
        %4427 = vmatmul.mubr.bf16.gmra.mrb[0].mxu0 %v1154
        %v4428 = vpop.f32.mrb[0].mxu0
        %v4429 = vadd.f32 0.0, %v4428
        %v4430 = vpop.f32.mrb[0].mxu0
        %v4431 = vpop.f32.mrb[0].mxu0
        %v4432 = vadd.f32 0.0, %v4431
        %v4433 = vpop.f32.mrb[0].mxu0
        %4434 = vmatprep.mubr.bf16.mxu0 0
        %4435 = vmatmul.mubr.bf16.gmra.mrb[0].mxu0 %v1157
        %v4436 = vpop.f32.mrb[0].mxu0
        %v4437 = vadd.f32 0.0, %v4436
        %v4438 = vpop.f32.mrb[0].mxu0
        %v4439 = vpop.f32.mrb[0].mxu0
        %v4440 = vadd.f32 0.0, %v4439
        %v4441 = vpop.f32.mrb[0].mxu0
        %4442 = vmatprep.mubr.bf16.mxu0 0
        %4443 = vmatmul.mubr.bf16.gmra.mrb[0].mxu0 %v1160
        %v4444 = vpop.f32.mrb[0].mxu0
        %v4445 = vadd.f32 0.0, %v4444
        %v4446 = vpop.f32.mrb[0].mxu0
        %v4447 = vpop.f32.mrb[0].mxu0
        %v4448 = vadd.f32 0.0, %v4447
        %v4449 = vpop.f32.mrb[0].mxu0
        %4450 = vmatprep.mubr.bf16.mxu0 0
        %4451 = vmatmul.mubr.bf16.gmra.mrb[0].mxu0 %v1163
        %v4452 = vpop.f32.mrb[0].mxu0
        %v4453 = vadd.f32 0.0, %v4452
        %v4454 = vpop.f32.mrb[0].mxu0
        %v4455 = vpop.f32.mrb[0].mxu0
        %v4456 = vadd.f32 0.0, %v4455
        %v4457 = vpop.f32.mrb[0].mxu0
        %4458 = vmatprep.mubr.bf16.mxu0 0
        %4459 = vmatmul.mubr.bf16.gmra.mrb[0].mxu0 %v1166
        %v4460 = vpop.f32.mrb[0].mxu0
        %v4461 = vadd.f32 0.0, %v4460
        %v4462 = vpop.f32.mrb[0].mxu0
        %v4463 = vpop.f32.mrb[0].mxu0
        %v4464 = vadd.f32 0.0, %v4463
        %v4465 = vpop.f32.mrb[0].mxu0
        %4466 = vmatprep.mubr.bf16.mxu0 0
        %4467 = vmatmul.mubr.bf16.gmra.mrb[0].mxu0 %v1169
        %v4468 = vpop.f32.mrb[0].mxu0
        %v4469 = vadd.f32 0.0, %v4468
        %v4470 = vpop.f32.mrb[0].mxu0
        %v4471 = vpop.f32.mrb[0].mxu0
        %v4472 = vadd.f32 0.0, %v4471
        %v4473 = vpop.f32.mrb[0].mxu0
        %4474 = vmatprep.mubr.bf16.mxu0 0
        %4475 = vmatmul.mubr.bf16.gmra.mrb[0].mxu0 %v1172
        %v4476 = vpop.f32.mrb[0].mxu0
        %v4477 = vadd.f32 0.0, %v4476
        %v4478 = vpop.f32.mrb[0].mxu0
        %v4479 = vpop.f32.mrb[0].mxu0
        %v4480 = vadd.f32 0.0, %v4479
        %v4481 = vpop.f32.mrb[0].mxu0
        %4482 = vmatprep.mubr.bf16.mxu0 0
        %4483 = vmatmul.mubr.bf16.gmra.mrb[0].mxu0 %v1175
        %v4484 = vpop.f32.mrb[0].mxu0
        %v4485 = vadd.f32 0.0, %v4484
        %v4486 = vpop.f32.mrb[0].mxu0
        %v4487 = vpop.f32.mrb[0].mxu0
        %v4488 = vadd.f32 0.0, %v4487
        %v4489 = vpop.f32.mrb[0].mxu0
        %4490 = vmatprep.mubr.bf16.mxu0 0
        %4491 = vmatmul.mubr.bf16.gmra.mrb[0].mxu0 %v1178
        %v4492 = vpop.f32.mrb[0].mxu0
        %v4493 = vadd.f32 0.0, %v4492
        %v4494 = vpop.f32.mrb[0].mxu0
        %v4495 = vpop.f32.mrb[0].mxu0
        %v4496 = vadd.f32 0.0, %v4495
        %v4497 = vpop.f32.mrb[0].mxu0
        %4498 = vmatprep.mubr.bf16.mxu0 0
        %4499 = vmatmul.mubr.bf16.gmra.mrb[0].mxu0 %v1181
        %v4500 = vpop.f32.mrb[0].mxu0
        %v4501 = vadd.f32 0.0, %v4500
        %v4502 = vpop.f32.mrb[0].mxu0
        %v4503 = vpop.f32.mrb[0].mxu0
        %v4504 = vadd.f32 0.0, %v4503
        %v4505 = vpop.f32.mrb[0].mxu0
        %4506 = vmatprep.mubr.bf16.mxu0 0
        %4507 = vmatmul.mubr.bf16.gmra.mrb[0].mxu0 %v1184
        %v4508 = vpop.f32.mrb[0].mxu0
        %v4509 = vadd.f32 0.0, %v4508
        %v4510 = vpop.f32.mrb[0].mxu0
        %v4511 = vpop.f32.mrb[0].mxu0
        %v4512 = vadd.f32 0.0, %v4511
        %v4513 = vpop.f32.mrb[0].mxu0
        %4514 = vmatprep.mubr.bf16.mxu0 0
        %4515 = vmatmul.mubr.bf16.gmra.mrb[0].mxu0 %v1187
        %v4516 = vpop.f32.mrb[0].mxu0
        %v4517 = vadd.f32 0.0, %v4516
        %v4518 = vpop.f32.mrb[0].mxu0
        %v4519 = vpop.f32.mrb[0].mxu0
        %v4520 = vadd.f32 0.0, %v4519
        %v4521 = vpop.f32.mrb[0].mxu0
        %4522 = vmatprep.mubr.bf16.mxu0 0
        %4523 = vmatmul.mubr.bf16.gmra.mrb[0].mxu0 %v1190
        %v4524 = vpop.f32.mrb[0].mxu0
        %v4525 = vadd.f32 0.0, %v4524
        %v4526 = vpop.f32.mrb[0].mxu0
        %v4527 = vpop.f32.mrb[0].mxu0
        %v4528 = vadd.f32 0.0, %v4527
        %v4529 = vpop.f32.mrb[0].mxu0
        %4530 = vmatprep.mubr.bf16.mxu0 0
        %4531 = vmatmul.mubr.bf16.gmra.mrb[0].mxu0 %v1193
        %v4532 = vpop.f32.mrb[0].mxu0
        %v4533 = vadd.f32 0.0, %v4532
        %v4534 = vpop.f32.mrb[0].mxu0
        %v4535 = vpop.f32.mrb[0].mxu0
        %v4536 = vadd.f32 0.0, %v4535
        %v4537 = vpop.f32.mrb[0].mxu0
        %4538 = vmatprep.mubr.bf16.mxu0 0
        %4539 = vmatmul.mubr.bf16.gmra.mrb[0].mxu0 %v1196
        %v4540 = vpop.f32.mrb[0].mxu0
        %v4541 = vadd.f32 0.0, %v4540
        %v4542 = vpop.f32.mrb[0].mxu0
        %v4543 = vpop.f32.mrb[0].mxu0
        %v4544 = vadd.f32 0.0, %v4543
        %v4545 = vpop.f32.mrb[0].mxu0
        %4546 = vmatprep.mubr.bf16.mxu0 0
        %4547 = vmatmul.mubr.bf16.gmra.mrb[0].mxu0 %v1199
        %v4548 = vpop.f32.mrb[0].mxu0
        %v4549 = vadd.f32 0.0, %v4548
        %v4550 = vpop.f32.mrb[0].mxu0
        %v4551 = vpop.f32.mrb[0].mxu0
        %v4552 = vadd.f32 0.0, %v4551
        %v4553 = vpop.f32.mrb[0].mxu0
        %4554 = vmatprep.mubr.bf16.mxu0 0
        %4555 = vmatmul.mubr.bf16.gmra.mrb[0].mxu0 %v1202
        %v4556 = vpop.f32.mrb[0].mxu0
        %v4557 = vadd.f32 0.0, %v4556
        %v4558 = vpop.f32.mrb[0].mxu0
        %v4559 = vpop.f32.mrb[0].mxu0
        %v4560 = vadd.f32 0.0, %v4559
        %v4561 = vpop.f32.mrb[0].mxu0
        %4562 = vmatprep.mubr.bf16.mxu0 0
        %4563 = vmatmul.mubr.bf16.gmra.mrb[0].mxu0 %v1205
        %v4564 = vpop.f32.mrb[0].mxu0
        %v4565 = vadd.f32 0.0, %v4564
        %v4566 = vpop.f32.mrb[0].mxu0
        %v4567 = vpop.f32.mrb[0].mxu0
        %v4568 = vadd.f32 0.0, %v4567
        %v4569 = vpop.f32.mrb[0].mxu0
        %4570 = vmatprep.mubr.bf16.mxu0 0
        %4571 = vmatmul.mubr.bf16.gmra.mrb[0].mxu0 %v1208
        %v4572 = vpop.f32.mrb[0].mxu0
        %v4573 = vadd.f32 0.0, %v4572
        %v4574 = vpop.f32.mrb[0].mxu0
        %v4575 = vpop.f32.mrb[0].mxu0
        %v4576 = vadd.f32 0.0, %v4575
        %v4577 = vpop.f32.mrb[0].mxu0
        %4578 = vdwg.mxu0
        %v4579 = vld [vmem:[#allocation3 + $0xb] sm:$0xff]
        %v4580 = vld [vmem:[#allocation3 + $0x13] sm:$0xff]
        %v4581 = vld [vmem:[#allocation3 + $0x1b] sm:$0xff]
        %v4582 = vld [vmem:[#allocation3 + $0x23] sm:$0xff]
        %v4583 = vld [vmem:[#allocation3 + $0x2b] sm:$0xff]
        %v4584 = vld [vmem:[#allocation3 + $0x33] sm:$0xff]
        %v4585 = vld [vmem:[#allocation3 + $0x3b] sm:$0xff]
        %v4586 = vld [vmem:[#allocation3 + $0x43] sm:$0xff]
        %v4587 = vld [vmem:[#allocation3 + $0x4b] sm:$0xff]
        %v4588 = vld [vmem:[#allocation3 + $0x53] sm:$0xff]
        %v4589 = vld [vmem:[#allocation3 + $0x5b] sm:$0xff]
        %v4590 = vld [vmem:[#allocation3 + $0x63] sm:$0xff]
        %v4591 = vld [vmem:[#allocation3 + $0x6b] sm:$0xff]
        %v4592 = vld [vmem:[#allocation3 + $0x73] sm:$0xff]
        %v4593 = vld [vmem:[#allocation3 + $0x7b] sm:$0xff]
        %v4594 = vld [vmem:[#allocation3 + $0x83] sm:$0xff]
        %v4595 = vld [vmem:[#allocation3 + $0x8b] sm:$0xff]
        %v4596 = vld [vmem:[#allocation3 + $0x93] sm:$0xff]
        %v4597 = vld [vmem:[#allocation3 + $0x9b] sm:$0xff]
        %v4598 = vld [vmem:[#allocation3 + $0xa3] sm:$0xff]
        %v4599 = vld [vmem:[#allocation3 + $0xab] sm:$0xff]
        %v4600 = vld [vmem:[#allocation3 + $0xb3] sm:$0xff]
        %v4601 = vld [vmem:[#allocation3 + $0xbb] sm:$0xff]
        %v4602 = vld [vmem:[#allocation3 + $0xc3] sm:$0xff]
        %v4603 = vld [vmem:[#allocation3 + $0xcb] sm:$0xff]
        %v4604 = vld [vmem:[#allocation3 + $0xd3] sm:$0xff]
        %v4605 = vld [vmem:[#allocation3 + $0xdb] sm:$0xff]
        %v4606 = vld [vmem:[#allocation3 + $0xe3] sm:$0xff]
        %v4607 = vld [vmem:[#allocation3 + $0xeb] sm:$0xff]
        %v4608 = vld [vmem:[#allocation3 + $0xf3] sm:$0xff]
        %v4609 = vld [vmem:[#allocation3 + $0xfb] sm:$0xff]
        %v4610 = vld [vmem:[#allocation3 + $0x103] sm:$0xff]
        %v4611 = vld [vmem:[#allocation3 + $0x10b] sm:$0xff]
        %v4612 = vld [vmem:[#allocation3 + $0x113] sm:$0xff]
        %v4613 = vld [vmem:[#allocation3 + $0x11b] sm:$0xff]
        %v4614 = vld [vmem:[#allocation3 + $0x123] sm:$0xff]
        %v4615 = vld [vmem:[#allocation3 + $0x12b] sm:$0xff]
        %v4616 = vld [vmem:[#allocation3 + $0x133] sm:$0xff]
        %v4617 = vld [vmem:[#allocation3 + $0x13b] sm:$0xff]
        %v4618 = vld [vmem:[#allocation3 + $0x143] sm:$0xff]
        %v4619 = vld [vmem:[#allocation3 + $0x14b] sm:$0xff]
        %v4620 = vld [vmem:[#allocation3 + $0x153] sm:$0xff]
        %v4621 = vld [vmem:[#allocation3 + $0x15b] sm:$0xff]
        %v4622 = vld [vmem:[#allocation3 + $0x163] sm:$0xff]
        %v4623 = vld [vmem:[#allocation3 + $0x16b] sm:$0xff]
        %v4624 = vld [vmem:[#allocation3 + $0x173] sm:$0xff]
        %v4625 = vld [vmem:[#allocation3 + $0x17b] sm:$0xff]
        %v4626 = vld [vmem:[#allocation3 + $0x183] sm:$0xff]
        %v4627 = vld [vmem:[#allocation3 + $0x18b] sm:$0xff]
        %v4628 = vld [vmem:[#allocation3 + $0x193] sm:$0xff]
        %v4629 = vadd.f32 %v4579, %v4381
        %v4630 = vadd.f32 %v4580, %v4384
        %v4631 = vadd.f32 %v4581, %v4389
        %v4632 = vadd.f32 %v4582, %v4392
        %v4633 = vadd.f32 %v4583, %v4397
        %v4634 = vadd.f32 %v4584, %v4400
        %v4635 = vadd.f32 %v4585, %v4405
        %v4636 = vadd.f32 %v4586, %v4408
        %v4637 = vadd.f32 %v4587, %v4413
        %v4638 = vadd.f32 %v4588, %v4416
        %v4639 = vadd.f32 %v4589, %v4421
        %v4640 = vadd.f32 %v4590, %v4424
        %v4641 = vadd.f32 %v4591, %v4429
        %v4642 = vadd.f32 %v4592, %v4432
        %v4643 = vadd.f32 %v4593, %v4437
        %v4644 = vadd.f32 %v4594, %v4440
        %v4645 = vadd.f32 %v4595, %v4445
        %v4646 = vadd.f32 %v4596, %v4448
        %v4647 = vadd.f32 %v4597, %v4453
        %v4648 = vadd.f32 %v4598, %v4456
        %v4649 = vadd.f32 %v4599, %v4461
        %v4650 = vadd.f32 %v4600, %v4464
        %v4651 = vadd.f32 %v4601, %v4469
        %v4652 = vadd.f32 %v4602, %v4472
        %v4653 = vadd.f32 %v4603, %v4477
        %v4654 = vadd.f32 %v4604, %v4480
        %v4655 = vadd.f32 %v4605, %v4485
        %v4656 = vadd.f32 %v4606, %v4488
        %v4657 = vadd.f32 %v4607, %v4493
        %v4658 = vadd.f32 %v4608, %v4496
        %v4659 = vadd.f32 %v4609, %v4501
        %v4660 = vadd.f32 %v4610, %v4504
        %v4661 = vadd.f32 %v4611, %v4509
        %v4662 = vadd.f32 %v4612, %v4512
        %v4663 = vadd.f32 %v4613, %v4517
        %v4664 = vadd.f32 %v4614, %v4520
        %v4665 = vadd.f32 %v4615, %v4525
        %v4666 = vadd.f32 %v4616, %v4528
        %v4667 = vadd.f32 %v4617, %v4533
        %v4668 = vadd.f32 %v4618, %v4536
        %v4669 = vadd.f32 %v4619, %v4541
        %v4670 = vadd.f32 %v4620, %v4544
        %v4671 = vadd.f32 %v4621, %v4549
        %v4672 = vadd.f32 %v4622, %v4552
        %v4673 = vadd.f32 %v4623, %v4557
        %v4674 = vadd.f32 %v4624, %v4560
        %v4675 = vadd.f32 %v4625, %v4565
        %v4676 = vadd.f32 %v4626, %v4568
        %v4677 = vadd.f32 %v4627, %v4573
        %v4678 = vadd.f32 %v4628, %v4576
        %4679 = vst [vmem:[#allocation3 + $0xb] sm:$0xff] %v4629
        %4680 = vst [vmem:[#allocation3 + $0x13] sm:$0xff] %v4630
        %4681 = vst [vmem:[#allocation3 + $0x1b] sm:$0xff] %v4631
        %4682 = vst [vmem:[#allocation3 + $0x23] sm:$0xff] %v4632
        %4683 = vst [vmem:[#allocation3 + $0x2b] sm:$0xff] %v4633
        %4684 = vst [vmem:[#allocation3 + $0x33] sm:$0xff] %v4634
        %4685 = vst [vmem:[#allocation3 + $0x3b] sm:$0xff] %v4635
        %4686 = vst [vmem:[#allocation3 + $0x43] sm:$0xff] %v4636
        %4687 = vst [vmem:[#allocation3 + $0x4b] sm:$0xff] %v4637
        %4688 = vst [vmem:[#allocation3 + $0x53] sm:$0xff] %v4638
        %4689 = vst [vmem:[#allocation3 + $0x5b] sm:$0xff] %v4639
        %4690 = vst [vmem:[#allocation3 + $0x63] sm:$0xff] %v4640
        %4691 = vst [vmem:[#allocation3 + $0x6b] sm:$0xff] %v4641
        %4692 = vst [vmem:[#allocation3 + $0x73] sm:$0xff] %v4642
        %4693 = vst [vmem:[#allocation3 + $0x7b] sm:$0xff] %v4643
        %4694 = vst [vmem:[#allocation3 + $0x83] sm:$0xff] %v4644
        %4695 = vst [vmem:[#allocation3 + $0x8b] sm:$0xff] %v4645
        %4696 = vst [vmem:[#allocation3 + $0x93] sm:$0xff] %v4646
        %4697 = vst [vmem:[#allocation3 + $0x9b] sm:$0xff] %v4647
        %4698 = vst [vmem:[#allocation3 + $0xa3] sm:$0xff] %v4648
        %4699 = vst [vmem:[#allocation3 + $0xab] sm:$0xff] %v4649
        %4700 = vst [vmem:[#allocation3 + $0xb3] sm:$0xff] %v4650
        %4701 = vst [vmem:[#allocation3 + $0xbb] sm:$0xff] %v4651
        %4702 = vst [vmem:[#allocation3 + $0xc3] sm:$0xff] %v4652
        %4703 = vst [vmem:[#allocation3 + $0xcb] sm:$0xff] %v4653
        %4704 = vst [vmem:[#allocation3 + $0xd3] sm:$0xff] %v4654
        %4705 = vst [vmem:[#allocation3 + $0xdb] sm:$0xff] %v4655
        %4706 = vst [vmem:[#allocation3 + $0xe3] sm:$0xff] %v4656
        %4707 = vst [vmem:[#allocation3 + $0xeb] sm:$0xff] %v4657
        %4708 = vst [vmem:[#allocation3 + $0xf3] sm:$0xff] %v4658
        %4709 = vst [vmem:[#allocation3 + $0xfb] sm:$0xff] %v4659
        %4710 = vst [vmem:[#allocation3 + $0x103] sm:$0xff] %v4660
        %4711 = vst [vmem:[#allocation3 + $0x10b] sm:$0xff] %v4661
        %4712 = vst [vmem:[#allocation3 + $0x113] sm:$0xff] %v4662
        %4713 = vst [vmem:[#allocation3 + $0x11b] sm:$0xff] %v4663
        %4714 = vst [vmem:[#allocation3 + $0x123] sm:$0xff] %v4664
        %4715 = vst [vmem:[#allocation3 + $0x12b] sm:$0xff] %v4665
        %4716 = vst [vmem:[#allocation3 + $0x133] sm:$0xff] %v4666
        %4717 = vst [vmem:[#allocation3 + $0x13b] sm:$0xff] %v4667
        %4718 = vst [vmem:[#allocation3 + $0x143] sm:$0xff] %v4668
        %4719 = vst [vmem:[#allocation3 + $0x14b] sm:$0xff] %v4669
        %4720 = vst [vmem:[#allocation3 + $0x153] sm:$0xff] %v4670
        %4721 = vst [vmem:[#allocation3 + $0x15b] sm:$0xff] %v4671
        %4722 = vst [vmem:[#allocation3 + $0x163] sm:$0xff] %v4672
        %4723 = vst [vmem:[#allocation3 + $0x16b] sm:$0xff] %v4673
        %4724 = vst [vmem:[#allocation3 + $0x173] sm:$0xff] %v4674
        %4725 = vst [vmem:[#allocation3 + $0x17b] sm:$0xff] %v4675
        %4726 = vst [vmem:[#allocation3 + $0x183] sm:$0xff] %v4676
        %4727 = vst [vmem:[#allocation3 + $0x18b] sm:$0xff] %v4677
        %4728 = vst [vmem:[#allocation3 + $0x193] sm:$0xff] %v4678
        %v4729 = vld [vmem:[#allocation3 + $0x20] sm:$0xff]
        %v4730 = vld [vmem:[#allocation3 + $0x28] sm:$0xff]
        %v4731 = vld [vmem:[#allocation3 + $0x30] sm:$0xff]
        %v4732 = vld [vmem:[#allocation3 + $0x38] sm:$0xff]
        %v4733 = vld [vmem:[#allocation3 + $0x40] sm:$0xff]
        %v4734 = vld [vmem:[#allocation3 + $0x48] sm:$0xff]
        %v4735 = vld [vmem:[#allocation3 + $0x50] sm:$0xff]
        %v4736 = vld [vmem:[#allocation3 + $0x58] sm:$0xff]
        %v4737 = vld [vmem:[#allocation3 + $0x60] sm:$0xff]
        %v4738 = vld [vmem:[#allocation3 + $0x68] sm:$0xff]
        %v4739 = vld [vmem:[#allocation3 + $0x70] sm:$0xff]
        %v4740 = vld [vmem:[#allocation3 + $0x78] sm:$0xff]
        %v4741 = vld [vmem:[#allocation3 + $0x80] sm:$0xff]
        %v4742 = vld [vmem:[#allocation3 + $0x88] sm:$0xff]
        %v4743 = vld [vmem:[#allocation3 + $0x90] sm:$0xff]
        %v4744 = vld [vmem:[#allocation3 + $0x98] sm:$0xff]
        %v4745 = vld [vmem:[#allocation3 + $0xa0] sm:$0xff]
        %v4746 = vld [vmem:[#allocation3 + $0xa8] sm:$0xff]
        %v4747 = vld [vmem:[#allocation3 + $0xb0] sm:$0xff]
        %v4748 = vld [vmem:[#allocation3 + $0xb8] sm:$0xff]
        %v4749 = vld [vmem:[#allocation3 + $0xc0] sm:$0xff]
        %v4750 = vld [vmem:[#allocation3 + $0xc8] sm:$0xff]
        %v4751 = vld [vmem:[#allocation3 + $0xd0] sm:$0xff]
        %v4752 = vld [vmem:[#allocation3 + $0xd8] sm:$0xff]
        %v4753 = vld [vmem:[#allocation3 + $0xe0] sm:$0xff]
        %v4754 = vld [vmem:[#allocation3 + $0xe8] sm:$0xff]
        %v4755 = vld [vmem:[#allocation3 + $0xf0] sm:$0xff]
        %v4756 = vld [vmem:[#allocation3 + $0xf8] sm:$0xff]
        %v4757 = vld [vmem:[#allocation3 + $0x100] sm:$0xff]
        %v4758 = vld [vmem:[#allocation3 + $0x108] sm:$0xff]
        %v4759 = vld [vmem:[#allocation3 + $0x110] sm:$0xff]
        %v4760 = vld [vmem:[#allocation3 + $0x118] sm:$0xff]
        %v4761 = vld [vmem:[#allocation3 + $0x120] sm:$0xff]
        %v4762 = vld [vmem:[#allocation3 + $0x128] sm:$0xff]
        %v4763 = vld [vmem:[#allocation3 + $0x130] sm:$0xff]
        %v4764 = vld [vmem:[#allocation3 + $0x138] sm:$0xff]
        %v4765 = vld [vmem:[#allocation3 + $0x140] sm:$0xff]
        %v4766 = vld [vmem:[#allocation3 + $0x148] sm:$0xff]
        %v4767 = vld [vmem:[#allocation3 + $0x150] sm:$0xff]
        %v4768 = vld [vmem:[#allocation3 + $0x158] sm:$0xff]
        %v4769 = vld [vmem:[#allocation3 + $0x160] sm:$0xff]
        %v4770 = vld [vmem:[#allocation3 + $0x168] sm:$0xff]
        %v4771 = vld [vmem:[#allocation3 + $0x170] sm:$0xff]
        %v4772 = vld [vmem:[#allocation3 + $0x178] sm:$0xff]
        %v4773 = vld [vmem:[#allocation3 + $0x180] sm:$0xff]
        %v4774 = vld [vmem:[#allocation3 + $0x188] sm:$0xff]
        %v4775 = vld [vmem:[#allocation3 + $0x190] sm:$0xff]
        %v4776 = vld [vmem:[#allocation3 + $0x198] sm:$0xff]
        %v4777 = vld [vmem:[#allocation3 + $0x1a0] sm:$0xff]
        %v4778 = vld [vmem:[#allocation3 + $0x1a8] sm:$0xff]
        %v4779 = vmax.f32 %v4729, 0.0
        %v4780 = vmax.f32 %v4730, 0.0
        %v4781 = vmax.f32 %v4731, 0.0
        %v4782 = vmax.f32 %v4732, 0.0
        %v4783 = vmax.f32 %v4733, 0.0
        %v4784 = vmax.f32 %v4734, 0.0
        %v4785 = vmax.f32 %v4735, 0.0
        %v4786 = vmax.f32 %v4736, 0.0
        %v4787 = vmax.f32 %v4737, 0.0
        %v4788 = vmax.f32 %v4738, 0.0
        %v4789 = vmax.f32 %v4739, 0.0
        %v4790 = vmax.f32 %v4740, 0.0
        %v4791 = vmax.f32 %v4741, 0.0
        %v4792 = vmax.f32 %v4742, 0.0
        %v4793 = vmax.f32 %v4743, 0.0
        %v4794 = vmax.f32 %v4744, 0.0
        %v4795 = vmax.f32 %v4745, 0.0
        %v4796 = vmax.f32 %v4746, 0.0
        %v4797 = vmax.f32 %v4747, 0.0
        %v4798 = vmax.f32 %v4748, 0.0
        %v4799 = vmax.f32 %v4749, 0.0
        %v4800 = vmax.f32 %v4750, 0.0
        %v4801 = vmax.f32 %v4751, 0.0
        %v4802 = vmax.f32 %v4752, 0.0
        %v4803 = vmax.f32 %v4753, 0.0
        %v4804 = vmax.f32 %v4754, 0.0
        %v4805 = vmax.f32 %v4755, 0.0
        %v4806 = vmax.f32 %v4756, 0.0
        %v4807 = vmax.f32 %v4757, 0.0
        %v4808 = vmax.f32 %v4758, 0.0
        %v4809 = vmax.f32 %v4759, 0.0
        %v4810 = vmax.f32 %v4760, 0.0
        %v4811 = vmax.f32 %v4761, 0.0
        %v4812 = vmax.f32 %v4762, 0.0
        %v4813 = vmax.f32 %v4763, 0.0
        %v4814 = vmax.f32 %v4764, 0.0
        %v4815 = vmax.f32 %v4765, 0.0
        %v4816 = vmax.f32 %v4766, 0.0
        %v4817 = vmax.f32 %v4767, 0.0
        %v4818 = vmax.f32 %v4768, 0.0
        %v4819 = vmax.f32 %v4769, 0.0
        %v4820 = vmax.f32 %v4770, 0.0
        %v4821 = vmax.f32 %v4771, 0.0
        %v4822 = vmax.f32 %v4772, 0.0
        %v4823 = vmax.f32 %v4773, 0.0
        %v4824 = vmax.f32 %v4774, 0.0
        %v4825 = vmax.f32 %v4775, 0.0
        %v4826 = vmax.f32 %v4776, 0.0
        %v4827 = vmax.f32 %v4777, 0.0
        %v4828 = vmax.f32 %v4778, 0.0
        %v4829 = vld [vmem:[%s2] sm:$0x1]
        %v4831 = vlaneseq
        %v4832 = vshrl.u32 %v4831, 7
        %v4833 = vsub.s32 0, %v4832
        %v4834 = vrot.slane %v4829, %v4833
        %v4836 = vmul.f32 %v4779, %v4834
        %v4837 = vmul.f32 %v4780, %v4834
        %v4838 = vmul.f32 %v4781, %v4834
        %v4839 = vmul.f32 %v4782, %v4834
        %v4840 = vmul.f32 %v4783, %v4834
        %v4841 = vmul.f32 %v4784, %v4834
        %v4842 = vmul.f32 %v4785, %v4834
        %v4843 = vmul.f32 %v4786, %v4834
        %v4844 = vmul.f32 %v4787, %v4834
        %v4845 = vmul.f32 %v4788, %v4834
        %v4846 = vmul.f32 %v4789, %v4834
        %v4847 = vmul.f32 %v4790, %v4834
        %v4848 = vmul.f32 %v4791, %v4834
        %v4849 = vmul.f32 %v4792, %v4834
        %v4850 = vmul.f32 %v4793, %v4834
        %v4851 = vmul.f32 %v4794, %v4834
        %v4852 = vmul.f32 %v4795, %v4834
        %v4853 = vmul.f32 %v4796, %v4834
        %v4854 = vmul.f32 %v4797, %v4834
        %v4855 = vmul.f32 %v4798, %v4834
        %v4856 = vmul.f32 %v4799, %v4834
        %v4857 = vmul.f32 %v4800, %v4834
        %v4858 = vmul.f32 %v4801, %v4834
        %v4859 = vmul.f32 %v4802, %v4834
        %v4860 = vmul.f32 %v4803, %v4834
        %v4861 = vmul.f32 %v4804, %v4834
        %v4862 = vmul.f32 %v4805, %v4834
        %v4863 = vmul.f32 %v4806, %v4834
        %v4864 = vmul.f32 %v4807, %v4834
        %v4865 = vmul.f32 %v4808, %v4834
        %v4866 = vmul.f32 %v4809, %v4834
        %v4867 = vmul.f32 %v4810, %v4834
        %v4868 = vmul.f32 %v4811, %v4834
        %v4869 = vmul.f32 %v4812, %v4834
        %v4870 = vmul.f32 %v4813, %v4834
        %v4871 = vmul.f32 %v4814, %v4834
        %v4872 = vmul.f32 %v4815, %v4834
        %v4873 = vmul.f32 %v4816, %v4834
        %v4874 = vmul.f32 %v4817, %v4834
        %v4875 = vmul.f32 %v4818, %v4834
        %v4876 = vmul.f32 %v4819, %v4834
        %v4877 = vmul.f32 %v4820, %v4834
        %v4878 = vmul.f32 %v4821, %v4834
        %v4879 = vmul.f32 %v4822, %v4834
        %v4880 = vmul.f32 %v4823, %v4834
        %v4881 = vmul.f32 %v4824, %v4834
        %v4882 = vmul.f32 %v4825, %v4834
        %v4883 = vmul.f32 %v4826, %v4834
        %v4884 = vmul.f32 %v4827, %v4834
        %v4885 = vmul.f32 %v4828, %v4834
        %v4886 = vld [vmem:[%s3] sm:$0x1]
        %v4888 = vlaneseq
        %v4889 = vshrl.u32 %v4888, 7
        %v4890 = vsub.s32 0, %v4889
        %v4891 = vrot.slane %v4886, %v4890
        %v4893 = vadd.f32 %v4836, %v4891
        %v4894 = vadd.f32 %v4837, %v4891
        %v4895 = vadd.f32 %v4838, %v4891
        %v4896 = vadd.f32 %v4839, %v4891
        %v4897 = vadd.f32 %v4840, %v4891
        %v4898 = vadd.f32 %v4841, %v4891
        %v4899 = vadd.f32 %v4842, %v4891
        %v4900 = vadd.f32 %v4843, %v4891
        %v4901 = vadd.f32 %v4844, %v4891
        %v4902 = vadd.f32 %v4845, %v4891
        %v4903 = vadd.f32 %v4846, %v4891
        %v4904 = vadd.f32 %v4847, %v4891
        %v4905 = vadd.f32 %v4848, %v4891
        %v4906 = vadd.f32 %v4849, %v4891
        %v4907 = vadd.f32 %v4850, %v4891
        %v4908 = vadd.f32 %v4851, %v4891
        %v4909 = vadd.f32 %v4852, %v4891
        %v4910 = vadd.f32 %v4853, %v4891
        %v4911 = vadd.f32 %v4854, %v4891
        %v4912 = vadd.f32 %v4855, %v4891
        %v4913 = vadd.f32 %v4856, %v4891
        %v4914 = vadd.f32 %v4857, %v4891
        %v4915 = vadd.f32 %v4858, %v4891
        %v4916 = vadd.f32 %v4859, %v4891
        %v4917 = vadd.f32 %v4860, %v4891
        %v4918 = vadd.f32 %v4861, %v4891
        %v4919 = vadd.f32 %v4862, %v4891
        %v4920 = vadd.f32 %v4863, %v4891
        %v4921 = vadd.f32 %v4864, %v4891
        %v4922 = vadd.f32 %v4865, %v4891
        %v4923 = vadd.f32 %v4866, %v4891
        %v4924 = vadd.f32 %v4867, %v4891
        %v4925 = vadd.f32 %v4868, %v4891
        %v4926 = vadd.f32 %v4869, %v4891
        %v4927 = vadd.f32 %v4870, %v4891
        %v4928 = vadd.f32 %v4871, %v4891
        %v4929 = vadd.f32 %v4872, %v4891
        %v4930 = vadd.f32 %v4873, %v4891
        %v4931 = vadd.f32 %v4874, %v4891
        %v4932 = vadd.f32 %v4875, %v4891
        %v4933 = vadd.f32 %v4876, %v4891
        %v4934 = vadd.f32 %v4877, %v4891
        %v4935 = vadd.f32 %v4878, %v4891
        %v4936 = vadd.f32 %v4879, %v4891
        %v4937 = vadd.f32 %v4880, %v4891
        %v4938 = vadd.f32 %v4881, %v4891
        %v4939 = vadd.f32 %v4882, %v4891
        %v4940 = vadd.f32 %v4883, %v4891
        %v4941 = vadd.f32 %v4884, %v4891
        %v4942 = vadd.f32 %v4885, %v4891
        %4943 = vst [vmem:[#allocation3 + $0x20] sm:$0xff] %v4893
        %4944 = vst [vmem:[#allocation3 + $0x28] sm:$0xff] %v4894
        %4945 = vst [vmem:[#allocation3 + $0x30] sm:$0xff] %v4895
        %4946 = vst [vmem:[#allocation3 + $0x38] sm:$0xff] %v4896
        %4947 = vst [vmem:[#allocation3 + $0x40] sm:$0xff] %v4897
        %4948 = vst [vmem:[#allocation3 + $0x48] sm:$0xff] %v4898
        %4949 = vst [vmem:[#allocation3 + $0x50] sm:$0xff] %v4899
        %4950 = vst [vmem:[#allocation3 + $0x58] sm:$0xff] %v4900
        %4951 = vst [vmem:[#allocation3 + $0x60] sm:$0xff] %v4901
        %4952 = vst [vmem:[#allocation3 + $0x68] sm:$0xff] %v4902
        %4953 = vst [vmem:[#allocation3 + $0x70] sm:$0xff] %v4903
        %4954 = vst [vmem:[#allocation3 + $0x78] sm:$0xff] %v4904
        %4955 = vst [vmem:[#allocation3 + $0x80] sm:$0xff] %v4905
        %4956 = vst [vmem:[#allocation3 + $0x88] sm:$0xff] %v4906
        %4957 = vst [vmem:[#allocation3 + $0x90] sm:$0xff] %v4907
        %4958 = vst [vmem:[#allocation3 + $0x98] sm:$0xff] %v4908
        %4959 = vst [vmem:[#allocation3 + $0xa0] sm:$0xff] %v4909
        %4960 = vst [vmem:[#allocation3 + $0xa8] sm:$0xff] %v4910
        %4961 = vst [vmem:[#allocation3 + $0xb0] sm:$0xff] %v4911
        %4962 = vst [vmem:[#allocation3 + $0xb8] sm:$0xff] %v4912
        %4963 = vst [vmem:[#allocation3 + $0xc0] sm:$0xff] %v4913
        %4964 = vst [vmem:[#allocation3 + $0xc8] sm:$0xff] %v4914
        %4965 = vst [vmem:[#allocation3 + $0xd0] sm:$0xff] %v4915
        %4966 = vst [vmem:[#allocation3 + $0xd8] sm:$0xff] %v4916
        %4967 = vst [vmem:[#allocation3 + $0xe0] sm:$0xff] %v4917
        %4968 = vst [vmem:[#allocation3 + $0xe8] sm:$0xff] %v4918
        %4969 = vst [vmem:[#allocation3 + $0xf0] sm:$0xff] %v4919
        %4970 = vst [vmem:[#allocation3 + $0xf8] sm:$0xff] %v4920
        %4971 = vst [vmem:[#allocation3 + $0x100] sm:$0xff] %v4921
        %4972 = vst [vmem:[#allocation3 + $0x108] sm:$0xff] %v4922
        %4973 = vst [vmem:[#allocation3 + $0x110] sm:$0xff] %v4923
        %4974 = vst [vmem:[#allocation3 + $0x118] sm:$0xff] %v4924
        %4975 = vst [vmem:[#allocation3 + $0x120] sm:$0xff] %v4925
        %4976 = vst [vmem:[#allocation3 + $0x128] sm:$0xff] %v4926
        %4977 = vst [vmem:[#allocation3 + $0x130] sm:$0xff] %v4927
        %4978 = vst [vmem:[#allocation3 + $0x138] sm:$0xff] %v4928
        %4979 = vst [vmem:[#allocation3 + $0x140] sm:$0xff] %v4929
        %4980 = vst [vmem:[#allocation3 + $0x148] sm:$0xff] %v4930
        %4981 = vst [vmem:[#allocation3 + $0x150] sm:$0xff] %v4931
        %4982 = vst [vmem:[#allocation3 + $0x158] sm:$0xff] %v4932
        %4983 = vst [vmem:[#allocation3 + $0x160] sm:$0xff] %v4933
        %4984 = vst [vmem:[#allocation3 + $0x168] sm:$0xff] %v4934
        %4985 = vst [vmem:[#allocation3 + $0x170] sm:$0xff] %v4935
        %4986 = vst [vmem:[#allocation3 + $0x178] sm:$0xff] %v4936
        %4987 = vst [vmem:[#allocation3 + $0x180] sm:$0xff] %v4937
        %4988 = vst [vmem:[#allocation3 + $0x188] sm:$0xff] %v4938
        %4989 = vst [vmem:[#allocation3 + $0x190] sm:$0xff] %v4939
        %4990 = vst [vmem:[#allocation3 + $0x198] sm:$0xff] %v4940
        %4991 = vst [vmem:[#allocation3 + $0x1a0] sm:$0xff] %v4941
        %4992 = vst [vmem:[#allocation3 + $0x1a8] sm:$0xff] %v4942
        %v4993 = vld [vmem:[#allocation3 + $0x20] sm:$0xff]
        %v4994 = vld [vmem:[#allocation3 + $0x28] sm:$0xff]
        %v4995 = vld [vmem:[#allocation3 + $0x30] sm:$0xff]
        %v4996 = vld [vmem:[#allocation3 + $0x38] sm:$0xff]
        %v4997 = vld [vmem:[#allocation3 + $0x40] sm:$0xff]
        %v4998 = vld [vmem:[#allocation3 + $0x48] sm:$0xff]
        %v4999 = vld [vmem:[#allocation3 + $0x50] sm:$0xff]
        %v5000 = vld [vmem:[#allocation3 + $0x58] sm:$0xff]
        %v5001 = vld [vmem:[#allocation3 + $0x60] sm:$0xff]
        %v5002 = vld [vmem:[#allocation3 + $0x68] sm:$0xff]
        %v5003 = vld [vmem:[#allocation3 + $0x70] sm:$0xff]
        %v5004 = vld [vmem:[#allocation3 + $0x78] sm:$0xff]
        %v5005 = vld [vmem:[#allocation3 + $0x80] sm:$0xff]
        %v5006 = vld [vmem:[#allocation3 + $0x88] sm:$0xff]
        %v5007 = vld [vmem:[#allocation3 + $0x90] sm:$0xff]
        %v5008 = vld [vmem:[#allocation3 + $0x98] sm:$0xff]
        %v5009 = vld [vmem:[#allocation3 + $0xa0] sm:$0xff]
        %v5010 = vld [vmem:[#allocation3 + $0xa8] sm:$0xff]
        %v5011 = vld [vmem:[#allocation3 + $0xb0] sm:$0xff]
        %v5012 = vld [vmem:[#allocation3 + $0xb8] sm:$0xff]
        %v5013 = vld [vmem:[#allocation3 + $0xc0] sm:$0xff]
        %v5014 = vld [vmem:[#allocation3 + $0xc8] sm:$0xff]
        %v5015 = vld [vmem:[#allocation3 + $0xd0] sm:$0xff]
        %v5016 = vld [vmem:[#allocation3 + $0xd8] sm:$0xff]
        %v5017 = vld [vmem:[#allocation3 + $0xe0] sm:$0xff]
        %v5018 = vld [vmem:[#allocation3 + $0xe8] sm:$0xff]
        %v5019 = vld [vmem:[#allocation3 + $0xf0] sm:$0xff]
        %v5020 = vld [vmem:[#allocation3 + $0xf8] sm:$0xff]
        %v5021 = vld [vmem:[#allocation3 + $0x100] sm:$0xff]
        %v5022 = vld [vmem:[#allocation3 + $0x108] sm:$0xff]
        %v5023 = vld [vmem:[#allocation3 + $0x110] sm:$0xff]
        %v5024 = vld [vmem:[#allocation3 + $0x118] sm:$0xff]
        %v5025 = vld [vmem:[#allocation3 + $0x120] sm:$0xff]
        %v5026 = vld [vmem:[#allocation3 + $0x128] sm:$0xff]
        %v5027 = vld [vmem:[#allocation3 + $0x130] sm:$0xff]
        %v5028 = vld [vmem:[#allocation3 + $0x138] sm:$0xff]
        %v5029 = vld [vmem:[#allocation3 + $0x140] sm:$0xff]
        %v5030 = vld [vmem:[#allocation3 + $0x148] sm:$0xff]
        %v5031 = vld [vmem:[#allocation3 + $0x150] sm:$0xff]
        %v5032 = vld [vmem:[#allocation3 + $0x158] sm:$0xff]
        %v5033 = vld [vmem:[#allocation3 + $0x160] sm:$0xff]
        %v5034 = vld [vmem:[#allocation3 + $0x168] sm:$0xff]
        %v5035 = vld [vmem:[#allocation3 + $0x170] sm:$0xff]
        %v5036 = vld [vmem:[#allocation3 + $0x178] sm:$0xff]
        %v5037 = vld [vmem:[#allocation3 + $0x180] sm:$0xff]
        %v5038 = vld [vmem:[#allocation3 + $0x188] sm:$0xff]
        %v5039 = vld [vmem:[#allocation3 + $0x190] sm:$0xff]
        %v5040 = vld [vmem:[#allocation3 + $0x198] sm:$0xff]
        %v5041 = vld [vmem:[#allocation3 + $0x1a0] sm:$0xff]
        %v5042 = vld [vmem:[#allocation3 + $0x1a8] sm:$0xff]
        %v5043 = vld [vmem:[#allocation3 + $0x21] sm:$0xff]
        %v5044 = vld [vmem:[#allocation3 + $0x29] sm:$0xff]
        %v5045 = vld [vmem:[#allocation3 + $0x31] sm:$0xff]
        %v5046 = vld [vmem:[#allocation3 + $0x39] sm:$0xff]
        %v5047 = vld [vmem:[#allocation3 + $0x41] sm:$0xff]
        %v5048 = vld [vmem:[#allocation3 + $0x49] sm:$0xff]
        %v5049 = vld [vmem:[#allocation3 + $0x51] sm:$0xff]
        %v5050 = vld [vmem:[#allocation3 + $0x59] sm:$0xff]
        %v5051 = vld [vmem:[#allocation3 + $0x61] sm:$0xff]
        %v5052 = vld [vmem:[#allocation3 + $0x69] sm:$0xff]
        %v5053 = vld [vmem:[#allocation3 + $0x71] sm:$0xff]
        %v5054 = vld [vmem:[#allocation3 + $0x79] sm:$0xff]
        %v5055 = vld [vmem:[#allocation3 + $0x81] sm:$0xff]
        %v5056 = vld [vmem:[#allocation3 + $0x89] sm:$0xff]
        %v5057 = vld [vmem:[#allocation3 + $0x91] sm:$0xff]
        %v5058 = vld [vmem:[#allocation3 + $0x99] sm:$0xff]
        %v5059 = vld [vmem:[#allocation3 + $0xa1] sm:$0xff]
        %v5060 = vld [vmem:[#allocation3 + $0xa9] sm:$0xff]
        %v5061 = vld [vmem:[#allocation3 + $0xb1] sm:$0xff]
        %v5062 = vld [vmem:[#allocation3 + $0xb9] sm:$0xff]
        %v5063 = vld [vmem:[#allocation3 + $0xc1] sm:$0xff]
        %v5064 = vld [vmem:[#allocation3 + $0xc9] sm:$0xff]
        %v5065 = vld [vmem:[#allocation3 + $0xd1] sm:$0xff]
        %v5066 = vld [vmem:[#allocation3 + $0xd9] sm:$0xff]
        %v5067 = vld [vmem:[#allocation3 + $0xe1] sm:$0xff]
        %v5068 = vld [vmem:[#allocation3 + $0xe9] sm:$0xff]
        %v5069 = vld [vmem:[#allocation3 + $0xf1] sm:$0xff]
        %v5070 = vld [vmem:[#allocation3 + $0xf9] sm:$0xff]
        %v5071 = vld [vmem:[#allocation3 + $0x101] sm:$0xff]
        %v5072 = vld [vmem:[#allocation3 + $0x109] sm:$0xff]
        %v5073 = vld [vmem:[#allocation3 + $0x111] sm:$0xff]
        %v5074 = vld [vmem:[#allocation3 + $0x119] sm:$0xff]
        %v5075 = vld [vmem:[#allocation3 + $0x121] sm:$0xff]
        %v5076 = vld [vmem:[#allocation3 + $0x129] sm:$0xff]
        %v5077 = vld [vmem:[#allocation3 + $0x131] sm:$0xff]
        %v5078 = vld [vmem:[#allocation3 + $0x139] sm:$0xff]
        %v5079 = vld [vmem:[#allocation3 + $0x141] sm:$0xff]
        %v5080 = vld [vmem:[#allocation3 + $0x149] sm:$0xff]
        %v5081 = vld [vmem:[#allocation3 + $0x151] sm:$0xff]
        %v5082 = vld [vmem:[#allocation3 + $0x159] sm:$0xff]
        %v5083 = vld [vmem:[#allocation3 + $0x161] sm:$0xff]
        %v5084 = vld [vmem:[#allocation3 + $0x169] sm:$0xff]
        %v5085 = vld [vmem:[#allocation3 + $0x171] sm:$0xff]
        %v5086 = vld [vmem:[#allocation3 + $0x179] sm:$0xff]
        %v5087 = vld [vmem:[#allocation3 + $0x181] sm:$0xff]
        %v5088 = vld [vmem:[#allocation3 + $0x189] sm:$0xff]
        %v5089 = vld [vmem:[#allocation3 + $0x191] sm:$0xff]
        %v5090 = vld [vmem:[#allocation3 + $0x199] sm:$0xff]
        %v5091 = vld [vmem:[#allocation3 + $0x1a1] sm:$0xff]
        %v5092 = vld [vmem:[#allocation3 + $0x1a9] sm:$0xff]
        %v5093 = vmax.f32 %v4993, %v5043
        %v5094 = vmax.f32 %v4994, %v5044
        %v5095 = vmax.f32 %v4995, %v5045
        %v5096 = vmax.f32 %v4996, %v5046
        %v5097 = vmax.f32 %v4997, %v5047
        %v5098 = vmax.f32 %v4998, %v5048
        %v5099 = vmax.f32 %v4999, %v5049
        %v5100 = vmax.f32 %v5000, %v5050
        %v5101 = vmax.f32 %v5001, %v5051
        %v5102 = vmax.f32 %v5002, %v5052
        %v5103 = vmax.f32 %v5003, %v5053
        %v5104 = vmax.f32 %v5004, %v5054
        %v5105 = vmax.f32 %v5005, %v5055
        %v5106 = vmax.f32 %v5006, %v5056
        %v5107 = vmax.f32 %v5007, %v5057
        %v5108 = vmax.f32 %v5008, %v5058
        %v5109 = vmax.f32 %v5009, %v5059
        %v5110 = vmax.f32 %v5010, %v5060
        %v5111 = vmax.f32 %v5011, %v5061
        %v5112 = vmax.f32 %v5012, %v5062
        %v5113 = vmax.f32 %v5013, %v5063
        %v5114 = vmax.f32 %v5014, %v5064
        %v5115 = vmax.f32 %v5015, %v5065
        %v5116 = vmax.f32 %v5016, %v5066
        %v5117 = vmax.f32 %v5017, %v5067
        %v5118 = vmax.f32 %v5018, %v5068
        %v5119 = vmax.f32 %v5019, %v5069
        %v5120 = vmax.f32 %v5020, %v5070
        %v5121 = vmax.f32 %v5021, %v5071
        %v5122 = vmax.f32 %v5022, %v5072
        %v5123 = vmax.f32 %v5023, %v5073
        %v5124 = vmax.f32 %v5024, %v5074
        %v5125 = vmax.f32 %v5025, %v5075
        %v5126 = vmax.f32 %v5026, %v5076
        %v5127 = vmax.f32 %v5027, %v5077
        %v5128 = vmax.f32 %v5028, %v5078
        %v5129 = vmax.f32 %v5029, %v5079
        %v5130 = vmax.f32 %v5030, %v5080
        %v5131 = vmax.f32 %v5031, %v5081
        %v5132 = vmax.f32 %v5032, %v5082
        %v5133 = vmax.f32 %v5033, %v5083
        %v5134 = vmax.f32 %v5034, %v5084
        %v5135 = vmax.f32 %v5035, %v5085
        %v5136 = vmax.f32 %v5036, %v5086
        %v5137 = vmax.f32 %v5037, %v5087
        %v5138 = vmax.f32 %v5038, %v5088
        %v5139 = vmax.f32 %v5039, %v5089
        %v5140 = vmax.f32 %v5040, %v5090
        %v5141 = vmax.f32 %v5041, %v5091
        %v5142 = vmax.f32 %v5042, %v5092
        %v5143 = vld [vmem:[#allocation3 + $0x34] sm:$0xff]
        %v5144 = vld [vmem:[#allocation3 + $0x3c] sm:$0xff]
        %v5145 = vld [vmem:[#allocation3 + $0x44] sm:$0xff]
        %v5146 = vld [vmem:[#allocation3 + $0x4c] sm:$0xff]
        %v5147 = vld [vmem:[#allocation3 + $0x54] sm:$0xff]
        %v5148 = vld [vmem:[#allocation3 + $0x5c] sm:$0xff]
        %v5149 = vld [vmem:[#allocation3 + $0x64] sm:$0xff]
        %v5150 = vld [vmem:[#allocation3 + $0x6c] sm:$0xff]
        %v5151 = vld [vmem:[#allocation3 + $0x74] sm:$0xff]
        %v5152 = vld [vmem:[#allocation3 + $0x7c] sm:$0xff]
        %v5153 = vld [vmem:[#allocation3 + $0x84] sm:$0xff]
        %v5154 = vld [vmem:[#allocation3 + $0x8c] sm:$0xff]
        %v5155 = vld [vmem:[#allocation3 + $0x94] sm:$0xff]
        %v5156 = vld [vmem:[#allocation3 + $0x9c] sm:$0xff]
        %v5157 = vld [vmem:[#allocation3 + $0xa4] sm:$0xff]
        %v5158 = vld [vmem:[#allocation3 + $0xac] sm:$0xff]
        %v5159 = vld [vmem:[#allocation3 + $0xb4] sm:$0xff]
        %v5160 = vld [vmem:[#allocation3 + $0xbc] sm:$0xff]
        %v5161 = vld [vmem:[#allocation3 + $0xc4] sm:$0xff]
        %v5162 = vld [vmem:[#allocation3 + $0xcc] sm:$0xff]
        %v5163 = vld [vmem:[#allocation3 + $0xd4] sm:$0xff]
        %v5164 = vld [vmem:[#allocation3 + $0xdc] sm:$0xff]
        %v5165 = vld [vmem:[#allocation3 + $0xe4] sm:$0xff]
        %v5166 = vld [vmem:[#allocation3 + $0xec] sm:$0xff]
        %v5167 = vld [vmem:[#allocation3 + $0xf4] sm:$0xff]
        %v5168 = vld [vmem:[#allocation3 + $0xfc] sm:$0xff]
        %v5169 = vld [vmem:[#allocation3 + $0x104] sm:$0xff]
        %v5170 = vld [vmem:[#allocation3 + $0x10c] sm:$0xff]
        %v5171 = vld [vmem:[#allocation3 + $0x114] sm:$0xff]
        %v5172 = vld [vmem:[#allocation3 + $0x11c] sm:$0xff]
        %v5173 = vld [vmem:[#allocation3 + $0x124] sm:$0xff]
        %v5174 = vld [vmem:[#allocation3 + $0x12c] sm:$0xff]
        %v5175 = vld [vmem:[#allocation3 + $0x134] sm:$0xff]
        %v5176 = vld [vmem:[#allocation3 + $0x13c] sm:$0xff]
        %v5177 = vld [vmem:[#allocation3 + $0x144] sm:$0xff]
        %v5178 = vld [vmem:[#allocation3 + $0x14c] sm:$0xff]
        %v5179 = vld [vmem:[#allocation3 + $0x154] sm:$0xff]
        %v5180 = vld [vmem:[#allocation3 + $0x15c] sm:$0xff]
        %v5181 = vld [vmem:[#allocation3 + $0x164] sm:$0xff]
        %v5182 = vld [vmem:[#allocation3 + $0x16c] sm:$0xff]
        %v5183 = vld [vmem:[#allocation3 + $0x174] sm:$0xff]
        %v5184 = vld [vmem:[#allocation3 + $0x17c] sm:$0xff]
        %v5185 = vld [vmem:[#allocation3 + $0x184] sm:$0xff]
        %v5186 = vld [vmem:[#allocation3 + $0x18c] sm:$0xff]
        %v5187 = vld [vmem:[#allocation3 + $0x194] sm:$0xff]
        %v5188 = vld [vmem:[#allocation3 + $0x19c] sm:$0xff]
        %v5189 = vld [vmem:[#allocation3 + $0x1a4] sm:$0xff]
        %v5190 = vld [vmem:[#allocation3 + $0x1ac] sm:$0xff]
        %v5191 = vld [vmem:[#allocation3 + $0x1b4] sm:$0xff]
        %v5192 = vld [vmem:[#allocation3 + $0x1bc] sm:$0xff]
        %v5193 = vmax.f32 %v5093, %v5143
        %v5194 = vmax.f32 %v5094, %v5144
        %v5195 = vmax.f32 %v5095, %v5145
        %v5196 = vmax.f32 %v5096, %v5146
        %v5197 = vmax.f32 %v5097, %v5147
        %v5198 = vmax.f32 %v5098, %v5148
        %v5199 = vmax.f32 %v5099, %v5149
        %v5200 = vmax.f32 %v5100, %v5150
        %v5201 = vmax.f32 %v5101, %v5151
        %v5202 = vmax.f32 %v5102, %v5152
        %v5203 = vmax.f32 %v5103, %v5153
        %v5204 = vmax.f32 %v5104, %v5154
        %v5205 = vmax.f32 %v5105, %v5155
        %v5206 = vmax.f32 %v5106, %v5156
        %v5207 = vmax.f32 %v5107, %v5157
        %v5208 = vmax.f32 %v5108, %v5158
        %v5209 = vmax.f32 %v5109, %v5159
        %v5210 = vmax.f32 %v5110, %v5160
        %v5211 = vmax.f32 %v5111, %v5161
        %v5212 = vmax.f32 %v5112, %v5162
        %v5213 = vmax.f32 %v5113, %v5163
        %v5214 = vmax.f32 %v5114, %v5164
        %v5215 = vmax.f32 %v5115, %v5165
        %v5216 = vmax.f32 %v5116, %v5166
        %v5217 = vmax.f32 %v5117, %v5167
        %v5218 = vmax.f32 %v5118, %v5168
        %v5219 = vmax.f32 %v5119, %v5169
        %v5220 = vmax.f32 %v5120, %v5170
        %v5221 = vmax.f32 %v5121, %v5171
        %v5222 = vmax.f32 %v5122, %v5172
        %v5223 = vmax.f32 %v5123, %v5173
        %v5224 = vmax.f32 %v5124, %v5174
        %v5225 = vmax.f32 %v5125, %v5175
        %v5226 = vmax.f32 %v5126, %v5176
        %v5227 = vmax.f32 %v5127, %v5177
        %v5228 = vmax.f32 %v5128, %v5178
        %v5229 = vmax.f32 %v5129, %v5179
        %v5230 = vmax.f32 %v5130, %v5180
        %v5231 = vmax.f32 %v5131, %v5181
        %v5232 = vmax.f32 %v5132, %v5182
        %v5233 = vmax.f32 %v5133, %v5183
        %v5234 = vmax.f32 %v5134, %v5184
        %v5235 = vmax.f32 %v5135, %v5185
        %v5236 = vmax.f32 %v5136, %v5186
        %v5237 = vmax.f32 %v5137, %v5187
        %v5238 = vmax.f32 %v5138, %v5188
        %v5239 = vmax.f32 %v5139, %v5189
        %v5240 = vmax.f32 %v5140, %v5190
        %v5241 = vmax.f32 %v5141, %v5191
        %v5242 = vmax.f32 %v5142, %v5192
        %v5243 = vld [vmem:[#allocation3 + $0x35] sm:$0xff]
        %v5244 = vld [vmem:[#allocation3 + $0x3d] sm:$0xff]
        %v5245 = vld [vmem:[#allocation3 + $0x45] sm:$0xff]
        %v5246 = vld [vmem:[#allocation3 + $0x4d] sm:$0xff]
        %v5247 = vld [vmem:[#allocation3 + $0x55] sm:$0xff]
        %v5248 = vld [vmem:[#allocation3 + $0x5d] sm:$0xff]
        %v5249 = vld [vmem:[#allocation3 + $0x65] sm:$0xff]
        %v5250 = vld [vmem:[#allocation3 + $0x6d] sm:$0xff]
        %v5251 = vld [vmem:[#allocation3 + $0x75] sm:$0xff]
        %v5252 = vld [vmem:[#allocation3 + $0x7d] sm:$0xff]
        %v5253 = vld [vmem:[#allocation3 + $0x85] sm:$0xff]
        %v5254 = vld [vmem:[#allocation3 + $0x8d] sm:$0xff]
        %v5255 = vld [vmem:[#allocation3 + $0x95] sm:$0xff]
        %v5256 = vld [vmem:[#allocation3 + $0x9d] sm:$0xff]
        %v5257 = vld [vmem:[#allocation3 + $0xa5] sm:$0xff]
        %v5258 = vld [vmem:[#allocation3 + $0xad] sm:$0xff]
        %v5259 = vld [vmem:[#allocation3 + $0xb5] sm:$0xff]
        %v5260 = vld [vmem:[#allocation3 + $0xbd] sm:$0xff]
        %v5261 = vld [vmem:[#allocation3 + $0xc5] sm:$0xff]
        %v5262 = vld [vmem:[#allocation3 + $0xcd] sm:$0xff]
        %v5263 = vld [vmem:[#allocation3 + $0xd5] sm:$0xff]
        %v5264 = vld [vmem:[#allocation3 + $0xdd] sm:$0xff]
        %v5265 = vld [vmem:[#allocation3 + $0xe5] sm:$0xff]
        %v5266 = vld [vmem:[#allocation3 + $0xed] sm:$0xff]
        %v5267 = vld [vmem:[#allocation3 + $0xf5] sm:$0xff]
        %v5268 = vld [vmem:[#allocation3 + $0xfd] sm:$0xff]
        %v5269 = vld [vmem:[#allocation3 + $0x105] sm:$0xff]
        %v5270 = vld [vmem:[#allocation3 + $0x10d] sm:$0xff]
        %v5271 = vld [vmem:[#allocation3 + $0x115] sm:$0xff]
        %v5272 = vld [vmem:[#allocation3 + $0x11d] sm:$0xff]
        %v5273 = vld [vmem:[#allocation3 + $0x125] sm:$0xff]
        %v5274 = vld [vmem:[#allocation3 + $0x12d] sm:$0xff]
        %v5275 = vld [vmem:[#allocation3 + $0x135] sm:$0xff]
        %v5276 = vld [vmem:[#allocation3 + $0x13d] sm:$0xff]
        %v5277 = vld [vmem:[#allocation3 + $0x145] sm:$0xff]
        %v5278 = vld [vmem:[#allocation3 + $0x14d] sm:$0xff]
        %v5279 = vld [vmem:[#allocation3 + $0x155] sm:$0xff]
        %v5280 = vld [vmem:[#allocation3 + $0x15d] sm:$0xff]
        %v5281 = vld [vmem:[#allocation3 + $0x165] sm:$0xff]
        %v5282 = vld [vmem:[#allocation3 + $0x16d] sm:$0xff]
        %v5283 = vld [vmem:[#allocation3 + $0x175] sm:$0xff]
        %v5284 = vld [vmem:[#allocation3 + $0x17d] sm:$0xff]
        %v5285 = vld [vmem:[#allocation3 + $0x185] sm:$0xff]
        %v5286 = vld [vmem:[#allocation3 + $0x18d] sm:$0xff]
        %v5287 = vld [vmem:[#allocation3 + $0x195] sm:$0xff]
        %v5288 = vld [vmem:[#allocation3 + $0x19d] sm:$0xff]
        %v5289 = vld [vmem:[#allocation3 + $0x1a5] sm:$0xff]
        %v5290 = vld [vmem:[#allocation3 + $0x1ad] sm:$0xff]
        %v5291 = vld [vmem:[#allocation3 + $0x1b5] sm:$0xff]
        %v5292 = vld [vmem:[#allocation3 + $0x1bd] sm:$0xff]
        %v5293 = vmax.f32 %v5193, %v5243
        %v5294 = vmax.f32 %v5194, %v5244
        %v5295 = vmax.f32 %v5195, %v5245
        %v5296 = vmax.f32 %v5196, %v5246
        %v5297 = vmax.f32 %v5197, %v5247
        %v5298 = vmax.f32 %v5198, %v5248
        %v5299 = vmax.f32 %v5199, %v5249
        %v5300 = vmax.f32 %v5200, %v5250
        %v5301 = vmax.f32 %v5201, %v5251
        %v5302 = vmax.f32 %v5202, %v5252
        %v5303 = vmax.f32 %v5203, %v5253
        %v5304 = vmax.f32 %v5204, %v5254
        %v5305 = vmax.f32 %v5205, %v5255
        %v5306 = vmax.f32 %v5206, %v5256
        %v5307 = vmax.f32 %v5207, %v5257
        %v5308 = vmax.f32 %v5208, %v5258
        %v5309 = vmax.f32 %v5209, %v5259
        %v5310 = vmax.f32 %v5210, %v5260
        %v5311 = vmax.f32 %v5211, %v5261
        %v5312 = vmax.f32 %v5212, %v5262
        %v5313 = vmax.f32 %v5213, %v5263
        %v5314 = vmax.f32 %v5214, %v5264
        %v5315 = vmax.f32 %v5215, %v5265
        %v5316 = vmax.f32 %v5216, %v5266
        %v5317 = vmax.f32 %v5217, %v5267
        %v5318 = vmax.f32 %v5218, %v5268
        %v5319 = vmax.f32 %v5219, %v5269
        %v5320 = vmax.f32 %v5220, %v5270
        %v5321 = vmax.f32 %v5221, %v5271
        %v5322 = vmax.f32 %v5222, %v5272
        %v5323 = vmax.f32 %v5223, %v5273
        %v5324 = vmax.f32 %v5224, %v5274
        %v5325 = vmax.f32 %v5225, %v5275
        %v5326 = vmax.f32 %v5226, %v5276
        %v5327 = vmax.f32 %v5227, %v5277
        %v5328 = vmax.f32 %v5228, %v5278
        %v5329 = vmax.f32 %v5229, %v5279
        %v5330 = vmax.f32 %v5230, %v5280
        %v5331 = vmax.f32 %v5231, %v5281
        %v5332 = vmax.f32 %v5232, %v5282
        %v5333 = vmax.f32 %v5233, %v5283
        %v5334 = vmax.f32 %v5234, %v5284
        %v5335 = vmax.f32 %v5235, %v5285
        %v5336 = vmax.f32 %v5236, %v5286
        %v5337 = vmax.f32 %v5237, %v5287
        %v5338 = vmax.f32 %v5238, %v5288
        %v5339 = vmax.f32 %v5239, %v5289
        %v5340 = vmax.f32 %v5240, %v5290
        %v5341 = vmax.f32 %v5241, %v5291
        %v5342 = vmax.f32 %v5242, %v5292
        %v5343 = vld [vmem:[%s4] sm:$0xff]
        %v5344 = vld [vmem:[%s4 + $0x8] sm:$0xff]
        %v5345 = vld [vmem:[%s4 + $0x10] sm:$0xff]
        %v5346 = vld [vmem:[%s4 + $0x18] sm:$0xff]
        %v5347 = vld [vmem:[%s4 + $0x20] sm:$0xff]
        %v5348 = vld [vmem:[%s4 + $0x28] sm:$0xff]
        %v5349 = vld [vmem:[%s4 + $0x30] sm:$0xff]
        %v5350 = vld [vmem:[%s4 + $0x38] sm:$0xff]
        %v5351 = vld [vmem:[%s4 + $0x40] sm:$0xff]
        %v5352 = vld [vmem:[%s4 + $0x48] sm:$0xff]
        %v5353 = vld [vmem:[%s4 + $0x50] sm:$0xff]
        %v5354 = vld [vmem:[%s4 + $0x58] sm:$0xff]
        %v5355 = vld [vmem:[%s4 + $0x60] sm:$0xff]
        %v5356 = vld [vmem:[%s4 + $0x68] sm:$0xff]
        %v5357 = vld [vmem:[%s4 + $0x70] sm:$0xff]
        %v5358 = vld [vmem:[%s4 + $0x78] sm:$0xff]
        %v5359 = vld [vmem:[%s4 + $0x80] sm:$0xff]
        %v5360 = vld [vmem:[%s4 + $0x88] sm:$0xff]
        %v5361 = vld [vmem:[%s4 + $0x90] sm:$0xff]
        %v5362 = vld [vmem:[%s4 + $0x98] sm:$0xff]
        %v5363 = vld [vmem:[%s4 + $0xa0] sm:$0xff]
        %v5364 = vld [vmem:[%s4 + $0xa8] sm:$0xff]
        %v5365 = vld [vmem:[%s4 + $0xb0] sm:$0xff]
        %v5366 = vld [vmem:[%s4 + $0xb8] sm:$0xff]
        %v5367 = vld [vmem:[%s4 + $0xc0] sm:$0xff]
        %v5368 = vld [vmem:[%s4 + $0xc8] sm:$0xff]
        %v5369 = vld [vmem:[%s4 + $0xd0] sm:$0xff]
        %v5370 = vld [vmem:[%s4 + $0xd8] sm:$0xff]
        %v5371 = vld [vmem:[%s4 + $0xe0] sm:$0xff]
        %v5372 = vld [vmem:[%s4 + $0xe8] sm:$0xff]
        %v5373 = vld [vmem:[%s4 + $0xf0] sm:$0xff]
        %v5374 = vld [vmem:[%s4 + $0xf8] sm:$0xff]
        %v5375 = vld [vmem:[%s4 + $0x100] sm:$0xff]
        %v5376 = vld [vmem:[%s4 + $0x108] sm:$0xff]
        %v5377 = vld [vmem:[%s4 + $0x110] sm:$0xff]
        %v5378 = vld [vmem:[%s4 + $0x118] sm:$0xff]
        %v5379 = vld [vmem:[%s4 + $0x120] sm:$0xff]
        %v5380 = vld [vmem:[%s4 + $0x128] sm:$0xff]
        %v5381 = vld [vmem:[%s4 + $0x130] sm:$0xff]
        %v5382 = vld [vmem:[%s4 + $0x138] sm:$0xff]
        %v5383 = vld [vmem:[%s4 + $0x140] sm:$0xff]
        %v5384 = vld [vmem:[%s4 + $0x148] sm:$0xff]
        %v5385 = vld [vmem:[%s4 + $0x150] sm:$0xff]
        %v5386 = vld [vmem:[%s4 + $0x158] sm:$0xff]
        %v5387 = vld [vmem:[%s4 + $0x160] sm:$0xff]
        %v5388 = vld [vmem:[%s4 + $0x168] sm:$0xff]
        %v5389 = vld [vmem:[%s4 + $0x170] sm:$0xff]
        %v5390 = vld [vmem:[%s4 + $0x178] sm:$0xff]
        %v5391 = vld [vmem:[%s4 + $0x180] sm:$0xff]
        %v5392 = vld [vmem:[%s4 + $0x188] sm:$0xff]
        %v5393 = vld [vmem:[%s4 + $0x190] sm:$0xff]
        %v5394 = vld [vmem:[%s4 + $0x198] sm:$0xff]
        %v5395 = vld [vmem:[%s4 + $0x1a0] sm:$0xff]
        %v5396 = vld [vmem:[%s4 + $0x1a8] sm:$0xff]
        %v5397 = vld [vmem:[%s4 + $0x1b0] sm:$0xff]
        %v5398 = vld [vmem:[%s4 + $0x1b8] sm:$0xff]
        %v5399 = vld [vmem:[%s4 + $0x1c0] sm:$0xff]
        %v5400 = vld [vmem:[%s4 + $0x1c8] sm:$0xff]
        %v5401 = vld [vmem:[%s4 + $0x1d0] sm:$0xff]
        %v5402 = vld [vmem:[%s4 + $0x1d8] sm:$0xff]
        %v5403 = vld [vmem:[%s4 + $0x1e0] sm:$0x1]
        %v5404 = vld [vmem:[%s4 + $0x1e8] sm:$0x1]
        %v5405 = vld [vmem:[%s4 + $0x1f0] sm:$0x1]
        %v5406 = vld [vmem:[%s4 + $0x1f8] sm:$0x1]
        %v5408 = vsel %vm522, %v5346, 0
        %v5411 = vsel %vm522, %v5350, 0
        %v5414 = vsel %vm522, %v5354, 0
        %v5417 = vsel %vm522, %v5358, 0
        %v5420 = vsel %vm522, %v5362, 0
        %v5423 = vsel %vm522, %v5366, 0
        %v5426 = vsel %vm522, %v5370, 0
        %v5429 = vsel %vm522, %v5374, 0
        %v5432 = vsel %vm522, %v5378, 0
        %v5435 = vsel %vm522, %v5382, 0
        %v5438 = vsel %vm522, %v5386, 0
        %v5441 = vsel %vm522, %v5390, 0
        %v5444 = vsel %vm522, %v5394, 0
        %v5447 = vsel %vm522, %v5398, 0
        %v5450 = vsel %vm522, %v5402, 0
        %v5453 = vsel %vm522, %v5406, 0
        %5455 = vmatprep.subr.mxu0 0.0
        %5456 = vmatpush1.msra.mxu0 %v5293
        %5457 = vmatprep.subr.mxu0 0.0
        %5458 = vmatpush1.msra.mxu0 %v5294
        %5459 = vmatprep.subr.mxu0 0.0
        %5460 = vmatpush1.msra.mxu0 %v5295
        %5461 = vmatprep.subr.mxu0 0.0
        %5462 = vmatpush1.msra.mxu0 %v5296
        %5463 = vmatprep.subr.mxu0 0.0
        %5464 = vmatpush1.msra.mxu0 %v5297
        %5465 = vmatprep.subr.mxu0 0.0
        %5466 = vmatpush1.msra.mxu0 %v5298
        %5467 = vmatprep.subr.mxu0 0.0
        %5468 = vmatpush1.msra.mxu0 %v5299
        %5469 = vmatprep.subr.mxu0 0.0
        %5470 = vmatpush1.msra.mxu0 %v5300
        %5471 = vmatprep.subr.mxu0 0.0
        %5472 = vmatpush1.msra.mxu0 %v5301
        %5473 = vmatprep.subr.mxu0 0.0
        %5474 = vmatpush1.msra.mxu0 %v5302
        %5475 = vmatprep.subr.mxu0 0.0
        %5476 = vmatpush1.msra.mxu0 %v5303
        %5477 = vmatprep.subr.mxu0 0.0
        %5478 = vmatpush1.msra.mxu0 %v5304
        %5479 = vmatprep.subr.mxu0 0.0
        %5480 = vmatpush1.msra.mxu0 %v5305
        %5481 = vmatprep.subr.mxu0 0.0
        %5482 = vmatpush1.msra.mxu0 %v5306
        %5483 = vmatprep.subr.mxu0 0.0
        %5484 = vmatpush1.msra.mxu0 %v5307
        %5485 = vmatprep.subr.mxu0 0.0
        %5486 = vmatpush1.msra.mxu0 %v5308
        %5487 = vmatprep.subr.mxu0 0.0
        %5488 = vmatpush1.msra.mxu0 %v5309
        %5489 = vmatprep.subr.mxu0 0.0
        %5490 = vmatpush1.msra.mxu0 %v5310
        %5491 = vmatprep.subr.mxu0 0.0
        %5492 = vmatpush1.msra.mxu0 %v5311
        %5493 = vmatprep.subr.mxu0 0.0
        %5494 = vmatpush1.msra.mxu0 %v5312
        %5495 = vmatprep.subr.mxu0 0.0
        %5496 = vmatpush1.msra.mxu0 %v5313
        %5497 = vmatprep.subr.mxu0 0.0
        %5498 = vmatpush1.msra.mxu0 %v5314
        %5499 = vmatprep.subr.mxu0 0.0
        %5500 = vmatpush1.msra.mxu0 %v5315
        %5501 = vmatprep.subr.mxu0 0.0
        %5502 = vmatpush1.msra.mxu0 %v5316
        %5503 = vmatprep.subr.mxu0 0.0
        %5504 = vmatpush1.msra.mxu0 %v5317
        %5505 = vmatprep.subr.mxu0 0.0
        %5506 = vmatpush1.msra.mxu0 %v5318
        %5507 = vmatprep.subr.mxu0 0.0
        %5508 = vmatpush1.msra.mxu0 %v5319
        %5509 = vmatprep.subr.mxu0 0.0
        %5510 = vmatpush1.msra.mxu0 %v5320
        %5511 = vmatprep.subr.mxu0 0.0
        %5512 = vmatpush1.msra.mxu0 %v5321
        %5513 = vmatprep.subr.mxu0 0.0
        %5514 = vmatpush1.msra.mxu0 %v5322
        %5515 = vmatprep.subr.mxu0 0.0
        %5516 = vmatpush1.msra.mxu0 %v5323
        %5517 = vmatprep.subr.mxu0 0.0
        %5518 = vmatpush1.msra.mxu0 %v5324
        %5519 = vmatprep.mubr.f32.mxu0 %v5344
        %5520 = vmatmul.mubr.f32.gmra.mrb[0].mxu0 %v5343
        %v5521 = vpop.f32.mrb[0].mxu0
        %v5522 = vadd.f32 0.0, %v5521
        %v5523 = vpop.f32.mrb[0].mxu0
        %5524 = vmatprep.mubr.f32.mxu0 %v5348
        %5525 = vmatmul.mubr.f32.gmra.mrb[0].mxu0 %v5347
        %v5526 = vpop.f32.mrb[0].mxu0
        %v5527 = vadd.f32 0.0, %v5526
        %v5528 = vpop.f32.mrb[0].mxu0
        %5529 = vmatprep.mubr.f32.mxu0 %v5352
        %5530 = vmatmul.mubr.f32.gmra.mrb[0].mxu0 %v5351
        %v5531 = vpop.f32.mrb[0].mxu0
        %v5532 = vadd.f32 0.0, %v5531
        %v5533 = vpop.f32.mrb[0].mxu0
        %5534 = vmatprep.mubr.f32.mxu0 %v5356
        %5535 = vmatmul.mubr.f32.gmra.mrb[0].mxu0 %v5355
        %v5536 = vpop.f32.mrb[0].mxu0
        %v5537 = vadd.f32 0.0, %v5536
        %v5538 = vpop.f32.mrb[0].mxu0
        %5539 = vmatprep.mubr.f32.mxu0 %v5360
        %5540 = vmatmul.mubr.f32.gmra.mrb[0].mxu0 %v5359
        %v5541 = vpop.f32.mrb[0].mxu0
        %v5542 = vadd.f32 0.0, %v5541
        %v5543 = vpop.f32.mrb[0].mxu0
        %5544 = vmatprep.mubr.f32.mxu0 %v5364
        %5545 = vmatmul.mubr.f32.gmra.mrb[0].mxu0 %v5363
        %v5546 = vpop.f32.mrb[0].mxu0
        %v5547 = vadd.f32 0.0, %v5546
        %v5548 = vpop.f32.mrb[0].mxu0
        %5549 = vmatprep.mubr.f32.mxu0 %v5368
        %5550 = vmatmul.mubr.f32.gmra.mrb[0].mxu0 %v5367
        %v5551 = vpop.f32.mrb[0].mxu0
        %v5552 = vadd.f32 0.0, %v5551
        %v5553 = vpop.f32.mrb[0].mxu0
        %5554 = vmatprep.mubr.f32.mxu0 %v5372
        %5555 = vmatmul.mubr.f32.gmra.mrb[0].mxu0 %v5371
        %v5556 = vpop.f32.mrb[0].mxu0
        %v5557 = vadd.f32 0.0, %v5556
        %v5558 = vpop.f32.mrb[0].mxu0
        %5559 = vmatprep.mubr.f32.mxu0 %v5376
        %5560 = vmatmul.mubr.f32.gmra.mrb[0].mxu0 %v5375
        %v5561 = vpop.f32.mrb[0].mxu0
        %v5562 = vadd.f32 0.0, %v5561
        %v5563 = vpop.f32.mrb[0].mxu0
        %5564 = vmatprep.mubr.f32.mxu0 %v5380
        %5565 = vmatmul.mubr.f32.gmra.mrb[0].mxu0 %v5379
        %v5566 = vpop.f32.mrb[0].mxu0
        %v5567 = vadd.f32 0.0, %v5566
        %v5568 = vpop.f32.mrb[0].mxu0
        %5569 = vmatprep.mubr.f32.mxu0 %v5384
        %5570 = vmatmul.mubr.f32.gmra.mrb[0].mxu0 %v5383
        %v5571 = vpop.f32.mrb[0].mxu0
        %v5572 = vadd.f32 0.0, %v5571
        %v5573 = vpop.f32.mrb[0].mxu0
        %5574 = vmatprep.mubr.f32.mxu0 %v5388
        %5575 = vmatmul.mubr.f32.gmra.mrb[0].mxu0 %v5387
        %v5576 = vpop.f32.mrb[0].mxu0
        %v5577 = vadd.f32 0.0, %v5576
        %v5578 = vpop.f32.mrb[0].mxu0
        %5579 = vmatprep.mubr.f32.mxu0 %v5392
        %5580 = vmatmul.mubr.f32.gmra.mrb[0].mxu0 %v5391
        %v5581 = vpop.f32.mrb[0].mxu0
        %v5582 = vadd.f32 0.0, %v5581
        %v5583 = vpop.f32.mrb[0].mxu0
        %5584 = vmatprep.mubr.f32.mxu0 %v5396
        %5585 = vmatmul.mubr.f32.gmra.mrb[0].mxu0 %v5395
        %v5586 = vpop.f32.mrb[0].mxu0
        %v5587 = vadd.f32 0.0, %v5586
        %v5588 = vpop.f32.mrb[0].mxu0
        %5589 = vmatprep.mubr.f32.mxu0 %v5400
        %5590 = vmatmul.mubr.f32.gmra.mrb[0].mxu0 %v5399
        %v5591 = vpop.f32.mrb[0].mxu0
        %v5592 = vadd.f32 0.0, %v5591
        %v5593 = vpop.f32.mrb[0].mxu0
        %5594 = vmatprep.mubr.f32.mxu0 %v5404
        %5595 = vmatmul.mubr.f32.gmra.mrb[0].mxu0 %v5403
        %v5596 = vpop.f32.mrb[0].mxu0
        %v5597 = vadd.f32 0.0, %v5596
        %v5598 = vpop.f32.mrb[0].mxu0
        %5599 = vdwg.mxu0
        %5600 = vmatprep.subr.mxu0 0.0
        %5601 = vmatpush1.msra.mxu0 %v5325
        %5602 = vmatprep.subr.mxu0 0.0
        %5603 = vmatpush1.msra.mxu0 %v5326
        %5604 = vmatprep.subr.mxu0 0.0
        %5605 = vmatpush1.msra.mxu0 %v5327
        %5606 = vmatprep.subr.mxu0 0.0
        %5607 = vmatpush1.msra.mxu0 %v5328
        %5608 = vmatprep.subr.mxu0 0.0
        %5609 = vmatpush1.msra.mxu0 %v5329
        %5610 = vmatprep.subr.mxu0 0.0
        %5611 = vmatpush1.msra.mxu0 %v5330
        %5612 = vmatprep.subr.mxu0 0.0
        %5613 = vmatpush1.msra.mxu0 %v5331
        %5614 = vmatprep.subr.mxu0 0.0
        %5615 = vmatpush1.msra.mxu0 %v5332
        %5616 = vmatprep.subr.mxu0 0.0
        %5617 = vmatpush1.msra.mxu0 %v5333
        %5618 = vmatprep.subr.mxu0 0.0
        %5619 = vmatpush1.msra.mxu0 %v5334
        %5620 = vmatprep.subr.mxu0 0.0
        %5621 = vmatpush1.msra.mxu0 %v5335
        %5622 = vmatprep.subr.mxu0 0.0
        %5623 = vmatpush1.msra.mxu0 %v5336
        %5624 = vmatprep.subr.mxu0 0.0
        %5625 = vmatpush1.msra.mxu0 %v5337
        %5626 = vmatprep.subr.mxu0 0.0
        %5627 = vmatpush1.msra.mxu0 %v5338
        %5628 = vmatprep.subr.mxu0 0.0
        %5629 = vmatpush1.msra.mxu0 %v5339
        %5630 = vmatprep.subr.mxu0 0.0
        %5631 = vmatpush1.msra.mxu0 %v5340
        %5632 = vmatprep.subr.mxu0 0.0
        %5633 = vmatpush1.msra.mxu0 %v5341
        %5634 = vmatprep.subr.mxu0 0.0
        %5635 = vmatpush1.msra.mxu0 %v5342
        %5636 = vmatprep.subr.mxu0 0.0
        %5637 = vmatpush1.msra.mxu0 0.0
        %5638 = vmatprep.subr.mxu0 0.0
        %5639 = vmatpush1.msra.mxu0 0.0
        %5640 = vmatprep.subr.mxu0 0.0
        %5641 = vmatpush1.msra.mxu0 0.0
        %5642 = vmatprep.subr.mxu0 0.0
        %5643 = vmatpush1.msra.mxu0 0.0
        %5644 = vmatprep.subr.mxu0 0.0
        %5645 = vmatpush1.msra.mxu0 0.0
        %5646 = vmatprep.subr.mxu0 0.0
        %5647 = vmatpush1.msra.mxu0 0.0
        %5648 = vmatprep.subr.mxu0 0.0
        %5649 = vmatpush1.msra.mxu0 0.0
        %5650 = vmatprep.subr.mxu0 0.0
        %5651 = vmatpush1.msra.mxu0 0.0
        %5652 = vmatprep.subr.mxu0 0.0
        %5653 = vmatpush1.msra.mxu0 0.0
        %5654 = vmatprep.subr.mxu0 0.0
        %5655 = vmatpush1.msra.mxu0 0.0
        %5656 = vmatprep.subr.mxu0 0.0
        %5657 = vmatpush1.msra.mxu0 0.0
        %5658 = vmatprep.subr.mxu0 0.0
        %5659 = vmatpush1.msra.mxu0 0.0
        %5660 = vmatprep.subr.mxu0 0.0
        %5661 = vmatpush1.msra.mxu0 0.0
        %5662 = vmatprep.subr.mxu0 0.0
        %5663 = vmatpush1.msra.mxu0 0.0
        %5664 = vmatprep.mubr.f32.mxu0 %v5408
        %5665 = vmatmul.mubr.f32.gmra.mrb[0].mxu0 %v5345
        %v5666 = vpop.f32.mrb[0].mxu0
        %v5667 = vadd.f32 %v5522, %v5666
        %v5668 = vpop.f32.mrb[0].mxu0
        %5669 = vmatprep.mubr.f32.mxu0 %v5411
        %5670 = vmatmul.mubr.f32.gmra.mrb[0].mxu0 %v5349
        %v5671 = vpop.f32.mrb[0].mxu0
        %v5672 = vadd.f32 %v5527, %v5671
        %v5673 = vpop.f32.mrb[0].mxu0
        %5674 = vmatprep.mubr.f32.mxu0 %v5414
        %5675 = vmatmul.mubr.f32.gmra.mrb[0].mxu0 %v5353
        %v5676 = vpop.f32.mrb[0].mxu0
        %v5677 = vadd.f32 %v5532, %v5676
        %v5678 = vpop.f32.mrb[0].mxu0
        %5679 = vmatprep.mubr.f32.mxu0 %v5417
        %5680 = vmatmul.mubr.f32.gmra.mrb[0].mxu0 %v5357
        %v5681 = vpop.f32.mrb[0].mxu0
        %v5682 = vadd.f32 %v5537, %v5681
        %v5683 = vpop.f32.mrb[0].mxu0
        %5684 = vmatprep.mubr.f32.mxu0 %v5420
        %5685 = vmatmul.mubr.f32.gmra.mrb[0].mxu0 %v5361
        %v5686 = vpop.f32.mrb[0].mxu0
        %v5687 = vadd.f32 %v5542, %v5686
        %v5688 = vpop.f32.mrb[0].mxu0
        %5689 = vmatprep.mubr.f32.mxu0 %v5423
        %5690 = vmatmul.mubr.f32.gmra.mrb[0].mxu0 %v5365
        %v5691 = vpop.f32.mrb[0].mxu0
        %v5692 = vadd.f32 %v5547, %v5691
        %v5693 = vpop.f32.mrb[0].mxu0
        %5694 = vmatprep.mubr.f32.mxu0 %v5426
        %5695 = vmatmul.mubr.f32.gmra.mrb[0].mxu0 %v5369
        %v5696 = vpop.f32.mrb[0].mxu0
        %v5697 = vadd.f32 %v5552, %v5696
        %v5698 = vpop.f32.mrb[0].mxu0
        %5699 = vmatprep.mubr.f32.mxu0 %v5429
        %5700 = vmatmul.mubr.f32.gmra.mrb[0].mxu0 %v5373
        %v5701 = vpop.f32.mrb[0].mxu0
        %v5702 = vadd.f32 %v5557, %v5701
        %v5703 = vpop.f32.mrb[0].mxu0
        %5704 = vmatprep.mubr.f32.mxu0 %v5432
        %5705 = vmatmul.mubr.f32.gmra.mrb[0].mxu0 %v5377
        %v5706 = vpop.f32.mrb[0].mxu0
        %v5707 = vadd.f32 %v5562, %v5706
        %v5708 = vpop.f32.mrb[0].mxu0
        %5709 = vmatprep.mubr.f32.mxu0 %v5435
        %5710 = vmatmul.mubr.f32.gmra.mrb[0].mxu0 %v5381
        %v5711 = vpop.f32.mrb[0].mxu0
        %v5712 = vadd.f32 %v5567, %v5711
        %v5713 = vpop.f32.mrb[0].mxu0
        %5714 = vmatprep.mubr.f32.mxu0 %v5438
        %5715 = vmatmul.mubr.f32.gmra.mrb[0].mxu0 %v5385
        %v5716 = vpop.f32.mrb[0].mxu0
        %v5717 = vadd.f32 %v5572, %v5716
        %v5718 = vpop.f32.mrb[0].mxu0
        %5719 = vmatprep.mubr.f32.mxu0 %v5441
        %5720 = vmatmul.mubr.f32.gmra.mrb[0].mxu0 %v5389
        %v5721 = vpop.f32.mrb[0].mxu0
        %v5722 = vadd.f32 %v5577, %v5721
        %v5723 = vpop.f32.mrb[0].mxu0
        %5724 = vmatprep.mubr.f32.mxu0 %v5444
        %5725 = vmatmul.mubr.f32.gmra.mrb[0].mxu0 %v5393
        %v5726 = vpop.f32.mrb[0].mxu0
        %v5727 = vadd.f32 %v5582, %v5726
        %v5728 = vpop.f32.mrb[0].mxu0
        %5729 = vmatprep.mubr.f32.mxu0 %v5447
        %5730 = vmatmul.mubr.f32.gmra.mrb[0].mxu0 %v5397
        %v5731 = vpop.f32.mrb[0].mxu0
        %v5732 = vadd.f32 %v5587, %v5731
        %v5733 = vpop.f32.mrb[0].mxu0
        %5734 = vmatprep.mubr.f32.mxu0 %v5450
        %5735 = vmatmul.mubr.f32.gmra.mrb[0].mxu0 %v5401
        %v5736 = vpop.f32.mrb[0].mxu0
        %v5737 = vadd.f32 %v5592, %v5736
        %v5738 = vpop.f32.mrb[0].mxu0
        %5739 = vmatprep.mubr.f32.mxu0 %v5453
        %5740 = vmatmul.mubr.f32.gmra.mrb[0].mxu0 %v5405
        %v5741 = vpop.f32.mrb[0].mxu0
        %v5742 = vadd.f32 %v5597, %v5741
        %v5743 = vpop.f32.mrb[0].mxu0
        %5744 = vdwg.mxu0
        %v5745 = vpack.c.bf16 %v5672, %v5667
        %v5746 = vpack.c.bf16 %v5682, %v5677
        %v5747 = vpack.c.bf16 %v5692, %v5687
        %v5748 = vpack.c.bf16 %v5702, %v5697
        %v5749 = vpack.c.bf16 %v5712, %v5707
        %v5750 = vpack.c.bf16 %v5722, %v5717
        %v5751 = vpack.c.bf16 %v5732, %v5727
        %v5752 = vpack.c.bf16 %v5742, %v5737
        %v5753 = vld [vmem:[%s5] sm:$0xf]
        %v5754 = vld [vmem:[%s5 + $0x4] sm:$0xf]
        %v5755 = vld [vmem:[%s5 + $0x8] sm:$0xf]
        %v5756 = vld [vmem:[%s5 + $0xc] sm:$0xf]
        %v5757 = vld [vmem:[%s5 + $0x10] sm:$0xf]
        %v5758 = vld [vmem:[%s5 + $0x14] sm:$0xf]
        %v5759 = vld [vmem:[%s5 + $0x18] sm:$0xf]
        %v5760 = vld [vmem:[%s5 + $0x1c] sm:$0xf]
        %v5769 = vunpack.c.l.b16 %v5753
        %v5770 = vunpack.c.l.b16 %v5754
        %v5771 = vunpack.c.l.b16 %v5755
        %v5772 = vunpack.c.l.b16 %v5756
        %v5773 = vunpack.c.l.b16 %v5757
        %v5774 = vunpack.c.l.b16 %v5758
        %v5775 = vunpack.c.l.b16 %v5759
        %v5776 = vunpack.c.l.b16 %v5760
        %v5777 = vpack.c.b16 %v5770, %v5769
        %v5778 = vpack.c.b16 %v5772, %v5771
        %v5779 = vpack.c.b16 %v5774, %v5773
        %v5780 = vpack.c.b16 %v5776, %v5775
        %vm5785 = vcmask 523264
        %v5787 = vsel %vm5785, %v5745, 0
        %v5790 = vsel %vm5785, %v5746, 0
        %v5793 = vsel %vm5785, %v5747, 0
        %v5796 = vsel %vm5785, %v5748, 0
        %v5799 = vsel %vm5785, %v5749, 0
        %v5802 = vsel %vm5785, %v5750, 0
        %v5805 = vsel %vm5785, %v5751, 0
        %v5808 = vsel %vm5785, %v5752, 0
        %5810 = vmatprep.subr.bf16.mxu0 0
        %5811 = vmatpush1.bf16.msra.mxu0 %v5777
        %5812 = vmatprep.subr.bf16.mxu0 0
        %5813 = vmatpush1.bf16.msra.mxu0 %v5778
        %5814 = vmatprep.subr.bf16.mxu0 0
        %5815 = vmatpush1.bf16.msra.mxu0 %v5779
        %5816 = vmatprep.subr.bf16.mxu0 0
        %5817 = vmatpush1.bf16.msra.mxu0 %v5780
        %5818 = vmatprep.subr.bf16.mxu0 0
        %5819 = vmatpush1.bf16.msra.mxu0 0
        %5820 = vmatprep.subr.bf16.mxu0 0
        %5821 = vmatpush1.bf16.msra.mxu0 0
        %5822 = vmatprep.subr.bf16.mxu0 0
        %5823 = vmatpush1.bf16.msra.mxu0 0
        %5824 = vmatprep.subr.bf16.mxu0 0
        %5825 = vmatpush1.bf16.msra.mxu0 0
        %5826 = vmatprep.subr.bf16.mxu0 0
        %5827 = vmatpush1.bf16.msra.mxu0 0
        %5828 = vmatprep.subr.bf16.mxu0 0
        %5829 = vmatpush1.bf16.msra.mxu0 0
        %5830 = vmatprep.subr.bf16.mxu0 0
        %5831 = vmatpush1.bf16.msra.mxu0 0
        %5832 = vmatprep.subr.bf16.mxu0 0
        %5833 = vmatpush1.bf16.msra.mxu0 0
        %5834 = vmatprep.subr.bf16.mxu0 0
        %5835 = vmatpush1.bf16.msra.mxu0 0
        %5836 = vmatprep.subr.bf16.mxu0 0
        %5837 = vmatpush1.bf16.msra.mxu0 0
        %5838 = vmatprep.subr.bf16.mxu0 0
        %5839 = vmatpush1.bf16.msra.mxu0 0
        %5840 = vmatprep.subr.bf16.mxu0 0
        %5841 = vmatpush1.bf16.msra.mxu0 0
        %5842 = vmatprep.mubr.bf16.mxu0 0
        %5843 = vmatmul.mubr.bf16.gmra.mrb[0].mxu0 %v5787
        %v5844 = vpop.f32.mrb[0].mxu0
        %v5845 = vadd.f32 0.0, %v5844
        %v5846 = vpop.f32.mrb[0].mxu0
        %v5847 = vpop.f32.mrb[0].mxu0
        %v5848 = vadd.f32 0.0, %v5847
        %v5849 = vpop.f32.mrb[0].mxu0
        %5850 = vmatprep.mubr.bf16.mxu0 0
        %5851 = vmatmul.mubr.bf16.gmra.mrb[0].mxu0 %v5790
        %v5852 = vpop.f32.mrb[0].mxu0
        %v5853 = vadd.f32 0.0, %v5852
        %v5854 = vpop.f32.mrb[0].mxu0
        %v5855 = vpop.f32.mrb[0].mxu0
        %v5856 = vadd.f32 0.0, %v5855
        %v5857 = vpop.f32.mrb[0].mxu0
        %5858 = vmatprep.mubr.bf16.mxu0 0
        %5859 = vmatmul.mubr.bf16.gmra.mrb[0].mxu0 %v5793
        %v5860 = vpop.f32.mrb[0].mxu0
        %v5861 = vadd.f32 0.0, %v5860
        %v5862 = vpop.f32.mrb[0].mxu0
        %v5863 = vpop.f32.mrb[0].mxu0
        %v5864 = vadd.f32 0.0, %v5863
        %v5865 = vpop.f32.mrb[0].mxu0
        %5866 = vmatprep.mubr.bf16.mxu0 0
        %5867 = vmatmul.mubr.bf16.gmra.mrb[0].mxu0 %v5796
        %v5868 = vpop.f32.mrb[0].mxu0
        %v5869 = vadd.f32 0.0, %v5868
        %v5870 = vpop.f32.mrb[0].mxu0
        %v5871 = vpop.f32.mrb[0].mxu0
        %v5872 = vadd.f32 0.0, %v5871
        %v5873 = vpop.f32.mrb[0].mxu0
        %5874 = vmatprep.mubr.bf16.mxu0 0
        %5875 = vmatmul.mubr.bf16.gmra.mrb[0].mxu0 %v5799
        %v5876 = vpop.f32.mrb[0].mxu0
        %v5877 = vadd.f32 0.0, %v5876
        %v5878 = vpop.f32.mrb[0].mxu0
        %v5879 = vpop.f32.mrb[0].mxu0
        %v5880 = vadd.f32 0.0, %v5879
        %v5881 = vpop.f32.mrb[0].mxu0
        %5882 = vmatprep.mubr.bf16.mxu0 0
        %5883 = vmatmul.mubr.bf16.gmra.mrb[0].mxu0 %v5802
        %v5884 = vpop.f32.mrb[0].mxu0
        %v5885 = vadd.f32 0.0, %v5884
        %v5886 = vpop.f32.mrb[0].mxu0
        %v5887 = vpop.f32.mrb[0].mxu0
        %v5888 = vadd.f32 0.0, %v5887
        %v5889 = vpop.f32.mrb[0].mxu0
        %5890 = vmatprep.mubr.bf16.mxu0 0
        %5891 = vmatmul.mubr.bf16.gmra.mrb[0].mxu0 %v5805
        %v5892 = vpop.f32.mrb[0].mxu0
        %v5893 = vadd.f32 0.0, %v5892
        %v5894 = vpop.f32.mrb[0].mxu0
        %v5895 = vpop.f32.mrb[0].mxu0
        %v5896 = vadd.f32 0.0, %v5895
        %v5897 = vpop.f32.mrb[0].mxu0
        %5898 = vmatprep.mubr.bf16.mxu0 0
        %5899 = vmatmul.mubr.bf16.gmra.mrb[0].mxu0 %v5808
        %v5900 = vpop.f32.mrb[0].mxu0
        %v5901 = vadd.f32 0.0, %v5900
        %v5902 = vpop.f32.mrb[0].mxu0
        %v5903 = vpop.f32.mrb[0].mxu0
        %v5904 = vadd.f32 0.0, %v5903
        %v5905 = vpop.f32.mrb[0].mxu0
        %5906 = vdwg.mxu0
        %v5907 = vld [vmem:[#allocation4 + $0x2c] sm:$0xff]
        %v5908 = vld [vmem:[#allocation4 + $0x34] sm:$0xff]
        %v5909 = vld [vmem:[#allocation4 + $0x3c] sm:$0xff]
        %v5910 = vld [vmem:[#allocation4 + $0x44] sm:$0xff]
        %v5911 = vld [vmem:[#allocation4 + $0x4c] sm:$0xff]
        %v5912 = vld [vmem:[#allocation4 + $0x54] sm:$0xff]
        %v5913 = vld [vmem:[#allocation4 + $0x5c] sm:$0xff]
        %v5914 = vld [vmem:[#allocation4 + $0x64] sm:$0xff]
        %v5915 = vld [vmem:[#allocation4 + $0x6c] sm:$0xff]
        %v5916 = vld [vmem:[#allocation4 + $0x74] sm:$0xff]
        %v5917 = vld [vmem:[#allocation4 + $0x7c] sm:$0xff]
        %v5918 = vld [vmem:[#allocation4 + $0x84] sm:$0xff]
        %v5919 = vld [vmem:[#allocation4 + $0x8c] sm:$0xff]
        %v5920 = vld [vmem:[#allocation4 + $0x94] sm:$0xff]
        %v5921 = vld [vmem:[#allocation4 + $0x9c] sm:$0xff]
        %v5922 = vld [vmem:[#allocation4 + $0xa4] sm:$0x1]
        %v5923 = vadd.f32 %v5907, %v5845
        %v5924 = vadd.f32 %v5908, %v5848
        %v5925 = vadd.f32 %v5909, %v5853
        %v5926 = vadd.f32 %v5910, %v5856
        %v5927 = vadd.f32 %v5911, %v5861
        %v5928 = vadd.f32 %v5912, %v5864
        %v5929 = vadd.f32 %v5913, %v5869
        %v5930 = vadd.f32 %v5914, %v5872
        %v5931 = vadd.f32 %v5915, %v5877
        %v5932 = vadd.f32 %v5916, %v5880
        %v5933 = vadd.f32 %v5917, %v5885
        %v5934 = vadd.f32 %v5918, %v5888
        %v5935 = vadd.f32 %v5919, %v5893
        %v5936 = vadd.f32 %v5920, %v5896
        %v5937 = vadd.f32 %v5921, %v5901
        %v5938 = vadd.f32 %v5922, %v5904
        %5939 = vst [vmem:[#allocation4 + $0x2c] sm:$0xff] %v5923
        %5940 = vst [vmem:[#allocation4 + $0x34] sm:$0xff] %v5924
        %5941 = vst [vmem:[#allocation4 + $0x3c] sm:$0xff] %v5925
        %5942 = vst [vmem:[#allocation4 + $0x44] sm:$0xff] %v5926
        %5943 = vst [vmem:[#allocation4 + $0x4c] sm:$0xff] %v5927
        %5944 = vst [vmem:[#allocation4 + $0x54] sm:$0xff] %v5928
        %5945 = vst [vmem:[#allocation4 + $0x5c] sm:$0xff] %v5929
        %5946 = vst [vmem:[#allocation4 + $0x64] sm:$0xff] %v5930
        %5947 = vst [vmem:[#allocation4 + $0x6c] sm:$0xff] %v5931
        %5948 = vst [vmem:[#allocation4 + $0x74] sm:$0xff] %v5932
        %5949 = vst [vmem:[#allocation4 + $0x7c] sm:$0xff] %v5933
        %5950 = vst [vmem:[#allocation4 + $0x84] sm:$0xff] %v5934
        %5951 = vst [vmem:[#allocation4 + $0x8c] sm:$0xff] %v5935
        %5952 = vst [vmem:[#allocation4 + $0x94] sm:$0xff] %v5936
        %5953 = vst [vmem:[#allocation4 + $0x9c] sm:$0xff] %v5937
        %5954 = vst [vmem:[#allocation4 + $0xa4] sm:$0x1] %v5938
        %s5955 = scalar_lea.vmem %s5, 32
        %v5956 = vld [vmem:[%s5955] sm:$0xf]
        %v5957 = vld [vmem:[%s5955 + $0x4] sm:$0xf]
        %v5958 = vld [vmem:[%s5955 + $0x8] sm:$0xf]
        %v5959 = vld [vmem:[%s5955 + $0xc] sm:$0xf]
        %v5960 = vld [vmem:[%s5955 + $0x10] sm:$0xf]
        %v5961 = vld [vmem:[%s5955 + $0x14] sm:$0xf]
        %v5962 = vld [vmem:[%s5955 + $0x18] sm:$0xf]
        %v5963 = vld [vmem:[%s5955 + $0x1c] sm:$0xf]
        %v5972 = vunpack.c.l.b16 %v5956
        %v5973 = vunpack.c.l.b16 %v5957
        %v5974 = vunpack.c.l.b16 %v5958
        %v5975 = vunpack.c.l.b16 %v5959
        %v5976 = vunpack.c.l.b16 %v5960
        %v5977 = vunpack.c.l.b16 %v5961
        %v5978 = vunpack.c.l.b16 %v5962
        %v5979 = vunpack.c.l.b16 %v5963
        %v5980 = vpack.c.b16 %v5973, %v5972
        %v5981 = vpack.c.b16 %v5975, %v5974
        %v5982 = vpack.c.b16 %v5977, %v5976
        %v5983 = vpack.c.b16 %v5979, %v5978
        %5988 = vmatprep.subr.bf16.mxu0 0
        %5989 = vmatpush1.bf16.msra.mxu0 %v5980
        %5990 = vmatprep.subr.bf16.mxu0 0
        %5991 = vmatpush1.bf16.msra.mxu0 %v5981
        %5992 = vmatprep.subr.bf16.mxu0 0
        %5993 = vmatpush1.bf16.msra.mxu0 %v5982
        %5994 = vmatprep.subr.bf16.mxu0 0
        %5995 = vmatpush1.bf16.msra.mxu0 %v5983
        %5996 = vmatprep.subr.bf16.mxu0 0
        %5997 = vmatpush1.bf16.msra.mxu0 0
        %5998 = vmatprep.subr.bf16.mxu0 0
        %5999 = vmatpush1.bf16.msra.mxu0 0
        %6000 = vmatprep.subr.bf16.mxu0 0
        %6001 = vmatpush1.bf16.msra.mxu0 0
        %6002 = vmatprep.subr.bf16.mxu0 0
        %6003 = vmatpush1.bf16.msra.mxu0 0
        %6004 = vmatprep.subr.bf16.mxu0 0
        %6005 = vmatpush1.bf16.msra.mxu0 0
        %6006 = vmatprep.subr.bf16.mxu0 0
        %6007 = vmatpush1.bf16.msra.mxu0 0
        %6008 = vmatprep.subr.bf16.mxu0 0
        %6009 = vmatpush1.bf16.msra.mxu0 0
        %6010 = vmatprep.subr.bf16.mxu0 0
        %6011 = vmatpush1.bf16.msra.mxu0 0
        %6012 = vmatprep.subr.bf16.mxu0 0
        %6013 = vmatpush1.bf16.msra.mxu0 0
        %6014 = vmatprep.subr.bf16.mxu0 0
        %6015 = vmatpush1.bf16.msra.mxu0 0
        %6016 = vmatprep.subr.bf16.mxu0 0
        %6017 = vmatpush1.bf16.msra.mxu0 0
        %6018 = vmatprep.subr.bf16.mxu0 0
        %6019 = vmatpush1.bf16.msra.mxu0 0
        %6020 = vmatprep.mubr.bf16.mxu0 0
        %6021 = vmatmul.mubr.bf16.gmra.mrb[0].mxu0 %v5787
        %v6022 = vpop.f32.mrb[0].mxu0
        %v6023 = vadd.f32 0.0, %v6022
        %v6024 = vpop.f32.mrb[0].mxu0
        %v6025 = vpop.f32.mrb[0].mxu0
        %v6026 = vadd.f32 0.0, %v6025
        %v6027 = vpop.f32.mrb[0].mxu0
        %6028 = vmatprep.mubr.bf16.mxu0 0
        %6029 = vmatmul.mubr.bf16.gmra.mrb[0].mxu0 %v5790
        %v6030 = vpop.f32.mrb[0].mxu0
        %v6031 = vadd.f32 0.0, %v6030
        %v6032 = vpop.f32.mrb[0].mxu0
        %v6033 = vpop.f32.mrb[0].mxu0
        %v6034 = vadd.f32 0.0, %v6033
        %v6035 = vpop.f32.mrb[0].mxu0
        %6036 = vmatprep.mubr.bf16.mxu0 0
        %6037 = vmatmul.mubr.bf16.gmra.mrb[0].mxu0 %v5793
        %v6038 = vpop.f32.mrb[0].mxu0
        %v6039 = vadd.f32 0.0, %v6038
        %v6040 = vpop.f32.mrb[0].mxu0
        %v6041 = vpop.f32.mrb[0].mxu0
        %v6042 = vadd.f32 0.0, %v6041
        %v6043 = vpop.f32.mrb[0].mxu0
        %6044 = vmatprep.mubr.bf16.mxu0 0
        %6045 = vmatmul.mubr.bf16.gmra.mrb[0].mxu0 %v5796
        %v6046 = vpop.f32.mrb[0].mxu0
        %v6047 = vadd.f32 0.0, %v6046
        %v6048 = vpop.f32.mrb[0].mxu0
        %v6049 = vpop.f32.mrb[0].mxu0
        %v6050 = vadd.f32 0.0, %v6049
        %v6051 = vpop.f32.mrb[0].mxu0
        %6052 = vmatprep.mubr.bf16.mxu0 0
        %6053 = vmatmul.mubr.bf16.gmra.mrb[0].mxu0 %v5799
        %v6054 = vpop.f32.mrb[0].mxu0
        %v6055 = vadd.f32 0.0, %v6054
        %v6056 = vpop.f32.mrb[0].mxu0
        %v6057 = vpop.f32.mrb[0].mxu0
        %v6058 = vadd.f32 0.0, %v6057
        %v6059 = vpop.f32.mrb[0].mxu0
        %6060 = vmatprep.mubr.bf16.mxu0 0
        %6061 = vmatmul.mubr.bf16.gmra.mrb[0].mxu0 %v5802
        %v6062 = vpop.f32.mrb[0].mxu0
        %v6063 = vadd.f32 0.0, %v6062
        %v6064 = vpop.f32.mrb[0].mxu0
        %v6065 = vpop.f32.mrb[0].mxu0
        %v6066 = vadd.f32 0.0, %v6065
        %v6067 = vpop.f32.mrb[0].mxu0
        %6068 = vmatprep.mubr.bf16.mxu0 0
        %6069 = vmatmul.mubr.bf16.gmra.mrb[0].mxu0 %v5805
        %v6070 = vpop.f32.mrb[0].mxu0
        %v6071 = vadd.f32 0.0, %v6070
        %v6072 = vpop.f32.mrb[0].mxu0
        %v6073 = vpop.f32.mrb[0].mxu0
        %v6074 = vadd.f32 0.0, %v6073
        %v6075 = vpop.f32.mrb[0].mxu0
        %6076 = vmatprep.mubr.bf16.mxu0 0
        %6077 = vmatmul.mubr.bf16.gmra.mrb[0].mxu0 %v5808
        %v6078 = vpop.f32.mrb[0].mxu0
        %v6079 = vadd.f32 0.0, %v6078
        %v6080 = vpop.f32.mrb[0].mxu0
        %v6081 = vpop.f32.mrb[0].mxu0
        %v6082 = vadd.f32 0.0, %v6081
        %v6083 = vpop.f32.mrb[0].mxu0
        %6084 = vdwg.mxu0
        %v6085 = vld [vmem:[#allocation4 + $0x2b] sm:$0xff]
        %v6086 = vld [vmem:[#allocation4 + $0x33] sm:$0xff]
        %v6087 = vld [vmem:[#allocation4 + $0x3b] sm:$0xff]
        %v6088 = vld [vmem:[#allocation4 + $0x43] sm:$0xff]
        %v6089 = vld [vmem:[#allocation4 + $0x4b] sm:$0xff]
        %v6090 = vld [vmem:[#allocation4 + $0x53] sm:$0xff]
        %v6091 = vld [vmem:[#allocation4 + $0x5b] sm:$0xff]
        %v6092 = vld [vmem:[#allocation4 + $0x63] sm:$0xff]
        %v6093 = vld [vmem:[#allocation4 + $0x6b] sm:$0xff]
        %v6094 = vld [vmem:[#allocation4 + $0x73] sm:$0xff]
        %v6095 = vld [vmem:[#allocation4 + $0x7b] sm:$0xff]
        %v6096 = vld [vmem:[#allocation4 + $0x83] sm:$0xff]
        %v6097 = vld [vmem:[#allocation4 + $0x8b] sm:$0xff]
        %v6098 = vld [vmem:[#allocation4 + $0x93] sm:$0xff]
        %v6099 = vld [vmem:[#allocation4 + $0x9b] sm:$0xff]
        %v6100 = vld [vmem:[#allocation4 + $0xa3] sm:$0x1]
        %v6101 = vadd.f32 %v6085, %v6023
        %v6102 = vadd.f32 %v6086, %v6026
        %v6103 = vadd.f32 %v6087, %v6031
        %v6104 = vadd.f32 %v6088, %v6034
        %v6105 = vadd.f32 %v6089, %v6039
        %v6106 = vadd.f32 %v6090, %v6042
        %v6107 = vadd.f32 %v6091, %v6047
        %v6108 = vadd.f32 %v6092, %v6050
        %v6109 = vadd.f32 %v6093, %v6055
        %v6110 = vadd.f32 %v6094, %v6058
        %v6111 = vadd.f32 %v6095, %v6063
        %v6112 = vadd.f32 %v6096, %v6066
        %v6113 = vadd.f32 %v6097, %v6071
        %v6114 = vadd.f32 %v6098, %v6074
        %v6115 = vadd.f32 %v6099, %v6079
        %v6116 = vadd.f32 %v6100, %v6082
        %6117 = vst [vmem:[#allocation4 + $0x2b] sm:$0xff] %v6101
        %6118 = vst [vmem:[#allocation4 + $0x33] sm:$0xff] %v6102
        %6119 = vst [vmem:[#allocation4 + $0x3b] sm:$0xff] %v6103
        %6120 = vst [vmem:[#allocation4 + $0x43] sm:$0xff] %v6104
        %6121 = vst [vmem:[#allocation4 + $0x4b] sm:$0xff] %v6105
        %6122 = vst [vmem:[#allocation4 + $0x53] sm:$0xff] %v6106
        %6123 = vst [vmem:[#allocation4 + $0x5b] sm:$0xff] %v6107
        %6124 = vst [vmem:[#allocation4 + $0x63] sm:$0xff] %v6108
        %6125 = vst [vmem:[#allocation4 + $0x6b] sm:$0xff] %v6109
        %6126 = vst [vmem:[#allocation4 + $0x73] sm:$0xff] %v6110
        %6127 = vst [vmem:[#allocation4 + $0x7b] sm:$0xff] %v6111
        %6128 = vst [vmem:[#allocation4 + $0x83] sm:$0xff] %v6112
        %6129 = vst [vmem:[#allocation4 + $0x8b] sm:$0xff] %v6113
        %6130 = vst [vmem:[#allocation4 + $0x93] sm:$0xff] %v6114
        %6131 = vst [vmem:[#allocation4 + $0x9b] sm:$0xff] %v6115
        %6132 = vst [vmem:[#allocation4 + $0xa3] sm:$0x1] %v6116
        %s6133 = scalar_lea.vmem %s5, 64
        %v6134 = vld [vmem:[%s6133] sm:$0xf]
        %v6135 = vld [vmem:[%s6133 + $0x4] sm:$0xf]
        %v6136 = vld [vmem:[%s6133 + $0x8] sm:$0xf]
        %v6137 = vld [vmem:[%s6133 + $0xc] sm:$0xf]
        %v6138 = vld [vmem:[%s6133 + $0x10] sm:$0xf]
        %v6139 = vld [vmem:[%s6133 + $0x14] sm:$0xf]
        %v6140 = vld [vmem:[%s6133 + $0x18] sm:$0xf]
        %v6141 = vld [vmem:[%s6133 + $0x1c] sm:$0xf]
        %v6150 = vunpack.c.l.b16 %v6134
        %v6151 = vunpack.c.l.b16 %v6135
        %v6152 = vunpack.c.l.b16 %v6136
        %v6153 = vunpack.c.l.b16 %v6137
        %v6154 = vunpack.c.l.b16 %v6138
        %v6155 = vunpack.c.l.b16 %v6139
        %v6156 = vunpack.c.l.b16 %v6140
        %v6157 = vunpack.c.l.b16 %v6141
        %v6158 = vpack.c.b16 %v6151, %v6150
        %v6159 = vpack.c.b16 %v6153, %v6152
        %v6160 = vpack.c.b16 %v6155, %v6154
        %v6161 = vpack.c.b16 %v6157, %v6156
        %6166 = vmatprep.subr.bf16.mxu0 0
        %6167 = vmatpush1.bf16.msra.mxu0 %v6158
        %6168 = vmatprep.subr.bf16.mxu0 0
        %6169 = vmatpush1.bf16.msra.mxu0 %v6159
        %6170 = vmatprep.subr.bf16.mxu0 0
        %6171 = vmatpush1.bf16.msra.mxu0 %v6160
        %6172 = vmatprep.subr.bf16.mxu0 0
        %6173 = vmatpush1.bf16.msra.mxu0 %v6161
        %6174 = vmatprep.subr.bf16.mxu0 0
        %6175 = vmatpush1.bf16.msra.mxu0 0
        %6176 = vmatprep.subr.bf16.mxu0 0
        %6177 = vmatpush1.bf16.msra.mxu0 0
        %6178 = vmatprep.subr.bf16.mxu0 0
        %6179 = vmatpush1.bf16.msra.mxu0 0
        %6180 = vmatprep.subr.bf16.mxu0 0
        %6181 = vmatpush1.bf16.msra.mxu0 0
        %6182 = vmatprep.subr.bf16.mxu0 0
        %6183 = vmatpush1.bf16.msra.mxu0 0
        %6184 = vmatprep.subr.bf16.mxu0 0
        %6185 = vmatpush1.bf16.msra.mxu0 0
        %6186 = vmatprep.subr.bf16.mxu0 0
        %6187 = vmatpush1.bf16.msra.mxu0 0
        %6188 = vmatprep.subr.bf16.mxu0 0
        %6189 = vmatpush1.bf16.msra.mxu0 0
        %6190 = vmatprep.subr.bf16.mxu0 0
        %6191 = vmatpush1.bf16.msra.mxu0 0
        %6192 = vmatprep.subr.bf16.mxu0 0
        %6193 = vmatpush1.bf16.msra.mxu0 0
        %6194 = vmatprep.subr.bf16.mxu0 0
        %6195 = vmatpush1.bf16.msra.mxu0 0
        %6196 = vmatprep.subr.bf16.mxu0 0
        %6197 = vmatpush1.bf16.msra.mxu0 0
        %6198 = vmatprep.mubr.bf16.mxu0 0
        %6199 = vmatmul.mubr.bf16.gmra.mrb[0].mxu0 %v5787
        %v6200 = vpop.f32.mrb[0].mxu0
        %v6201 = vadd.f32 0.0, %v6200
        %v6202 = vpop.f32.mrb[0].mxu0
        %v6203 = vpop.f32.mrb[0].mxu0
        %v6204 = vadd.f32 0.0, %v6203
        %v6205 = vpop.f32.mrb[0].mxu0
        %6206 = vmatprep.mubr.bf16.mxu0 0
        %6207 = vmatmul.mubr.bf16.gmra.mrb[0].mxu0 %v5790
        %v6208 = vpop.f32.mrb[0].mxu0
        %v6209 = vadd.f32 0.0, %v6208
        %v6210 = vpop.f32.mrb[0].mxu0
        %v6211 = vpop.f32.mrb[0].mxu0
        %v6212 = vadd.f32 0.0, %v6211
        %v6213 = vpop.f32.mrb[0].mxu0
        %6214 = vmatprep.mubr.bf16.mxu0 0
        %6215 = vmatmul.mubr.bf16.gmra.mrb[0].mxu0 %v5793
        %v6216 = vpop.f32.mrb[0].mxu0
        %v6217 = vadd.f32 0.0, %v6216
        %v6218 = vpop.f32.mrb[0].mxu0
        %v6219 = vpop.f32.mrb[0].mxu0
        %v6220 = vadd.f32 0.0, %v6219
        %v6221 = vpop.f32.mrb[0].mxu0
        %6222 = vmatprep.mubr.bf16.mxu0 0
        %6223 = vmatmul.mubr.bf16.gmra.mrb[0].mxu0 %v5796
        %v6224 = vpop.f32.mrb[0].mxu0
        %v6225 = vadd.f32 0.0, %v6224
        %v6226 = vpop.f32.mrb[0].mxu0
        %v6227 = vpop.f32.mrb[0].mxu0
        %v6228 = vadd.f32 0.0, %v6227
        %v6229 = vpop.f32.mrb[0].mxu0
        %6230 = vmatprep.mubr.bf16.mxu0 0
        %6231 = vmatmul.mubr.bf16.gmra.mrb[0].mxu0 %v5799
        %v6232 = vpop.f32.mrb[0].mxu0
        %v6233 = vadd.f32 0.0, %v6232
        %v6234 = vpop.f32.mrb[0].mxu0
        %v6235 = vpop.f32.mrb[0].mxu0
        %v6236 = vadd.f32 0.0, %v6235
        %v6237 = vpop.f32.mrb[0].mxu0
        %6238 = vmatprep.mubr.bf16.mxu0 0
        %6239 = vmatmul.mubr.bf16.gmra.mrb[0].mxu0 %v5802
        %v6240 = vpop.f32.mrb[0].mxu0
        %v6241 = vadd.f32 0.0, %v6240
        %v6242 = vpop.f32.mrb[0].mxu0
        %v6243 = vpop.f32.mrb[0].mxu0
        %v6244 = vadd.f32 0.0, %v6243
        %v6245 = vpop.f32.mrb[0].mxu0
        %6246 = vmatprep.mubr.bf16.mxu0 0
        %6247 = vmatmul.mubr.bf16.gmra.mrb[0].mxu0 %v5805
        %v6248 = vpop.f32.mrb[0].mxu0
        %v6249 = vadd.f32 0.0, %v6248
        %v6250 = vpop.f32.mrb[0].mxu0
        %v6251 = vpop.f32.mrb[0].mxu0
        %v6252 = vadd.f32 0.0, %v6251
        %v6253 = vpop.f32.mrb[0].mxu0
        %6254 = vmatprep.mubr.bf16.mxu0 0
        %6255 = vmatmul.mubr.bf16.gmra.mrb[0].mxu0 %v5808
        %v6256 = vpop.f32.mrb[0].mxu0
        %v6257 = vadd.f32 0.0, %v6256
        %v6258 = vpop.f32.mrb[0].mxu0
        %v6259 = vpop.f32.mrb[0].mxu0
        %v6260 = vadd.f32 0.0, %v6259
        %v6261 = vpop.f32.mrb[0].mxu0
        %6262 = vdwg.mxu0
        %v6263 = vld [vmem:[#allocation4 + $0x2a] sm:$0xff]
        %v6264 = vld [vmem:[#allocation4 + $0x32] sm:$0xff]
        %v6265 = vld [vmem:[#allocation4 + $0x3a] sm:$0xff]
        %v6266 = vld [vmem:[#allocation4 + $0x42] sm:$0xff]
        %v6267 = vld [vmem:[#allocation4 + $0x4a] sm:$0xff]
        %v6268 = vld [vmem:[#allocation4 + $0x52] sm:$0xff]
        %v6269 = vld [vmem:[#allocation4 + $0x5a] sm:$0xff]
        %v6270 = vld [vmem:[#allocation4 + $0x62] sm:$0xff]
        %v6271 = vld [vmem:[#allocation4 + $0x6a] sm:$0xff]
        %v6272 = vld [vmem:[#allocation4 + $0x72] sm:$0xff]
        %v6273 = vld [vmem:[#allocation4 + $0x7a] sm:$0xff]
        %v6274 = vld [vmem:[#allocation4 + $0x82] sm:$0xff]
        %v6275 = vld [vmem:[#allocation4 + $0x8a] sm:$0xff]
        %v6276 = vld [vmem:[#allocation4 + $0x92] sm:$0xff]
        %v6277 = vld [vmem:[#allocation4 + $0x9a] sm:$0xff]
        %v6278 = vld [vmem:[#allocation4 + $0xa2] sm:$0x1]
        %v6279 = vadd.f32 %v6263, %v6201
        %v6280 = vadd.f32 %v6264, %v6204
        %v6281 = vadd.f32 %v6265, %v6209
        %v6282 = vadd.f32 %v6266, %v6212
        %v6283 = vadd.f32 %v6267, %v6217
        %v6284 = vadd.f32 %v6268, %v6220
        %v6285 = vadd.f32 %v6269, %v6225
        %v6286 = vadd.f32 %v6270, %v6228
        %v6287 = vadd.f32 %v6271, %v6233
        %v6288 = vadd.f32 %v6272, %v6236
        %v6289 = vadd.f32 %v6273, %v6241
        %v6290 = vadd.f32 %v6274, %v6244
        %v6291 = vadd.f32 %v6275, %v6249
        %v6292 = vadd.f32 %v6276, %v6252
        %v6293 = vadd.f32 %v6277, %v6257
        %v6294 = vadd.f32 %v6278, %v6260
        %6295 = vst [vmem:[#allocation4 + $0x2a] sm:$0xff] %v6279
        %6296 = vst [vmem:[#allocation4 + $0x32] sm:$0xff] %v6280
        %6297 = vst [vmem:[#allocation4 + $0x3a] sm:$0xff] %v6281
        %6298 = vst [vmem:[#allocation4 + $0x42] sm:$0xff] %v6282
        %6299 = vst [vmem:[#allocation4 + $0x4a] sm:$0xff] %v6283
        %6300 = vst [vmem:[#allocation4 + $0x52] sm:$0xff] %v6284
        %6301 = vst [vmem:[#allocation4 + $0x5a] sm:$0xff] %v6285
        %6302 = vst [vmem:[#allocation4 + $0x62] sm:$0xff] %v6286
        %6303 = vst [vmem:[#allocation4 + $0x6a] sm:$0xff] %v6287
        %6304 = vst [vmem:[#allocation4 + $0x72] sm:$0xff] %v6288
        %6305 = vst [vmem:[#allocation4 + $0x7a] sm:$0xff] %v6289
        %6306 = vst [vmem:[#allocation4 + $0x82] sm:$0xff] %v6290
        %6307 = vst [vmem:[#allocation4 + $0x8a] sm:$0xff] %v6291
        %6308 = vst [vmem:[#allocation4 + $0x92] sm:$0xff] %v6292
        %6309 = vst [vmem:[#allocation4 + $0x9a] sm:$0xff] %v6293
        %6310 = vst [vmem:[#allocation4 + $0xa2] sm:$0x1] %v6294
        %s6311 = scalar_lea.vmem %s5, 96
        %v6312 = vld [vmem:[%s6311] sm:$0xf]
        %v6313 = vld [vmem:[%s6311 + $0x4] sm:$0xf]
        %v6314 = vld [vmem:[%s6311 + $0x8] sm:$0xf]
        %v6315 = vld [vmem:[%s6311 + $0xc] sm:$0xf]
        %v6316 = vld [vmem:[%s6311 + $0x10] sm:$0xf]
        %v6317 = vld [vmem:[%s6311 + $0x14] sm:$0xf]
        %v6318 = vld [vmem:[%s6311 + $0x18] sm:$0xf]
        %v6319 = vld [vmem:[%s6311 + $0x1c] sm:$0xf]
        %v6328 = vunpack.c.l.b16 %v6312
        %v6329 = vunpack.c.l.b16 %v6313
        %v6330 = vunpack.c.l.b16 %v6314
        %v6331 = vunpack.c.l.b16 %v6315
        %v6332 = vunpack.c.l.b16 %v6316
        %v6333 = vunpack.c.l.b16 %v6317
        %v6334 = vunpack.c.l.b16 %v6318
        %v6335 = vunpack.c.l.b16 %v6319
        %v6336 = vpack.c.b16 %v6329, %v6328
        %v6337 = vpack.c.b16 %v6331, %v6330
        %v6338 = vpack.c.b16 %v6333, %v6332
        %v6339 = vpack.c.b16 %v6335, %v6334
        %6344 = vmatprep.subr.bf16.mxu0 0
        %6345 = vmatpush1.bf16.msra.mxu0 %v6336
        %6346 = vmatprep.subr.bf16.mxu0 0
        %6347 = vmatpush1.bf16.msra.mxu0 %v6337
        %6348 = vmatprep.subr.bf16.mxu0 0
        %6349 = vmatpush1.bf16.msra.mxu0 %v6338
        %6350 = vmatprep.subr.bf16.mxu0 0
        %6351 = vmatpush1.bf16.msra.mxu0 %v6339
        %6352 = vmatprep.subr.bf16.mxu0 0
        %6353 = vmatpush1.bf16.msra.mxu0 0
        %6354 = vmatprep.subr.bf16.mxu0 0
        %6355 = vmatpush1.bf16.msra.mxu0 0
        %6356 = vmatprep.subr.bf16.mxu0 0
        %6357 = vmatpush1.bf16.msra.mxu0 0
        %6358 = vmatprep.subr.bf16.mxu0 0
        %6359 = vmatpush1.bf16.msra.mxu0 0
        %6360 = vmatprep.subr.bf16.mxu0 0
        %6361 = vmatpush1.bf16.msra.mxu0 0
        %6362 = vmatprep.subr.bf16.mxu0 0
        %6363 = vmatpush1.bf16.msra.mxu0 0
        %6364 = vmatprep.subr.bf16.mxu0 0
        %6365 = vmatpush1.bf16.msra.mxu0 0
        %6366 = vmatprep.subr.bf16.mxu0 0
        %6367 = vmatpush1.bf16.msra.mxu0 0
        %6368 = vmatprep.subr.bf16.mxu0 0
        %6369 = vmatpush1.bf16.msra.mxu0 0
        %6370 = vmatprep.subr.bf16.mxu0 0
        %6371 = vmatpush1.bf16.msra.mxu0 0
        %6372 = vmatprep.subr.bf16.mxu0 0
        %6373 = vmatpush1.bf16.msra.mxu0 0
        %6374 = vmatprep.subr.bf16.mxu0 0
        %6375 = vmatpush1.bf16.msra.mxu0 0
        %6376 = vmatprep.mubr.bf16.mxu0 0
        %6377 = vmatmul.mubr.bf16.gmra.mrb[0].mxu0 %v5787
        %v6378 = vpop.f32.mrb[0].mxu0
        %v6379 = vadd.f32 0.0, %v6378
        %v6380 = vpop.f32.mrb[0].mxu0
        %v6381 = vpop.f32.mrb[0].mxu0
        %v6382 = vadd.f32 0.0, %v6381
        %v6383 = vpop.f32.mrb[0].mxu0
        %6384 = vmatprep.mubr.bf16.mxu0 0
        %6385 = vmatmul.mubr.bf16.gmra.mrb[0].mxu0 %v5790
        %v6386 = vpop.f32.mrb[0].mxu0
        %v6387 = vadd.f32 0.0, %v6386
        %v6388 = vpop.f32.mrb[0].mxu0
        %v6389 = vpop.f32.mrb[0].mxu0
        %v6390 = vadd.f32 0.0, %v6389
        %v6391 = vpop.f32.mrb[0].mxu0
        %6392 = vmatprep.mubr.bf16.mxu0 0
        %6393 = vmatmul.mubr.bf16.gmra.mrb[0].mxu0 %v5793
        %v6394 = vpop.f32.mrb[0].mxu0
        %v6395 = vadd.f32 0.0, %v6394
        %v6396 = vpop.f32.mrb[0].mxu0
        %v6397 = vpop.f32.mrb[0].mxu0
        %v6398 = vadd.f32 0.0, %v6397
        %v6399 = vpop.f32.mrb[0].mxu0
        %6400 = vmatprep.mubr.bf16.mxu0 0
        %6401 = vmatmul.mubr.bf16.gmra.mrb[0].mxu0 %v5796
        %v6402 = vpop.f32.mrb[0].mxu0
        %v6403 = vadd.f32 0.0, %v6402
        %v6404 = vpop.f32.mrb[0].mxu0
        %v6405 = vpop.f32.mrb[0].mxu0
        %v6406 = vadd.f32 0.0, %v6405
        %v6407 = vpop.f32.mrb[0].mxu0
        %6408 = vmatprep.mubr.bf16.mxu0 0
        %6409 = vmatmul.mubr.bf16.gmra.mrb[0].mxu0 %v5799
        %v6410 = vpop.f32.mrb[0].mxu0
        %v6411 = vadd.f32 0.0, %v6410
        %v6412 = vpop.f32.mrb[0].mxu0
        %v6413 = vpop.f32.mrb[0].mxu0
        %v6414 = vadd.f32 0.0, %v6413
        %v6415 = vpop.f32.mrb[0].mxu0
        %6416 = vmatprep.mubr.bf16.mxu0 0
        %6417 = vmatmul.mubr.bf16.gmra.mrb[0].mxu0 %v5802
        %v6418 = vpop.f32.mrb[0].mxu0
        %v6419 = vadd.f32 0.0, %v6418
        %v6420 = vpop.f32.mrb[0].mxu0
        %v6421 = vpop.f32.mrb[0].mxu0
        %v6422 = vadd.f32 0.0, %v6421
        %v6423 = vpop.f32.mrb[0].mxu0
        %6424 = vmatprep.mubr.bf16.mxu0 0
        %6425 = vmatmul.mubr.bf16.gmra.mrb[0].mxu0 %v5805
        %v6426 = vpop.f32.mrb[0].mxu0
        %v6427 = vadd.f32 0.0, %v6426
        %v6428 = vpop.f32.mrb[0].mxu0
        %v6429 = vpop.f32.mrb[0].mxu0
        %v6430 = vadd.f32 0.0, %v6429
        %v6431 = vpop.f32.mrb[0].mxu0
        %6432 = vmatprep.mubr.bf16.mxu0 0
        %6433 = vmatmul.mubr.bf16.gmra.mrb[0].mxu0 %v5808
        %v6434 = vpop.f32.mrb[0].mxu0
        %v6435 = vadd.f32 0.0, %v6434
        %v6436 = vpop.f32.mrb[0].mxu0
        %v6437 = vpop.f32.mrb[0].mxu0
        %v6438 = vadd.f32 0.0, %v6437
        %v6439 = vpop.f32.mrb[0].mxu0
        %6440 = vdwg.mxu0
        %v6441 = vld [vmem:[#allocation4 + $0x21] sm:$0xff]
        %v6442 = vld [vmem:[#allocation4 + $0x29] sm:$0xff]
        %v6443 = vld [vmem:[#allocation4 + $0x31] sm:$0xff]
        %v6444 = vld [vmem:[#allocation4 + $0x39] sm:$0xff]
        %v6445 = vld [vmem:[#allocation4 + $0x41] sm:$0xff]
        %v6446 = vld [vmem:[#allocation4 + $0x49] sm:$0xff]
        %v6447 = vld [vmem:[#allocation4 + $0x51] sm:$0xff]
        %v6448 = vld [vmem:[#allocation4 + $0x59] sm:$0xff]
        %v6449 = vld [vmem:[#allocation4 + $0x61] sm:$0xff]
        %v6450 = vld [vmem:[#allocation4 + $0x69] sm:$0xff]
        %v6451 = vld [vmem:[#allocation4 + $0x71] sm:$0xff]
        %v6452 = vld [vmem:[#allocation4 + $0x79] sm:$0xff]
        %v6453 = vld [vmem:[#allocation4 + $0x81] sm:$0xff]
        %v6454 = vld [vmem:[#allocation4 + $0x89] sm:$0xff]
        %v6455 = vld [vmem:[#allocation4 + $0x91] sm:$0xff]
        %v6456 = vld [vmem:[#allocation4 + $0x99] sm:$0x1]
        %v6457 = vadd.f32 %v6441, %v6379
        %v6458 = vadd.f32 %v6442, %v6382
        %v6459 = vadd.f32 %v6443, %v6387
        %v6460 = vadd.f32 %v6444, %v6390
        %v6461 = vadd.f32 %v6445, %v6395
        %v6462 = vadd.f32 %v6446, %v6398
        %v6463 = vadd.f32 %v6447, %v6403
        %v6464 = vadd.f32 %v6448, %v6406
        %v6465 = vadd.f32 %v6449, %v6411
        %v6466 = vadd.f32 %v6450, %v6414
        %v6467 = vadd.f32 %v6451, %v6419
        %v6468 = vadd.f32 %v6452, %v6422
        %v6469 = vadd.f32 %v6453, %v6427
        %v6470 = vadd.f32 %v6454, %v6430
        %v6471 = vadd.f32 %v6455, %v6435
        %v6472 = vadd.f32 %v6456, %v6438
        %6473 = vst [vmem:[#allocation4 + $0x21] sm:$0xff] %v6457
        %6474 = vst [vmem:[#allocation4 + $0x29] sm:$0xff] %v6458
        %6475 = vst [vmem:[#allocation4 + $0x31] sm:$0xff] %v6459
        %6476 = vst [vmem:[#allocation4 + $0x39] sm:$0xff] %v6460
        %6477 = vst [vmem:[#allocation4 + $0x41] sm:$0xff] %v6461
        %6478 = vst [vmem:[#allocation4 + $0x49] sm:$0xff] %v6462
        %6479 = vst [vmem:[#allocation4 + $0x51] sm:$0xff] %v6463
        %6480 = vst [vmem:[#allocation4 + $0x59] sm:$0xff] %v6464
        %6481 = vst [vmem:[#allocation4 + $0x61] sm:$0xff] %v6465
        %6482 = vst [vmem:[#allocation4 + $0x69] sm:$0xff] %v6466
        %6483 = vst [vmem:[#allocation4 + $0x71] sm:$0xff] %v6467
        %6484 = vst [vmem:[#allocation4 + $0x79] sm:$0xff] %v6468
        %6485 = vst [vmem:[#allocation4 + $0x81] sm:$0xff] %v6469
        %6486 = vst [vmem:[#allocation4 + $0x89] sm:$0xff] %v6470
        %6487 = vst [vmem:[#allocation4 + $0x91] sm:$0xff] %v6471
        %6488 = vst [vmem:[#allocation4 + $0x99] sm:$0x1] %v6472
        %s6489 = scalar_lea.vmem %s5, 128
        %v6490 = vld [vmem:[%s6489] sm:$0xf]
        %v6491 = vld [vmem:[%s6489 + $0x4] sm:$0xf]
        %v6492 = vld [vmem:[%s6489 + $0x8] sm:$0xf]
        %v6493 = vld [vmem:[%s6489 + $0xc] sm:$0xf]
        %v6494 = vld [vmem:[%s6489 + $0x10] sm:$0xf]
        %v6495 = vld [vmem:[%s6489 + $0x14] sm:$0xf]
        %v6496 = vld [vmem:[%s6489 + $0x18] sm:$0xf]
        %v6497 = vld [vmem:[%s6489 + $0x1c] sm:$0xf]
        %v6506 = vunpack.c.l.b16 %v6490
        %v6507 = vunpack.c.l.b16 %v6491
        %v6508 = vunpack.c.l.b16 %v6492
        %v6509 = vunpack.c.l.b16 %v6493
        %v6510 = vunpack.c.l.b16 %v6494
        %v6511 = vunpack.c.l.b16 %v6495
        %v6512 = vunpack.c.l.b16 %v6496
        %v6513 = vunpack.c.l.b16 %v6497
        %v6514 = vpack.c.b16 %v6507, %v6506
        %v6515 = vpack.c.b16 %v6509, %v6508
        %v6516 = vpack.c.b16 %v6511, %v6510
        %v6517 = vpack.c.b16 %v6513, %v6512
        %6522 = vmatprep.subr.bf16.mxu0 0
        %6523 = vmatpush1.bf16.msra.mxu0 %v6514
        %6524 = vmatprep.subr.bf16.mxu0 0
        %6525 = vmatpush1.bf16.msra.mxu0 %v6515
        %6526 = vmatprep.subr.bf16.mxu0 0
        %6527 = vmatpush1.bf16.msra.mxu0 %v6516
        %6528 = vmatprep.subr.bf16.mxu0 0
        %6529 = vmatpush1.bf16.msra.mxu0 %v6517
        %6530 = vmatprep.subr.bf16.mxu0 0
        %6531 = vmatpush1.bf16.msra.mxu0 0
        %6532 = vmatprep.subr.bf16.mxu0 0
        %6533 = vmatpush1.bf16.msra.mxu0 0
        %6534 = vmatprep.subr.bf16.mxu0 0
        %6535 = vmatpush1.bf16.msra.mxu0 0
        %6536 = vmatprep.subr.bf16.mxu0 0
        %6537 = vmatpush1.bf16.msra.mxu0 0
        %6538 = vmatprep.subr.bf16.mxu0 0
        %6539 = vmatpush1.bf16.msra.mxu0 0
        %6540 = vmatprep.subr.bf16.mxu0 0
        %6541 = vmatpush1.bf16.msra.mxu0 0
        %6542 = vmatprep.subr.bf16.mxu0 0
        %6543 = vmatpush1.bf16.msra.mxu0 0
        %6544 = vmatprep.subr.bf16.mxu0 0
        %6545 = vmatpush1.bf16.msra.mxu0 0
        %6546 = vmatprep.subr.bf16.mxu0 0
        %6547 = vmatpush1.bf16.msra.mxu0 0
        %6548 = vmatprep.subr.bf16.mxu0 0
        %6549 = vmatpush1.bf16.msra.mxu0 0
        %6550 = vmatprep.subr.bf16.mxu0 0
        %6551 = vmatpush1.bf16.msra.mxu0 0
        %6552 = vmatprep.subr.bf16.mxu0 0
        %6553 = vmatpush1.bf16.msra.mxu0 0
        %6554 = vmatprep.mubr.bf16.mxu0 0
        %6555 = vmatmul.mubr.bf16.gmra.mrb[0].mxu0 %v5787
        %v6556 = vpop.f32.mrb[0].mxu0
        %v6557 = vadd.f32 0.0, %v6556
        %v6558 = vpop.f32.mrb[0].mxu0
        %v6559 = vpop.f32.mrb[0].mxu0
        %v6560 = vadd.f32 0.0, %v6559
        %v6561 = vpop.f32.mrb[0].mxu0
        %6562 = vmatprep.mubr.bf16.mxu0 0
        %6563 = vmatmul.mubr.bf16.gmra.mrb[0].mxu0 %v5790
        %v6564 = vpop.f32.mrb[0].mxu0
        %v6565 = vadd.f32 0.0, %v6564
        %v6566 = vpop.f32.mrb[0].mxu0
        %v6567 = vpop.f32.mrb[0].mxu0
        %v6568 = vadd.f32 0.0, %v6567
        %v6569 = vpop.f32.mrb[0].mxu0
        %6570 = vmatprep.mubr.bf16.mxu0 0
        %6571 = vmatmul.mubr.bf16.gmra.mrb[0].mxu0 %v5793
        %v6572 = vpop.f32.mrb[0].mxu0
        %v6573 = vadd.f32 0.0, %v6572
        %v6574 = vpop.f32.mrb[0].mxu0
        %v6575 = vpop.f32.mrb[0].mxu0
        %v6576 = vadd.f32 0.0, %v6575
        %v6577 = vpop.f32.mrb[0].mxu0
        %6578 = vmatprep.mubr.bf16.mxu0 0
        %6579 = vmatmul.mubr.bf16.gmra.mrb[0].mxu0 %v5796
        %v6580 = vpop.f32.mrb[0].mxu0
        %v6581 = vadd.f32 0.0, %v6580
        %v6582 = vpop.f32.mrb[0].mxu0
        %v6583 = vpop.f32.mrb[0].mxu0
        %v6584 = vadd.f32 0.0, %v6583
        %v6585 = vpop.f32.mrb[0].mxu0
        %6586 = vmatprep.mubr.bf16.mxu0 0
        %6587 = vmatmul.mubr.bf16.gmra.mrb[0].mxu0 %v5799
        %v6588 = vpop.f32.mrb[0].mxu0
        %v6589 = vadd.f32 0.0, %v6588
        %v6590 = vpop.f32.mrb[0].mxu0
        %v6591 = vpop.f32.mrb[0].mxu0
        %v6592 = vadd.f32 0.0, %v6591
        %v6593 = vpop.f32.mrb[0].mxu0
        %6594 = vmatprep.mubr.bf16.mxu0 0
        %6595 = vmatmul.mubr.bf16.gmra.mrb[0].mxu0 %v5802
        %v6596 = vpop.f32.mrb[0].mxu0
        %v6597 = vadd.f32 0.0, %v6596
        %v6598 = vpop.f32.mrb[0].mxu0
        %v6599 = vpop.f32.mrb[0].mxu0
        %v6600 = vadd.f32 0.0, %v6599
        %v6601 = vpop.f32.mrb[0].mxu0
        %6602 = vmatprep.mubr.bf16.mxu0 0
        %6603 = vmatmul.mubr.bf16.gmra.mrb[0].mxu0 %v5805
        %v6604 = vpop.f32.mrb[0].mxu0
        %v6605 = vadd.f32 0.0, %v6604
        %v6606 = vpop.f32.mrb[0].mxu0
        %v6607 = vpop.f32.mrb[0].mxu0
        %v6608 = vadd.f32 0.0, %v6607
        %v6609 = vpop.f32.mrb[0].mxu0
        %6610 = vmatprep.mubr.bf16.mxu0 0
        %6611 = vmatmul.mubr.bf16.gmra.mrb[0].mxu0 %v5808
        %v6612 = vpop.f32.mrb[0].mxu0
        %v6613 = vadd.f32 0.0, %v6612
        %v6614 = vpop.f32.mrb[0].mxu0
        %v6615 = vpop.f32.mrb[0].mxu0
        %v6616 = vadd.f32 0.0, %v6615
        %v6617 = vpop.f32.mrb[0].mxu0
        %6618 = vdwg.mxu0
        %v6619 = vld [vmem:[#allocation4 + $0x20] sm:$0xff]
        %v6620 = vld [vmem:[#allocation4 + $0x28] sm:$0xff]
        %v6621 = vld [vmem:[#allocation4 + $0x30] sm:$0xff]
        %v6622 = vld [vmem:[#allocation4 + $0x38] sm:$0xff]
        %v6623 = vld [vmem:[#allocation4 + $0x40] sm:$0xff]
        %v6624 = vld [vmem:[#allocation4 + $0x48] sm:$0xff]
        %v6625 = vld [vmem:[#allocation4 + $0x50] sm:$0xff]
        %v6626 = vld [vmem:[#allocation4 + $0x58] sm:$0xff]
        %v6627 = vld [vmem:[#allocation4 + $0x60] sm:$0xff]
        %v6628 = vld [vmem:[#allocation4 + $0x68] sm:$0xff]
        %v6629 = vld [vmem:[#allocation4 + $0x70] sm:$0xff]
        %v6630 = vld [vmem:[#allocation4 + $0x78] sm:$0xff]
        %v6631 = vld [vmem:[#allocation4 + $0x80] sm:$0xff]
        %v6632 = vld [vmem:[#allocation4 + $0x88] sm:$0xff]
        %v6633 = vld [vmem:[#allocation4 + $0x90] sm:$0xff]
        %v6634 = vld [vmem:[#allocation4 + $0x98] sm:$0x1]
        %v6635 = vadd.f32 %v6619, %v6557
        %v6636 = vadd.f32 %v6620, %v6560
        %v6637 = vadd.f32 %v6621, %v6565
        %v6638 = vadd.f32 %v6622, %v6568
        %v6639 = vadd.f32 %v6623, %v6573
        %v6640 = vadd.f32 %v6624, %v6576
        %v6641 = vadd.f32 %v6625, %v6581
        %v6642 = vadd.f32 %v6626, %v6584
        %v6643 = vadd.f32 %v6627, %v6589
        %v6644 = vadd.f32 %v6628, %v6592
        %v6645 = vadd.f32 %v6629, %v6597
        %v6646 = vadd.f32 %v6630, %v6600
        %v6647 = vadd.f32 %v6631, %v6605
        %v6648 = vadd.f32 %v6632, %v6608
        %v6649 = vadd.f32 %v6633, %v6613
        %v6650 = vadd.f32 %v6634, %v6616
        %6651 = vst [vmem:[#allocation4 + $0x20] sm:$0xff] %v6635
        %6652 = vst [vmem:[#allocation4 + $0x28] sm:$0xff] %v6636
        %6653 = vst [vmem:[#allocation4 + $0x30] sm:$0xff] %v6637
        %6654 = vst [vmem:[#allocation4 + $0x38] sm:$0xff] %v6638
        %6655 = vst [vmem:[#allocation4 + $0x40] sm:$0xff] %v6639
        %6656 = vst [vmem:[#allocation4 + $0x48] sm:$0xff] %v6640
        %6657 = vst [vmem:[#allocation4 + $0x50] sm:$0xff] %v6641
        %6658 = vst [vmem:[#allocation4 + $0x58] sm:$0xff] %v6642
        %6659 = vst [vmem:[#allocation4 + $0x60] sm:$0xff] %v6643
        %6660 = vst [vmem:[#allocation4 + $0x68] sm:$0xff] %v6644
        %6661 = vst [vmem:[#allocation4 + $0x70] sm:$0xff] %v6645
        %6662 = vst [vmem:[#allocation4 + $0x78] sm:$0xff] %v6646
        %6663 = vst [vmem:[#allocation4 + $0x80] sm:$0xff] %v6647
        %6664 = vst [vmem:[#allocation4 + $0x88] sm:$0xff] %v6648
        %6665 = vst [vmem:[#allocation4 + $0x90] sm:$0xff] %v6649
        %6666 = vst [vmem:[#allocation4 + $0x98] sm:$0x1] %v6650
        %s6667 = scalar_lea.vmem %s5, 160
        %v6668 = vld [vmem:[%s6667] sm:$0xf]
        %v6669 = vld [vmem:[%s6667 + $0x4] sm:$0xf]
        %v6670 = vld [vmem:[%s6667 + $0x8] sm:$0xf]
        %v6671 = vld [vmem:[%s6667 + $0xc] sm:$0xf]
        %v6672 = vld [vmem:[%s6667 + $0x10] sm:$0xf]
        %v6673 = vld [vmem:[%s6667 + $0x14] sm:$0xf]
        %v6674 = vld [vmem:[%s6667 + $0x18] sm:$0xf]
        %v6675 = vld [vmem:[%s6667 + $0x1c] sm:$0xf]
        %v6684 = vunpack.c.l.b16 %v6668
        %v6685 = vunpack.c.l.b16 %v6669
        %v6686 = vunpack.c.l.b16 %v6670
        %v6687 = vunpack.c.l.b16 %v6671
        %v6688 = vunpack.c.l.b16 %v6672
        %v6689 = vunpack.c.l.b16 %v6673
        %v6690 = vunpack.c.l.b16 %v6674
        %v6691 = vunpack.c.l.b16 %v6675
        %v6692 = vpack.c.b16 %v6685, %v6684
        %v6693 = vpack.c.b16 %v6687, %v6686
        %v6694 = vpack.c.b16 %v6689, %v6688
        %v6695 = vpack.c.b16 %v6691, %v6690
        %6700 = vmatprep.subr.bf16.mxu0 0
        %6701 = vmatpush1.bf16.msra.mxu0 %v6692
        %6702 = vmatprep.subr.bf16.mxu0 0
        %6703 = vmatpush1.bf16.msra.mxu0 %v6693
        %6704 = vmatprep.subr.bf16.mxu0 0
        %6705 = vmatpush1.bf16.msra.mxu0 %v6694
        %6706 = vmatprep.subr.bf16.mxu0 0
        %6707 = vmatpush1.bf16.msra.mxu0 %v6695
        %6708 = vmatprep.subr.bf16.mxu0 0
        %6709 = vmatpush1.bf16.msra.mxu0 0
        %6710 = vmatprep.subr.bf16.mxu0 0
        %6711 = vmatpush1.bf16.msra.mxu0 0
        %6712 = vmatprep.subr.bf16.mxu0 0
        %6713 = vmatpush1.bf16.msra.mxu0 0
        %6714 = vmatprep.subr.bf16.mxu0 0
        %6715 = vmatpush1.bf16.msra.mxu0 0
        %6716 = vmatprep.subr.bf16.mxu0 0
        %6717 = vmatpush1.bf16.msra.mxu0 0
        %6718 = vmatprep.subr.bf16.mxu0 0
        %6719 = vmatpush1.bf16.msra.mxu0 0
        %6720 = vmatprep.subr.bf16.mxu0 0
        %6721 = vmatpush1.bf16.msra.mxu0 0
        %6722 = vmatprep.subr.bf16.mxu0 0
        %6723 = vmatpush1.bf16.msra.mxu0 0
        %6724 = vmatprep.subr.bf16.mxu0 0
        %6725 = vmatpush1.bf16.msra.mxu0 0
        %6726 = vmatprep.subr.bf16.mxu0 0
        %6727 = vmatpush1.bf16.msra.mxu0 0
        %6728 = vmatprep.subr.bf16.mxu0 0
        %6729 = vmatpush1.bf16.msra.mxu0 0
        %6730 = vmatprep.subr.bf16.mxu0 0
        %6731 = vmatpush1.bf16.msra.mxu0 0
        %6732 = vmatprep.mubr.bf16.mxu0 0
        %6733 = vmatmul.mubr.bf16.gmra.mrb[0].mxu0 %v5787
        %v6734 = vpop.f32.mrb[0].mxu0
        %v6735 = vadd.f32 0.0, %v6734
        %v6736 = vpop.f32.mrb[0].mxu0
        %v6737 = vpop.f32.mrb[0].mxu0
        %v6738 = vadd.f32 0.0, %v6737
        %v6739 = vpop.f32.mrb[0].mxu0
        %6740 = vmatprep.mubr.bf16.mxu0 0
        %6741 = vmatmul.mubr.bf16.gmra.mrb[0].mxu0 %v5790
        %v6742 = vpop.f32.mrb[0].mxu0
        %v6743 = vadd.f32 0.0, %v6742
        %v6744 = vpop.f32.mrb[0].mxu0
        %v6745 = vpop.f32.mrb[0].mxu0
        %v6746 = vadd.f32 0.0, %v6745
        %v6747 = vpop.f32.mrb[0].mxu0
        %6748 = vmatprep.mubr.bf16.mxu0 0
        %6749 = vmatmul.mubr.bf16.gmra.mrb[0].mxu0 %v5793
        %v6750 = vpop.f32.mrb[0].mxu0
        %v6751 = vadd.f32 0.0, %v6750
        %v6752 = vpop.f32.mrb[0].mxu0
        %v6753 = vpop.f32.mrb[0].mxu0
        %v6754 = vadd.f32 0.0, %v6753
        %v6755 = vpop.f32.mrb[0].mxu0
        %6756 = vmatprep.mubr.bf16.mxu0 0
        %6757 = vmatmul.mubr.bf16.gmra.mrb[0].mxu0 %v5796
        %v6758 = vpop.f32.mrb[0].mxu0
        %v6759 = vadd.f32 0.0, %v6758
        %v6760 = vpop.f32.mrb[0].mxu0
        %v6761 = vpop.f32.mrb[0].mxu0
        %v6762 = vadd.f32 0.0, %v6761
        %v6763 = vpop.f32.mrb[0].mxu0
        %6764 = vmatprep.mubr.bf16.mxu0 0
        %6765 = vmatmul.mubr.bf16.gmra.mrb[0].mxu0 %v5799
        %v6766 = vpop.f32.mrb[0].mxu0
        %v6767 = vadd.f32 0.0, %v6766
        %v6768 = vpop.f32.mrb[0].mxu0
        %v6769 = vpop.f32.mrb[0].mxu0
        %v6770 = vadd.f32 0.0, %v6769
        %v6771 = vpop.f32.mrb[0].mxu0
        %6772 = vmatprep.mubr.bf16.mxu0 0
        %6773 = vmatmul.mubr.bf16.gmra.mrb[0].mxu0 %v5802
        %v6774 = vpop.f32.mrb[0].mxu0
        %v6775 = vadd.f32 0.0, %v6774
        %v6776 = vpop.f32.mrb[0].mxu0
        %v6777 = vpop.f32.mrb[0].mxu0
        %v6778 = vadd.f32 0.0, %v6777
        %v6779 = vpop.f32.mrb[0].mxu0
        %6780 = vmatprep.mubr.bf16.mxu0 0
        %6781 = vmatmul.mubr.bf16.gmra.mrb[0].mxu0 %v5805
        %v6782 = vpop.f32.mrb[0].mxu0
        %v6783 = vadd.f32 0.0, %v6782
        %v6784 = vpop.f32.mrb[0].mxu0
        %v6785 = vpop.f32.mrb[0].mxu0
        %v6786 = vadd.f32 0.0, %v6785
        %v6787 = vpop.f32.mrb[0].mxu0
        %6788 = vmatprep.mubr.bf16.mxu0 0
        %6789 = vmatmul.mubr.bf16.gmra.mrb[0].mxu0 %v5808
        %v6790 = vpop.f32.mrb[0].mxu0
        %v6791 = vadd.f32 0.0, %v6790
        %v6792 = vpop.f32.mrb[0].mxu0
        %v6793 = vpop.f32.mrb[0].mxu0
        %v6794 = vadd.f32 0.0, %v6793
        %v6795 = vpop.f32.mrb[0].mxu0
        %6796 = vdwg.mxu0
        %v6797 = vld [vmem:[#allocation4 + $0x1f] sm:$0xff]
        %v6798 = vld [vmem:[#allocation4 + $0x27] sm:$0xff]
        %v6799 = vld [vmem:[#allocation4 + $0x2f] sm:$0xff]
        %v6800 = vld [vmem:[#allocation4 + $0x37] sm:$0xff]
        %v6801 = vld [vmem:[#allocation4 + $0x3f] sm:$0xff]
        %v6802 = vld [vmem:[#allocation4 + $0x47] sm:$0xff]
        %v6803 = vld [vmem:[#allocation4 + $0x4f] sm:$0xff]
        %v6804 = vld [vmem:[#allocation4 + $0x57] sm:$0xff]
        %v6805 = vld [vmem:[#allocation4 + $0x5f] sm:$0xff]
        %v6806 = vld [vmem:[#allocation4 + $0x67] sm:$0xff]
        %v6807 = vld [vmem:[#allocation4 + $0x6f] sm:$0xff]
        %v6808 = vld [vmem:[#allocation4 + $0x77] sm:$0xff]
        %v6809 = vld [vmem:[#allocation4 + $0x7f] sm:$0xff]
        %v6810 = vld [vmem:[#allocation4 + $0x87] sm:$0xff]
        %v6811 = vld [vmem:[#allocation4 + $0x8f] sm:$0xff]
        %v6812 = vld [vmem:[#allocation4 + $0x97] sm:$0x1]
        %v6813 = vadd.f32 %v6797, %v6735
        %v6814 = vadd.f32 %v6798, %v6738
        %v6815 = vadd.f32 %v6799, %v6743
        %v6816 = vadd.f32 %v6800, %v6746
        %v6817 = vadd.f32 %v6801, %v6751
        %v6818 = vadd.f32 %v6802, %v6754
        %v6819 = vadd.f32 %v6803, %v6759
        %v6820 = vadd.f32 %v6804, %v6762
        %v6821 = vadd.f32 %v6805, %v6767
        %v6822 = vadd.f32 %v6806, %v6770
        %v6823 = vadd.f32 %v6807, %v6775
        %v6824 = vadd.f32 %v6808, %v6778
        %v6825 = vadd.f32 %v6809, %v6783
        %v6826 = vadd.f32 %v6810, %v6786
        %v6827 = vadd.f32 %v6811, %v6791
        %v6828 = vadd.f32 %v6812, %v6794
        %6829 = vst [vmem:[#allocation4 + $0x1f] sm:$0xff] %v6813
        %6830 = vst [vmem:[#allocation4 + $0x27] sm:$0xff] %v6814
        %6831 = vst [vmem:[#allocation4 + $0x2f] sm:$0xff] %v6815
        %6832 = vst [vmem:[#allocation4 + $0x37] sm:$0xff] %v6816
        %6833 = vst [vmem:[#allocation4 + $0x3f] sm:$0xff] %v6817
        %6834 = vst [vmem:[#allocation4 + $0x47] sm:$0xff] %v6818
        %6835 = vst [vmem:[#allocation4 + $0x4f] sm:$0xff] %v6819
        %6836 = vst [vmem:[#allocation4 + $0x57] sm:$0xff] %v6820
        %6837 = vst [vmem:[#allocation4 + $0x5f] sm:$0xff] %v6821
        %6838 = vst [vmem:[#allocation4 + $0x67] sm:$0xff] %v6822
        %6839 = vst [vmem:[#allocation4 + $0x6f] sm:$0xff] %v6823
        %6840 = vst [vmem:[#allocation4 + $0x77] sm:$0xff] %v6824
        %6841 = vst [vmem:[#allocation4 + $0x7f] sm:$0xff] %v6825
        %6842 = vst [vmem:[#allocation4 + $0x87] sm:$0xff] %v6826
        %6843 = vst [vmem:[#allocation4 + $0x8f] sm:$0xff] %v6827
        %6844 = vst [vmem:[#allocation4 + $0x97] sm:$0x1] %v6828
        %s6845 = scalar_lea.vmem %s5, 192
        %v6846 = vld [vmem:[%s6845] sm:$0xf]
        %v6847 = vld [vmem:[%s6845 + $0x4] sm:$0xf]
        %v6848 = vld [vmem:[%s6845 + $0x8] sm:$0xf]
        %v6849 = vld [vmem:[%s6845 + $0xc] sm:$0xf]
        %v6850 = vld [vmem:[%s6845 + $0x10] sm:$0xf]
        %v6851 = vld [vmem:[%s6845 + $0x14] sm:$0xf]
        %v6852 = vld [vmem:[%s6845 + $0x18] sm:$0xf]
        %v6853 = vld [vmem:[%s6845 + $0x1c] sm:$0xf]
        %v6862 = vunpack.c.l.b16 %v6846
        %v6863 = vunpack.c.l.b16 %v6847
        %v6864 = vunpack.c.l.b16 %v6848
        %v6865 = vunpack.c.l.b16 %v6849
        %v6866 = vunpack.c.l.b16 %v6850
        %v6867 = vunpack.c.l.b16 %v6851
        %v6868 = vunpack.c.l.b16 %v6852
        %v6869 = vunpack.c.l.b16 %v6853
        %v6870 = vpack.c.b16 %v6863, %v6862
        %v6871 = vpack.c.b16 %v6865, %v6864
        %v6872 = vpack.c.b16 %v6867, %v6866
        %v6873 = vpack.c.b16 %v6869, %v6868
        %6878 = vmatprep.subr.bf16.mxu0 0
        %6879 = vmatpush1.bf16.msra.mxu0 %v6870
        %6880 = vmatprep.subr.bf16.mxu0 0
        %6881 = vmatpush1.bf16.msra.mxu0 %v6871
        %6882 = vmatprep.subr.bf16.mxu0 0
        %6883 = vmatpush1.bf16.msra.mxu0 %v6872
        %6884 = vmatprep.subr.bf16.mxu0 0
        %6885 = vmatpush1.bf16.msra.mxu0 %v6873
        %6886 = vmatprep.subr.bf16.mxu0 0
        %6887 = vmatpush1.bf16.msra.mxu0 0
        %6888 = vmatprep.subr.bf16.mxu0 0
        %6889 = vmatpush1.bf16.msra.mxu0 0
        %6890 = vmatprep.subr.bf16.mxu0 0
        %6891 = vmatpush1.bf16.msra.mxu0 0
        %6892 = vmatprep.subr.bf16.mxu0 0
        %6893 = vmatpush1.bf16.msra.mxu0 0
        %6894 = vmatprep.subr.bf16.mxu0 0
        %6895 = vmatpush1.bf16.msra.mxu0 0
        %6896 = vmatprep.subr.bf16.mxu0 0
        %6897 = vmatpush1.bf16.msra.mxu0 0
        %6898 = vmatprep.subr.bf16.mxu0 0
        %6899 = vmatpush1.bf16.msra.mxu0 0
        %6900 = vmatprep.subr.bf16.mxu0 0
        %6901 = vmatpush1.bf16.msra.mxu0 0
        %6902 = vmatprep.subr.bf16.mxu0 0
        %6903 = vmatpush1.bf16.msra.mxu0 0
        %6904 = vmatprep.subr.bf16.mxu0 0
        %6905 = vmatpush1.bf16.msra.mxu0 0
        %6906 = vmatprep.subr.bf16.mxu0 0
        %6907 = vmatpush1.bf16.msra.mxu0 0
        %6908 = vmatprep.subr.bf16.mxu0 0
        %6909 = vmatpush1.bf16.msra.mxu0 0
        %6910 = vmatprep.mubr.bf16.mxu0 0
        %6911 = vmatmul.mubr.bf16.gmra.mrb[0].mxu0 %v5787
        %v6912 = vpop.f32.mrb[0].mxu0
        %v6913 = vadd.f32 0.0, %v6912
        %v6914 = vpop.f32.mrb[0].mxu0
        %v6915 = vpop.f32.mrb[0].mxu0
        %v6916 = vadd.f32 0.0, %v6915
        %v6917 = vpop.f32.mrb[0].mxu0
        %6918 = vmatprep.mubr.bf16.mxu0 0
        %6919 = vmatmul.mubr.bf16.gmra.mrb[0].mxu0 %v5790
        %v6920 = vpop.f32.mrb[0].mxu0
        %v6921 = vadd.f32 0.0, %v6920
        %v6922 = vpop.f32.mrb[0].mxu0
        %v6923 = vpop.f32.mrb[0].mxu0
        %v6924 = vadd.f32 0.0, %v6923
        %v6925 = vpop.f32.mrb[0].mxu0
        %6926 = vmatprep.mubr.bf16.mxu0 0
        %6927 = vmatmul.mubr.bf16.gmra.mrb[0].mxu0 %v5793
        %v6928 = vpop.f32.mrb[0].mxu0
        %v6929 = vadd.f32 0.0, %v6928
        %v6930 = vpop.f32.mrb[0].mxu0
        %v6931 = vpop.f32.mrb[0].mxu0
        %v6932 = vadd.f32 0.0, %v6931
        %v6933 = vpop.f32.mrb[0].mxu0
        %6934 = vmatprep.mubr.bf16.mxu0 0
        %6935 = vmatmul.mubr.bf16.gmra.mrb[0].mxu0 %v5796
        %v6936 = vpop.f32.mrb[0].mxu0
        %v6937 = vadd.f32 0.0, %v6936
        %v6938 = vpop.f32.mrb[0].mxu0
        %v6939 = vpop.f32.mrb[0].mxu0
        %v6940 = vadd.f32 0.0, %v6939
        %v6941 = vpop.f32.mrb[0].mxu0
        %6942 = vmatprep.mubr.bf16.mxu0 0
        %6943 = vmatmul.mubr.bf16.gmra.mrb[0].mxu0 %v5799
        %v6944 = vpop.f32.mrb[0].mxu0
        %v6945 = vadd.f32 0.0, %v6944
        %v6946 = vpop.f32.mrb[0].mxu0
        %v6947 = vpop.f32.mrb[0].mxu0
        %v6948 = vadd.f32 0.0, %v6947
        %v6949 = vpop.f32.mrb[0].mxu0
        %6950 = vmatprep.mubr.bf16.mxu0 0
        %6951 = vmatmul.mubr.bf16.gmra.mrb[0].mxu0 %v5802
        %v6952 = vpop.f32.mrb[0].mxu0
        %v6953 = vadd.f32 0.0, %v6952
        %v6954 = vpop.f32.mrb[0].mxu0
        %v6955 = vpop.f32.mrb[0].mxu0
        %v6956 = vadd.f32 0.0, %v6955
        %v6957 = vpop.f32.mrb[0].mxu0
        %6958 = vmatprep.mubr.bf16.mxu0 0
        %6959 = vmatmul.mubr.bf16.gmra.mrb[0].mxu0 %v5805
        %v6960 = vpop.f32.mrb[0].mxu0
        %v6961 = vadd.f32 0.0, %v6960
        %v6962 = vpop.f32.mrb[0].mxu0
        %v6963 = vpop.f32.mrb[0].mxu0
        %v6964 = vadd.f32 0.0, %v6963
        %v6965 = vpop.f32.mrb[0].mxu0
        %6966 = vmatprep.mubr.bf16.mxu0 0
        %6967 = vmatmul.mubr.bf16.gmra.mrb[0].mxu0 %v5808
        %v6968 = vpop.f32.mrb[0].mxu0
        %v6969 = vadd.f32 0.0, %v6968
        %v6970 = vpop.f32.mrb[0].mxu0
        %v6971 = vpop.f32.mrb[0].mxu0
        %v6972 = vadd.f32 0.0, %v6971
        %v6973 = vpop.f32.mrb[0].mxu0
        %6974 = vdwg.mxu0
        %v6975 = vld [vmem:[#allocation4 + $0x16] sm:$0xff]
        %v6976 = vld [vmem:[#allocation4 + $0x1e] sm:$0xff]
        %v6977 = vld [vmem:[#allocation4 + $0x26] sm:$0xff]
        %v6978 = vld [vmem:[#allocation4 + $0x2e] sm:$0xff]
        %v6979 = vld [vmem:[#allocation4 + $0x36] sm:$0xff]
        %v6980 = vld [vmem:[#allocation4 + $0x3e] sm:$0xff]
        %v6981 = vld [vmem:[#allocation4 + $0x46] sm:$0xff]
        %v6982 = vld [vmem:[#allocation4 + $0x4e] sm:$0xff]
        %v6983 = vld [vmem:[#allocation4 + $0x56] sm:$0xff]
        %v6984 = vld [vmem:[#allocation4 + $0x5e] sm:$0xff]
        %v6985 = vld [vmem:[#allocation4 + $0x66] sm:$0xff]
        %v6986 = vld [vmem:[#allocation4 + $0x6e] sm:$0xff]
        %v6987 = vld [vmem:[#allocation4 + $0x76] sm:$0xff]
        %v6988 = vld [vmem:[#allocation4 + $0x7e] sm:$0xff]
        %v6989 = vld [vmem:[#allocation4 + $0x86] sm:$0xff]
        %v6990 = vld [vmem:[#allocation4 + $0x8e] sm:$0x1]
        %v6991 = vadd.f32 %v6975, %v6913
        %v6992 = vadd.f32 %v6976, %v6916
        %v6993 = vadd.f32 %v6977, %v6921
        %v6994 = vadd.f32 %v6978, %v6924
        %v6995 = vadd.f32 %v6979, %v6929
        %v6996 = vadd.f32 %v6980, %v6932
        %v6997 = vadd.f32 %v6981, %v6937
        %v6998 = vadd.f32 %v6982, %v6940
        %v6999 = vadd.f32 %v6983, %v6945
        %v7000 = vadd.f32 %v6984, %v6948
        %v7001 = vadd.f32 %v6985, %v6953
        %v7002 = vadd.f32 %v6986, %v6956
        %v7003 = vadd.f32 %v6987, %v6961
        %v7004 = vadd.f32 %v6988, %v6964
        %v7005 = vadd.f32 %v6989, %v6969
        %v7006 = vadd.f32 %v6990, %v6972
        %7007 = vst [vmem:[#allocation4 + $0x16] sm:$0xff] %v6991
        %7008 = vst [vmem:[#allocation4 + $0x1e] sm:$0xff] %v6992
        %7009 = vst [vmem:[#allocation4 + $0x26] sm:$0xff] %v6993
        %7010 = vst [vmem:[#allocation4 + $0x2e] sm:$0xff] %v6994
        %7011 = vst [vmem:[#allocation4 + $0x36] sm:$0xff] %v6995
        %7012 = vst [vmem:[#allocation4 + $0x3e] sm:$0xff] %v6996
        %7013 = vst [vmem:[#allocation4 + $0x46] sm:$0xff] %v6997
        %7014 = vst [vmem:[#allocation4 + $0x4e] sm:$0xff] %v6998
        %7015 = vst [vmem:[#allocation4 + $0x56] sm:$0xff] %v6999
        %7016 = vst [vmem:[#allocation4 + $0x5e] sm:$0xff] %v7000
        %7017 = vst [vmem:[#allocation4 + $0x66] sm:$0xff] %v7001
        %7018 = vst [vmem:[#allocation4 + $0x6e] sm:$0xff] %v7002
        %7019 = vst [vmem:[#allocation4 + $0x76] sm:$0xff] %v7003
        %7020 = vst [vmem:[#allocation4 + $0x7e] sm:$0xff] %v7004
        %7021 = vst [vmem:[#allocation4 + $0x86] sm:$0xff] %v7005
        %7022 = vst [vmem:[#allocation4 + $0x8e] sm:$0x1] %v7006
        %s7023 = scalar_lea.vmem %s5, 224
        %v7024 = vld [vmem:[%s7023] sm:$0xf]
        %v7025 = vld [vmem:[%s7023 + $0x4] sm:$0xf]
        %v7026 = vld [vmem:[%s7023 + $0x8] sm:$0xf]
        %v7027 = vld [vmem:[%s7023 + $0xc] sm:$0xf]
        %v7028 = vld [vmem:[%s7023 + $0x10] sm:$0xf]
        %v7029 = vld [vmem:[%s7023 + $0x14] sm:$0xf]
        %v7030 = vld [vmem:[%s7023 + $0x18] sm:$0xf]
        %v7031 = vld [vmem:[%s7023 + $0x1c] sm:$0xf]
        %v7040 = vunpack.c.l.b16 %v7024
        %v7041 = vunpack.c.l.b16 %v7025
        %v7042 = vunpack.c.l.b16 %v7026
        %v7043 = vunpack.c.l.b16 %v7027
        %v7044 = vunpack.c.l.b16 %v7028
        %v7045 = vunpack.c.l.b16 %v7029
        %v7046 = vunpack.c.l.b16 %v7030
        %v7047 = vunpack.c.l.b16 %v7031
        %v7048 = vpack.c.b16 %v7041, %v7040
        %v7049 = vpack.c.b16 %v7043, %v7042
        %v7050 = vpack.c.b16 %v7045, %v7044
        %v7051 = vpack.c.b16 %v7047, %v7046
        %7056 = vmatprep.subr.bf16.mxu0 0
        %7057 = vmatpush1.bf16.msra.mxu0 %v7048
        %7058 = vmatprep.subr.bf16.mxu0 0
        %7059 = vmatpush1.bf16.msra.mxu0 %v7049
        %7060 = vmatprep.subr.bf16.mxu0 0
        %7061 = vmatpush1.bf16.msra.mxu0 %v7050
        %7062 = vmatprep.subr.bf16.mxu0 0
        %7063 = vmatpush1.bf16.msra.mxu0 %v7051
        %7064 = vmatprep.subr.bf16.mxu0 0
        %7065 = vmatpush1.bf16.msra.mxu0 0
        %7066 = vmatprep.subr.bf16.mxu0 0
        %7067 = vmatpush1.bf16.msra.mxu0 0
        %7068 = vmatprep.subr.bf16.mxu0 0
        %7069 = vmatpush1.bf16.msra.mxu0 0
        %7070 = vmatprep.subr.bf16.mxu0 0
        %7071 = vmatpush1.bf16.msra.mxu0 0
        %7072 = vmatprep.subr.bf16.mxu0 0
        %7073 = vmatpush1.bf16.msra.mxu0 0
        %7074 = vmatprep.subr.bf16.mxu0 0
        %7075 = vmatpush1.bf16.msra.mxu0 0
        %7076 = vmatprep.subr.bf16.mxu0 0
        %7077 = vmatpush1.bf16.msra.mxu0 0
        %7078 = vmatprep.subr.bf16.mxu0 0
        %7079 = vmatpush1.bf16.msra.mxu0 0
        %7080 = vmatprep.subr.bf16.mxu0 0
        %7081 = vmatpush1.bf16.msra.mxu0 0
        %7082 = vmatprep.subr.bf16.mxu0 0
        %7083 = vmatpush1.bf16.msra.mxu0 0
        %7084 = vmatprep.subr.bf16.mxu0 0
        %7085 = vmatpush1.bf16.msra.mxu0 0
        %7086 = vmatprep.subr.bf16.mxu0 0
        %7087 = vmatpush1.bf16.msra.mxu0 0
        %7088 = vmatprep.mubr.bf16.mxu0 0
        %7089 = vmatmul.mubr.bf16.gmra.mrb[0].mxu0 %v5787
        %v7090 = vpop.f32.mrb[0].mxu0
        %v7091 = vadd.f32 0.0, %v7090
        %v7092 = vpop.f32.mrb[0].mxu0
        %v7093 = vpop.f32.mrb[0].mxu0
        %v7094 = vadd.f32 0.0, %v7093
        %v7095 = vpop.f32.mrb[0].mxu0
        %7096 = vmatprep.mubr.bf16.mxu0 0
        %7097 = vmatmul.mubr.bf16.gmra.mrb[0].mxu0 %v5790
        %v7098 = vpop.f32.mrb[0].mxu0
        %v7099 = vadd.f32 0.0, %v7098
        %v7100 = vpop.f32.mrb[0].mxu0
        %v7101 = vpop.f32.mrb[0].mxu0
        %v7102 = vadd.f32 0.0, %v7101
        %v7103 = vpop.f32.mrb[0].mxu0
        %7104 = vmatprep.mubr.bf16.mxu0 0
        %7105 = vmatmul.mubr.bf16.gmra.mrb[0].mxu0 %v5793
        %v7106 = vpop.f32.mrb[0].mxu0
        %v7107 = vadd.f32 0.0, %v7106
        %v7108 = vpop.f32.mrb[0].mxu0
        %v7109 = vpop.f32.mrb[0].mxu0
        %v7110 = vadd.f32 0.0, %v7109
        %v7111 = vpop.f32.mrb[0].mxu0
        %7112 = vmatprep.mubr.bf16.mxu0 0
        %7113 = vmatmul.mubr.bf16.gmra.mrb[0].mxu0 %v5796
        %v7114 = vpop.f32.mrb[0].mxu0
        %v7115 = vadd.f32 0.0, %v7114
        %v7116 = vpop.f32.mrb[0].mxu0
        %v7117 = vpop.f32.mrb[0].mxu0
        %v7118 = vadd.f32 0.0, %v7117
        %v7119 = vpop.f32.mrb[0].mxu0
        %7120 = vmatprep.mubr.bf16.mxu0 0
        %7121 = vmatmul.mubr.bf16.gmra.mrb[0].mxu0 %v5799
        %v7122 = vpop.f32.mrb[0].mxu0
        %v7123 = vadd.f32 0.0, %v7122
        %v7124 = vpop.f32.mrb[0].mxu0
        %v7125 = vpop.f32.mrb[0].mxu0
        %v7126 = vadd.f32 0.0, %v7125
        %v7127 = vpop.f32.mrb[0].mxu0
        %7128 = vmatprep.mubr.bf16.mxu0 0
        %7129 = vmatmul.mubr.bf16.gmra.mrb[0].mxu0 %v5802
        %v7130 = vpop.f32.mrb[0].mxu0
        %v7131 = vadd.f32 0.0, %v7130
        %v7132 = vpop.f32.mrb[0].mxu0
        %v7133 = vpop.f32.mrb[0].mxu0
        %v7134 = vadd.f32 0.0, %v7133
        %v7135 = vpop.f32.mrb[0].mxu0
        %7136 = vmatprep.mubr.bf16.mxu0 0
        %7137 = vmatmul.mubr.bf16.gmra.mrb[0].mxu0 %v5805
        %v7138 = vpop.f32.mrb[0].mxu0
        %v7139 = vadd.f32 0.0, %v7138
        %v7140 = vpop.f32.mrb[0].mxu0
        %v7141 = vpop.f32.mrb[0].mxu0
        %v7142 = vadd.f32 0.0, %v7141
        %v7143 = vpop.f32.mrb[0].mxu0
        %7144 = vmatprep.mubr.bf16.mxu0 0
        %7145 = vmatmul.mubr.bf16.gmra.mrb[0].mxu0 %v5808
        %v7146 = vpop.f32.mrb[0].mxu0
        %v7147 = vadd.f32 0.0, %v7146
        %v7148 = vpop.f32.mrb[0].mxu0
        %v7149 = vpop.f32.mrb[0].mxu0
        %v7150 = vadd.f32 0.0, %v7149
        %v7151 = vpop.f32.mrb[0].mxu0
        %7152 = vdwg.mxu0
        %v7153 = vld [vmem:[#allocation4 + $0x15] sm:$0xff]
        %v7154 = vld [vmem:[#allocation4 + $0x1d] sm:$0xff]
        %v7155 = vld [vmem:[#allocation4 + $0x25] sm:$0xff]
        %v7156 = vld [vmem:[#allocation4 + $0x2d] sm:$0xff]
        %v7157 = vld [vmem:[#allocation4 + $0x35] sm:$0xff]
        %v7158 = vld [vmem:[#allocation4 + $0x3d] sm:$0xff]
        %v7159 = vld [vmem:[#allocation4 + $0x45] sm:$0xff]
        %v7160 = vld [vmem:[#allocation4 + $0x4d] sm:$0xff]
        %v7161 = vld [vmem:[#allocation4 + $0x55] sm:$0xff]
        %v7162 = vld [vmem:[#allocation4 + $0x5d] sm:$0xff]
        %v7163 = vld [vmem:[#allocation4 + $0x65] sm:$0xff]
        %v7164 = vld [vmem:[#allocation4 + $0x6d] sm:$0xff]
        %v7165 = vld [vmem:[#allocation4 + $0x75] sm:$0xff]
        %v7166 = vld [vmem:[#allocation4 + $0x7d] sm:$0xff]
        %v7167 = vld [vmem:[#allocation4 + $0x85] sm:$0xff]
        %v7168 = vld [vmem:[#allocation4 + $0x8d] sm:$0x1]
        %v7169 = vadd.f32 %v7153, %v7091
        %v7170 = vadd.f32 %v7154, %v7094
        %v7171 = vadd.f32 %v7155, %v7099
        %v7172 = vadd.f32 %v7156, %v7102
        %v7173 = vadd.f32 %v7157, %v7107
        %v7174 = vadd.f32 %v7158, %v7110
        %v7175 = vadd.f32 %v7159, %v7115
        %v7176 = vadd.f32 %v7160, %v7118
        %v7177 = vadd.f32 %v7161, %v7123
        %v7178 = vadd.f32 %v7162, %v7126
        %v7179 = vadd.f32 %v7163, %v7131
        %v7180 = vadd.f32 %v7164, %v7134
        %v7181 = vadd.f32 %v7165, %v7139
        %v7182 = vadd.f32 %v7166, %v7142
        %v7183 = vadd.f32 %v7167, %v7147
        %v7184 = vadd.f32 %v7168, %v7150
        %7185 = vst [vmem:[#allocation4 + $0x15] sm:$0xff] %v7169
        %7186 = vst [vmem:[#allocation4 + $0x1d] sm:$0xff] %v7170
        %7187 = vst [vmem:[#allocation4 + $0x25] sm:$0xff] %v7171
        %7188 = vst [vmem:[#allocation4 + $0x2d] sm:$0xff] %v7172
        %7189 = vst [vmem:[#allocation4 + $0x35] sm:$0xff] %v7173
        %7190 = vst [vmem:[#allocation4 + $0x3d] sm:$0xff] %v7174
        %7191 = vst [vmem:[#allocation4 + $0x45] sm:$0xff] %v7175
        %7192 = vst [vmem:[#allocation4 + $0x4d] sm:$0xff] %v7176
        %7193 = vst [vmem:[#allocation4 + $0x55] sm:$0xff] %v7177
        %7194 = vst [vmem:[#allocation4 + $0x5d] sm:$0xff] %v7178
        %7195 = vst [vmem:[#allocation4 + $0x65] sm:$0xff] %v7179
        %7196 = vst [vmem:[#allocation4 + $0x6d] sm:$0xff] %v7180
        %7197 = vst [vmem:[#allocation4 + $0x75] sm:$0xff] %v7181
        %7198 = vst [vmem:[#allocation4 + $0x7d] sm:$0xff] %v7182
        %7199 = vst [vmem:[#allocation4 + $0x85] sm:$0xff] %v7183
        %7200 = vst [vmem:[#allocation4 + $0x8d] sm:$0x1] %v7184
        %s7201 = scalar_lea.vmem %s5, 256
        %v7202 = vld [vmem:[%s7201] sm:$0xf]
        %v7203 = vld [vmem:[%s7201 + $0x4] sm:$0xf]
        %v7204 = vld [vmem:[%s7201 + $0x8] sm:$0xf]
        %v7205 = vld [vmem:[%s7201 + $0xc] sm:$0xf]
        %v7206 = vld [vmem:[%s7201 + $0x10] sm:$0xf]
        %v7207 = vld [vmem:[%s7201 + $0x14] sm:$0xf]
        %v7208 = vld [vmem:[%s7201 + $0x18] sm:$0xf]
        %v7209 = vld [vmem:[%s7201 + $0x1c] sm:$0xf]
        %v7218 = vunpack.c.l.b16 %v7202
        %v7219 = vunpack.c.l.b16 %v7203
        %v7220 = vunpack.c.l.b16 %v7204
        %v7221 = vunpack.c.l.b16 %v7205
        %v7222 = vunpack.c.l.b16 %v7206
        %v7223 = vunpack.c.l.b16 %v7207
        %v7224 = vunpack.c.l.b16 %v7208
        %v7225 = vunpack.c.l.b16 %v7209
        %v7226 = vpack.c.b16 %v7219, %v7218
        %v7227 = vpack.c.b16 %v7221, %v7220
        %v7228 = vpack.c.b16 %v7223, %v7222
        %v7229 = vpack.c.b16 %v7225, %v7224
        %7234 = vmatprep.subr.bf16.mxu0 0
        %7235 = vmatpush1.bf16.msra.mxu0 %v7226
        %7236 = vmatprep.subr.bf16.mxu0 0
        %7237 = vmatpush1.bf16.msra.mxu0 %v7227
        %7238 = vmatprep.subr.bf16.mxu0 0
        %7239 = vmatpush1.bf16.msra.mxu0 %v7228
        %7240 = vmatprep.subr.bf16.mxu0 0
        %7241 = vmatpush1.bf16.msra.mxu0 %v7229
        %7242 = vmatprep.subr.bf16.mxu0 0
        %7243 = vmatpush1.bf16.msra.mxu0 0
        %7244 = vmatprep.subr.bf16.mxu0 0
        %7245 = vmatpush1.bf16.msra.mxu0 0
        %7246 = vmatprep.subr.bf16.mxu0 0
        %7247 = vmatpush1.bf16.msra.mxu0 0
        %7248 = vmatprep.subr.bf16.mxu0 0
        %7249 = vmatpush1.bf16.msra.mxu0 0
        %7250 = vmatprep.subr.bf16.mxu0 0
        %7251 = vmatpush1.bf16.msra.mxu0 0
        %7252 = vmatprep.subr.bf16.mxu0 0
        %7253 = vmatpush1.bf16.msra.mxu0 0
        %7254 = vmatprep.subr.bf16.mxu0 0
        %7255 = vmatpush1.bf16.msra.mxu0 0
        %7256 = vmatprep.subr.bf16.mxu0 0
        %7257 = vmatpush1.bf16.msra.mxu0 0
        %7258 = vmatprep.subr.bf16.mxu0 0
        %7259 = vmatpush1.bf16.msra.mxu0 0
        %7260 = vmatprep.subr.bf16.mxu0 0
        %7261 = vmatpush1.bf16.msra.mxu0 0
        %7262 = vmatprep.subr.bf16.mxu0 0
        %7263 = vmatpush1.bf16.msra.mxu0 0
        %7264 = vmatprep.subr.bf16.mxu0 0
        %7265 = vmatpush1.bf16.msra.mxu0 0
        %7266 = vmatprep.mubr.bf16.mxu0 0
        %7267 = vmatmul.mubr.bf16.gmra.mrb[0].mxu0 %v5787
        %v7268 = vpop.f32.mrb[0].mxu0
        %v7269 = vadd.f32 0.0, %v7268
        %v7270 = vpop.f32.mrb[0].mxu0
        %v7271 = vpop.f32.mrb[0].mxu0
        %v7272 = vadd.f32 0.0, %v7271
        %v7273 = vpop.f32.mrb[0].mxu0
        %7274 = vmatprep.mubr.bf16.mxu0 0
        %7275 = vmatmul.mubr.bf16.gmra.mrb[0].mxu0 %v5790
        %v7276 = vpop.f32.mrb[0].mxu0
        %v7277 = vadd.f32 0.0, %v7276
        %v7278 = vpop.f32.mrb[0].mxu0
        %v7279 = vpop.f32.mrb[0].mxu0
        %v7280 = vadd.f32 0.0, %v7279
        %v7281 = vpop.f32.mrb[0].mxu0
        %7282 = vmatprep.mubr.bf16.mxu0 0
        %7283 = vmatmul.mubr.bf16.gmra.mrb[0].mxu0 %v5793
        %v7284 = vpop.f32.mrb[0].mxu0
        %v7285 = vadd.f32 0.0, %v7284
        %v7286 = vpop.f32.mrb[0].mxu0
        %v7287 = vpop.f32.mrb[0].mxu0
        %v7288 = vadd.f32 0.0, %v7287
        %v7289 = vpop.f32.mrb[0].mxu0
        %7290 = vmatprep.mubr.bf16.mxu0 0
        %7291 = vmatmul.mubr.bf16.gmra.mrb[0].mxu0 %v5796
        %v7292 = vpop.f32.mrb[0].mxu0
        %v7293 = vadd.f32 0.0, %v7292
        %v7294 = vpop.f32.mrb[0].mxu0
        %v7295 = vpop.f32.mrb[0].mxu0
        %v7296 = vadd.f32 0.0, %v7295
        %v7297 = vpop.f32.mrb[0].mxu0
        %7298 = vmatprep.mubr.bf16.mxu0 0
        %7299 = vmatmul.mubr.bf16.gmra.mrb[0].mxu0 %v5799
        %v7300 = vpop.f32.mrb[0].mxu0
        %v7301 = vadd.f32 0.0, %v7300
        %v7302 = vpop.f32.mrb[0].mxu0
        %v7303 = vpop.f32.mrb[0].mxu0
        %v7304 = vadd.f32 0.0, %v7303
        %v7305 = vpop.f32.mrb[0].mxu0
        %7306 = vmatprep.mubr.bf16.mxu0 0
        %7307 = vmatmul.mubr.bf16.gmra.mrb[0].mxu0 %v5802
        %v7308 = vpop.f32.mrb[0].mxu0
        %v7309 = vadd.f32 0.0, %v7308
        %v7310 = vpop.f32.mrb[0].mxu0
        %v7311 = vpop.f32.mrb[0].mxu0
        %v7312 = vadd.f32 0.0, %v7311
        %v7313 = vpop.f32.mrb[0].mxu0
        %7314 = vmatprep.mubr.bf16.mxu0 0
        %7315 = vmatmul.mubr.bf16.gmra.mrb[0].mxu0 %v5805
        %v7316 = vpop.f32.mrb[0].mxu0
        %v7317 = vadd.f32 0.0, %v7316
        %v7318 = vpop.f32.mrb[0].mxu0
        %v7319 = vpop.f32.mrb[0].mxu0
        %v7320 = vadd.f32 0.0, %v7319
        %v7321 = vpop.f32.mrb[0].mxu0
        %7322 = vmatprep.mubr.bf16.mxu0 0
        %7323 = vmatmul.mubr.bf16.gmra.mrb[0].mxu0 %v5808
        %v7324 = vpop.f32.mrb[0].mxu0
        %v7325 = vadd.f32 0.0, %v7324
        %v7326 = vpop.f32.mrb[0].mxu0
        %v7327 = vpop.f32.mrb[0].mxu0
        %v7328 = vadd.f32 0.0, %v7327
        %v7329 = vpop.f32.mrb[0].mxu0
        %7330 = vdwg.mxu0
        %v7331 = vld [vmem:[#allocation4 + $0x14] sm:$0xff]
        %v7332 = vld [vmem:[#allocation4 + $0x1c] sm:$0xff]
        %v7333 = vld [vmem:[#allocation4 + $0x24] sm:$0xff]
        %v7334 = vld [vmem:[#allocation4 + $0x2c] sm:$0xff]
        %v7335 = vld [vmem:[#allocation4 + $0x34] sm:$0xff]
        %v7336 = vld [vmem:[#allocation4 + $0x3c] sm:$0xff]
        %v7337 = vld [vmem:[#allocation4 + $0x44] sm:$0xff]
        %v7338 = vld [vmem:[#allocation4 + $0x4c] sm:$0xff]
        %v7339 = vld [vmem:[#allocation4 + $0x54] sm:$0xff]
        %v7340 = vld [vmem:[#allocation4 + $0x5c] sm:$0xff]
        %v7341 = vld [vmem:[#allocation4 + $0x64] sm:$0xff]
        %v7342 = vld [vmem:[#allocation4 + $0x6c] sm:$0xff]
        %v7343 = vld [vmem:[#allocation4 + $0x74] sm:$0xff]
        %v7344 = vld [vmem:[#allocation4 + $0x7c] sm:$0xff]
        %v7345 = vld [vmem:[#allocation4 + $0x84] sm:$0xff]
        %v7346 = vld [vmem:[#allocation4 + $0x8c] sm:$0x1]
        %v7347 = vadd.f32 %v7331, %v7269
        %v7348 = vadd.f32 %v7332, %v7272
        %v7349 = vadd.f32 %v7333, %v7277
        %v7350 = vadd.f32 %v7334, %v7280
        %v7351 = vadd.f32 %v7335, %v7285
        %v7352 = vadd.f32 %v7336, %v7288
        %v7353 = vadd.f32 %v7337, %v7293
        %v7354 = vadd.f32 %v7338, %v7296
        %v7355 = vadd.f32 %v7339, %v7301
        %v7356 = vadd.f32 %v7340, %v7304
        %v7357 = vadd.f32 %v7341, %v7309
        %v7358 = vadd.f32 %v7342, %v7312
        %v7359 = vadd.f32 %v7343, %v7317
        %v7360 = vadd.f32 %v7344, %v7320
        %v7361 = vadd.f32 %v7345, %v7325
        %v7362 = vadd.f32 %v7346, %v7328
        %7363 = vst [vmem:[#allocation4 + $0x14] sm:$0xff] %v7347
        %7364 = vst [vmem:[#allocation4 + $0x1c] sm:$0xff] %v7348
        %7365 = vst [vmem:[#allocation4 + $0x24] sm:$0xff] %v7349
        %7366 = vst [vmem:[#allocation4 + $0x2c] sm:$0xff] %v7350
        %7367 = vst [vmem:[#allocation4 + $0x34] sm:$0xff] %v7351
        %7368 = vst [vmem:[#allocation4 + $0x3c] sm:$0xff] %v7352
        %7369 = vst [vmem:[#allocation4 + $0x44] sm:$0xff] %v7353
        %7370 = vst [vmem:[#allocation4 + $0x4c] sm:$0xff] %v7354
        %7371 = vst [vmem:[#allocation4 + $0x54] sm:$0xff] %v7355
        %7372 = vst [vmem:[#allocation4 + $0x5c] sm:$0xff] %v7356
        %7373 = vst [vmem:[#allocation4 + $0x64] sm:$0xff] %v7357
        %7374 = vst [vmem:[#allocation4 + $0x6c] sm:$0xff] %v7358
        %7375 = vst [vmem:[#allocation4 + $0x74] sm:$0xff] %v7359
        %7376 = vst [vmem:[#allocation4 + $0x7c] sm:$0xff] %v7360
        %7377 = vst [vmem:[#allocation4 + $0x84] sm:$0xff] %v7361
        %7378 = vst [vmem:[#allocation4 + $0x8c] sm:$0x1] %v7362
        %v7379 = vld [vmem:[#allocation4 + $0x20] sm:$0xff]
        %v7380 = vld [vmem:[#allocation4 + $0x28] sm:$0xff]
        %v7381 = vld [vmem:[#allocation4 + $0x30] sm:$0xff]
        %v7382 = vld [vmem:[#allocation4 + $0x38] sm:$0xff]
        %v7383 = vld [vmem:[#allocation4 + $0x40] sm:$0xff]
        %v7384 = vld [vmem:[#allocation4 + $0x48] sm:$0xff]
        %v7385 = vld [vmem:[#allocation4 + $0x50] sm:$0xff]
        %v7386 = vld [vmem:[#allocation4 + $0x58] sm:$0xff]
        %v7387 = vld [vmem:[#allocation4 + $0x60] sm:$0xff]
        %v7388 = vld [vmem:[#allocation4 + $0x68] sm:$0xff]
        %v7389 = vld [vmem:[#allocation4 + $0x70] sm:$0xff]
        %v7390 = vld [vmem:[#allocation4 + $0x78] sm:$0xff]
        %v7391 = vld [vmem:[#allocation4 + $0x80] sm:$0xff]
        %v7392 = vld [vmem:[#allocation4 + $0x88] sm:$0xff]
        %v7393 = vld [vmem:[#allocation4 + $0x90] sm:$0xff]
        %v7394 = vld [vmem:[#allocation4 + $0x98] sm:$0x1]
        %v7395 = vmax.f32 %v7379, 0.0
        %v7396 = vmax.f32 %v7380, 0.0
        %v7397 = vmax.f32 %v7381, 0.0
        %v7398 = vmax.f32 %v7382, 0.0
        %v7399 = vmax.f32 %v7383, 0.0
        %v7400 = vmax.f32 %v7384, 0.0
        %v7401 = vmax.f32 %v7385, 0.0
        %v7402 = vmax.f32 %v7386, 0.0
        %v7403 = vmax.f32 %v7387, 0.0
        %v7404 = vmax.f32 %v7388, 0.0
        %v7405 = vmax.f32 %v7389, 0.0
        %v7406 = vmax.f32 %v7390, 0.0
        %v7407 = vmax.f32 %v7391, 0.0
        %v7408 = vmax.f32 %v7392, 0.0
        %v7409 = vmax.f32 %v7393, 0.0
        %v7410 = vmax.f32 %v7394, 0.0
        %v7411 = vld [vmem:[%s6] sm:$0x1]
        %v7413 = vlaneseq
        %v7414 = vshrl.u32 %v7413, 7
        %v7415 = vsub.s32 0, %v7414
        %v7416 = vrot.slane %v7411, %v7415
        %v7418 = vmul.f32 %v7395, %v7416
        %v7419 = vmul.f32 %v7396, %v7416
        %v7420 = vmul.f32 %v7397, %v7416
        %v7421 = vmul.f32 %v7398, %v7416
        %v7422 = vmul.f32 %v7399, %v7416
        %v7423 = vmul.f32 %v7400, %v7416
        %v7424 = vmul.f32 %v7401, %v7416
        %v7425 = vmul.f32 %v7402, %v7416
        %v7426 = vmul.f32 %v7403, %v7416
        %v7427 = vmul.f32 %v7404, %v7416
        %v7428 = vmul.f32 %v7405, %v7416
        %v7429 = vmul.f32 %v7406, %v7416
        %v7430 = vmul.f32 %v7407, %v7416
        %v7431 = vmul.f32 %v7408, %v7416
        %v7432 = vmul.f32 %v7409, %v7416
        %v7433 = vmul.f32 %v7410, %v7416
        %v7434 = vld [vmem:[%s7] sm:$0x1]
        %v7436 = vlaneseq
        %v7437 = vshrl.u32 %v7436, 7
        %v7438 = vsub.s32 0, %v7437
        %v7439 = vrot.slane %v7434, %v7438
        %v7441 = vadd.f32 %v7418, %v7439
        %v7442 = vadd.f32 %v7419, %v7439
        %v7443 = vadd.f32 %v7420, %v7439
        %v7444 = vadd.f32 %v7421, %v7439
        %v7445 = vadd.f32 %v7422, %v7439
        %v7446 = vadd.f32 %v7423, %v7439
        %v7447 = vadd.f32 %v7424, %v7439
        %v7448 = vadd.f32 %v7425, %v7439
        %v7449 = vadd.f32 %v7426, %v7439
        %v7450 = vadd.f32 %v7427, %v7439
        %v7451 = vadd.f32 %v7428, %v7439
        %v7452 = vadd.f32 %v7429, %v7439
        %v7453 = vadd.f32 %v7430, %v7439
        %v7454 = vadd.f32 %v7431, %v7439
        %v7455 = vadd.f32 %v7432, %v7439
        %v7456 = vadd.f32 %v7433, %v7439
        %7457 = vst [vmem:[#allocation4 + $0x20] sm:$0xff] %v7441
        %7458 = vst [vmem:[#allocation4 + $0x28] sm:$0xff] %v7442
        %7459 = vst [vmem:[#allocation4 + $0x30] sm:$0xff] %v7443
        %7460 = vst [vmem:[#allocation4 + $0x38] sm:$0xff] %v7444
        %7461 = vst [vmem:[#allocation4 + $0x40] sm:$0xff] %v7445
        %7462 = vst [vmem:[#allocation4 + $0x48] sm:$0xff] %v7446
        %7463 = vst [vmem:[#allocation4 + $0x50] sm:$0xff] %v7447
        %7464 = vst [vmem:[#allocation4 + $0x58] sm:$0xff] %v7448
        %7465 = vst [vmem:[#allocation4 + $0x60] sm:$0xff] %v7449
        %7466 = vst [vmem:[#allocation4 + $0x68] sm:$0xff] %v7450
        %7467 = vst [vmem:[#allocation4 + $0x70] sm:$0xff] %v7451
        %7468 = vst [vmem:[#allocation4 + $0x78] sm:$0xff] %v7452
        %7469 = vst [vmem:[#allocation4 + $0x80] sm:$0xff] %v7453
        %7470 = vst [vmem:[#allocation4 + $0x88] sm:$0xff] %v7454
        %7471 = vst [vmem:[#allocation4 + $0x90] sm:$0xff] %v7455
        %7472 = vst [vmem:[#allocation4 + $0x98] sm:$0x1] %v7456
        %v7473 = vld [vmem:[#allocation4 + $0x20] sm:$0xff]
        %v7474 = vld [vmem:[#allocation4 + $0x28] sm:$0xff]
        %v7475 = vld [vmem:[#allocation4 + $0x30] sm:$0xff]
        %v7476 = vld [vmem:[#allocation4 + $0x38] sm:$0xff]
        %v7477 = vld [vmem:[#allocation4 + $0x40] sm:$0xff]
        %v7478 = vld [vmem:[#allocation4 + $0x48] sm:$0xff]
        %v7479 = vld [vmem:[#allocation4 + $0x50] sm:$0xff]
        %v7480 = vld [vmem:[#allocation4 + $0x58] sm:$0xff]
        %v7481 = vld [vmem:[#allocation4 + $0x60] sm:$0xff]
        %v7482 = vld [vmem:[#allocation4 + $0x68] sm:$0xff]
        %v7483 = vld [vmem:[#allocation4 + $0x70] sm:$0xff]
        %v7484 = vld [vmem:[#allocation4 + $0x78] sm:$0xff]
        %v7485 = vld [vmem:[#allocation4 + $0x80] sm:$0xff]
        %v7486 = vld [vmem:[#allocation4 + $0x88] sm:$0xff]
        %v7487 = vld [vmem:[#allocation4 + $0x90] sm:$0xff]
        %v7488 = vld [vmem:[#allocation4 + $0x98] sm:$0x1]
        %v7489 = vld [vmem:[#allocation4 + $0x21] sm:$0xff]
        %v7490 = vld [vmem:[#allocation4 + $0x29] sm:$0xff]
        %v7491 = vld [vmem:[#allocation4 + $0x31] sm:$0xff]
        %v7492 = vld [vmem:[#allocation4 + $0x39] sm:$0xff]
        %v7493 = vld [vmem:[#allocation4 + $0x41] sm:$0xff]
        %v7494 = vld [vmem:[#allocation4 + $0x49] sm:$0xff]
        %v7495 = vld [vmem:[#allocation4 + $0x51] sm:$0xff]
        %v7496 = vld [vmem:[#allocation4 + $0x59] sm:$0xff]
        %v7497 = vld [vmem:[#allocation4 + $0x61] sm:$0xff]
        %v7498 = vld [vmem:[#allocation4 + $0x69] sm:$0xff]
        %v7499 = vld [vmem:[#allocation4 + $0x71] sm:$0xff]
        %v7500 = vld [vmem:[#allocation4 + $0x79] sm:$0xff]
        %v7501 = vld [vmem:[#allocation4 + $0x81] sm:$0xff]
        %v7502 = vld [vmem:[#allocation4 + $0x89] sm:$0xff]
        %v7503 = vld [vmem:[#allocation4 + $0x91] sm:$0xff]
        %v7504 = vld [vmem:[#allocation4 + $0x99] sm:$0x1]
        %v7505 = vmax.f32 %v7473, %v7489
        %v7506 = vmax.f32 %v7474, %v7490
        %v7507 = vmax.f32 %v7475, %v7491
        %v7508 = vmax.f32 %v7476, %v7492
        %v7509 = vmax.f32 %v7477, %v7493
        %v7510 = vmax.f32 %v7478, %v7494
        %v7511 = vmax.f32 %v7479, %v7495
        %v7512 = vmax.f32 %v7480, %v7496
        %v7513 = vmax.f32 %v7481, %v7497
        %v7514 = vmax.f32 %v7482, %v7498
        %v7515 = vmax.f32 %v7483, %v7499
        %v7516 = vmax.f32 %v7484, %v7500
        %v7517 = vmax.f32 %v7485, %v7501
        %v7518 = vmax.f32 %v7486, %v7502
        %v7519 = vmax.f32 %v7487, %v7503
        %v7520 = vmax.f32 %v7488, %v7504
        %v7521 = vld [vmem:[#allocation4 + $0x22] sm:$0xff]
        %v7522 = vld [vmem:[#allocation4 + $0x2a] sm:$0xff]
        %v7523 = vld [vmem:[#allocation4 + $0x32] sm:$0xff]
        %v7524 = vld [vmem:[#allocation4 + $0x3a] sm:$0xff]
        %v7525 = vld [vmem:[#allocation4 + $0x42] sm:$0xff]
        %v7526 = vld [vmem:[#allocation4 + $0x4a] sm:$0xff]
        %v7527 = vld [vmem:[#allocation4 + $0x52] sm:$0xff]
        %v7528 = vld [vmem:[#allocation4 + $0x5a] sm:$0xff]
        %v7529 = vld [vmem:[#allocation4 + $0x62] sm:$0xff]
        %v7530 = vld [vmem:[#allocation4 + $0x6a] sm:$0xff]
        %v7531 = vld [vmem:[#allocation4 + $0x72] sm:$0xff]
        %v7532 = vld [vmem:[#allocation4 + $0x7a] sm:$0xff]
        %v7533 = vld [vmem:[#allocation4 + $0x82] sm:$0xff]
        %v7534 = vld [vmem:[#allocation4 + $0x8a] sm:$0xff]
        %v7535 = vld [vmem:[#allocation4 + $0x92] sm:$0xff]
        %v7536 = vld [vmem:[#allocation4 + $0x9a] sm:$0x1]
        %v7537 = vmax.f32 %v7505, %v7521
        %v7538 = vmax.f32 %v7506, %v7522
        %v7539 = vmax.f32 %v7507, %v7523
        %v7540 = vmax.f32 %v7508, %v7524
        %v7541 = vmax.f32 %v7509, %v7525
        %v7542 = vmax.f32 %v7510, %v7526
        %v7543 = vmax.f32 %v7511, %v7527
        %v7544 = vmax.f32 %v7512, %v7528
        %v7545 = vmax.f32 %v7513, %v7529
        %v7546 = vmax.f32 %v7514, %v7530
        %v7547 = vmax.f32 %v7515, %v7531
        %v7548 = vmax.f32 %v7516, %v7532
        %v7549 = vmax.f32 %v7517, %v7533
        %v7550 = vmax.f32 %v7518, %v7534
        %v7551 = vmax.f32 %v7519, %v7535
        %v7552 = vmax.f32 %v7520, %v7536
        %v7553 = vld [vmem:[#allocation4 + $0x2b] sm:$0xff]
        %v7554 = vld [vmem:[#allocation4 + $0x33] sm:$0xff]
        %v7555 = vld [vmem:[#allocation4 + $0x3b] sm:$0xff]
        %v7556 = vld [vmem:[#allocation4 + $0x43] sm:$0xff]
        %v7557 = vld [vmem:[#allocation4 + $0x4b] sm:$0xff]
        %v7558 = vld [vmem:[#allocation4 + $0x53] sm:$0xff]
        %v7559 = vld [vmem:[#allocation4 + $0x5b] sm:$0xff]
        %v7560 = vld [vmem:[#allocation4 + $0x63] sm:$0xff]
        %v7561 = vld [vmem:[#allocation4 + $0x6b] sm:$0xff]
        %v7562 = vld [vmem:[#allocation4 + $0x73] sm:$0xff]
        %v7563 = vld [vmem:[#allocation4 + $0x7b] sm:$0xff]
        %v7564 = vld [vmem:[#allocation4 + $0x83] sm:$0xff]
        %v7565 = vld [vmem:[#allocation4 + $0x8b] sm:$0xff]
        %v7566 = vld [vmem:[#allocation4 + $0x93] sm:$0xff]
        %v7567 = vld [vmem:[#allocation4 + $0x9b] sm:$0xff]
        %v7568 = vld [vmem:[#allocation4 + $0xa3] sm:$0x1]
        %v7569 = vmax.f32 %v7537, %v7553
        %v7570 = vmax.f32 %v7538, %v7554
        %v7571 = vmax.f32 %v7539, %v7555
        %v7572 = vmax.f32 %v7540, %v7556
        %v7573 = vmax.f32 %v7541, %v7557
        %v7574 = vmax.f32 %v7542, %v7558
        %v7575 = vmax.f32 %v7543, %v7559
        %v7576 = vmax.f32 %v7544, %v7560
        %v7577 = vmax.f32 %v7545, %v7561
        %v7578 = vmax.f32 %v7546, %v7562
        %v7579 = vmax.f32 %v7547, %v7563
        %v7580 = vmax.f32 %v7548, %v7564
        %v7581 = vmax.f32 %v7549, %v7565
        %v7582 = vmax.f32 %v7550, %v7566
        %v7583 = vmax.f32 %v7551, %v7567
        %v7584 = vmax.f32 %v7552, %v7568
        %v7585 = vld [vmem:[#allocation4 + $0x2c] sm:$0xff]
        %v7586 = vld [vmem:[#allocation4 + $0x34] sm:$0xff]
        %v7587 = vld [vmem:[#allocation4 + $0x3c] sm:$0xff]
        %v7588 = vld [vmem:[#allocation4 + $0x44] sm:$0xff]
        %v7589 = vld [vmem:[#allocation4 + $0x4c] sm:$0xff]
        %v7590 = vld [vmem:[#allocation4 + $0x54] sm:$0xff]
        %v7591 = vld [vmem:[#allocation4 + $0x5c] sm:$0xff]
        %v7592 = vld [vmem:[#allocation4 + $0x64] sm:$0xff]
        %v7593 = vld [vmem:[#allocation4 + $0x6c] sm:$0xff]
        %v7594 = vld [vmem:[#allocation4 + $0x74] sm:$0xff]
        %v7595 = vld [vmem:[#allocation4 + $0x7c] sm:$0xff]
        %v7596 = vld [vmem:[#allocation4 + $0x84] sm:$0xff]
        %v7597 = vld [vmem:[#allocation4 + $0x8c] sm:$0xff]
        %v7598 = vld [vmem:[#allocation4 + $0x94] sm:$0xff]
        %v7599 = vld [vmem:[#allocation4 + $0x9c] sm:$0xff]
        %v7600 = vld [vmem:[#allocation4 + $0xa4] sm:$0x1]
        %v7601 = vmax.f32 %v7569, %v7585
        %v7602 = vmax.f32 %v7570, %v7586
        %v7603 = vmax.f32 %v7571, %v7587
        %v7604 = vmax.f32 %v7572, %v7588
        %v7605 = vmax.f32 %v7573, %v7589
        %v7606 = vmax.f32 %v7574, %v7590
        %v7607 = vmax.f32 %v7575, %v7591
        %v7608 = vmax.f32 %v7576, %v7592
        %v7609 = vmax.f32 %v7577, %v7593
        %v7610 = vmax.f32 %v7578, %v7594
        %v7611 = vmax.f32 %v7579, %v7595
        %v7612 = vmax.f32 %v7580, %v7596
        %v7613 = vmax.f32 %v7581, %v7597
        %v7614 = vmax.f32 %v7582, %v7598
        %v7615 = vmax.f32 %v7583, %v7599
        %v7616 = vmax.f32 %v7584, %v7600
        %v7617 = vld [vmem:[#allocation4 + $0x2d] sm:$0xff]
        %v7618 = vld [vmem:[#allocation4 + $0x35] sm:$0xff]
        %v7619 = vld [vmem:[#allocation4 + $0x3d] sm:$0xff]
        %v7620 = vld [vmem:[#allocation4 + $0x45] sm:$0xff]
        %v7621 = vld [vmem:[#allocation4 + $0x4d] sm:$0xff]
        %v7622 = vld [vmem:[#allocation4 + $0x55] sm:$0xff]
        %v7623 = vld [vmem:[#allocation4 + $0x5d] sm:$0xff]
        %v7624 = vld [vmem:[#allocation4 + $0x65] sm:$0xff]
        %v7625 = vld [vmem:[#allocation4 + $0x6d] sm:$0xff]
        %v7626 = vld [vmem:[#allocation4 + $0x75] sm:$0xff]
        %v7627 = vld [vmem:[#allocation4 + $0x7d] sm:$0xff]
        %v7628 = vld [vmem:[#allocation4 + $0x85] sm:$0xff]
        %v7629 = vld [vmem:[#allocation4 + $0x8d] sm:$0xff]
        %v7630 = vld [vmem:[#allocation4 + $0x95] sm:$0xff]
        %v7631 = vld [vmem:[#allocation4 + $0x9d] sm:$0xff]
        %v7632 = vld [vmem:[#allocation4 + $0xa5] sm:$0x1]
        %v7633 = vmax.f32 %v7601, %v7617
        %v7634 = vmax.f32 %v7602, %v7618
        %v7635 = vmax.f32 %v7603, %v7619
        %v7636 = vmax.f32 %v7604, %v7620
        %v7637 = vmax.f32 %v7605, %v7621
        %v7638 = vmax.f32 %v7606, %v7622
        %v7639 = vmax.f32 %v7607, %v7623
        %v7640 = vmax.f32 %v7608, %v7624
        %v7641 = vmax.f32 %v7609, %v7625
        %v7642 = vmax.f32 %v7610, %v7626
        %v7643 = vmax.f32 %v7611, %v7627
        %v7644 = vmax.f32 %v7612, %v7628
        %v7645 = vmax.f32 %v7613, %v7629
        %v7646 = vmax.f32 %v7614, %v7630
        %v7647 = vmax.f32 %v7615, %v7631
        %v7648 = vmax.f32 %v7616, %v7632
        %v7649 = vld [vmem:[#allocation4 + $0x36] sm:$0xff]
        %v7650 = vld [vmem:[#allocation4 + $0x3e] sm:$0xff]
        %v7651 = vld [vmem:[#allocation4 + $0x46] sm:$0xff]
        %v7652 = vld [vmem:[#allocation4 + $0x4e] sm:$0xff]
        %v7653 = vld [vmem:[#allocation4 + $0x56] sm:$0xff]
        %v7654 = vld [vmem:[#allocation4 + $0x5e] sm:$0xff]
        %v7655 = vld [vmem:[#allocation4 + $0x66] sm:$0xff]
        %v7656 = vld [vmem:[#allocation4 + $0x6e] sm:$0xff]
        %v7657 = vld [vmem:[#allocation4 + $0x76] sm:$0xff]
        %v7658 = vld [vmem:[#allocation4 + $0x7e] sm:$0xff]
        %v7659 = vld [vmem:[#allocation4 + $0x86] sm:$0xff]
        %v7660 = vld [vmem:[#allocation4 + $0x8e] sm:$0xff]
        %v7661 = vld [vmem:[#allocation4 + $0x96] sm:$0xff]
        %v7662 = vld [vmem:[#allocation4 + $0x9e] sm:$0xff]
        %v7663 = vld [vmem:[#allocation4 + $0xa6] sm:$0xff]
        %v7664 = vld [vmem:[#allocation4 + $0xae] sm:$0x1]
        %v7665 = vmax.f32 %v7633, %v7649
        %v7666 = vmax.f32 %v7634, %v7650
        %v7667 = vmax.f32 %v7635, %v7651
        %v7668 = vmax.f32 %v7636, %v7652
        %v7669 = vmax.f32 %v7637, %v7653
        %v7670 = vmax.f32 %v7638, %v7654
        %v7671 = vmax.f32 %v7639, %v7655
        %v7672 = vmax.f32 %v7640, %v7656
        %v7673 = vmax.f32 %v7641, %v7657
        %v7674 = vmax.f32 %v7642, %v7658
        %v7675 = vmax.f32 %v7643, %v7659
        %v7676 = vmax.f32 %v7644, %v7660
        %v7677 = vmax.f32 %v7645, %v7661
        %v7678 = vmax.f32 %v7646, %v7662
        %v7679 = vmax.f32 %v7647, %v7663
        %v7680 = vmax.f32 %v7648, %v7664
        %v7681 = vld [vmem:[#allocation4 + $0x37] sm:$0xff]
        %v7682 = vld [vmem:[#allocation4 + $0x3f] sm:$0xff]
        %v7683 = vld [vmem:[#allocation4 + $0x47] sm:$0xff]
        %v7684 = vld [vmem:[#allocation4 + $0x4f] sm:$0xff]
        %v7685 = vld [vmem:[#allocation4 + $0x57] sm:$0xff]
        %v7686 = vld [vmem:[#allocation4 + $0x5f] sm:$0xff]
        %v7687 = vld [vmem:[#allocation4 + $0x67] sm:$0xff]
        %v7688 = vld [vmem:[#allocation4 + $0x6f] sm:$0xff]
        %v7689 = vld [vmem:[#allocation4 + $0x77] sm:$0xff]
        %v7690 = vld [vmem:[#allocation4 + $0x7f] sm:$0xff]
        %v7691 = vld [vmem:[#allocation4 + $0x87] sm:$0xff]
        %v7692 = vld [vmem:[#allocation4 + $0x8f] sm:$0xff]
        %v7693 = vld [vmem:[#allocation4 + $0x97] sm:$0xff]
        %v7694 = vld [vmem:[#allocation4 + $0x9f] sm:$0xff]
        %v7695 = vld [vmem:[#allocation4 + $0xa7] sm:$0xff]
        %v7696 = vld [vmem:[#allocation4 + $0xaf] sm:$0x1]
        %v7697 = vmax.f32 %v7665, %v7681
        %v7698 = vmax.f32 %v7666, %v7682
        %v7699 = vmax.f32 %v7667, %v7683
        %v7700 = vmax.f32 %v7668, %v7684
        %v7701 = vmax.f32 %v7669, %v7685
        %v7702 = vmax.f32 %v7670, %v7686
        %v7703 = vmax.f32 %v7671, %v7687
        %v7704 = vmax.f32 %v7672, %v7688
        %v7705 = vmax.f32 %v7673, %v7689
        %v7706 = vmax.f32 %v7674, %v7690
        %v7707 = vmax.f32 %v7675, %v7691
        %v7708 = vmax.f32 %v7676, %v7692
        %v7709 = vmax.f32 %v7677, %v7693
        %v7710 = vmax.f32 %v7678, %v7694
        %v7711 = vmax.f32 %v7679, %v7695
        %v7712 = vmax.f32 %v7680, %v7696
        %v7713 = vld [vmem:[#allocation4 + $0x98] sm:$0xff]
        %v7714 = vld [vmem:[#allocation4 + $0xa0] sm:$0xff]
        %v7715 = vld [vmem:[#allocation4 + $0xa8] sm:$0xff]
        %v7716 = vld [vmem:[#allocation4 + $0xb0] sm:$0x1]
        %v7717 = vmax.f32 %v7697, %v7476
        %v7718 = vmax.f32 %v7698, %v7477
        %v7719 = vmax.f32 %v7699, %v7478
        %v7720 = vmax.f32 %v7700, %v7479
        %v7721 = vmax.f32 %v7701, %v7480
        %v7722 = vmax.f32 %v7702, %v7481
        %v7723 = vmax.f32 %v7703, %v7482
        %v7724 = vmax.f32 %v7704, %v7483
        %v7725 = vmax.f32 %v7705, %v7484
        %v7726 = vmax.f32 %v7706, %v7485
        %v7727 = vmax.f32 %v7707, %v7486
        %v7728 = vmax.f32 %v7708, %v7487
        %v7729 = vmax.f32 %v7709, %v7713
        %v7730 = vmax.f32 %v7710, %v7714
        %v7731 = vmax.f32 %v7711, %v7715
        %v7732 = vmax.f32 %v7712, %v7716
        %v7733 = vld [vmem:[%s8] sm:$0xff]
        %v7734 = vld [vmem:[%s8 + $0x8] sm:$0xff]
        %v7735 = vld [vmem:[%s8 + $0x10] sm:$0xff]
        %v7736 = vld [vmem:[%s8 + $0x18] sm:$0x1]
        %vm7737 = vcmask 990208
        %v7739 = vsel %vm7737, %v7733, 0
        %v7742 = vsel %vm7737, %v7734, 0
        %v7745 = vsel %vm7737, %v7735, 0
        %v7748 = vsel %vm7737, %v7736, 0
        %vm7750 = vcmask 1040384
        %v7752 = vsel %vm7750, %v7732, 0
        %7754 = vmatprep.subr.mxu0 0.0
        %7755 = vmatpush1.msra.mxu0 %v7717
        %7756 = vmatprep.subr.mxu0 0.0
        %7757 = vmatpush1.msra.mxu0 %v7718
        %7758 = vmatprep.subr.mxu0 0.0
        %7759 = vmatpush1.msra.mxu0 %v7719
        %7760 = vmatprep.subr.mxu0 0.0
        %7761 = vmatpush1.msra.mxu0 %v7720
        %7762 = vmatprep.subr.mxu0 0.0
        %7763 = vmatpush1.msra.mxu0 %v7721
        %7764 = vmatprep.subr.mxu0 0.0
        %7765 = vmatpush1.msra.mxu0 %v7722
        %7766 = vmatprep.subr.mxu0 0.0
        %7767 = vmatpush1.msra.mxu0 %v7723
        %7768 = vmatprep.subr.mxu0 0.0
        %7769 = vmatpush1.msra.mxu0 %v7724
        %7770 = vmatprep.subr.mxu0 0.0
        %7771 = vmatpush1.msra.mxu0 %v7725
        %7772 = vmatprep.subr.mxu0 0.0
        %7773 = vmatpush1.msra.mxu0 %v7726
        %7774 = vmatprep.subr.mxu0 0.0
        %7775 = vmatpush1.msra.mxu0 %v7727
        %7776 = vmatprep.subr.mxu0 0.0
        %7777 = vmatpush1.msra.mxu0 %v7728
        %7778 = vmatprep.subr.mxu0 0.0
        %7779 = vmatpush1.msra.mxu0 %v7729
        %7780 = vmatprep.subr.mxu0 0.0
        %7781 = vmatpush1.msra.mxu0 %v7730
        %7782 = vmatprep.subr.mxu0 0.0
        %7783 = vmatpush1.msra.mxu0 %v7731
        %7784 = vmatprep.subr.mxu0 0.0
        %7785 = vmatpush1.msra.mxu0 %v7752
        %7786 = vmatprep.subr.mxu0 0.0
        %7787 = vmatpush1.msra.mxu0 0.0
        %7788 = vmatprep.subr.mxu0 0.0
        %7789 = vmatpush1.msra.mxu0 0.0
        %7790 = vmatprep.subr.mxu0 0.0
        %7791 = vmatpush1.msra.mxu0 0.0
        %7792 = vmatprep.subr.mxu0 0.0
        %7793 = vmatpush1.msra.mxu0 0.0
        %7794 = vmatprep.subr.mxu0 0.0
        %7795 = vmatpush1.msra.mxu0 0.0
        %7796 = vmatprep.subr.mxu0 0.0
        %7797 = vmatpush1.msra.mxu0 0.0
        %7798 = vmatprep.subr.mxu0 0.0
        %7799 = vmatpush1.msra.mxu0 0.0
        %7800 = vmatprep.subr.mxu0 0.0
        %7801 = vmatpush1.msra.mxu0 0.0
        %7802 = vmatprep.subr.mxu0 0.0
        %7803 = vmatpush1.msra.mxu0 0.0
        %7804 = vmatprep.subr.mxu0 0.0
        %7805 = vmatpush1.msra.mxu0 0.0
        %7806 = vmatprep.subr.mxu0 0.0
        %7807 = vmatpush1.msra.mxu0 0.0
        %7808 = vmatprep.subr.mxu0 0.0
        %7809 = vmatpush1.msra.mxu0 0.0
        %7810 = vmatprep.subr.mxu0 0.0
        %7811 = vmatpush1.msra.mxu0 0.0
        %7812 = vmatprep.subr.mxu0 0.0
        %7813 = vmatpush1.msra.mxu0 0.0
        %7814 = vmatprep.subr.mxu0 0.0
        %7815 = vmatpush1.msra.mxu0 0.0
        %7816 = vmatprep.subr.mxu0 0.0
        %7817 = vmatpush1.msra.mxu0 0.0
        %7818 = vmatprep.mubr.f32.mxu0 0.0
        %7819 = vmatmul.mubr.f32.gmra.mrb[0].mxu0 %v7739
        %v7820 = vpop.f32.mrb[0].mxu0
        %v7821 = vadd.f32 0.0, %v7820
        %v7822 = vpop.f32.mrb[0].mxu0
        %7823 = vmatprep.mubr.f32.mxu0 0.0
        %7824 = vmatmul.mubr.f32.gmra.mrb[0].mxu0 %v7742
        %v7825 = vpop.f32.mrb[0].mxu0
        %v7826 = vadd.f32 0.0, %v7825
        %v7827 = vpop.f32.mrb[0].mxu0
        %7828 = vmatprep.mubr.f32.mxu0 0.0
        %7829 = vmatmul.mubr.f32.gmra.mrb[0].mxu0 %v7745
        %v7830 = vpop.f32.mrb[0].mxu0
        %v7831 = vadd.f32 0.0, %v7830
        %v7832 = vpop.f32.mrb[0].mxu0
        %7833 = vmatprep.mubr.f32.mxu0 0.0
        %7834 = vmatmul.mubr.f32.gmra.mrb[0].mxu0 %v7748
        %v7835 = vpop.f32.mrb[0].mxu0
        %v7836 = vadd.f32 0.0, %v7835
        %v7837 = vpop.f32.mrb[0].mxu0
        %7838 = vdwg.mxu0
        %v7839 = vpack.c.bf16 %v7826, %v7821
        %v7840 = vpack.c.bf16 %v7836, %v7831
        %v7841 = vld [vmem:[%s9] sm:$0xf]
        %v7842 = vld [vmem:[%s9 + $0x4] sm:$0xf]
        %v7843 = vld [vmem:[%s9 + $0x8] sm:$0xf]
        %v7844 = vld [vmem:[%s9 + $0xc] sm:$0xf]
        %v7845 = vld [vmem:[%s9 + $0x10] sm:$0xf]
        %v7846 = vld [vmem:[%s9 + $0x14] sm:$0xf]
        %v7847 = vld [vmem:[%s9 + $0x18] sm:$0xf]
        %v7848 = vld [vmem:[%s9 + $0x1c] sm:$0xf]
        %v7857 = vunpack.c.l.b16 %v7841
        %v7858 = vunpack.c.l.b16 %v7842
        %v7859 = vunpack.c.l.b16 %v7843
        %v7860 = vunpack.c.l.b16 %v7844
        %v7861 = vunpack.c.l.b16 %v7845
        %v7862 = vunpack.c.l.b16 %v7846
        %v7863 = vunpack.c.l.b16 %v7847
        %v7864 = vunpack.c.l.b16 %v7848
        %v7865 = vpack.c.b16 %v7858, %v7857
        %v7866 = vpack.c.b16 %v7860, %v7859
        %v7867 = vpack.c.b16 %v7862, %v7861
        %v7868 = vpack.c.b16 %v7864, %v7863
        %v7874 = vsel %vm5785, %v7839, 0
        %v7877 = vsel %vm5785, %v7840, 0
        %7879 = vmatprep.subr.bf16.mxu0 0
        %7880 = vmatpush1.bf16.msra.mxu0 %v7865
        %7881 = vmatprep.subr.bf16.mxu0 0
        %7882 = vmatpush1.bf16.msra.mxu0 %v7866
        %7883 = vmatprep.subr.bf16.mxu0 0
        %7884 = vmatpush1.bf16.msra.mxu0 %v7867
        %7885 = vmatprep.subr.bf16.mxu0 0
        %7886 = vmatpush1.bf16.msra.mxu0 %v7868
        %7887 = vmatprep.subr.bf16.mxu0 0
        %7888 = vmatpush1.bf16.msra.mxu0 0
        %7889 = vmatprep.subr.bf16.mxu0 0
        %7890 = vmatpush1.bf16.msra.mxu0 0
        %7891 = vmatprep.subr.bf16.mxu0 0
        %7892 = vmatpush1.bf16.msra.mxu0 0
        %7893 = vmatprep.subr.bf16.mxu0 0
        %7894 = vmatpush1.bf16.msra.mxu0 0
        %7895 = vmatprep.subr.bf16.mxu0 0
        %7896 = vmatpush1.bf16.msra.mxu0 0
        %7897 = vmatprep.subr.bf16.mxu0 0
        %7898 = vmatpush1.bf16.msra.mxu0 0
        %7899 = vmatprep.subr.bf16.mxu0 0
        %7900 = vmatpush1.bf16.msra.mxu0 0
        %7901 = vmatprep.subr.bf16.mxu0 0
        %7902 = vmatpush1.bf16.msra.mxu0 0
        %7903 = vmatprep.subr.bf16.mxu0 0
        %7904 = vmatpush1.bf16.msra.mxu0 0
        %7905 = vmatprep.subr.bf16.mxu0 0
        %7906 = vmatpush1.bf16.msra.mxu0 0
        %7907 = vmatprep.subr.bf16.mxu0 0
        %7908 = vmatpush1.bf16.msra.mxu0 0
        %7909 = vmatprep.subr.bf16.mxu0 0
        %7910 = vmatpush1.bf16.msra.mxu0 0
        %7911 = vmatprep.mubr.bf16.mxu0 0
        %7912 = vmatmul.mubr.bf16.gmra.mrb[0].mxu0 %v7874
        %v7913 = vpop.f32.mrb[0].mxu0
        %v7914 = vadd.f32 0.0, %v7913
        %v7915 = vpop.f32.mrb[0].mxu0
        %v7916 = vpop.f32.mrb[0].mxu0
        %v7917 = vadd.f32 0.0, %v7916
        %v7918 = vpop.f32.mrb[0].mxu0
        %7919 = vmatprep.mubr.bf16.mxu0 0
        %7920 = vmatmul.mubr.bf16.gmra.mrb[0].mxu0 %v7877
        %v7921 = vpop.f32.mrb[0].mxu0
        %v7922 = vadd.f32 0.0, %v7921
        %v7923 = vpop.f32.mrb[0].mxu0
        %v7924 = vpop.f32.mrb[0].mxu0
        %v7925 = vadd.f32 0.0, %v7924
        %v7926 = vpop.f32.mrb[0].mxu0
        %7927 = vdwg.mxu0
        %v7928 = vld [vmem:[#allocation5 + $0x26] sm:$0xff]
        %v7929 = vld [vmem:[#allocation5 + $0x2e] sm:$0xff]
        %v7930 = vld [vmem:[#allocation5 + $0x36] sm:$0xff]
        %v7931 = vld [vmem:[#allocation5 + $0x3e] sm:$0x1]
        %v7932 = vadd.f32 %v7928, %v7914
        %v7933 = vadd.f32 %v7929, %v7917
        %v7934 = vadd.f32 %v7930, %v7922
        %v7935 = vadd.f32 %v7931, %v7925
        %7936 = vst [vmem:[#allocation5 + $0x26] sm:$0xff] %v7932
        %7937 = vst [vmem:[#allocation5 + $0x2e] sm:$0xff] %v7933
        %7938 = vst [vmem:[#allocation5 + $0x36] sm:$0xff] %v7934
        %7939 = vst [vmem:[#allocation5 + $0x3e] sm:$0x1] %v7935
        %s7940 = scalar_lea.vmem %s9, 32
        %v7941 = vld [vmem:[%s7940] sm:$0xf]
        %v7942 = vld [vmem:[%s7940 + $0x4] sm:$0xf]
        %v7943 = vld [vmem:[%s7940 + $0x8] sm:$0xf]
        %v7944 = vld [vmem:[%s7940 + $0xc] sm:$0xf]
        %v7945 = vld [vmem:[%s7940 + $0x10] sm:$0xf]
        %v7946 = vld [vmem:[%s7940 + $0x14] sm:$0xf]
        %v7947 = vld [vmem:[%s7940 + $0x18] sm:$0xf]
        %v7948 = vld [vmem:[%s7940 + $0x1c] sm:$0xf]
        %v7957 = vunpack.c.l.b16 %v7941
        %v7958 = vunpack.c.l.b16 %v7942
        %v7959 = vunpack.c.l.b16 %v7943
        %v7960 = vunpack.c.l.b16 %v7944
        %v7961 = vunpack.c.l.b16 %v7945
        %v7962 = vunpack.c.l.b16 %v7946
        %v7963 = vunpack.c.l.b16 %v7947
        %v7964 = vunpack.c.l.b16 %v7948
        %v7965 = vpack.c.b16 %v7958, %v7957
        %v7966 = vpack.c.b16 %v7960, %v7959
        %v7967 = vpack.c.b16 %v7962, %v7961
        %v7968 = vpack.c.b16 %v7964, %v7963
        %7973 = vmatprep.subr.bf16.mxu0 0
        %7974 = vmatpush1.bf16.msra.mxu0 %v7965
        %7975 = vmatprep.subr.bf16.mxu0 0
        %7976 = vmatpush1.bf16.msra.mxu0 %v7966
        %7977 = vmatprep.subr.bf16.mxu0 0
        %7978 = vmatpush1.bf16.msra.mxu0 %v7967
        %7979 = vmatprep.subr.bf16.mxu0 0
        %7980 = vmatpush1.bf16.msra.mxu0 %v7968
        %7981 = vmatprep.subr.bf16.mxu0 0
        %7982 = vmatpush1.bf16.msra.mxu0 0
        %7983 = vmatprep.subr.bf16.mxu0 0
        %7984 = vmatpush1.bf16.msra.mxu0 0
        %7985 = vmatprep.subr.bf16.mxu0 0
        %7986 = vmatpush1.bf16.msra.mxu0 0
        %7987 = vmatprep.subr.bf16.mxu0 0
        %7988 = vmatpush1.bf16.msra.mxu0 0
        %7989 = vmatprep.subr.bf16.mxu0 0
        %7990 = vmatpush1.bf16.msra.mxu0 0
        %7991 = vmatprep.subr.bf16.mxu0 0
        %7992 = vmatpush1.bf16.msra.mxu0 0
        %7993 = vmatprep.subr.bf16.mxu0 0
        %7994 = vmatpush1.bf16.msra.mxu0 0
        %7995 = vmatprep.subr.bf16.mxu0 0
        %7996 = vmatpush1.bf16.msra.mxu0 0
        %7997 = vmatprep.subr.bf16.mxu0 0
        %7998 = vmatpush1.bf16.msra.mxu0 0
        %7999 = vmatprep.subr.bf16.mxu0 0
        %8000 = vmatpush1.bf16.msra.mxu0 0
        %8001 = vmatprep.subr.bf16.mxu0 0
        %8002 = vmatpush1.bf16.msra.mxu0 0
        %8003 = vmatprep.subr.bf16.mxu0 0
        %8004 = vmatpush1.bf16.msra.mxu0 0
        %8005 = vmatprep.mubr.bf16.mxu0 0
        %8006 = vmatmul.mubr.bf16.gmra.mrb[0].mxu0 %v7874
        %v8007 = vpop.f32.mrb[0].mxu0
        %v8008 = vadd.f32 0.0, %v8007
        %v8009 = vpop.f32.mrb[0].mxu0
        %v8010 = vpop.f32.mrb[0].mxu0
        %v8011 = vadd.f32 0.0, %v8010
        %v8012 = vpop.f32.mrb[0].mxu0
        %8013 = vmatprep.mubr.bf16.mxu0 0
        %8014 = vmatmul.mubr.bf16.gmra.mrb[0].mxu0 %v7877
        %v8015 = vpop.f32.mrb[0].mxu0
        %v8016 = vadd.f32 0.0, %v8015
        %v8017 = vpop.f32.mrb[0].mxu0
        %v8018 = vpop.f32.mrb[0].mxu0
        %v8019 = vadd.f32 0.0, %v8018
        %v8020 = vpop.f32.mrb[0].mxu0
        %8021 = vdwg.mxu0
        %v8022 = vld [vmem:[#allocation5 + $0x25] sm:$0xff]
        %v8023 = vld [vmem:[#allocation5 + $0x2d] sm:$0xff]
        %v8024 = vld [vmem:[#allocation5 + $0x35] sm:$0xff]
        %v8025 = vld [vmem:[#allocation5 + $0x3d] sm:$0x1]
        %v8026 = vadd.f32 %v8022, %v8008
        %v8027 = vadd.f32 %v8023, %v8011
        %v8028 = vadd.f32 %v8024, %v8016
        %v8029 = vadd.f32 %v8025, %v8019
        %8030 = vst [vmem:[#allocation5 + $0x25] sm:$0xff] %v8026
        %8031 = vst [vmem:[#allocation5 + $0x2d] sm:$0xff] %v8027
        %8032 = vst [vmem:[#allocation5 + $0x35] sm:$0xff] %v8028
        %8033 = vst [vmem:[#allocation5 + $0x3d] sm:$0x1] %v8029
        %s8034 = scalar_lea.vmem %s9, 64
        %v8035 = vld [vmem:[%s8034] sm:$0xf]
        %v8036 = vld [vmem:[%s8034 + $0x4] sm:$0xf]
        %v8037 = vld [vmem:[%s8034 + $0x8] sm:$0xf]
        %v8038 = vld [vmem:[%s8034 + $0xc] sm:$0xf]
        %v8039 = vld [vmem:[%s8034 + $0x10] sm:$0xf]
        %v8040 = vld [vmem:[%s8034 + $0x14] sm:$0xf]
        %v8041 = vld [vmem:[%s8034 + $0x18] sm:$0xf]
        %v8042 = vld [vmem:[%s8034 + $0x1c] sm:$0xf]
        %v8051 = vunpack.c.l.b16 %v8035
        %v8052 = vunpack.c.l.b16 %v8036
        %v8053 = vunpack.c.l.b16 %v8037
        %v8054 = vunpack.c.l.b16 %v8038
        %v8055 = vunpack.c.l.b16 %v8039
        %v8056 = vunpack.c.l.b16 %v8040
        %v8057 = vunpack.c.l.b16 %v8041
        %v8058 = vunpack.c.l.b16 %v8042
        %v8059 = vpack.c.b16 %v8052, %v8051
        %v8060 = vpack.c.b16 %v8054, %v8053
        %v8061 = vpack.c.b16 %v8056, %v8055
        %v8062 = vpack.c.b16 %v8058, %v8057
        %8067 = vmatprep.subr.bf16.mxu0 0
        %8068 = vmatpush1.bf16.msra.mxu0 %v8059
        %8069 = vmatprep.subr.bf16.mxu0 0
        %8070 = vmatpush1.bf16.msra.mxu0 %v8060
        %8071 = vmatprep.subr.bf16.mxu0 0
        %8072 = vmatpush1.bf16.msra.mxu0 %v8061
        %8073 = vmatprep.subr.bf16.mxu0 0
        %8074 = vmatpush1.bf16.msra.mxu0 %v8062
        %8075 = vmatprep.subr.bf16.mxu0 0
        %8076 = vmatpush1.bf16.msra.mxu0 0
        %8077 = vmatprep.subr.bf16.mxu0 0
        %8078 = vmatpush1.bf16.msra.mxu0 0
        %8079 = vmatprep.subr.bf16.mxu0 0
        %8080 = vmatpush1.bf16.msra.mxu0 0
        %8081 = vmatprep.subr.bf16.mxu0 0
        %8082 = vmatpush1.bf16.msra.mxu0 0
        %8083 = vmatprep.subr.bf16.mxu0 0
        %8084 = vmatpush1.bf16.msra.mxu0 0
        %8085 = vmatprep.subr.bf16.mxu0 0
        %8086 = vmatpush1.bf16.msra.mxu0 0
        %8087 = vmatprep.subr.bf16.mxu0 0
        %8088 = vmatpush1.bf16.msra.mxu0 0
        %8089 = vmatprep.subr.bf16.mxu0 0
        %8090 = vmatpush1.bf16.msra.mxu0 0
        %8091 = vmatprep.subr.bf16.mxu0 0
        %8092 = vmatpush1.bf16.msra.mxu0 0
        %8093 = vmatprep.subr.bf16.mxu0 0
        %8094 = vmatpush1.bf16.msra.mxu0 0
        %8095 = vmatprep.subr.bf16.mxu0 0
        %8096 = vmatpush1.bf16.msra.mxu0 0
        %8097 = vmatprep.subr.bf16.mxu0 0
        %8098 = vmatpush1.bf16.msra.mxu0 0
        %8099 = vmatprep.mubr.bf16.mxu0 0
        %8100 = vmatmul.mubr.bf16.gmra.mrb[0].mxu0 %v7874
        %v8101 = vpop.f32.mrb[0].mxu0
        %v8102 = vadd.f32 0.0, %v8101
        %v8103 = vpop.f32.mrb[0].mxu0
        %v8104 = vpop.f32.mrb[0].mxu0
        %v8105 = vadd.f32 0.0, %v8104
        %v8106 = vpop.f32.mrb[0].mxu0
        %8107 = vmatprep.mubr.bf16.mxu0 0
        %8108 = vmatmul.mubr.bf16.gmra.mrb[0].mxu0 %v7877
        %v8109 = vpop.f32.mrb[0].mxu0
        %v8110 = vadd.f32 0.0, %v8109
        %v8111 = vpop.f32.mrb[0].mxu0
        %v8112 = vpop.f32.mrb[0].mxu0
        %v8113 = vadd.f32 0.0, %v8112
        %v8114 = vpop.f32.mrb[0].mxu0
        %8115 = vdwg.mxu0
        %v8116 = vld [vmem:[#allocation5 + $0x24] sm:$0xff]
        %v8117 = vld [vmem:[#allocation5 + $0x2c] sm:$0xff]
        %v8118 = vld [vmem:[#allocation5 + $0x34] sm:$0xff]
        %v8119 = vld [vmem:[#allocation5 + $0x3c] sm:$0x1]
        %v8120 = vadd.f32 %v8116, %v8102
        %v8121 = vadd.f32 %v8117, %v8105
        %v8122 = vadd.f32 %v8118, %v8110
        %v8123 = vadd.f32 %v8119, %v8113
        %8124 = vst [vmem:[#allocation5 + $0x24] sm:$0xff] %v8120
        %8125 = vst [vmem:[#allocation5 + $0x2c] sm:$0xff] %v8121
        %8126 = vst [vmem:[#allocation5 + $0x34] sm:$0xff] %v8122
        %8127 = vst [vmem:[#allocation5 + $0x3c] sm:$0x1] %v8123
        %s8128 = scalar_lea.vmem %s9, 96
        %v8129 = vld [vmem:[%s8128] sm:$0xf]
        %v8130 = vld [vmem:[%s8128 + $0x4] sm:$0xf]
        %v8131 = vld [vmem:[%s8128 + $0x8] sm:$0xf]
        %v8132 = vld [vmem:[%s8128 + $0xc] sm:$0xf]
        %v8133 = vld [vmem:[%s8128 + $0x10] sm:$0xf]
        %v8134 = vld [vmem:[%s8128 + $0x14] sm:$0xf]
        %v8135 = vld [vmem:[%s8128 + $0x18] sm:$0xf]
        %v8136 = vld [vmem:[%s8128 + $0x1c] sm:$0xf]
        %v8145 = vunpack.c.l.b16 %v8129
        %v8146 = vunpack.c.l.b16 %v8130
        %v8147 = vunpack.c.l.b16 %v8131
        %v8148 = vunpack.c.l.b16 %v8132
        %v8149 = vunpack.c.l.b16 %v8133
        %v8150 = vunpack.c.l.b16 %v8134
        %v8151 = vunpack.c.l.b16 %v8135
        %v8152 = vunpack.c.l.b16 %v8136
        %v8153 = vpack.c.b16 %v8146, %v8145
        %v8154 = vpack.c.b16 %v8148, %v8147
        %v8155 = vpack.c.b16 %v8150, %v8149
        %v8156 = vpack.c.b16 %v8152, %v8151
        %8161 = vmatprep.subr.bf16.mxu0 0
        %8162 = vmatpush1.bf16.msra.mxu0 %v8153
        %8163 = vmatprep.subr.bf16.mxu0 0
        %8164 = vmatpush1.bf16.msra.mxu0 %v8154
        %8165 = vmatprep.subr.bf16.mxu0 0
        %8166 = vmatpush1.bf16.msra.mxu0 %v8155
        %8167 = vmatprep.subr.bf16.mxu0 0
        %8168 = vmatpush1.bf16.msra.mxu0 %v8156
        %8169 = vmatprep.subr.bf16.mxu0 0
        %8170 = vmatpush1.bf16.msra.mxu0 0
        %8171 = vmatprep.subr.bf16.mxu0 0
        %8172 = vmatpush1.bf16.msra.mxu0 0
        %8173 = vmatprep.subr.bf16.mxu0 0
        %8174 = vmatpush1.bf16.msra.mxu0 0
        %8175 = vmatprep.subr.bf16.mxu0 0
        %8176 = vmatpush1.bf16.msra.mxu0 0
        %8177 = vmatprep.subr.bf16.mxu0 0
        %8178 = vmatpush1.bf16.msra.mxu0 0
        %8179 = vmatprep.subr.bf16.mxu0 0
        %8180 = vmatpush1.bf16.msra.mxu0 0
        %8181 = vmatprep.subr.bf16.mxu0 0
        %8182 = vmatpush1.bf16.msra.mxu0 0
        %8183 = vmatprep.subr.bf16.mxu0 0
        %8184 = vmatpush1.bf16.msra.mxu0 0
        %8185 = vmatprep.subr.bf16.mxu0 0
        %8186 = vmatpush1.bf16.msra.mxu0 0
        %8187 = vmatprep.subr.bf16.mxu0 0
        %8188 = vmatpush1.bf16.msra.mxu0 0
        %8189 = vmatprep.subr.bf16.mxu0 0
        %8190 = vmatpush1.bf16.msra.mxu0 0
        %8191 = vmatprep.subr.bf16.mxu0 0
        %8192 = vmatpush1.bf16.msra.mxu0 0
        %8193 = vmatprep.mubr.bf16.mxu0 0
        %8194 = vmatmul.mubr.bf16.gmra.mrb[0].mxu0 %v7874
        %v8195 = vpop.f32.mrb[0].mxu0
        %v8196 = vadd.f32 0.0, %v8195
        %v8197 = vpop.f32.mrb[0].mxu0
        %v8198 = vpop.f32.mrb[0].mxu0
        %v8199 = vadd.f32 0.0, %v8198
        %v8200 = vpop.f32.mrb[0].mxu0
        %8201 = vmatprep.mubr.bf16.mxu0 0
        %8202 = vmatmul.mubr.bf16.gmra.mrb[0].mxu0 %v7877
        %v8203 = vpop.f32.mrb[0].mxu0
        %v8204 = vadd.f32 0.0, %v8203
        %v8205 = vpop.f32.mrb[0].mxu0
        %v8206 = vpop.f32.mrb[0].mxu0
        %v8207 = vadd.f32 0.0, %v8206
        %v8208 = vpop.f32.mrb[0].mxu0
        %8209 = vdwg.mxu0
        %v8210 = vld [vmem:[#allocation5 + $0x21] sm:$0xff]
        %v8211 = vld [vmem:[#allocation5 + $0x29] sm:$0xff]
        %v8212 = vld [vmem:[#allocation5 + $0x31] sm:$0xff]
        %v8213 = vld [vmem:[#allocation5 + $0x39] sm:$0x1]
        %v8214 = vadd.f32 %v8210, %v8196
        %v8215 = vadd.f32 %v8211, %v8199
        %v8216 = vadd.f32 %v8212, %v8204
        %v8217 = vadd.f32 %v8213, %v8207
        %8218 = vst [vmem:[#allocation5 + $0x21] sm:$0xff] %v8214
        %8219 = vst [vmem:[#allocation5 + $0x29] sm:$0xff] %v8215
        %8220 = vst [vmem:[#allocation5 + $0x31] sm:$0xff] %v8216
        %8221 = vst [vmem:[#allocation5 + $0x39] sm:$0x1] %v8217
        %s8222 = scalar_lea.vmem %s9, 128
        %v8223 = vld [vmem:[%s8222] sm:$0xf]
        %v8224 = vld [vmem:[%s8222 + $0x4] sm:$0xf]
        %v8225 = vld [vmem:[%s8222 + $0x8] sm:$0xf]
        %v8226 = vld [vmem:[%s8222 + $0xc] sm:$0xf]
        %v8227 = vld [vmem:[%s8222 + $0x10] sm:$0xf]
        %v8228 = vld [vmem:[%s8222 + $0x14] sm:$0xf]
        %v8229 = vld [vmem:[%s8222 + $0x18] sm:$0xf]
        %v8230 = vld [vmem:[%s8222 + $0x1c] sm:$0xf]
        %v8239 = vunpack.c.l.b16 %v8223
        %v8240 = vunpack.c.l.b16 %v8224
        %v8241 = vunpack.c.l.b16 %v8225
        %v8242 = vunpack.c.l.b16 %v8226
        %v8243 = vunpack.c.l.b16 %v8227
        %v8244 = vunpack.c.l.b16 %v8228
        %v8245 = vunpack.c.l.b16 %v8229
        %v8246 = vunpack.c.l.b16 %v8230
        %v8247 = vpack.c.b16 %v8240, %v8239
        %v8248 = vpack.c.b16 %v8242, %v8241
        %v8249 = vpack.c.b16 %v8244, %v8243
        %v8250 = vpack.c.b16 %v8246, %v8245
        %8255 = vmatprep.subr.bf16.mxu0 0
        %8256 = vmatpush1.bf16.msra.mxu0 %v8247
        %8257 = vmatprep.subr.bf16.mxu0 0
        %8258 = vmatpush1.bf16.msra.mxu0 %v8248
        %8259 = vmatprep.subr.bf16.mxu0 0
        %8260 = vmatpush1.bf16.msra.mxu0 %v8249
        %8261 = vmatprep.subr.bf16.mxu0 0
        %8262 = vmatpush1.bf16.msra.mxu0 %v8250
        %8263 = vmatprep.subr.bf16.mxu0 0
        %8264 = vmatpush1.bf16.msra.mxu0 0
        %8265 = vmatprep.subr.bf16.mxu0 0
        %8266 = vmatpush1.bf16.msra.mxu0 0
        %8267 = vmatprep.subr.bf16.mxu0 0
        %8268 = vmatpush1.bf16.msra.mxu0 0
        %8269 = vmatprep.subr.bf16.mxu0 0
        %8270 = vmatpush1.bf16.msra.mxu0 0
        %8271 = vmatprep.subr.bf16.mxu0 0
        %8272 = vmatpush1.bf16.msra.mxu0 0
        %8273 = vmatprep.subr.bf16.mxu0 0
        %8274 = vmatpush1.bf16.msra.mxu0 0
        %8275 = vmatprep.subr.bf16.mxu0 0
        %8276 = vmatpush1.bf16.msra.mxu0 0
        %8277 = vmatprep.subr.bf16.mxu0 0
        %8278 = vmatpush1.bf16.msra.mxu0 0
        %8279 = vmatprep.subr.bf16.mxu0 0
        %8280 = vmatpush1.bf16.msra.mxu0 0
        %8281 = vmatprep.subr.bf16.mxu0 0
        %8282 = vmatpush1.bf16.msra.mxu0 0
        %8283 = vmatprep.subr.bf16.mxu0 0
        %8284 = vmatpush1.bf16.msra.mxu0 0
        %8285 = vmatprep.subr.bf16.mxu0 0
        %8286 = vmatpush1.bf16.msra.mxu0 0
        %8287 = vmatprep.mubr.bf16.mxu0 0
        %8288 = vmatmul.mubr.bf16.gmra.mrb[0].mxu0 %v7874
        %v8289 = vpop.f32.mrb[0].mxu0
        %v8290 = vadd.f32 0.0, %v8289
        %v8291 = vpop.f32.mrb[0].mxu0
        %v8292 = vpop.f32.mrb[0].mxu0
        %v8293 = vadd.f32 0.0, %v8292
        %v8294 = vpop.f32.mrb[0].mxu0
        %8295 = vmatprep.mubr.bf16.mxu0 0
        %8296 = vmatmul.mubr.bf16.gmra.mrb[0].mxu0 %v7877
        %v8297 = vpop.f32.mrb[0].mxu0
        %v8298 = vadd.f32 0.0, %v8297
        %v8299 = vpop.f32.mrb[0].mxu0
        %v8300 = vpop.f32.mrb[0].mxu0
        %v8301 = vadd.f32 0.0, %v8300
        %v8302 = vpop.f32.mrb[0].mxu0
        %8303 = vdwg.mxu0
        %v8304 = vld [vmem:[#allocation5 + $0x20] sm:$0xff]
        %v8305 = vld [vmem:[#allocation5 + $0x28] sm:$0xff]
        %v8306 = vld [vmem:[#allocation5 + $0x30] sm:$0xff]
        %v8307 = vld [vmem:[#allocation5 + $0x38] sm:$0x1]
        %v8308 = vadd.f32 %v8304, %v8290
        %v8309 = vadd.f32 %v8305, %v8293
        %v8310 = vadd.f32 %v8306, %v8298
        %v8311 = vadd.f32 %v8307, %v8301
        %8312 = vst [vmem:[#allocation5 + $0x20] sm:$0xff] %v8308
        %8313 = vst [vmem:[#allocation5 + $0x28] sm:$0xff] %v8309
        %8314 = vst [vmem:[#allocation5 + $0x30] sm:$0xff] %v8310
        %8315 = vst [vmem:[#allocation5 + $0x38] sm:$0x1] %v8311
        %s8316 = scalar_lea.vmem %s9, 160
        %v8317 = vld [vmem:[%s8316] sm:$0xf]
        %v8318 = vld [vmem:[%s8316 + $0x4] sm:$0xf]
        %v8319 = vld [vmem:[%s8316 + $0x8] sm:$0xf]
        %v8320 = vld [vmem:[%s8316 + $0xc] sm:$0xf]
        %v8321 = vld [vmem:[%s8316 + $0x10] sm:$0xf]
        %v8322 = vld [vmem:[%s8316 + $0x14] sm:$0xf]
        %v8323 = vld [vmem:[%s8316 + $0x18] sm:$0xf]
        %v8324 = vld [vmem:[%s8316 + $0x1c] sm:$0xf]
        %v8333 = vunpack.c.l.b16 %v8317
        %v8334 = vunpack.c.l.b16 %v8318
        %v8335 = vunpack.c.l.b16 %v8319
        %v8336 = vunpack.c.l.b16 %v8320
        %v8337 = vunpack.c.l.b16 %v8321
        %v8338 = vunpack.c.l.b16 %v8322
        %v8339 = vunpack.c.l.b16 %v8323
        %v8340 = vunpack.c.l.b16 %v8324
        %v8341 = vpack.c.b16 %v8334, %v8333
        %v8342 = vpack.c.b16 %v8336, %v8335
        %v8343 = vpack.c.b16 %v8338, %v8337
        %v8344 = vpack.c.b16 %v8340, %v8339
        %8349 = vmatprep.subr.bf16.mxu0 0
        %8350 = vmatpush1.bf16.msra.mxu0 %v8341
        %8351 = vmatprep.subr.bf16.mxu0 0
        %8352 = vmatpush1.bf16.msra.mxu0 %v8342
        %8353 = vmatprep.subr.bf16.mxu0 0
        %8354 = vmatpush1.bf16.msra.mxu0 %v8343
        %8355 = vmatprep.subr.bf16.mxu0 0
        %8356 = vmatpush1.bf16.msra.mxu0 %v8344
        %8357 = vmatprep.subr.bf16.mxu0 0
        %8358 = vmatpush1.bf16.msra.mxu0 0
        %8359 = vmatprep.subr.bf16.mxu0 0
        %8360 = vmatpush1.bf16.msra.mxu0 0
        %8361 = vmatprep.subr.bf16.mxu0 0
        %8362 = vmatpush1.bf16.msra.mxu0 0
        %8363 = vmatprep.subr.bf16.mxu0 0
        %8364 = vmatpush1.bf16.msra.mxu0 0
        %8365 = vmatprep.subr.bf16.mxu0 0
        %8366 = vmatpush1.bf16.msra.mxu0 0
        %8367 = vmatprep.subr.bf16.mxu0 0
        %8368 = vmatpush1.bf16.msra.mxu0 0
        %8369 = vmatprep.subr.bf16.mxu0 0
        %8370 = vmatpush1.bf16.msra.mxu0 0
        %8371 = vmatprep.subr.bf16.mxu0 0
        %8372 = vmatpush1.bf16.msra.mxu0 0
        %8373 = vmatprep.subr.bf16.mxu0 0
        %8374 = vmatpush1.bf16.msra.mxu0 0
        %8375 = vmatprep.subr.bf16.mxu0 0
        %8376 = vmatpush1.bf16.msra.mxu0 0
        %8377 = vmatprep.subr.bf16.mxu0 0
        %8378 = vmatpush1.bf16.msra.mxu0 0
        %8379 = vmatprep.subr.bf16.mxu0 0
        %8380 = vmatpush1.bf16.msra.mxu0 0
        %8381 = vmatprep.mubr.bf16.mxu0 0
        %8382 = vmatmul.mubr.bf16.gmra.mrb[0].mxu0 %v7874
        %v8383 = vpop.f32.mrb[0].mxu0
        %v8384 = vadd.f32 0.0, %v8383
        %v8385 = vpop.f32.mrb[0].mxu0
        %v8386 = vpop.f32.mrb[0].mxu0
        %v8387 = vadd.f32 0.0, %v8386
        %v8388 = vpop.f32.mrb[0].mxu0
        %8389 = vmatprep.mubr.bf16.mxu0 0
        %8390 = vmatmul.mubr.bf16.gmra.mrb[0].mxu0 %v7877
        %v8391 = vpop.f32.mrb[0].mxu0
        %v8392 = vadd.f32 0.0, %v8391
        %v8393 = vpop.f32.mrb[0].mxu0
        %v8394 = vpop.f32.mrb[0].mxu0
        %v8395 = vadd.f32 0.0, %v8394
        %v8396 = vpop.f32.mrb[0].mxu0
        %8397 = vdwg.mxu0
        %v8398 = vld [vmem:[#allocation5 + $0x1f] sm:$0xff]
        %v8399 = vld [vmem:[#allocation5 + $0x27] sm:$0xff]
        %v8400 = vld [vmem:[#allocation5 + $0x2f] sm:$0xff]
        %v8401 = vld [vmem:[#allocation5 + $0x37] sm:$0x1]
        %v8402 = vadd.f32 %v8398, %v8384
        %v8403 = vadd.f32 %v8399, %v8387
        %v8404 = vadd.f32 %v8400, %v8392
        %v8405 = vadd.f32 %v8401, %v8395
        %8406 = vst [vmem:[#allocation5 + $0x1f] sm:$0xff] %v8402
        %8407 = vst [vmem:[#allocation5 + $0x27] sm:$0xff] %v8403
        %8408 = vst [vmem:[#allocation5 + $0x2f] sm:$0xff] %v8404
        %8409 = vst [vmem:[#allocation5 + $0x37] sm:$0x1] %v8405
        %s8410 = scalar_lea.vmem %s9, 192
        %v8411 = vld [vmem:[%s8410] sm:$0xf]
        %v8412 = vld [vmem:[%s8410 + $0x4] sm:$0xf]
        %v8413 = vld [vmem:[%s8410 + $0x8] sm:$0xf]
        %v8414 = vld [vmem:[%s8410 + $0xc] sm:$0xf]
        %v8415 = vld [vmem:[%s8410 + $0x10] sm:$0xf]
        %v8416 = vld [vmem:[%s8410 + $0x14] sm:$0xf]
        %v8417 = vld [vmem:[%s8410 + $0x18] sm:$0xf]
        %v8418 = vld [vmem:[%s8410 + $0x1c] sm:$0xf]
        %v8427 = vunpack.c.l.b16 %v8411
        %v8428 = vunpack.c.l.b16 %v8412
        %v8429 = vunpack.c.l.b16 %v8413
        %v8430 = vunpack.c.l.b16 %v8414
        %v8431 = vunpack.c.l.b16 %v8415
        %v8432 = vunpack.c.l.b16 %v8416
        %v8433 = vunpack.c.l.b16 %v8417
        %v8434 = vunpack.c.l.b16 %v8418
        %v8435 = vpack.c.b16 %v8428, %v8427
        %v8436 = vpack.c.b16 %v8430, %v8429
        %v8437 = vpack.c.b16 %v8432, %v8431
        %v8438 = vpack.c.b16 %v8434, %v8433
        %8443 = vmatprep.subr.bf16.mxu0 0
        %8444 = vmatpush1.bf16.msra.mxu0 %v8435
        %8445 = vmatprep.subr.bf16.mxu0 0
        %8446 = vmatpush1.bf16.msra.mxu0 %v8436
        %8447 = vmatprep.subr.bf16.mxu0 0
        %8448 = vmatpush1.bf16.msra.mxu0 %v8437
        %8449 = vmatprep.subr.bf16.mxu0 0
        %8450 = vmatpush1.bf16.msra.mxu0 %v8438
        %8451 = vmatprep.subr.bf16.mxu0 0
        %8452 = vmatpush1.bf16.msra.mxu0 0
        %8453 = vmatprep.subr.bf16.mxu0 0
        %8454 = vmatpush1.bf16.msra.mxu0 0
        %8455 = vmatprep.subr.bf16.mxu0 0
        %8456 = vmatpush1.bf16.msra.mxu0 0
        %8457 = vmatprep.subr.bf16.mxu0 0
        %8458 = vmatpush1.bf16.msra.mxu0 0
        %8459 = vmatprep.subr.bf16.mxu0 0
        %8460 = vmatpush1.bf16.msra.mxu0 0
        %8461 = vmatprep.subr.bf16.mxu0 0
        %8462 = vmatpush1.bf16.msra.mxu0 0
        %8463 = vmatprep.subr.bf16.mxu0 0
        %8464 = vmatpush1.bf16.msra.mxu0 0
        %8465 = vmatprep.subr.bf16.mxu0 0
        %8466 = vmatpush1.bf16.msra.mxu0 0
        %8467 = vmatprep.subr.bf16.mxu0 0
        %8468 = vmatpush1.bf16.msra.mxu0 0
        %8469 = vmatprep.subr.bf16.mxu0 0
        %8470 = vmatpush1.bf16.msra.mxu0 0
        %8471 = vmatprep.subr.bf16.mxu0 0
        %8472 = vmatpush1.bf16.msra.mxu0 0
        %8473 = vmatprep.subr.bf16.mxu0 0
        %8474 = vmatpush1.bf16.msra.mxu0 0
        %8475 = vmatprep.mubr.bf16.mxu0 0
        %8476 = vmatmul.mubr.bf16.gmra.mrb[0].mxu0 %v7874
        %v8477 = vpop.f32.mrb[0].mxu0
        %v8478 = vadd.f32 0.0, %v8477
        %v8479 = vpop.f32.mrb[0].mxu0
        %v8480 = vpop.f32.mrb[0].mxu0
        %v8481 = vadd.f32 0.0, %v8480
        %v8482 = vpop.f32.mrb[0].mxu0
        %8483 = vmatprep.mubr.bf16.mxu0 0
        %8484 = vmatmul.mubr.bf16.gmra.mrb[0].mxu0 %v7877
        %v8485 = vpop.f32.mrb[0].mxu0
        %v8486 = vadd.f32 0.0, %v8485
        %v8487 = vpop.f32.mrb[0].mxu0
        %v8488 = vpop.f32.mrb[0].mxu0
        %v8489 = vadd.f32 0.0, %v8488
        %v8490 = vpop.f32.mrb[0].mxu0
        %8491 = vdwg.mxu0
        %v8492 = vld [vmem:[#allocation5 + $0x1c] sm:$0xff]
        %v8493 = vld [vmem:[#allocation5 + $0x24] sm:$0xff]
        %v8494 = vld [vmem:[#allocation5 + $0x2c] sm:$0xff]
        %v8495 = vld [vmem:[#allocation5 + $0x34] sm:$0x1]
        %v8496 = vadd.f32 %v8492, %v8478
        %v8497 = vadd.f32 %v8493, %v8481
        %v8498 = vadd.f32 %v8494, %v8486
        %v8499 = vadd.f32 %v8495, %v8489
        %8500 = vst [vmem:[#allocation5 + $0x1c] sm:$0xff] %v8496
        %8501 = vst [vmem:[#allocation5 + $0x24] sm:$0xff] %v8497
        %8502 = vst [vmem:[#allocation5 + $0x2c] sm:$0xff] %v8498
        %8503 = vst [vmem:[#allocation5 + $0x34] sm:$0x1] %v8499
        %s8504 = scalar_lea.vmem %s9, 224
        %v8505 = vld [vmem:[%s8504] sm:$0xf]
        %v8506 = vld [vmem:[%s8504 + $0x4] sm:$0xf]
        %v8507 = vld [vmem:[%s8504 + $0x8] sm:$0xf]
        %v8508 = vld [vmem:[%s8504 + $0xc] sm:$0xf]
        %v8509 = vld [vmem:[%s8504 + $0x10] sm:$0xf]
        %v8510 = vld [vmem:[%s8504 + $0x14] sm:$0xf]
        %v8511 = vld [vmem:[%s8504 + $0x18] sm:$0xf]
        %v8512 = vld [vmem:[%s8504 + $0x1c] sm:$0xf]
        %v8521 = vunpack.c.l.b16 %v8505
        %v8522 = vunpack.c.l.b16 %v8506
        %v8523 = vunpack.c.l.b16 %v8507
        %v8524 = vunpack.c.l.b16 %v8508
        %v8525 = vunpack.c.l.b16 %v8509
        %v8526 = vunpack.c.l.b16 %v8510
        %v8527 = vunpack.c.l.b16 %v8511
        %v8528 = vunpack.c.l.b16 %v8512
        %v8529 = vpack.c.b16 %v8522, %v8521
        %v8530 = vpack.c.b16 %v8524, %v8523
        %v8531 = vpack.c.b16 %v8526, %v8525
        %v8532 = vpack.c.b16 %v8528, %v8527
        %8537 = vmatprep.subr.bf16.mxu0 0
        %8538 = vmatpush1.bf16.msra.mxu0 %v8529
        %8539 = vmatprep.subr.bf16.mxu0 0
        %8540 = vmatpush1.bf16.msra.mxu0 %v8530
        %8541 = vmatprep.subr.bf16.mxu0 0
        %8542 = vmatpush1.bf16.msra.mxu0 %v8531
        %8543 = vmatprep.subr.bf16.mxu0 0
        %8544 = vmatpush1.bf16.msra.mxu0 %v8532
        %8545 = vmatprep.subr.bf16.mxu0 0
        %8546 = vmatpush1.bf16.msra.mxu0 0
        %8547 = vmatprep.subr.bf16.mxu0 0
        %8548 = vmatpush1.bf16.msra.mxu0 0
        %8549 = vmatprep.subr.bf16.mxu0 0
        %8550 = vmatpush1.bf16.msra.mxu0 0
        %8551 = vmatprep.subr.bf16.mxu0 0
        %8552 = vmatpush1.bf16.msra.mxu0 0
        %8553 = vmatprep.subr.bf16.mxu0 0
        %8554 = vmatpush1.bf16.msra.mxu0 0
        %8555 = vmatprep.subr.bf16.mxu0 0
        %8556 = vmatpush1.bf16.msra.mxu0 0
        %8557 = vmatprep.subr.bf16.mxu0 0
        %8558 = vmatpush1.bf16.msra.mxu0 0
        %8559 = vmatprep.subr.bf16.mxu0 0
        %8560 = vmatpush1.bf16.msra.mxu0 0
        %8561 = vmatprep.subr.bf16.mxu0 0
        %8562 = vmatpush1.bf16.msra.mxu0 0
        %8563 = vmatprep.subr.bf16.mxu0 0
        %8564 = vmatpush1.bf16.msra.mxu0 0
        %8565 = vmatprep.subr.bf16.mxu0 0
        %8566 = vmatpush1.bf16.msra.mxu0 0
        %8567 = vmatprep.subr.bf16.mxu0 0
        %8568 = vmatpush1.bf16.msra.mxu0 0
        %8569 = vmatprep.mubr.bf16.mxu0 0
        %8570 = vmatmul.mubr.bf16.gmra.mrb[0].mxu0 %v7874
        %v8571 = vpop.f32.mrb[0].mxu0
        %v8572 = vadd.f32 0.0, %v8571
        %v8573 = vpop.f32.mrb[0].mxu0
        %v8574 = vpop.f32.mrb[0].mxu0
        %v8575 = vadd.f32 0.0, %v8574
        %v8576 = vpop.f32.mrb[0].mxu0
        %8577 = vmatprep.mubr.bf16.mxu0 0
        %8578 = vmatmul.mubr.bf16.gmra.mrb[0].mxu0 %v7877
        %v8579 = vpop.f32.mrb[0].mxu0
        %v8580 = vadd.f32 0.0, %v8579
        %v8581 = vpop.f32.mrb[0].mxu0
        %v8582 = vpop.f32.mrb[0].mxu0
        %v8583 = vadd.f32 0.0, %v8582
        %v8584 = vpop.f32.mrb[0].mxu0
        %8585 = vdwg.mxu0
        %v8586 = vld [vmem:[#allocation5 + $0x1b] sm:$0xff]
        %v8587 = vld [vmem:[#allocation5 + $0x23] sm:$0xff]
        %v8588 = vld [vmem:[#allocation5 + $0x2b] sm:$0xff]
        %v8589 = vld [vmem:[#allocation5 + $0x33] sm:$0x1]
        %v8590 = vadd.f32 %v8586, %v8572
        %v8591 = vadd.f32 %v8587, %v8575
        %v8592 = vadd.f32 %v8588, %v8580
        %v8593 = vadd.f32 %v8589, %v8583
        %8594 = vst [vmem:[#allocation5 + $0x1b] sm:$0xff] %v8590
        %8595 = vst [vmem:[#allocation5 + $0x23] sm:$0xff] %v8591
        %8596 = vst [vmem:[#allocation5 + $0x2b] sm:$0xff] %v8592
        %8597 = vst [vmem:[#allocation5 + $0x33] sm:$0x1] %v8593
        %s8598 = scalar_lea.vmem %s9, 256
        %v8599 = vld [vmem:[%s8598] sm:$0xf]
        %v8600 = vld [vmem:[%s8598 + $0x4] sm:$0xf]
        %v8601 = vld [vmem:[%s8598 + $0x8] sm:$0xf]
        %v8602 = vld [vmem:[%s8598 + $0xc] sm:$0xf]
        %v8603 = vld [vmem:[%s8598 + $0x10] sm:$0xf]
        %v8604 = vld [vmem:[%s8598 + $0x14] sm:$0xf]
        %v8605 = vld [vmem:[%s8598 + $0x18] sm:$0xf]
        %v8606 = vld [vmem:[%s8598 + $0x1c] sm:$0xf]
        %v8615 = vunpack.c.l.b16 %v8599
        %v8616 = vunpack.c.l.b16 %v8600
        %v8617 = vunpack.c.l.b16 %v8601
        %v8618 = vunpack.c.l.b16 %v8602
        %v8619 = vunpack.c.l.b16 %v8603
        %v8620 = vunpack.c.l.b16 %v8604
        %v8621 = vunpack.c.l.b16 %v8605
        %v8622 = vunpack.c.l.b16 %v8606
        %v8623 = vpack.c.b16 %v8616, %v8615
        %v8624 = vpack.c.b16 %v8618, %v8617
        %v8625 = vpack.c.b16 %v8620, %v8619
        %v8626 = vpack.c.b16 %v8622, %v8621
        %8631 = vmatprep.subr.bf16.mxu0 0
        %8632 = vmatpush1.bf16.msra.mxu0 %v8623
        %8633 = vmatprep.subr.bf16.mxu0 0
        %8634 = vmatpush1.bf16.msra.mxu0 %v8624
        %8635 = vmatprep.subr.bf16.mxu0 0
        %8636 = vmatpush1.bf16.msra.mxu0 %v8625
        %8637 = vmatprep.subr.bf16.mxu0 0
        %8638 = vmatpush1.bf16.msra.mxu0 %v8626
        %8639 = vmatprep.subr.bf16.mxu0 0
        %8640 = vmatpush1.bf16.msra.mxu0 0
        %8641 = vmatprep.subr.bf16.mxu0 0
        %8642 = vmatpush1.bf16.msra.mxu0 0
        %8643 = vmatprep.subr.bf16.mxu0 0
        %8644 = vmatpush1.bf16.msra.mxu0 0
        %8645 = vmatprep.subr.bf16.mxu0 0
        %8646 = vmatpush1.bf16.msra.mxu0 0
        %8647 = vmatprep.subr.bf16.mxu0 0
        %8648 = vmatpush1.bf16.msra.mxu0 0
        %8649 = vmatprep.subr.bf16.mxu0 0
        %8650 = vmatpush1.bf16.msra.mxu0 0
        %8651 = vmatprep.subr.bf16.mxu0 0
        %8652 = vmatpush1.bf16.msra.mxu0 0
        %8653 = vmatprep.subr.bf16.mxu0 0
        %8654 = vmatpush1.bf16.msra.mxu0 0
        %8655 = vmatprep.subr.bf16.mxu0 0
        %8656 = vmatpush1.bf16.msra.mxu0 0
        %8657 = vmatprep.subr.bf16.mxu0 0
        %8658 = vmatpush1.bf16.msra.mxu0 0
        %8659 = vmatprep.subr.bf16.mxu0 0
        %8660 = vmatpush1.bf16.msra.mxu0 0
        %8661 = vmatprep.subr.bf16.mxu0 0
        %8662 = vmatpush1.bf16.msra.mxu0 0
        %8663 = vmatprep.mubr.bf16.mxu0 0
        %8664 = vmatmul.mubr.bf16.gmra.mrb[0].mxu0 %v7874
        %v8665 = vpop.f32.mrb[0].mxu0
        %v8666 = vadd.f32 0.0, %v8665
        %v8667 = vpop.f32.mrb[0].mxu0
        %v8668 = vpop.f32.mrb[0].mxu0
        %v8669 = vadd.f32 0.0, %v8668
        %v8670 = vpop.f32.mrb[0].mxu0
        %8671 = vmatprep.mubr.bf16.mxu0 0
        %8672 = vmatmul.mubr.bf16.gmra.mrb[0].mxu0 %v7877
        %v8673 = vpop.f32.mrb[0].mxu0
        %v8674 = vadd.f32 0.0, %v8673
        %v8675 = vpop.f32.mrb[0].mxu0
        %v8676 = vpop.f32.mrb[0].mxu0
        %v8677 = vadd.f32 0.0, %v8676
        %v8678 = vpop.f32.mrb[0].mxu0
        %8679 = vdwg.mxu0
        %v8680 = vld [vmem:[#allocation5 + $0x1a] sm:$0xff]
        %v8681 = vld [vmem:[#allocation5 + $0x22] sm:$0xff]
        %v8682 = vld [vmem:[#allocation5 + $0x2a] sm:$0xff]
        %v8683 = vld [vmem:[#allocation5 + $0x32] sm:$0x1]
        %v8684 = vadd.f32 %v8680, %v8666
        %v8685 = vadd.f32 %v8681, %v8669
        %v8686 = vadd.f32 %v8682, %v8674
        %v8687 = vadd.f32 %v8683, %v8677
        %8688 = vst [vmem:[#allocation5 + $0x1a] sm:$0xff] %v8684
        %8689 = vst [vmem:[#allocation5 + $0x22] sm:$0xff] %v8685
        %8690 = vst [vmem:[#allocation5 + $0x2a] sm:$0xff] %v8686
        %8691 = vst [vmem:[#allocation5 + $0x32] sm:$0x1] %v8687
        %v8692 = vld [vmem:[#allocation5 + $0x20] sm:$0xff]
        %v8693 = vld [vmem:[#allocation5 + $0x28] sm:$0xff]
        %v8694 = vld [vmem:[#allocation5 + $0x30] sm:$0xff]
        %v8695 = vld [vmem:[#allocation5 + $0x38] sm:$0x1]
        %v8696 = vmax.f32 %v8692, 0.0
        %v8697 = vmax.f32 %v8693, 0.0
        %v8698 = vmax.f32 %v8694, 0.0
        %v8699 = vmax.f32 %v8695, 0.0
        %v8700 = vld [vmem:[%s10] sm:$0x1]
        %v8702 = vlaneseq
        %v8703 = vshrl.u32 %v8702, 7
        %v8704 = vsub.s32 0, %v8703
        %v8705 = vrot.slane %v8700, %v8704
        %v8707 = vmul.f32 %v8696, %v8705
        %v8708 = vmul.f32 %v8697, %v8705
        %v8709 = vmul.f32 %v8698, %v8705
        %v8710 = vmul.f32 %v8699, %v8705
        %v8711 = vld [vmem:[%s11] sm:$0x1]
        %v8713 = vlaneseq
        %v8714 = vshrl.u32 %v8713, 7
        %v8715 = vsub.s32 0, %v8714
        %v8716 = vrot.slane %v8711, %v8715
        %v8718 = vadd.f32 %v8707, %v8716
        %v8719 = vadd.f32 %v8708, %v8716
        %v8720 = vadd.f32 %v8709, %v8716
        %v8721 = vadd.f32 %v8710, %v8716
        %8722 = vst [vmem:[#allocation5 + $0x20] sm:$0xff] %v8718
        %8723 = vst [vmem:[#allocation5 + $0x28] sm:$0xff] %v8719
        %8724 = vst [vmem:[#allocation5 + $0x30] sm:$0xff] %v8720
        %8725 = vst [vmem:[#allocation5 + $0x38] sm:$0x1] %v8721
        %v8726 = vld [vmem:[#allocation5 + $0x26] sm:$0x7]
        %v8727 = vld [vmem:[#allocation5 + $0x2b] sm:$0x7]
        %v8728 = vmax.f32 %v8726, %v8727
        %v8729 = vld [vmem:[#allocation5 + $0x30] sm:$0x7]
        %v8730 = vmax.f32 %v8728, %v8729
        %vm8731 = vcmask 1042432
        %v8732 = vsel %vm8731, %v8730, -inf
        %v8733 = vrot.slane %v8732, 4
        %v8734 = vmax.f32 %v8732, %v8733
        %v8735 = vrot.slane %v8734, 2
        %v8736 = vmax.f32 %v8734, %v8735
        %v8737 = vrot.slane %v8736, 1
        %v8738 = vmax.f32 %v8736, %v8737
        %v8739 = vpack.c.bf16 %v8738, %v8738
        %v8740 = vld [vmem:[%s12] sm:$0xf]
        %v8741 = vld [vmem:[%s12 + $0x4] sm:$0xf]
        %v8742 = vld [vmem:[%s12 + $0x8] sm:$0xf]
        %v8743 = vld [vmem:[%s12 + $0xc] sm:$0xf]
        %v8744 = vld [vmem:[%s12 + $0x10] sm:$0xf]
        %v8745 = vld [vmem:[%s12 + $0x14] sm:$0xf]
        %v8746 = vld [vmem:[%s12 + $0x18] sm:$0xf]
        %v8747 = vld [vmem:[%s12 + $0x1c] sm:$0xf]
        %v8748 = vld [vmem:[%s12 + $0x20] sm:$0xf]
        %v8749 = vld [vmem:[%s12 + $0x24] sm:$0xf]
        %v8750 = vld [vmem:[%s12 + $0x28] sm:$0xf]
        %v8751 = vld [vmem:[%s12 + $0x2c] sm:$0xf]
        %v8752 = vld [vmem:[%s13] sm:$0x1]
        %v8765 = vunpack.c.l.b16 %v8740
        %v8766 = vunpack.c.l.b16 %v8741
        %v8767 = vunpack.c.l.b16 %v8742
        %v8768 = vunpack.c.l.b16 %v8743
        %v8769 = vunpack.c.l.b16 %v8744
        %v8770 = vunpack.c.l.b16 %v8745
        %v8771 = vunpack.c.l.b16 %v8746
        %v8772 = vunpack.c.l.b16 %v8747
        %v8773 = vunpack.c.l.b16 %v8748
        %v8774 = vunpack.c.l.b16 %v8749
        %v8775 = vunpack.c.l.b16 %v8750
        %v8776 = vunpack.c.l.b16 %v8751
        %v8777 = vpack.c.b16 %v8766, %v8765
        %v8778 = vpack.c.b16 %v8768, %v8767
        %v8779 = vpack.c.b16 %v8770, %v8769
        %v8780 = vpack.c.b16 %v8772, %v8771
        %v8781 = vpack.c.b16 %v8774, %v8773
        %v8782 = vpack.c.b16 %v8776, %v8775
        %vm8789 = vcmask 785408
        %v8791 = vsel %vm8789, %v8739, 0
        %8793 = vmatprep.subr.bf16.mxu0 0
        %8794 = vmatpush1.bf16.msra.mxu0 %v8777
        %8795 = vmatprep.subr.bf16.mxu0 0
        %8796 = vmatpush1.bf16.msra.mxu0 %v8778
        %8797 = vmatprep.subr.bf16.mxu0 0
        %8798 = vmatpush1.bf16.msra.mxu0 %v8779
        %8799 = vmatprep.subr.bf16.mxu0 0
        %8800 = vmatpush1.bf16.msra.mxu0 %v8780
        %8801 = vmatprep.subr.bf16.mxu0 0
        %8802 = vmatpush1.bf16.msra.mxu0 %v8781
        %8803 = vmatprep.subr.bf16.mxu0 0
        %8804 = vmatpush1.bf16.msra.mxu0 %v8782
        %8805 = vmatprep.subr.bf16.mxu0 0
        %8806 = vmatpush1.bf16.msra.mxu0 0
        %8807 = vmatprep.subr.bf16.mxu0 0
        %8808 = vmatpush1.bf16.msra.mxu0 0
        %8809 = vmatprep.subr.bf16.mxu0 0
        %8810 = vmatpush1.bf16.msra.mxu0 0
        %8811 = vmatprep.subr.bf16.mxu0 0
        %8812 = vmatpush1.bf16.msra.mxu0 0
        %8813 = vmatprep.subr.bf16.mxu0 0
        %8814 = vmatpush1.bf16.msra.mxu0 0
        %8815 = vmatprep.subr.bf16.mxu0 0
        %8816 = vmatpush1.bf16.msra.mxu0 0
        %8817 = vmatprep.subr.bf16.mxu0 0
        %8818 = vmatpush1.bf16.msra.mxu0 0
        %8819 = vmatprep.subr.bf16.mxu0 0
        %8820 = vmatpush1.bf16.msra.mxu0 0
        %8821 = vmatprep.subr.bf16.mxu0 0
        %8822 = vmatpush1.bf16.msra.mxu0 0
        %8823 = vmatprep.subr.bf16.mxu0 0
        %8824 = vmatpush1.bf16.msra.mxu0 0
        %8825 = vmatprep.mubr.bf16.mxu0 0
        %8826 = vmatmul.mubr.bf16.gmra.mrb[0].mxu0 %v8791
        %v8827 = vpop.f32.mrb[0].mxu0
        %v8828 = vadd.f32 %v8752, %v8827
        %v8829 = vpop.f32.mrb[0].mxu0
        %v8830 = vpop.f32.mrb[0].mxu0
        %v8831 = vpop.f32.mrb[0].mxu0
        %8832 = vdwg.mxu0
        %v8833 = vmax.f32 %v8828, 0.0
        %v8834 = vpack.c.bf16 %v8833, %v8833
        %v8835 = vld [vmem:[%s14] sm:$0xf]
        %v8836 = vld [vmem:[%s14 + $0x4] sm:$0xf]
        %v8837 = vld [vmem:[%s14 + $0x8] sm:$0xf]
        %v8838 = vld [vmem:[%s14 + $0xc] sm:$0xf]
        %v8839 = vld [vmem:[%s14 + $0x10] sm:$0xf]
        %v8840 = vld [vmem:[%s14 + $0x14] sm:$0xf]
        %v8841 = vld [vmem:[%s14 + $0x18] sm:$0xf]
        %v8842 = vld [vmem:[%s14 + $0x1c] sm:$0xf]
        %v8843 = vld [vmem:[%s14 + $0x20] sm:$0xf]
        %v8844 = vld [vmem:[%s14 + $0x24] sm:$0xf]
        %v8845 = vld [vmem:[%s14 + $0x28] sm:$0xf]
        %v8846 = vld [vmem:[%s14 + $0x2c] sm:$0xf]
        %v8847 = vld [vmem:[%s14 + $0x30] sm:$0xf]
        %v8848 = vld [vmem:[%s14 + $0x34] sm:$0xf]
        %v8849 = vld [vmem:[%s14 + $0x38] sm:$0xf]
        %v8850 = vld [vmem:[%s14 + $0x3c] sm:$0xf]
        %v8851 = vld [vmem:[%s15] sm:$0x1]
        %v8868 = vunpack.c.l.b16 %v8835
        %v8869 = vunpack.c.l.b16 %v8836
        %v8870 = vunpack.c.l.b16 %v8837
        %v8871 = vunpack.c.l.b16 %v8838
        %v8872 = vunpack.c.l.b16 %v8839
        %v8873 = vunpack.c.l.b16 %v8840
        %v8874 = vunpack.c.l.b16 %v8841
        %v8875 = vunpack.c.l.b16 %v8842
        %v8876 = vunpack.c.l.b16 %v8843
        %v8877 = vunpack.c.l.b16 %v8844
        %v8878 = vunpack.c.l.b16 %v8845
        %v8879 = vunpack.c.l.b16 %v8846
        %v8880 = vunpack.c.l.b16 %v8847
        %v8881 = vunpack.c.l.b16 %v8848
        %v8882 = vunpack.c.l.b16 %v8849
        %v8883 = vunpack.c.l.b16 %v8850
        %v8884 = vpack.c.b16 %v8869, %v8868
        %v8885 = vpack.c.b16 %v8871, %v8870
        %v8886 = vpack.c.b16 %v8873, %v8872
        %v8887 = vpack.c.b16 %v8875, %v8874
        %v8888 = vpack.c.b16 %v8877, %v8876
        %v8889 = vpack.c.b16 %v8879, %v8878
        %v8890 = vpack.c.b16 %v8881, %v8880
        %v8891 = vpack.c.b16 %v8883, %v8882
        %8900 = vmatprep.subr.bf16.mxu0 0
        %8901 = vmatpush1.bf16.msra.mxu0 %v8884
        %8902 = vmatprep.subr.bf16.mxu0 0
        %8903 = vmatpush1.bf16.msra.mxu0 %v8885
        %8904 = vmatprep.subr.bf16.mxu0 0
        %8905 = vmatpush1.bf16.msra.mxu0 %v8886
        %8906 = vmatprep.subr.bf16.mxu0 0
        %8907 = vmatpush1.bf16.msra.mxu0 %v8887
        %8908 = vmatprep.subr.bf16.mxu0 0
        %8909 = vmatpush1.bf16.msra.mxu0 %v8888
        %8910 = vmatprep.subr.bf16.mxu0 0
        %8911 = vmatpush1.bf16.msra.mxu0 %v8889
        %8912 = vmatprep.subr.bf16.mxu0 0
        %8913 = vmatpush1.bf16.msra.mxu0 %v8890
        %8914 = vmatprep.subr.bf16.mxu0 0
        %8915 = vmatpush1.bf16.msra.mxu0 %v8891
        %8916 = vmatprep.subr.bf16.mxu0 0
        %8917 = vmatpush1.bf16.msra.mxu0 0
        %8918 = vmatprep.subr.bf16.mxu0 0
        %8919 = vmatpush1.bf16.msra.mxu0 0
        %8920 = vmatprep.subr.bf16.mxu0 0
        %8921 = vmatpush1.bf16.msra.mxu0 0
        %8922 = vmatprep.subr.bf16.mxu0 0
        %8923 = vmatpush1.bf16.msra.mxu0 0
        %8924 = vmatprep.subr.bf16.mxu0 0
        %8925 = vmatpush1.bf16.msra.mxu0 0
        %8926 = vmatprep.subr.bf16.mxu0 0
        %8927 = vmatpush1.bf16.msra.mxu0 0
        %8928 = vmatprep.subr.bf16.mxu0 0
        %8929 = vmatpush1.bf16.msra.mxu0 0
        %8930 = vmatprep.subr.bf16.mxu0 0
        %8931 = vmatpush1.bf16.msra.mxu0 0
        %8932 = vmatprep.mubr.bf16.mxu0 0
        %8933 = vmatmul.mubr.bf16.gmra.mrb[0].mxu0 %v8834
        %v8934 = vpop.f32.mrb[0].mxu0
        %v8935 = vadd.f32 %v8851, %v8934
        %v8936 = vpop.f32.mrb[0].mxu0
        %v8937 = vpop.f32.mrb[0].mxu0
        %v8938 = vpop.f32.mrb[0].mxu0
        %8939 = vdwg.mxu0
        %8940 = vst [vmem:[%s514] sm:$0x1] %v8935
        %s8941 = sand.u32 %s379, 1
        %s8942 = scalar_lea.sflag [#allocation7], %s8941
        %s8943 = sand.u32 %s379, 1
        %s8944 = scalar_lea.vmem [#allocation6], %s8943
        // Predicated region
        $region85: #{single_chan_expert_forward.1} parent=83 // pred_check
          %p8945 = pneg %p389
        $region86: #{single_chan_expert_forward.1} parent=83 // pred_check_branch
          %8947 = sbr.rel (%p8945) target = $region88
        $region87: #{single_chan_expert_forward.1} parent=83 // pred_region
          %s8949 = ssub.s32 16, 16
          %8950 = vsyncadd %s8942, %s8949
          %s8951 = smul.addr %s30, 16
          %s8952 = scalar_lea.hbm %s16, %s8951
          %s8954 = sshll.u32 %s8944, 4
          %s8955 = int_to_ptr.vmem [resolvable:$true] %s8954
          %8957 = dma.vmem_to_hbm [thread:$0]  %s8955, 16, %s8952, %s8942
        $region88: #{single_chan_expert_forward.1} parent=83 // pred_fallthru
          _
      $region84: #{single_chan_expert_forward.1} parent=5 // pred_fallthru
        _
      %p8958 = scmp.le.s32.totalorder 2, %s25
      // Predicated region
      $region89: #{single_chan_expert_forward.1} parent=5 // pred_check
        %p8959 = pneg %p8958
      $region90: #{single_chan_expert_forward.1} parent=5 // pred_check_branch
        %8961 = sbr.rel (%p8959) target = $region92
      $region91: #{single_chan_expert_forward.1} parent=5 // pred_region
        %s8962 = ssub.s32 %s25, 2
        // Predicated region
        $region93: #{single_chan_expert_forward.1} parent=91 // pred_check
          %p8963 = pneg %p395
        $region94: #{single_chan_expert_forward.1} parent=91 // pred_check_branch
          %8965 = sbr.rel (%p8963) target = $region96
        $region95: #{single_chan_expert_forward.1} parent=91 // pred_region
          %s8966 = sand.u32 %s380, 1
          %s8967 = scalar_lea.sflag [#allocation7], %s8966
          %s8968 = sand.u32 %s380, 1
          %s8969 = scalar_lea.vmem [#allocation6], %s8968
          %8970 = dma.done %s8967, 16
        $region96: #{single_chan_expert_forward.1} parent=91 // pred_fallthru
          _
      $region92: #{single_chan_expert_forward.1} parent=5 // pred_fallthru
        _
    $region6: #{single_chan_expert_forward.1} parent=1 // loop_footer
      %s29 = sadd.s32 1, %s25
    $region7: #{single_chan_expert_forward.1} parent=1 // loop_footer_branch
      %24 = sbr.rel target = $region3
    $region8: #{single_chan_expert_forward.1} parent=1 // loop_exit
      _
    %8971 = vsyncpa [#allocation7], 1
    %s8972 = scalar_lea.sflag [#allocation7], 1
    %8973 = vsyncpa %s8972, 1

</llo_original>
